<compile_context>
chip_gen: v7x
topology: tpu7x:2x2x1
jax: 0.10.0
libtpu: 0.0.40
codegen_flags: <defaults>
</compile_context>

<pallas_src>
import functools

import jax
import jax.numpy as jnp
from jax.experimental import pallas as pl
from jax.experimental.pallas import tpu as pltpu


# ----------------------------------------------------------------------------
# Tiling helper
# ----------------------------------------------------------------------------
def _pick_tm(m, cap=512):
    """Largest row tile <= cap that divides m, is a multiple of 8, and leaves
    >= 2 grid steps (so both TensorCores get work on v7x). Falls back to m."""
    for t in (512, 256, 128, 64, 32, 16, 8):
        if t <= cap and m % t == 0 and m // t >= 2:
            return t
    return m


# ----------------------------------------------------------------------------
# Pallas kernels
# ----------------------------------------------------------------------------
def _edgeconv_kernel(nbr_ref, ctr_ref, wt_ref, wd_ref, o_ref, acc_ref, base_ref):
    """EdgeConv: y = max_k LeakyReLU( nbr_k @ Wt + ctr @ Wd )  (BN folded in W).

    The center term (ctr @ Wd) is k-invariant; it is computed once per row tile
    at j == 0 and kept in VMEM scratch.  BN beta / running mean are zero at
    init, so the folded edge-conv bias is identically 0 and omitted.
    """
    j = pl.program_id(1)

    @pl.when(j == 0)
    def _():
        base_ref[...] = jnp.dot(ctr_ref[...], wd_ref[...],
                                preferred_element_type=jnp.float32)
        acc_ref[...] = jnp.full(acc_ref.shape, -jnp.inf, jnp.float32)

    y = jnp.dot(nbr_ref[...], wt_ref[...], preferred_element_type=jnp.float32)
    y = y + base_ref[...]
    y = jnp.where(y > 0, y, 0.2 * y)                       # LeakyReLU(0.2)
    acc_ref[...] = jnp.maximum(acc_ref[...], y)            # max over k neighbors

    @pl.when(j == pl.num_programs(1) - 1)
    def _():
        o_ref[...] = acc_ref[...].astype(o_ref.dtype)


def _conv4_max_kernel(x_ref, w_ref, o_ref):
    """conv4 (128 -> 1024, no BN) + LeakyReLU, fused with the global max over
    points per batch.  Output block is resident across the point-tile axis."""
    i = pl.program_id(1)

    @pl.when(i == 0)
    def _():
        o_ref[...] = jnp.full(o_ref.shape, -jnp.inf, jnp.float32)

    y = jnp.dot(x_ref[...], w_ref[...], preferred_element_type=jnp.float32)
    y = jnp.where(y > 0, y, 0.2 * y)                       # LeakyReLU(0.2)
    o_ref[...] = jnp.maximum(o_ref[...], jnp.max(y, axis=0, keepdims=True))


def _rot_head_kernel(x_ref, w1_ref, b1_ref, w2_ref, b2_ref, w3_ref, b3_ref, o_ref):
    """Fused rotation head: Linear+BN+ReLU -> Linear+BN+ReLU -> Linear."""
    h = jnp.dot(x_ref[...], w1_ref[...], preferred_element_type=jnp.float32)
    h = jnp.maximum(h + b1_ref[...], 0.0)
    h = jnp.dot(h.astype(jnp.bfloat16), w2_ref[...],
                preferred_element_type=jnp.float32)
    h = jnp.maximum(h + b2_ref[...], 0.0)
    q = jnp.dot(h.astype(jnp.bfloat16), w3_ref[...],
                preferred_element_type=jnp.float32)
    o_ref[...] = q + b3_ref[...]


def _disp_head_kernel(x2_ref, base_ref, w1_ref, w2_ref, b2_ref,
                      w3_ref, b3_ref, w4_ref, b4_ref, o_ref):
    """Fused displacement head (dfc1..dfc4).  dfc1 is decomposed: the per-point
    part is x2 @ W_a; the per-batch broadcast part (x4/noise) arrives pre-folded
    into `base` (one row per batch, already scaled + biased)."""
    h = jnp.dot(x2_ref[...], w1_ref[...], preferred_element_type=jnp.float32)
    h = jnp.maximum(h + base_ref[...], 0.0)                      # ReLU(BN(dfc1))
    h = jnp.dot(h.astype(jnp.bfloat16), w2_ref[...],
                preferred_element_type=jnp.float32)
    h = jnp.maximum(h + b2_ref[...], 0.0)                        # ReLU(BN(dfc2))
    h = jnp.dot(h.astype(jnp.bfloat16), w3_ref[...],
                preferred_element_type=jnp.float32)
    h = jnp.maximum(h + b3_ref[...], 0.0)                        # ReLU(BN(dfc3))
    y = jnp.dot(h.astype(jnp.bfloat16), w4_ref[...],
                preferred_element_type=jnp.float32)
    o_ref[...] = y + b4_ref[...]                                 # dfc4 (+ bias)


# ----------------------------------------------------------------------------
# Kernel wrappers
# ----------------------------------------------------------------------------
def knn_idx(x_bnc, k):
    # x_bnc: (B, N, C) f32; returns indices of k nearest (incl. self), (B, N, k)
    sq = jnp.sum(x_bnc * x_bnc, axis=-1)                      # (B, N)
    inner = jnp.einsum('bnc,bmc->bnm', x_bnc, x_bnc)          # (B, N, N)
    neg_dist = 2.0 * inner - sq[:, :, None] - sq[:, None, :]  # -||xn - xm||^2
    # TODO(synk): top_k / gather have no clean Pallas TPU equivalent; done in JAX.
    return jax.lax.top_k(neg_dist, k)[1]


def edgeconv_layer(x_bnc, wt, wd, k, *, cap=512):
    """One EdgeConv layer.  x_bnc: (B, N, Cin) f32 -> (B*N, Cout) f32."""
    B, N, Cin = x_bnc.shape
    Cout = wt.shape[1]
    M = B * N
    idx = knn_idx(x_bnc, k)                                   # (B, N, k)
    x_b16 = x_bnc.astype(jnp.bfloat16)
    # Gather neighbors directly in (k, B*N, Cin) layout (k outermost) so no
    # big transpose of the edge tensor is needed.
    idx_kbn = jnp.transpose(idx, (2, 0, 1))                   # (k, B, N)
    nbr = jax.vmap(
        lambda ik: jnp.take_along_axis(x_b16, ik[:, :, None], axis=1))(idx_kbn)
    nbr = nbr.reshape(k, M, Cin)                              # (k, B*N, Cin) bf16
    ctr = x_b16.reshape(M, Cin)                               # (B*N, Cin) bf16
    tm = _pick_tm(M, cap=cap)
    return pl.pallas_call(
        _edgeconv_kernel,
        out_shape=jax.ShapeDtypeStruct((M, Cout), jnp.float32),
        grid=(M // tm, k),
        in_specs=[
            pl.BlockSpec((pl.Squeezed(), tm, Cin), lambda i, j: (j, i, 0)),
            pl.BlockSpec((tm, Cin), lambda i, j: (i, 0)),
            pl.BlockSpec((Cin, Cout), lambda i, j: (0, 0)),
            pl.BlockSpec((Cin, Cout), lambda i, j: (0, 0)),
        ],
        out_specs=pl.BlockSpec((tm, Cout), lambda i, j: (i, 0)),
        scratch_shapes=[pltpu.VMEM((tm, Cout), jnp.float32),
                        pltpu.VMEM((tm, Cout), jnp.float32)],
        compiler_params=pltpu.CompilerParams(
            dimension_semantics=("parallel", "arbitrary")),
    )(nbr, ctr, wt, wd)


def conv4_global_max(x_bnc, w, *, cap=512):
    """LeakyReLU(x @ W) then max over points, fused.  (B, N, 128) -> (B, 1024)."""
    B, N, Cin = x_bnc.shape
    Cout = w.shape[1]
    tn = _pick_tm(N, cap=cap)
    out = pl.pallas_call(
        _conv4_max_kernel,
        out_shape=jax.ShapeDtypeStruct((B, 1, Cout), jnp.float32),
        grid=(B, N // tn),
        in_specs=[
            pl.BlockSpec((pl.Squeezed(), tn, Cin), lambda b, i: (b, i, 0)),
            pl.BlockSpec((Cin, Cout), lambda b, i: (0, 0)),
        ],
        out_specs=pl.BlockSpec((pl.Squeezed(), 1, Cout), lambda b, i: (b, 0, 0)),
        compiler_params=pltpu.CompilerParams(
            dimension_semantics=("parallel", "arbitrary")),
    )(x_bnc.astype(jnp.bfloat16), w)
    return out.reshape(B, Cout)


def rotation_head(feat_r, w1, b1, w2, b2, w3, b3):
    """Fused rfc1 -> rfc2 -> rfc3.  feat_r: (B, 1024+emb) -> (B, 4)."""
    B, Cin = feat_r.shape
    H1, H2, H3 = w1.shape[1], w2.shape[1], w3.shape[1]

    def full(shape):
        return pl.BlockSpec(shape, lambda i, _s=len(shape): (0,) * _s)

    return pl.pallas_call(
        _rot_head_kernel,
        out_shape=jax.ShapeDtypeStruct((B, H3), jnp.float32),
        grid=(1,),
        in_specs=[full((B, Cin)),
                  full((Cin, H1)), full((1, H1)),
                  full((H1, H2)), full((1, H2)),
                  full((H2, H3)), full((1, H3))],
        out_specs=full((B, H3)),
    )(feat_r.astype(jnp.bfloat16), w1, b1, w2, b2, w3, b3)


def displacement_head(x2_bnc, base1, w1a, w2, b2, w3, b3, w4, b4, *, cap=256):
    """Fused dfc1..dfc4.  x2_bnc: (B, N, 64), base1: (B, 1, 1024) -> (B, N, 3)."""
    B, N, C2 = x2_bnc.shape
    H1, H2, H3, H4 = w1a.shape[1], w2.shape[1], w3.shape[1], w4.shape[1]
    tn = _pick_tm(N, cap=cap)

    def const(shape):
        return pl.BlockSpec(shape, lambda b, i, _s=len(shape): (0,) * _s)

    return pl.pallas_call(
        _disp_head_kernel,
        out_shape=jax.ShapeDtypeStruct((B, N, H4), jnp.float32),
        grid=(B, N // tn),
        in_specs=[
            pl.BlockSpec((pl.Squeezed(), tn, C2), lambda b, i: (b, i, 0)),
            pl.BlockSpec((pl.Squeezed(), 1, H1), lambda b, i: (b, 0, 0)),
            const((C2, H1)),
            const((H1, H2)), const((1, H2)),
            const((H2, H3)), const((1, H3)),
            const((H3, H4)), const((1, H4)),
        ],
        out_specs=pl.BlockSpec((pl.Squeezed(), tn, H4), lambda b, i: (b, i, 0)),
        compiler_params=pltpu.CompilerParams(
            dimension_semantics=("parallel", "parallel")),
    )(x2_bnc.astype(jnp.bfloat16), base1, w1a, w2, b2, w3, b3, w4, b4)


# ----------------------------------------------------------------------------
# Plain-JAX quaternion math
# ----------------------------------------------------------------------------
def batch_quat_to_rotmat(q):
    # q: (B, 4) -> (B, 3, 3), matching the PyTorch reference formula.
    l = jnp.sum(q * q, axis=1)
    s = 2.0 / l
    h = q[:, :, None] * q[:, None, :]

    def e(i, j):
        return h[:, i, j]

    r = jnp.stack([
        1.0 - (e(2, 2) + e(3, 3)) * s, (e(1, 2) - e(3, 0)) * s, (e(1, 3) + e(2, 0)) * s,
        (e(1, 2) + e(3, 0)) * s, 1.0 - (e(1, 1) + e(3, 3)) * s, (e(2, 3) - e(1, 0)) * s,
        (e(1, 3) - e(2, 0)) * s, (e(2, 3) + e(1, 0)) * s, 1.0 - (e(1, 1) + e(2, 2)) * s,
    ], axis=-1)
    return r.reshape(-1, 3, 3)


# ----------------------------------------------------------------------------
# Parameters (deterministic synthetic init), then BN-fold / split / bf16 cast
# ----------------------------------------------------------------------------
def init_params(key, emb_dims, dim=1024):
    keys = iter(jax.random.split(key, 32))

    def w(cin, cout):
        return 0.05 * jax.random.normal(next(keys), (cin, cout), jnp.float32)

    def b(cout):
        return 0.05 * jax.random.normal(next(keys), (cout,), jnp.float32)

    p = {}
    p['conv1_w'] = w(2 * 3, 64)            # EdgeConv Conv2d(bias=False)+BN2d
    p['conv2_w'] = w(2 * 64, 64)
    p['conv3_w'] = w(2 * 64, 128)
    p['conv4_w'] = w(128, dim)             # Conv1d(bias=False), no BN
    p['rfc1_w'], p['rfc1_b'] = w(dim + 1024 - 1024 + emb_dims + 1024 - emb_dims
                                 if False else emb_dims + 1024, 512), b(512)
    p['rfc2_w'], p['rfc2_b'] = w(512, 256), b(256)
    p['rfc3_w'], p['rfc3_b'] = w(256, 4), b(4)
    p['dfc1_w'], p['dfc1_b'] = w(64 + dim + emb_dims, 1024), b(1024)
    p['dfc2_w'], p['dfc2_b'] = w(1024, 512), b(512)
    p['dfc3_w'], p['dfc3_b'] = w(512, 64), b(64)
    p['dfc4_w'], p['dfc4_b'] = w(64, 3), b(3)
    return p


def fold_params(p, dim=1024):
    """Fold inference-mode BN (mean 0, var 1, gamma 1, beta 0) into the weight
    columns, split edge-conv weights for the nbr/ctr decomposition, split dfc1
    for the per-batch-broadcast decomposition, and cast matmul weights to bf16."""
    eps = 1e-5
    s = (1.0 + eps) ** -0.5
    bf = lambda a: a.astype(jnp.bfloat16)
    row = lambda a: a.reshape(1, -1).astype(jnp.float32)
    f = {}

    def edge(wfull):
        c = wfull.shape[0] // 2
        return bf(wfull[:c] * s), bf((wfull[c:] - wfull[:c]) * s)

    f['e1_wt'], f['e1_wd'] = edge(p['conv1_w'])
    f['e2_wt'], f['e2_wd'] = edge(p['conv2_w'])
    f['e3_wt'], f['e3_wd'] = edge(p['conv3_w'])
    f['conv4_w'] = bf(p['conv4_w'])

    f['rw1'], f['rb1'] = bf(p['rfc1_w'] * s), row(p['rfc1_b'] * s)
    f['rw2'], f['rb2'] = bf(p['rfc2_w'] * s), row(p['rfc2_b'] * s)
    f['rw3'], f['rb3'] = bf(p['rfc3_w']), row(p['rfc3_b'])

    w1 = p['dfc1_w'] * s
    f['dw1a'] = bf(w1[:64])                 # per-point x2 part   (Pallas)
    f['dw1b'] = w1[64:64 + dim]             # x4 part    (per-batch, plain JAX)
    f['dw1c'] = w1[64 + dim:]               # noise part (per-batch, plain JAX)
    f['db1'] = row(p['dfc1_b'] * s)
    f['dw2'], f['db2'] = bf(p['dfc2_w'] * s), row(p['dfc2_b'] * s)
    f['dw3'], f['db3'] = bf(p['dfc3_w'] * s), row(p['dfc3_b'] * s)
    f['dw4'], f['db4'] = bf(p['dfc4_w']), row(p['dfc4_b'])
    return f


# ----------------------------------------------------------------------------
# Full forward pass of Generator_backup
# ----------------------------------------------------------------------------
def generator_forward(f, pt, noise, k, dim=1024):
    # pt: (B, C, N) with C >= 3 (here 6: xyz + normal), noise: (B, emb_dims)
    B, C, N = pt.shape
    raw_pt = pt[:, :3, :]                                  # (B, 3, N)
    x_bnc = jnp.swapaxes(raw_pt, 1, 2)                     # (B, N, 3)

    # EdgeConv stack (Conv2d k=1 + BN + LeakyReLU + max over k)
    x1 = edgeconv_layer(x_bnc, f['e1_wt'], f['e1_wd'], k)          # (B*N, 64)
    x2 = edgeconv_layer(x1.reshape(B, N, -1), f['e2_wt'], f['e2_wd'], k)
    x2_bnc = x2.reshape(B, N, -1)                                  # point_feat
    x3 = edgeconv_layer(x2_bnc, f['e3_wt'], f['e3_wd'], k)         # (B*N, 128)

    # conv4 (128 -> 1024) + LeakyReLU, fused with the global max over points
    x4 = conv4_global_max(x3.reshape(B, N, -1), f['conv4_w'])      # (B, 1024)

    # ---- rotation head ----
    feat_r = jnp.concatenate([x4, noise], axis=1)                  # (B, 1024+emb)
    q = rotation_head(feat_r, f['rw1'], f['rb1'], f['rw2'], f['rb2'],
                      f['rw3'], f['rb3'])
    q = q + jnp.array([1.0, 0.0, 0.0, 0.0], jnp.float32)
    rotation = batch_quat_to_rotmat(q)                             # (B, 3, 3)

    # ---- displacement head ----
    # Per-batch (k-invariant) part of dfc1 computed once in plain JAX (tiny).
    base1 = x4 @ f['dw1b'] + noise @ f['dw1c'] + f['db1']          # (B, 1024)
    d = displacement_head(x2_bnc, base1.reshape(B, 1, dim), f['dw1a'],
                          f['dw2'], f['db2'], f['dw3'], f['db3'],
                          f['dw4'], f['db4'])                      # (B, N, 3)
    displacement = jnp.swapaxes(d, 1, 2)                           # (B, 3, N)

    # TODO(synk): the PyTorch forward flips two random coins (prob 0.5 each);
    # here both the rotation and displacement branches are applied deterministically.
    pt_bn3 = jnp.swapaxes(raw_pt, 1, 2)                            # (B, N, 3)
    pt_rot = jnp.swapaxes(jnp.einsum('bnc,bcd->bnd', pt_bn3, rotation), 1, 2)
    out = pt_rot + displacement
    if C > 3:
        normal_bn3 = jnp.swapaxes(pt[:, 3:, :], 1, 2)
        normal_rot = jnp.swapaxes(
            jnp.einsum('bnc,bcd->bnd', normal_bn3, rotation), 1, 2)
        out = jnp.concatenate([out, normal_rot], axis=1)           # (B, C, N)
    return out


if __name__ == "__main__":
    B, C, N, K, EMB = 2, 6, 64, 8, 64
    key = jax.random.PRNGKey(0)
    kp, kpt, kn = jax.random.split(key, 3)
    params = fold_params(init_params(kp, EMB), dim=1024)
    pt = jax.random.normal(kpt, (B, C, N), jnp.float32)
    noise = jax.random.normal(kn, (B, EMB), jnp.float32)

    fwd = jax.jit(functools.partial(generator_forward, k=K))
    out = jax.block_until_ready(fwd(params, pt, noise))
    assert out.shape == (B, C, N) and out.dtype == jnp.float32
    print("KERNEL_OK")
</pallas_src>

<mosaic_0001>
module attributes {stable_mosaic.version = 11 : i64} {
  func.func @_edgeconv_kernel(%arg0: i32, %arg1: i32, %arg2: memref<1x64x3xbf16, #tpu.memory_space<vmem>>, %arg3: memref<64x3xbf16, #tpu.memory_space<vmem>>, %arg4: memref<3x64xbf16, #tpu.memory_space<vmem>>, %arg5: memref<3x64xbf16, #tpu.memory_space<vmem>>, %arg6: memref<64x64xf32, #tpu.memory_space<vmem>>, %arg7: memref<64x64xf32, #tpu.memory_space<vmem>>, %arg8: memref<64x64xf32, #tpu.memory_space<vmem>>) attributes {dimension_semantics = [#tpu.dimension_semantics<parallel>, #tpu.dimension_semantics<arbitrary>], iteration_bounds = array<i64: 2, 8>, scalar_prefetch = 0 : i64, scratch_operands = 2 : i64, tpu.core_type = #tpu.core_type<tc>, window_params = [{transform_indices = @transform_0, window_bounds = array<i64: 1, 64, 3>}, {transform_indices = @transform_1, window_bounds = array<i64: 64, 3>}, {pipeline_mode = #tpu.pipeline_mode<synchronous>, transform_indices = @transform_2, window_bounds = array<i64: 3, 64>}, {pipeline_mode = #tpu.pipeline_mode<synchronous>, transform_indices = @transform_3, window_bounds = array<i64: 3, 64>}, {transform_indices = @transform_4, window_bounds = array<i64: 64, 64>}]} {
    %c0_i32 = arith.constant 0 : i32
    %0 = arith.cmpi eq, %arg1, %c0_i32 : i32
    %1 = arith.extui %0 : i1 to i32
    %c0_i32_0 = arith.constant 0 : i32
    %2 = arith.cmpi ne, %1, %c0_i32_0 : i32
    scf.if %2 {
      %c0_14 = arith.constant 0 : index
      %c0_15 = arith.constant 0 : index
      %20 = vector.load %arg3[%c0_14, %c0_15] : memref<64x3xbf16, #tpu.memory_space<vmem>>, vector<64x3xbf16>
      %c0_16 = arith.constant 0 : index
      %c0_17 = arith.constant 0 : index
      %21 = vector.load %arg5[%c0_16, %c0_17] : memref<3x64xbf16, #tpu.memory_space<vmem>>, vector<3x64xbf16>
      %cst_18 = arith.constant dense<0.000000e+00> : vector<64x64xf32>
      %22 = tpu.matmul %20, %21, %cst_18 {dimension_numbers = #tpu.dot_dimension_numbers<[1], [0], [0], [1], [0, 0, 1, 1], [], []>} : vector<64x3xbf16>, vector<3x64xbf16>, vector<64x64xf32> -> vector<64x64xf32>
      %c0_19 = arith.constant 0 : index
      %c0_20 = arith.constant 0 : index
      %23 = vector.load %arg8[%c0_19, %c0_20] : memref<64x64xf32, #tpu.memory_space<vmem>>, vector<64x64xf32>
      tpu.vector_store %arg8[%c0_19, %c0_20], %22 {strides = array<i32>} : memref<64x64xf32, #tpu.memory_space<vmem>>, vector<64x64xf32>,
      %cst_21 = arith.constant 0xFF800000 : f32
      %24 = vector.broadcast %cst_21 : f32 to vector<64x64xf32>
      %c0_22 = arith.constant 0 : index
      %c0_23 = arith.constant 0 : index
      %25 = vector.load %arg7[%c0_22, %c0_23] : memref<64x64xf32, #tpu.memory_space<vmem>>, vector<64x64xf32>
      tpu.vector_store %arg7[%c0_22, %c0_23], %24 {strides = array<i32>} : memref<64x64xf32, #tpu.memory_space<vmem>>, vector<64x64xf32>,
    } else {
    }
    %c0 = arith.constant 0 : index
    %c0_1 = arith.constant 0 : index
    %c0_2 = arith.constant 0 : index
    %3 = vector.load %arg2[%c0, %c0_1, %c0_2] : memref<1x64x3xbf16, #tpu.memory_space<vmem>>, vector<1x64x3xbf16>
    %4 = vector.shape_cast %3 : vector<1x64x3xbf16> to vector<64x3xbf16>
    %c0_3 = arith.constant 0 : index
    %c0_4 = arith.constant 0 : index
    %5 = vector.load %arg4[%c0_3, %c0_4] : memref<3x64xbf16, #tpu.memory_space<vmem>>, vector<3x64xbf16>
    %cst = arith.constant dense<0.000000e+00> : vector<64x64xf32>
    %6 = tpu.matmul %4, %5, %cst {dimension_numbers = #tpu.dot_dimension_numbers<[1], [0], [0], [1], [0, 0, 1, 1], [], []>} : vector<64x3xbf16>, vector<3x64xbf16>, vector<64x64xf32> -> vector<64x64xf32>
    %c0_5 = arith.constant 0 : index
    %c0_6 = arith.constant 0 : index
    %7 = vector.load %arg8[%c0_5, %c0_6] : memref<64x64xf32, #tpu.memory_space<vmem>>, vector<64x64xf32>
    %8 = arith.addf %6, %7 : vector<64x64xf32>
    %cst_7 = arith.constant 0.000000e+00 : f32
    %9 = vector.broadcast %cst_7 : f32 to vector<64x64xf32>
    %10 = arith.cmpf ogt, %8, %9 : vector<64x64xf32>
    %cst_8 = arith.constant 2.000000e-01 : f32
    %11 = vector.broadcast %cst_8 : f32 to vector<64x64xf32>
    %12 = arith.mulf %11, %8 : vector<64x64xf32>
    %13 = arith.select %10, %8, %12 : vector<64x64xi1>, vector<64x64xf32>
    %c0_9 = arith.constant 0 : index
    %c0_10 = arith.constant 0 : index
    %14 = vector.load %arg7[%c0_9, %c0_10] : memref<64x64xf32, #tpu.memory_space<vmem>>, vector<64x64xf32>
    %15 = arith.maximumf %14, %13 : vector<64x64xf32>
    %c0_11 = arith.constant 0 : index
    %c0_12 = arith.constant 0 : index
    %16 = vector.load %arg7[%c0_11, %c0_12] : memref<64x64xf32, #tpu.memory_space<vmem>>, vector<64x64xf32>
    tpu.vector_store %arg7[%c0_11, %c0_12], %15 {strides = array<i32>} : memref<64x64xf32, #tpu.memory_space<vmem>>, vector<64x64xf32>,
    %c7_i32 = arith.constant 7 : i32
    %17 = arith.cmpi eq, %arg1, %c7_i32 : i32
    %18 = arith.extui %17 : i1 to i32
    %c0_i32_13 = arith.constant 0 : i32
    %19 = arith.cmpi ne, %18, %c0_i32_13 : i32
    scf.if %19 {
      %c0_14 = arith.constant 0 : index
      %c0_15 = arith.constant 0 : index
      %20 = vector.load %arg7[%c0_14, %c0_15] : memref<64x64xf32, #tpu.memory_space<vmem>>, vector<64x64xf32>
      %c0_16 = arith.constant 0 : index
      %c0_17 = arith.constant 0 : index
      %21 = vector.load %arg6[%c0_16, %c0_17] : memref<64x64xf32, #tpu.memory_space<vmem>>, vector<64x64xf32>
      tpu.vector_store %arg6[%c0_16, %c0_17], %20 {strides = array<i32>} : memref<64x64xf32, #tpu.memory_space<vmem>>, vector<64x64xf32>,
    } else {
    }
    return
  }
  func.func @transform_0(%arg0: i32, %arg1: i32) -> (i32, i32, i32) {
    %c0_i32 = arith.constant 0 : i32
    %c0_i32_0 = arith.constant 0 : i32
    return %arg1, %arg0, %c0_i32 : i32, i32, i32
  }
  func.func @transform_1(%arg0: i32, %arg1: i32) -> (i32, i32) {
    %c0_i32 = arith.constant 0 : i32
    %c0_i32_0 = arith.constant 0 : i32
    return %arg0, %c0_i32 : i32, i32
  }
  func.func @transform_2(%arg0: i32, %arg1: i32) -> (i32, i32) {
    %c0_i32 = arith.constant 0 : i32
    %c0_i32_0 = arith.constant 0 : i32
    %c0_i32_1 = arith.constant 0 : i32
    return %c0_i32, %c0_i32_0 : i32, i32
  }
  func.func @transform_3(%arg0: i32, %arg1: i32) -> (i32, i32) {
    %c0_i32 = arith.constant 0 : i32
    %c0_i32_0 = arith.constant 0 : i32
    %c0_i32_1 = arith.constant 0 : i32
    return %c0_i32, %c0_i32_0 : i32, i32
  }
  func.func @transform_4(%arg0: i32, %arg1: i32) -> (i32, i32) {
    %c0_i32 = arith.constant 0 : i32
    %c0_i32_0 = arith.constant 0 : i32
    return %arg0, %c0_i32 : i32, i32
  }
}

module attributes {stable_mosaic.version = 11 : i64} {
  func.func @_edgeconv_kernel(%arg0: i32, %arg1: i32, %arg2: memref<1x64x64xbf16, #tpu.memory_space<vmem>>, %arg3: memref<64x64xbf16, #tpu.memory_space<vmem>>, %arg4: memref<64x64xbf16, #tpu.memory_space<vmem>>, %arg5: memref<64x64xbf16, #tpu.memory_space<vmem>>, %arg6: memref<64x64xf32, #tpu.memory_space<vmem>>, %arg7: memref<64x64xf32, #tpu.memory_space<vmem>>, %arg8: memref<64x64xf32, #tpu.memory_space<vmem>>) attributes {dimension_semantics = [#tpu.dimension_semantics<parallel>, #tpu.dimension_semantics<arbitrary>], iteration_bounds = array<i64: 2, 8>, scalar_prefetch = 0 : i64, scratch_operands = 2 : i64, tpu.core_type = #tpu.core_type<tc>, window_params = [{transform_indices = @transform_0, window_bounds = array<i64: 1, 64, 64>}, {transform_indices = @transform_1, window_bounds = array<i64: 64, 64>}, {pipeline_mode = #tpu.pipeline_mode<synchronous>, transform_indices = @transform_2, window_bounds = array<i64: 64, 64>}, {pipeline_mode = #tpu.pipeline_mode<synchronous>, transform_indices = @transform_3, window_bounds = array<i64: 64, 64>}, {transform_indices = @transform_4, window_bounds = array<i64: 64, 64>}]} {
    %c0_i32 = arith.constant 0 : i32
    %0 = arith.cmpi eq, %arg1, %c0_i32 : i32
    %1 = arith.extui %0 : i1 to i32
    %c0_i32_0 = arith.constant 0 : i32
    %2 = arith.cmpi ne, %1, %c0_i32_0 : i32
    scf.if %2 {
      %c0_14 = arith.constant 0 : index
      %c0_15 = arith.constant 0 : index
      %20 = vector.load %arg3[%c0_14, %c0_15] : memref<64x64xbf16, #tpu.memory_space<vmem>>, vector<64x64xbf16>
      %c0_16 = arith.constant 0 : index
      %c0_17 = arith.constant 0 : index
      %21 = vector.load %arg5[%c0_16, %c0_17] : memref<64x64xbf16, #tpu.memory_space<vmem>>, vector<64x64xbf16>
      %cst_18 = arith.constant dense<0.000000e+00> : vector<64x64xf32>
      %22 = tpu.matmul %20, %21, %cst_18 {dimension_numbers = #tpu.dot_dimension_numbers<[1], [0], [0], [1], [0, 0, 1, 1], [], []>} : vector<64x64xbf16>, vector<64x64xbf16>, vector<64x64xf32> -> vector<64x64xf32>
      %c0_19 = arith.constant 0 : index
      %c0_20 = arith.constant 0 : index
      %23 = vector.load %arg8[%c0_19, %c0_20] : memref<64x64xf32, #tpu.memory_space<vmem>>, vector<64x64xf32>
      tpu.vector_store %arg8[%c0_19, %c0_20], %22 {strides = array<i32>} : memref<64x64xf32, #tpu.memory_space<vmem>>, vector<64x64xf32>,
      %cst_21 = arith.constant 0xFF800000 : f32
      %24 = vector.broadcast %cst_21 : f32 to vector<64x64xf32>
      %c0_22 = arith.constant 0 : index
      %c0_23 = arith.constant 0 : index
      %25 = vector.load %arg7[%c0_22, %c0_23] : memref<64x64xf32, #tpu.memory_space<vmem>>, vector<64x64xf32>
      tpu.vector_store %arg7[%c0_22, %c0_23], %24 {strides = array<i32>} : memref<64x64xf32, #tpu.memory_space<vmem>>, vector<64x64xf32>,
    } else {
    }
    %c0 = arith.constant 0 : index
    %c0_1 = arith.constant 0 : index
    %c0_2 = arith.constant 0 : index
    %3 = vector.load %arg2[%c0, %c0_1, %c0_2] : memref<1x64x64xbf16, #tpu.memory_space<vmem>>, vector<1x64x64xbf16>
    %4 = vector.shape_cast %3 : vector<1x64x64xbf16> to vector<64x64xbf16>
    %c0_3 = arith.constant 0 : index
    %c0_4 = arith.constant 0 : index
    %5 = vector.load %arg4[%c0_3, %c0_4] : memref<64x64xbf16, #tpu.memory_space<vmem>>, vector<64x64xbf16>
    %cst = arith.constant dense<0.000000e+00> : vector<64x64xf32>
    %6 = tpu.matmul %4, %5, %cst {dimension_numbers = #tpu.dot_dimension_numbers<[1], [0], [0], [1], [0, 0, 1, 1], [], []>} : vector<64x64xbf16>, vector<64x64xbf16>, vector<64x64xf32> -> vector<64x64xf32>
    %c0_5 = arith.constant 0 : index
    %c0_6 = arith.constant 0 : index
    %7 = vector.load %arg8[%c0_5, %c0_6] : memref<64x64xf32, #tpu.memory_space<vmem>>, vector<64x64xf32>
    %8 = arith.addf %6, %7 : vector<64x64xf32>
    %cst_7 = arith.constant 0.000000e+00 : f32
    %9 = vector.broadcast %cst_7 : f32 to vector<64x64xf32>
    %10 = arith.cmpf ogt, %8, %9 : vector<64x64xf32>
    %cst_8 = arith.constant 2.000000e-01 : f32
    %11 = vector.broadcast %cst_8 : f32 to vector<64x64xf32>
    %12 = arith.mulf %11, %8 : vector<64x64xf32>
    %13 = arith.select %10, %8, %12 : vector<64x64xi1>, vector<64x64xf32>
    %c0_9 = arith.constant 0 : index
    %c0_10 = arith.constant 0 : index
    %14 = vector.load %arg7[%c0_9, %c0_10] : memref<64x64xf32, #tpu.memory_space<vmem>>, vector<64x64xf32>
    %15 = arith.maximumf %14, %13 : vector<64x64xf32>
    %c0_11 = arith.constant 0 : index
    %c0_12 = arith.constant 0 : index
    %16 = vector.load %arg7[%c0_11, %c0_12] : memref<64x64xf32, #tpu.memory_space<vmem>>, vector<64x64xf32>
    tpu.vector_store %arg7[%c0_11, %c0_12], %15 {strides = array<i32>} : memref<64x64xf32, #tpu.memory_space<vmem>>, vector<64x64xf32>,
    %c7_i32 = arith.constant 7 : i32
    %17 = arith.cmpi eq, %arg1, %c7_i32 : i32
    %18 = arith.extui %17 : i1 to i32
    %c0_i32_13 = arith.constant 0 : i32
    %19 = arith.cmpi ne, %18, %c0_i32_13 : i32
    scf.if %19 {
      %c0_14 = arith.constant 0 : index
      %c0_15 = arith.constant 0 : index
      %20 = vector.load %arg7[%c0_14, %c0_15] : memref<64x64xf32, #tpu.memory_space<vmem>>, vector<64x64xf32>
      %c0_16 = arith.constant 0 : index
      %c0_17 = arith.constant 0 : index
      %21 = vector.load %arg6[%c0_16, %c0_17] : memref<64x64xf32, #tpu.memory_space<vmem>>, vector<64x64xf32>
      tpu.vector_store %arg6[%c0_16, %c0_17], %20 {strides = array<i32>} : memref<64x64xf32, #tpu.memory_space<vmem>>, vector<64x64xf32>,
    } else {
    }
    return
  }
  func.func @transform_0(%arg0: i32, %arg1: i32) -> (i32, i32, i32) {
    %c0_i32 = arith.constant 0 : i32
    %c0_i32_0 = arith.constant 0 : i32
    return %arg1, %arg0, %c0_i32 : i32, i32, i32
  }
  func.func @transform_1(%arg0: i32, %arg1: i32) -> (i32, i32) {
    %c0_i32 = arith.constant 0 : i32
    %c0_i32_0 = arith.constant 0 : i32
    return %arg0, %c0_i32 : i32, i32
  }
  func.func @transform_2(%arg0: i32, %arg1: i32) -> (i32, i32) {
    %c0_i32 = arith.constant 0 : i32
    %c0_i32_0 = arith.constant 0 : i32
    %c0_i32_1 = arith.constant 0 : i32
    return %c0_i32, %c0_i32_0 : i32, i32
  }
  func.func @transform_3(%arg0: i32, %arg1: i32) -> (i32, i32) {
    %c0_i32 = arith.constant 0 : i32
    %c0_i32_0 = arith.constant 0 : i32
    %c0_i32_1 = arith.constant 0 : i32
    return %c0_i32, %c0_i32_0 : i32, i32
  }
  func.func @transform_4(%arg0: i32, %arg1: i32) -> (i32, i32) {
    %c0_i32 = arith.constant 0 : i32
    %c0_i32_0 = arith.constant 0 : i32
    return %arg0, %c0_i32 : i32, i32
  }
}

module attributes {stable_mosaic.version = 11 : i64} {
  func.func @_edgeconv_kernel(%arg0: i32, %arg1: i32, %arg2: memref<1x64x64xbf16, #tpu.memory_space<vmem>>, %arg3: memref<64x64xbf16, #tpu.memory_space<vmem>>, %arg4: memref<64x128xbf16, #tpu.memory_space<vmem>>, %arg5: memref<64x128xbf16, #tpu.memory_space<vmem>>, %arg6: memref<64x128xf32, #tpu.memory_space<vmem>>, %arg7: memref<64x128xf32, #tpu.memory_space<vmem>>, %arg8: memref<64x128xf32, #tpu.memory_space<vmem>>) attributes {dimension_semantics = [#tpu.dimension_semantics<parallel>, #tpu.dimension_semantics<arbitrary>], iteration_bounds = array<i64: 2, 8>, scalar_prefetch = 0 : i64, scratch_operands = 2 : i64, tpu.core_type = #tpu.core_type<tc>, window_params = [{transform_indices = @transform_0, window_bounds = array<i64: 1, 64, 64>}, {transform_indices = @transform_1, window_bounds = array<i64: 64, 64>}, {pipeline_mode = #tpu.pipeline_mode<synchronous>, transform_indices = @transform_2, window_bounds = array<i64: 64, 128>}, {pipeline_mode = #tpu.pipeline_mode<synchronous>, transform_indices = @transform_3, window_bounds = array<i64: 64, 128>}, {transform_indices = @transform_4, window_bounds = array<i64: 64, 128>}]} {
    %c0_i32 = arith.constant 0 : i32
    %0 = arith.cmpi eq, %arg1, %c0_i32 : i32
    %1 = arith.extui %0 : i1 to i32
    %c0_i32_0 = arith.constant 0 : i32
    %2 = arith.cmpi ne, %1, %c0_i32_0 : i32
    scf.if %2 {
      %c0_14 = arith.constant 0 : index
      %c0_15 = arith.constant 0 : index
      %20 = vector.load %arg3[%c0_14, %c0_15] : memref<64x64xbf16, #tpu.memory_space<vmem>>, vector<64x64xbf16>
      %c0_16 = arith.constant 0 : index
      %c0_17 = arith.constant 0 : index
      %21 = vector.load %arg5[%c0_16, %c0_17] : memref<64x128xbf16, #tpu.memory_space<vmem>>, vector<64x128xbf16>
      %cst_18 = arith.constant dense<0.000000e+00> : vector<64x128xf32>
      %22 = tpu.matmul %20, %21, %cst_18 {dimension_numbers = #tpu.dot_dimension_numbers<[1], [0], [0], [1], [0, 0, 1, 1], [], []>} : vector<64x64xbf16>, vector<64x128xbf16>, vector<64x128xf32> -> vector<64x128xf32>
      %c0_19 = arith.constant 0 : index
      %c0_20 = arith.constant 0 : index
      %23 = vector.load %arg8[%c0_19, %c0_20] : memref<64x128xf32, #tpu.memory_space<vmem>>, vector<64x128xf32>
      tpu.vector_store %arg8[%c0_19, %c0_20], %22 {strides = array<i32>} : memref<64x128xf32, #tpu.memory_space<vmem>>, vector<64x128xf32>,
      %cst_21 = arith.constant 0xFF800000 : f32
      %24 = vector.broadcast %cst_21 : f32 to vector<64x128xf32>
      %c0_22 = arith.constant 0 : index
      %c0_23 = arith.constant 0 : index
      %25 = vector.load %arg7[%c0_22, %c0_23] : memref<64x128xf32, #tpu.memory_space<vmem>>, vector<64x128xf32>
      tpu.vector_store %arg7[%c0_22, %c0_23], %24 {strides = array<i32>} : memref<64x128xf32, #tpu.memory_space<vmem>>, vector<64x128xf32>,
    } else {
    }
    %c0 = arith.constant 0 : index
    %c0_1 = arith.constant 0 : index
    %c0_2 = arith.constant 0 : index
    %3 = vector.load %arg2[%c0, %c0_1, %c0_2] : memref<1x64x64xbf16, #tpu.memory_space<vmem>>, vector<1x64x64xbf16>
    %4 = vector.shape_cast %3 : vector<1x64x64xbf16> to vector<64x64xbf16>
    %c0_3 = arith.constant 0 : index
    %c0_4 = arith.constant 0 : index
    %5 = vector.load %arg4[%c0_3, %c0_4] : memref<64x128xbf16, #tpu.memory_space<vmem>>, vector<64x128xbf16>
    %cst = arith.constant dense<0.000000e+00> : vector<64x128xf32>
    %6 = tpu.matmul %4, %5, %cst {dimension_numbers = #tpu.dot_dimension_numbers<[1], [0], [0], [1], [0, 0, 1, 1], [], []>} : vector<64x64xbf16>, vector<64x128xbf16>, vector<64x128xf32> -> vector<64x128xf32>
    %c0_5 = arith.constant 0 : index
    %c0_6 = arith.constant 0 : index
    %7 = vector.load %arg8[%c0_5, %c0_6] : memref<64x128xf32, #tpu.memory_space<vmem>>, vector<64x128xf32>
    %8 = arith.addf %6, %7 : vector<64x128xf32>
    %cst_7 = arith.constant 0.000000e+00 : f32
    %9 = vector.broadcast %cst_7 : f32 to vector<64x128xf32>
    %10 = arith.cmpf ogt, %8, %9 : vector<64x128xf32>
    %cst_8 = arith.constant 2.000000e-01 : f32
    %11 = vector.broadcast %cst_8 : f32 to vector<64x128xf32>
    %12 = arith.mulf %11, %8 : vector<64x128xf32>
    %13 = arith.select %10, %8, %12 : vector<64x128xi1>, vector<64x128xf32>
    %c0_9 = arith.constant 0 : index
    %c0_10 = arith.constant 0 : index
    %14 = vector.load %arg7[%c0_9, %c0_10] : memref<64x128xf32, #tpu.memory_space<vmem>>, vector<64x128xf32>
    %15 = arith.maximumf %14, %13 : vector<64x128xf32>
    %c0_11 = arith.constant 0 : index
    %c0_12 = arith.constant 0 : index
    %16 = vector.load %arg7[%c0_11, %c0_12] : memref<64x128xf32, #tpu.memory_space<vmem>>, vector<64x128xf32>
    tpu.vector_store %arg7[%c0_11, %c0_12], %15 {strides = array<i32>} : memref<64x128xf32, #tpu.memory_space<vmem>>, vector<64x128xf32>,
    %c7_i32 = arith.constant 7 : i32
    %17 = arith.cmpi eq, %arg1, %c7_i32 : i32
    %18 = arith.extui %17 : i1 to i32
    %c0_i32_13 = arith.constant 0 : i32
    %19 = arith.cmpi ne, %18, %c0_i32_13 : i32
    scf.if %19 {
      %c0_14 = arith.constant 0 : index
      %c0_15 = arith.constant 0 : index
      %20 = vector.load %arg7[%c0_14, %c0_15] : memref<64x128xf32, #tpu.memory_space<vmem>>, vector<64x128xf32>
      %c0_16 = arith.constant 0 : index
      %c0_17 = arith.constant 0 : index
      %21 = vector.load %arg6[%c0_16, %c0_17] : memref<64x128xf32, #tpu.memory_space<vmem>>, vector<64x128xf32>
      tpu.vector_store %arg6[%c0_16, %c0_17], %20 {strides = array<i32>} : memref<64x128xf32, #tpu.memory_space<vmem>>, vector<64x128xf32>,
    } else {
    }
    return
  }
  func.func @transform_0(%arg0: i32, %arg1: i32) -> (i32, i32, i32) {
    %c0_i32 = arith.constant 0 : i32
    %c0_i32_0 = arith.constant 0 : i32
    return %arg1, %arg0, %c0_i32 : i32, i32, i32
  }
  func.func @transform_1(%arg0: i32, %arg1: i32) -> (i32, i32) {
    %c0_i32 = arith.constant 0 : i32
    %c0_i32_0 = arith.constant 0 : i32
    return %arg0, %c0_i32 : i32, i32
  }
  func.func @transform_2(%arg0: i32, %arg1: i32) -> (i32, i32) {
    %c0_i32 = arith.constant 0 : i32
    %c0_i32_0 = arith.constant 0 : i32
    %c0_i32_1 = arith.constant 0 : i32
    return %c0_i32, %c0_i32_0 : i32, i32
  }
  func.func @transform_3(%arg0: i32, %arg1: i32) -> (i32, i32) {
    %c0_i32 = arith.constant 0 : i32
    %c0_i32_0 = arith.constant 0 : i32
    %c0_i32_1 = arith.constant 0 : i32
    return %c0_i32, %c0_i32_0 : i32, i32
  }
  func.func @transform_4(%arg0: i32, %arg1: i32) -> (i32, i32) {
    %c0_i32 = arith.constant 0 : i32
    %c0_i32_0 = arith.constant 0 : i32
    return %arg0, %c0_i32 : i32, i32
  }
}

module attributes {stable_mosaic.version = 11 : i64} {
  func.func @_conv4_max_kernel(%arg0: i32, %arg1: i32, %arg2: memref<1x32x128xbf16, #tpu.memory_space<vmem>>, %arg3: memref<128x1024xbf16, #tpu.memory_space<vmem>>, %arg4: memref<1x1x1024xf32, #tpu.memory_space<vmem>>) attributes {dimension_semantics = [#tpu.dimension_semantics<parallel>, #tpu.dimension_semantics<arbitrary>], iteration_bounds = array<i64: 2, 2>, scalar_prefetch = 0 : i64, scratch_operands = 0 : i64, tpu.core_type = #tpu.core_type<tc>, window_params = [{transform_indices = @transform_0, window_bounds = array<i64: 1, 32, 128>}, {pipeline_mode = #tpu.pipeline_mode<synchronous>, transform_indices = @transform_1, window_bounds = array<i64: 128, 1024>}, {transform_indices = @transform_2, window_bounds = array<i64: 1, 1, 1024>}]} {
    %c0_i32 = arith.constant 0 : i32
    %0 = arith.cmpi eq, %arg1, %c0_i32 : i32
    %1 = arith.extui %0 : i1 to i32
    %c0_i32_0 = arith.constant 0 : i32
    %2 = arith.cmpi ne, %1, %c0_i32_0 : i32
    scf.if %2 {
      %cst_14 = arith.constant 0xFF800000 : f32
      %20 = vector.broadcast %cst_14 : f32 to vector<1x1024xf32>
      %c0_15 = arith.constant 0 : index
      %c0_16 = arith.constant 0 : index
      %c0_17 = arith.constant 0 : index
      %21 = vector.load %arg4[%c0_15, %c0_16, %c0_17] : memref<1x1x1024xf32, #tpu.memory_space<vmem>>, vector<1x1x1024xf32>
      %22 = vector.shape_cast %21 : vector<1x1x1024xf32> to vector<1x1024xf32>
      %23 = vector.shape_cast %20 : vector<1x1024xf32> to vector<1x1x1024xf32>
      tpu.vector_store %arg4[%c0_15, %c0_16, %c0_17], %23 {strides = array<i32>} : memref<1x1x1024xf32, #tpu.memory_space<vmem>>, vector<1x1x1024xf32>,
    } else {
    }
    %c0 = arith.constant 0 : index
    %c0_1 = arith.constant 0 : index
    %c0_2 = arith.constant 0 : index
    %3 = vector.load %arg2[%c0, %c0_1, %c0_2] : memref<1x32x128xbf16, #tpu.memory_space<vmem>>, vector<1x32x128xbf16>
    %4 = vector.shape_cast %3 : vector<1x32x128xbf16> to vector<32x128xbf16>
    %c0_3 = arith.constant 0 : index
    %c0_4 = arith.constant 0 : index
    %5 = vector.load %arg3[%c0_3, %c0_4] : memref<128x1024xbf16, #tpu.memory_space<vmem>>, vector<128x1024xbf16>
    %cst = arith.constant dense<0.000000e+00> : vector<32x1024xf32>
    %6 = tpu.matmul %4, %5, %cst {dimension_numbers = #tpu.dot_dimension_numbers<[1], [0], [0], [1], [0, 0, 1, 1], [], []>} : vector<32x128xbf16>, vector<128x1024xbf16>, vector<32x1024xf32> -> vector<32x1024xf32>
    %cst_5 = arith.constant 0.000000e+00 : f32
    %7 = vector.broadcast %cst_5 : f32 to vector<32x1024xf32>
    %8 = arith.cmpf ogt, %6, %7 : vector<32x1024xf32>
    %cst_6 = arith.constant 2.000000e-01 : f32
    %9 = vector.broadcast %cst_6 : f32 to vector<32x1024xf32>
    %10 = arith.mulf %9, %6 : vector<32x1024xf32>
    %11 = arith.select %8, %6, %10 : vector<32x1024xi1>, vector<32x1024xf32>
    %c0_7 = arith.constant 0 : index
    %c0_8 = arith.constant 0 : index
    %c0_9 = arith.constant 0 : index
    %12 = vector.load %arg4[%c0_7, %c0_8, %c0_9] : memref<1x1x1024xf32, #tpu.memory_space<vmem>>, vector<1x1x1024xf32>
    %13 = vector.shape_cast %12 : vector<1x1x1024xf32> to vector<1x1024xf32>
    %cst_10 = arith.constant dense<0xFF800000> : vector<1024xf32>
    %14 = vector.multi_reduction <maximumf>, %11, %cst_10 [0] : vector<32x1024xf32> to vector<1024xf32>
    %15 = vector.shape_cast %14 : vector<1024xf32> to vector<1x1024xf32>
    %16 = arith.maximumf %13, %15 : vector<1x1024xf32>
    %c0_11 = arith.constant 0 : index
    %c0_12 = arith.constant 0 : index
    %c0_13 = arith.constant 0 : index
    %17 = vector.load %arg4[%c0_11, %c0_12, %c0_13] : memref<1x1x1024xf32, #tpu.memory_space<vmem>>, vector<1x1x1024xf32>
    %18 = vector.shape_cast %17 : vector<1x1x1024xf32> to vector<1x1024xf32>
    %19 = vector.shape_cast %16 : vector<1x1024xf32> to vector<1x1x1024xf32>
    tpu.vector_store %arg4[%c0_11, %c0_12, %c0_13], %19 {strides = array<i32>} : memref<1x1x1024xf32, #tpu.memory_space<vmem>>, vector<1x1x1024xf32>,
    return
  }
  func.func @transform_0(%arg0: i32, %arg1: i32) -> (i32, i32, i32) {
    %c0_i32 = arith.constant 0 : i32
    %c0_i32_0 = arith.constant 0 : i32
    return %arg0, %arg1, %c0_i32 : i32, i32, i32
  }
  func.func @transform_1(%arg0: i32, %arg1: i32) -> (i32, i32) {
    %c0_i32 = arith.constant 0 : i32
    %c0_i32_0 = arith.constant 0 : i32
    %c0_i32_1 = arith.constant 0 : i32
    return %c0_i32, %c0_i32_0 : i32, i32
  }
  func.func @transform_2(%arg0: i32, %arg1: i32) -> (i32, i32, i32) {
    %c0_i32 = arith.constant 0 : i32
    %c0_i32_0 = arith.constant 0 : i32
    %c0_i32_1 = arith.constant 0 : i32
    return %arg0, %c0_i32, %c0_i32_0 : i32, i32, i32
  }
}

module attributes {stable_mosaic.version = 11 : i64} {
  func.func @_disp_head_kernel(%arg0: i32, %arg1: i32, %arg2: memref<1x32x64xbf16, #tpu.memory_space<vmem>>, %arg3: memref<1x1x1024xf32, #tpu.memory_space<vmem>>, %arg4: memref<64x1024xbf16, #tpu.memory_space<vmem>>, %arg5: memref<1024x512xbf16, #tpu.memory_space<vmem>>, %arg6: memref<1x512xf32, #tpu.memory_space<vmem>>, %arg7: memref<512x64xbf16, #tpu.memory_space<vmem>>, %arg8: memref<1x64xf32, #tpu.memory_space<vmem>>, %arg9: memref<64x3xbf16, #tpu.memory_space<vmem>>, %arg10: memref<1x3xf32, #tpu.memory_space<vmem>>, %arg11: memref<1x32x3xf32, #tpu.memory_space<vmem>>) attributes {dimension_semantics = [#tpu.dimension_semantics<parallel>, #tpu.dimension_semantics<parallel>], iteration_bounds = array<i64: 2, 2>, scalar_prefetch = 0 : i64, scratch_operands = 0 : i64, tpu.core_type = #tpu.core_type<tc>, window_params = [{transform_indices = @transform_0, window_bounds = array<i64: 1, 32, 64>}, {transform_indices = @transform_1, window_bounds = array<i64: 1, 1, 1024>}, {pipeline_mode = #tpu.pipeline_mode<synchronous>, transform_indices = @transform_2, window_bounds = array<i64: 64, 1024>}, {pipeline_mode = #tpu.pipeline_mode<synchronous>, transform_indices = @transform_3, window_bounds = array<i64: 1024, 512>}, {pipeline_mode = #tpu.pipeline_mode<synchronous>, transform_indices = @transform_4, window_bounds = array<i64: 1, 512>}, {pipeline_mode = #tpu.pipeline_mode<synchronous>, transform_indices = @transform_5, window_bounds = array<i64: 512, 64>}, {pipeline_mode = #tpu.pipeline_mode<synchronous>, transform_indices = @transform_6, window_bounds = array<i64: 1, 64>}, {pipeline_mode = #tpu.pipeline_mode<synchronous>, transform_indices = @transform_7, window_bounds = array<i64: 64, 3>}, {pipeline_mode = #tpu.pipeline_mode<synchronous>, transform_indices = @transform_8, window_bounds = array<i64: 1, 3>}, {transform_indices = @transform_9, window_bounds = array<i64: 1, 32, 3>}]} {
    %c0 = arith.constant 0 : index
    %c0_0 = arith.constant 0 : index
    %c0_1 = arith.constant 0 : index
    %0 = vector.load %arg2[%c0, %c0_0, %c0_1] : memref<1x32x64xbf16, #tpu.memory_space<vmem>>, vector<1x32x64xbf16>
    %1 = vector.shape_cast %0 : vector<1x32x64xbf16> to vector<32x64xbf16>
    %c0_2 = arith.constant 0 : index
    %c0_3 = arith.constant 0 : index
    %2 = vector.load %arg4[%c0_2, %c0_3] : memref<64x1024xbf16, #tpu.memory_space<vmem>>, vector<64x1024xbf16>
    %cst = arith.constant dense<0.000000e+00> : vector<32x1024xf32>
    %3 = tpu.matmul %1, %2, %cst {dimension_numbers = #tpu.dot_dimension_numbers<[1], [0], [0], [1], [0, 0, 1, 1], [], []>} : vector<32x64xbf16>, vector<64x1024xbf16>, vector<32x1024xf32> -> vector<32x1024xf32>
    %c0_4 = arith.constant 0 : index
    %c0_5 = arith.constant 0 : index
    %c0_6 = arith.constant 0 : index
    %4 = vector.load %arg3[%c0_4, %c0_5, %c0_6] : memref<1x1x1024xf32, #tpu.memory_space<vmem>>, vector<1x1x1024xf32>
    %5 = vector.shape_cast %4 : vector<1x1x1024xf32> to vector<1x1024xf32>
    %6 = vector.broadcast %5 : vector<1x1024xf32> to vector<32x1024xf32>
    %7 = arith.addf %3, %6 : vector<32x1024xf32>
    %cst_7 = arith.constant 0.000000e+00 : f32
    %8 = vector.broadcast %cst_7 : f32 to vector<32x1024xf32>
    %9 = arith.maximumf %7, %8 : vector<32x1024xf32>
    %10 = arith.truncf %9 : vector<32x1024xf32> to vector<32x1024xbf16>
    %c0_8 = arith.constant 0 : index
    %c0_9 = arith.constant 0 : index
    %11 = vector.load %arg5[%c0_8, %c0_9] : memref<1024x512xbf16, #tpu.memory_space<vmem>>, vector<1024x512xbf16>
    %cst_10 = arith.constant dense<0.000000e+00> : vector<32x512xf32>
    %12 = tpu.matmul %10, %11, %cst_10 {dimension_numbers = #tpu.dot_dimension_numbers<[1], [0], [0], [1], [0, 0, 1, 1], [], []>} : vector<32x1024xbf16>, vector<1024x512xbf16>, vector<32x512xf32> -> vector<32x512xf32>
    %c0_11 = arith.constant 0 : index
    %c0_12 = arith.constant 0 : index
    %13 = vector.load %arg6[%c0_11, %c0_12] : memref<1x512xf32, #tpu.memory_space<vmem>>, vector<1x512xf32>
    %14 = vector.broadcast %13 : vector<1x512xf32> to vector<32x512xf32>
    %15 = arith.addf %12, %14 : vector<32x512xf32>
    %cst_13 = arith.constant 0.000000e+00 : f32
    %16 = vector.broadcast %cst_13 : f32 to vector<32x512xf32>
    %17 = arith.maximumf %15, %16 : vector<32x512xf32>
    %18 = arith.truncf %17 : vector<32x512xf32> to vector<32x512xbf16>
    %c0_14 = arith.constant 0 : index
    %c0_15 = arith.constant 0 : index
    %19 = vector.load %arg7[%c0_14, %c0_15] : memref<512x64xbf16, #tpu.memory_space<vmem>>, vector<512x64xbf16>
    %cst_16 = arith.constant dense<0.000000e+00> : vector<32x64xf32>
    %20 = tpu.matmul %18, %19, %cst_16 {dimension_numbers = #tpu.dot_dimension_numbers<[1], [0], [0], [1], [0, 0, 1, 1], [], []>} : vector<32x512xbf16>, vector<512x64xbf16>, vector<32x64xf32> -> vector<32x64xf32>
    %c0_17 = arith.constant 0 : index
    %c0_18 = arith.constant 0 : index
    %21 = vector.load %arg8[%c0_17, %c0_18] : memref<1x64xf32, #tpu.memory_space<vmem>>, vector<1x64xf32>
    %22 = vector.broadcast %21 : vector<1x64xf32> to vector<32x64xf32>
    %23 = arith.addf %20, %22 : vector<32x64xf32>
    %cst_19 = arith.constant 0.000000e+00 : f32
    %24 = vector.broadcast %cst_19 : f32 to vector<32x64xf32>
    %25 = arith.maximumf %23, %24 : vector<32x64xf32>
    %26 = arith.truncf %25 : vector<32x64xf32> to vector<32x64xbf16>
    %c0_20 = arith.constant 0 : index
    %c0_21 = arith.constant 0 : index
    %27 = vector.load %arg9[%c0_20, %c0_21] : memref<64x3xbf16, #tpu.memory_space<vmem>>, vector<64x3xbf16>
    %cst_22 = arith.constant dense<0.000000e+00> : vector<32x3xf32>
    %28 = tpu.matmul %26, %27, %cst_22 {dimension_numbers = #tpu.dot_dimension_numbers<[1], [0], [0], [1], [0, 0, 1, 1], [], []>} : vector<32x64xbf16>, vector<64x3xbf16>, vector<32x3xf32> -> vector<32x3xf32>
    %c0_23 = arith.constant 0 : index
    %c0_24 = arith.constant 0 : index
    %29 = vector.load %arg10[%c0_23, %c0_24] : memref<1x3xf32, #tpu.memory_space<vmem>>, vector<1x3xf32>
    %30 = vector.broadcast %29 : vector<1x3xf32> to vector<32x3xf32>
    %31 = arith.addf %28, %30 : vector<32x3xf32>
    %c0_25 = arith.constant 0 : index
    %c0_26 = arith.constant 0 : index
    %c0_27 = arith.constant 0 : index
    %32 = vector.load %arg11[%c0_25, %c0_26, %c0_27] : memref<1x32x3xf32, #tpu.memory_space<vmem>>, vector<1x32x3xf32>
    %33 = vector.shape_cast %32 : vector<1x32x3xf32> to vector<32x3xf32>
    %34 = vector.shape_cast %31 : vector<32x3xf32> to vector<1x32x3xf32>
    tpu.vector_store %arg11[%c0_25, %c0_26, %c0_27], %34 {strides = array<i32>} : memref<1x32x3xf32, #tpu.memory_space<vmem>>, vector<1x32x3xf32>,
    return
  }
  func.func @transform_0(%arg0: i32, %arg1: i32) -> (i32, i32, i32) {
    %c0_i32 = arith.constant 0 : i32
    %c0_i32_0 = arith.constant 0 : i32
    return %arg0, %arg1, %c0_i32 : i32, i32, i32
  }
  func.func @transform_1(%arg0: i32, %arg1: i32) -> (i32, i32, i32) {
    %c0_i32 = arith.constant 0 : i32
    %c0_i32_0 = arith.constant 0 : i32
    %c0_i32_1 = arith.constant 0 : i32
    return %arg0, %c0_i32, %c0_i32_0 : i32, i32, i32
  }
  func.func @transform_2(%arg0: i32, %arg1: i32) -> (i32, i32) {
    %c0_i32 = arith.constant 0 : i32
    %c0_i32_0 = arith.constant 0 : i32
    %c0_i32_1 = arith.constant 0 : i32
    return %c0_i32, %c0_i32_0 : i32, i32
  }
  func.func @transform_3(%arg0: i32, %arg1: i32) -> (i32, i32) {
    %c0_i32 = arith.constant 0 : i32
    %c0_i32_0 = arith.constant 0 : i32
    %c0_i32_1 = arith.constant 0 : i32
    return %c0_i32, %c0_i32_0 : i32, i32
  }
  func.func @transform_4(%arg0: i32, %arg1: i32) -> (i32, i32) {
    %c0_i32 = arith.constant 0 : i32
    %c0_i32_0 = arith.constant 0 : i32
    %c0_i32_1 = arith.constant 0 : i32
    return %c0_i32, %c0_i32_0 : i32, i32
  }
  func.func @transform_5(%arg0: i32, %arg1: i32) -> (i32, i32) {
    %c0_i32 = arith.constant 0 : i32
    %c0_i32_0 = arith.constant 0 : i32
    %c0_i32_1 = arith.constant 0 : i32
    return %c0_i32, %c0_i32_0 : i32, i32
  }
  func.func @transform_6(%arg0: i32, %arg1: i32) -> (i32, i32) {
    %c0_i32 = arith.constant 0 : i32
    %c0_i32_0 = arith.constant 0 : i32
    %c0_i32_1 = arith.constant 0 : i32
    return %c0_i32, %c0_i32_0 : i32, i32
  }
  func.func @transform_7(%arg0: i32, %arg1: i32) -> (i32, i32) {
    %c0_i32 = arith.constant 0 : i32
    %c0_i32_0 = arith.constant 0 : i32
    %c0_i32_1 = arith.constant 0 : i32
    return %c0_i32, %c0_i32_0 : i32, i32
  }
  func.func @transform_8(%arg0: i32, %arg1: i32) -> (i32, i32) {
    %c0_i32 = arith.constant 0 : i32
    %c0_i32_0 = arith.constant 0 : i32
    %c0_i32_1 = arith.constant 0 : i32
    return %c0_i32, %c0_i32_0 : i32, i32
  }
  func.func @transform_9(%arg0: i32, %arg1: i32) -> (i32, i32, i32) {
    %c0_i32 = arith.constant 0 : i32
    %c0_i32_0 = arith.constant 0 : i32
    return %arg0, %arg1, %c0_i32 : i32, i32, i32
  }
}

module attributes {stable_mosaic.version = 11 : i64} {
  func.func @_rot_head_kernel(%arg0: i32, %arg1: memref<2x1088xbf16, #tpu.memory_space<vmem>>, %arg2: memref<1088x512xbf16, #tpu.memory_space<vmem>>, %arg3: memref<1x512xf32, #tpu.memory_space<vmem>>, %arg4: memref<512x256xbf16, #tpu.memory_space<vmem>>, %arg5: memref<1x256xf32, #tpu.memory_space<vmem>>, %arg6: memref<256x4xbf16, #tpu.memory_space<vmem>>, %arg7: memref<1x4xf32, #tpu.memory_space<vmem>>, %arg8: memref<2x4xf32, #tpu.memory_space<vmem>>) attributes {dimension_semantics = [#tpu.dimension_semantics<arbitrary>], iteration_bounds = array<i64: 1>, scalar_prefetch = 0 : i64, scratch_operands = 0 : i64, tpu.core_type = #tpu.core_type<tc>, window_params = [{pipeline_mode = #tpu.pipeline_mode<synchronous>, transform_indices = @transform_0, window_bounds = array<i64: 2, 1088>}, {pipeline_mode = #tpu.pipeline_mode<synchronous>, transform_indices = @transform_1, window_bounds = array<i64: 1088, 512>}, {pipeline_mode = #tpu.pipeline_mode<synchronous>, transform_indices = @transform_2, window_bounds = array<i64: 1, 512>}, {pipeline_mode = #tpu.pipeline_mode<synchronous>, transform_indices = @transform_3, window_bounds = array<i64: 512, 256>}, {pipeline_mode = #tpu.pipeline_mode<synchronous>, transform_indices = @transform_4, window_bounds = array<i64: 1, 256>}, {pipeline_mode = #tpu.pipeline_mode<synchronous>, transform_indices = @transform_5, window_bounds = array<i64: 256, 4>}, {pipeline_mode = #tpu.pipeline_mode<synchronous>, transform_indices = @transform_6, window_bounds = array<i64: 1, 4>}, {pipeline_mode = #tpu.pipeline_mode<synchronous>, transform_indices = @transform_7, window_bounds = array<i64: 2, 4>}]} {
    %c0 = arith.constant 0 : index
    %c0_0 = arith.constant 0 : index
    %0 = vector.load %arg1[%c0, %c0_0] : memref<2x1088xbf16, #tpu.memory_space<vmem>>, vector<2x1088xbf16>
    %c0_1 = arith.constant 0 : index
    %c0_2 = arith.constant 0 : index
    %1 = vector.load %arg2[%c0_1, %c0_2] : memref<1088x512xbf16, #tpu.memory_space<vmem>>, vector<1088x512xbf16>
    %cst = arith.constant dense<0.000000e+00> : vector<2x512xf32>
    %2 = tpu.matmul %0, %1, %cst {dimension_numbers = #tpu.dot_dimension_numbers<[1], [0], [0], [1], [0, 0, 1, 1], [], []>} : vector<2x1088xbf16>, vector<1088x512xbf16>, vector<2x512xf32> -> vector<2x512xf32>
    %c0_3 = arith.constant 0 : index
    %c0_4 = arith.constant 0 : index
    %3 = vector.load %arg3[%c0_3, %c0_4] : memref<1x512xf32, #tpu.memory_space<vmem>>, vector<1x512xf32>
    %4 = vector.broadcast %3 : vector<1x512xf32> to vector<2x512xf32>
    %5 = arith.addf %2, %4 : vector<2x512xf32>
    %cst_5 = arith.constant 0.000000e+00 : f32
    %6 = vector.broadcast %cst_5 : f32 to vector<2x512xf32>
    %7 = arith.maximumf %5, %6 : vector<2x512xf32>
    %8 = arith.truncf %7 : vector<2x512xf32> to vector<2x512xbf16>
    %c0_6 = arith.constant 0 : index
    %c0_7 = arith.constant 0 : index
    %9 = vector.load %arg4[%c0_6, %c0_7] : memref<512x256xbf16, #tpu.memory_space<vmem>>, vector<512x256xbf16>
    %cst_8 = arith.constant dense<0.000000e+00> : vector<2x256xf32>
    %10 = tpu.matmul %8, %9, %cst_8 {dimension_numbers = #tpu.dot_dimension_numbers<[1], [0], [0], [1], [0, 0, 1, 1], [], []>} : vector<2x512xbf16>, vector<512x256xbf16>, vector<2x256xf32> -> vector<2x256xf32>
    %c0_9 = arith.constant 0 : index
    %c0_10 = arith.constant 0 : index
    %11 = vector.load %arg5[%c0_9, %c0_10] : memref<1x256xf32, #tpu.memory_space<vmem>>, vector<1x256xf32>
    %12 = vector.broadcast %11 : vector<1x256xf32> to vector<2x256xf32>
    %13 = arith.addf %10, %12 : vector<2x256xf32>
    %cst_11 = arith.constant 0.000000e+00 : f32
    %14 = vector.broadcast %cst_11 : f32 to vector<2x256xf32>
    %15 = arith.maximumf %13, %14 : vector<2x256xf32>
    %16 = arith.truncf %15 : vector<2x256xf32> to vector<2x256xbf16>
    %c0_12 = arith.constant 0 : index
    %c0_13 = arith.constant 0 : index
    %17 = vector.load %arg6[%c0_12, %c0_13] : memref<256x4xbf16, #tpu.memory_space<vmem>>, vector<256x4xbf16>
    %cst_14 = arith.constant dense<0.000000e+00> : vector<2x4xf32>
    %18 = tpu.matmul %16, %17, %cst_14 {dimension_numbers = #tpu.dot_dimension_numbers<[1], [0], [0], [1], [0, 0, 1, 1], [], []>} : vector<2x256xbf16>, vector<256x4xbf16>, vector<2x4xf32> -> vector<2x4xf32>
    %c0_15 = arith.constant 0 : index
    %c0_16 = arith.constant 0 : index
    %19 = vector.load %arg7[%c0_15, %c0_16] : memref<1x4xf32, #tpu.memory_space<vmem>>, vector<1x4xf32>
    %20 = vector.broadcast %19 : vector<1x4xf32> to vector<2x4xf32>
    %21 = arith.addf %18, %20 : vector<2x4xf32>
    %c0_17 = arith.constant 0 : index
    %c0_18 = arith.constant 0 : index
    %22 = vector.load %arg8[%c0_17, %c0_18] : memref<2x4xf32, #tpu.memory_space<vmem>>, vector<2x4xf32>
    tpu.vector_store %arg8[%c0_17, %c0_18], %21 {strides = array<i32>} : memref<2x4xf32, #tpu.memory_space<vmem>>, vector<2x4xf32>,
    return
  }
  func.func @transform_0(%arg0: i32) -> (i32, i32) {
    %c0_i32 = arith.constant 0 : i32
    %c0_i32_0 = arith.constant 0 : i32
    %c0_i32_1 = arith.constant 0 : i32
    return %c0_i32, %c0_i32_0 : i32, i32
  }
  func.func @transform_1(%arg0: i32) -> (i32, i32) {
    %c0_i32 = arith.constant 0 : i32
    %c0_i32_0 = arith.constant 0 : i32
    %c0_i32_1 = arith.constant 0 : i32
    return %c0_i32, %c0_i32_0 : i32, i32
  }
  func.func @transform_2(%arg0: i32) -> (i32, i32) {
    %c0_i32 = arith.constant 0 : i32
    %c0_i32_0 = arith.constant 0 : i32
    %c0_i32_1 = arith.constant 0 : i32
    return %c0_i32, %c0_i32_0 : i32, i32
  }
  func.func @transform_3(%arg0: i32) -> (i32, i32) {
    %c0_i32 = arith.constant 0 : i32
    %c0_i32_0 = arith.constant 0 : i32
    %c0_i32_1 = arith.constant 0 : i32
    return %c0_i32, %c0_i32_0 : i32, i32
  }
  func.func @transform_4(%arg0: i32) -> (i32, i32) {
    %c0_i32 = arith.constant 0 : i32
    %c0_i32_0 = arith.constant 0 : i32
    %c0_i32_1 = arith.constant 0 : i32
    return %c0_i32, %c0_i32_0 : i32, i32
  }
  func.func @transform_5(%arg0: i32) -> (i32, i32) {
    %c0_i32 = arith.constant 0 : i32
    %c0_i32_0 = arith.constant 0 : i32
    %c0_i32_1 = arith.constant 0 : i32
    return %c0_i32, %c0_i32_0 : i32, i32
  }
  func.func @transform_6(%arg0: i32) -> (i32, i32) {
    %c0_i32 = arith.constant 0 : i32
    %c0_i32_0 = arith.constant 0 : i32
    %c0_i32_1 = arith.constant 0 : i32
    return %c0_i32, %c0_i32_0 : i32, i32
  }
  func.func @transform_7(%arg0: i32) -> (i32, i32) {
    %c0_i32 = arith.constant 0 : i32
    %c0_i32_0 = arith.constant 0 : i32
    %c0_i32_1 = arith.constant 0 : i32
    return %c0_i32, %c0_i32_0 : i32, i32
  }
}

</mosaic_0001>

<llo_original>
// kernel: sub.39
$region0: #{sub.39}
  %s0 = inlined_call_operand.vmem [shape: f32[128], index: 0, kind: input, shape index: {}]
  %s1 = inlined_call_operand.vmem [shape: f32[2,64], index: 1, kind: output, shape index: {}]
  $region1: #{sub.39} parent=0
    #allocation0 [shape = 'u8[4096]{0}', space=vmem, size = 0x1000, scoped, tag = 'scoped mem for output reshape']
    #allocation1 [shape = 'u8[4096]{0}', space=vmem, size = 0x1000, scoped, tag = 'scoped mem for input reshape']
    %s3 = sshllo.u32 0, 1
    %v4 = vld [vmem:[%s0] sm:%s3]
    %5 = vst [vmem:[#allocation1] sm:%s3] %v4
    %v6 = vld [vmem:[#allocation1] sm:$0x1]
    %vm7 = vcmask 523264
    %8 = vst.msk [vmem:[#allocation0] sm:$0x1] %vm7, %v6
    %v9 = vld [vmem:[#allocation1] sm:$0x1]
    %10 = vrot.lane.b32.xlu0 %v9, 64
    %v11 = vpop.permute.xlu0 %10
    %vm12 = vcmask 523264
    %s13 = scalar_lea.vmem [#allocation0], 1
    %14 = vst.msk [vmem:[%s13] sm:$0x1] %vm12, %v11
    %s16 = sshllo.u32 0, 2
    %v18 = vld [vmem:[#allocation0] sm:%s16]
    %s19 = sshllo.u32 0, 2
    %20 = vst [vmem:[%s1] sm:%s19] %v18

// kernel: generator_forward.6
$region0: #{generator_forward.6}
  #allocation0 [shape = 'u32[]', space=smem, size = 0x4, offset = 0x4, fixed_abs, tag = 'smem constant byte address 0x4 - core index']
  #allocation1 [shape = 'u32[144,128]{1,0:T(1,128)}', space=vmem, size = 0x12000, scoped, tag = 'internal scratch']
  #allocation2 [shape = 'f32[64,64]{1,0:T(8,128)}', space=vmem, size = 0x8000, scoped, tag = 'scratch operand']
  #allocation3 [shape = 'f32[64,64]{1,0:T(8,128)}', space=vmem, size = 0x8000, scoped, tag = 'scratch operand']
  %s0 = inlined_call_operand.vmem [shape: bf16[8,128,3], index: 0, kind: input, shape index: {}]
  %s1 = inlined_call_operand.vmem [shape: bf16[128,3], index: 1, kind: input, shape index: {}]
  %s2 = inlined_call_operand.hbm [shape: bf16[3,64], index: 2, kind: input, shape index: {}]
  %s3 = inlined_call_operand.hbm [shape: bf16[3,64], index: 3, kind: input, shape index: {}]
  %s4 = inlined_call_operand.vmem [shape: f32[128,64], index: 4, kind: output, shape index: {}]
  %s5 = sld [smem:[#allocation0]]
  $region65: #{generator_forward.6} parent=0
    _
  %s7 = ssub.s32 1, %s5
  %s8 = scalar_select 0, %s7, %s5
  $region1: #{generator_forward.6} parent=0
    #allocation4 [shape = 'u8[1024]{0}', space=vmem, size = 0x400, scoped, tag = 'input window, operand 2, single buffered']
    #allocation5 [shape = 's32[2]{0}', space=sflag, size = 0x8, scoped, tag = 'scoped memory for generator_forward.6']
    #allocation6 [shape = 'u8[1024]{0}', space=vmem, size = 0x400, scoped, tag = 'input window, operand 3, single buffered']
    #allocation7 [shape = 's32[1]{0}', space=sflag, size = 0x4, scoped, tag = 'scoped memory for generator_forward.6']
    %9 = vsyncpa [#allocation5], 0
    %10 = vsyncpa [#allocation7], 0
    loop: start=0, step=1, limit=18
    $region2: #{generator_forward.6} parent=1 // loop_pre_header
      _
    $region3: #{generator_forward.6} parent=1 // loop_header
      %s12 = sphi 0, %s16
      %p13 = scmp.ge.s32.totalorder %s12, 18
      %s19 = sphi 0, %s31
      %s20 = sphi 0, %s27
      %s21 = sphi 0, %s19
      %s22 = sphi 0, %s20
      %s23 = sphi 0, %s21
      %s24 = sphi 0, %s22
      %s36 = sphi 0, %s38
      %s39 = sphi 0, %s36
      %s40 = sphi 0, %s39
      %s56 = sphi 0, %s40
      %s62 = sphi 0, %s64
      %s65 = sphi 0, %s62
      %s66 = sphi 0, %s65
      %s82 = sphi 0, %s66
      %s86 = sphi 0, %s86
      %s88 = sphi 0, %s86
      %s89 = sphi 0, %s88
      %s103 = sphi 0, %s89
      %s107 = sphi 0, %s107
      %s109 = sphi 0, %s107
      %s110 = sphi 0, %s109
      %s124 = sphi 0, %s110
      %s130 = sphi 0, %s132
      %s133 = sphi 0, %s130
      %s134 = sphi 0, %s133
      %s150 = sphi 0, %s134
    $region4: #{generator_forward.6} parent=1 // loop_header_branch
      %15 = sbr.rel (%p13) target = $region8
    $region5: #{generator_forward.6} parent=1 // loop_body
      %s17 = ssub.s32 %s12, 1
      %s18 = ssub.s32 %s12, 2
      %s25 = sadd.s32 1, %s20
      %p26 = scmp.ge.s32.totalorder %s25, 8
      %s27 = scalar_select %p26, 0, %s25
      %s28 = sadd.s32 1, %s19
      %s29 = scalar_select %p26, %s28, %s19
      %p30 = scmp.ge.s32.totalorder %s29, 2
      %s31 = scalar_select %p30, 0, %s29
      %s32 = ssub.s32 %s20, %s27
      %s33 = ssub.s32 %s19, %s31
      %s34 = sor.u32 %s32, %s33
      %p35 = scmp.eq.s32.totalorder %s34, 0
      %s37 = sadd.s32 %s36, 1
      %s38 = scalar_select %p35, %s36, %s37
      %p41 = pneg %p35
      %p42 = scmp.eq.s32.totalorder %s12, 15
      %p43 = por %p41, %p42
      %p44 = scmp.ne.s32.totalorder %s36, %s39
      %p45 = scmp.eq.s32.totalorder %s12, 0
      %p46 = por %p44, %p45
      %p47 = scmp.ne.s32.totalorder %s36, %s39
      %p48 = scmp.eq.s32.totalorder %s17, 15
      %p49 = por %p47, %p48
      %p50 = scmp.ne.s32.totalorder %s39, %s40
      %p51 = scmp.eq.s32.totalorder %s17, 0
      %p52 = por %p50, %p51
      %p53 = scmp.ne.s32.totalorder %s39, %s40
      %p54 = scmp.eq.s32.totalorder %s18, 15
      %p55 = por %p53, %p54
      %p57 = scmp.ne.s32.totalorder %s40, %s56
      %p58 = scmp.eq.s32.totalorder %s18, 0
      %p59 = por %p57, %p58
      %s60 = ssub.s32 %s19, %s31
      %p61 = scmp.eq.s32.totalorder %s60, 0
      %s63 = sadd.s32 %s62, 1
      %s64 = scalar_select %p61, %s62, %s63
      %p67 = pneg %p61
      %p68 = scmp.eq.s32.totalorder %s12, 15
      %p69 = por %p67, %p68
      %p70 = scmp.ne.s32.totalorder %s62, %s65
      %p71 = scmp.eq.s32.totalorder %s12, 0
      %p72 = por %p70, %p71
      %p73 = scmp.ne.s32.totalorder %s62, %s65
      %p74 = scmp.eq.s32.totalorder %s17, 15
      %p75 = por %p73, %p74
      %p76 = scmp.ne.s32.totalorder %s65, %s66
      %p77 = scmp.eq.s32.totalorder %s17, 0
      %p78 = por %p76, %p77
      %p79 = scmp.ne.s32.totalorder %s65, %s66
      %p80 = scmp.eq.s32.totalorder %s18, 15
      %p81 = por %p79, %p80
      %p83 = scmp.ne.s32.totalorder %s66, %s82
      %p84 = scmp.eq.s32.totalorder %s18, 0
      %p85 = por %p83, %p84
      %s87 = sadd.s32 %s86, 1
      %p90 = scmp.eq.s32.totalorder %s12, 15
      %p91 = scmp.ne.s32.totalorder %s86, %s88
      %p92 = scmp.eq.s32.totalorder %s12, 0
      %p93 = por %p91, %p92
      %p94 = scmp.ne.s32.totalorder %s86, %s88
      %p95 = scmp.eq.s32.totalorder %s17, 15
      %p96 = por %p94, %p95
      %p97 = scmp.ne.s32.totalorder %s88, %s89
      %p98 = scmp.eq.s32.totalorder %s17, 0
      %p99 = por %p97, %p98
      %p100 = scmp.ne.s32.totalorder %s88, %s89
      %p101 = scmp.eq.s32.totalorder %s18, 15
      %p102 = por %p100, %p101
      %p104 = scmp.ne.s32.totalorder %s89, %s103
      %p105 = scmp.eq.s32.totalorder %s18, 0
      %p106 = por %p104, %p105
      %s108 = sadd.s32 %s107, 1
      %p111 = scmp.eq.s32.totalorder %s12, 15
      %p112 = scmp.ne.s32.totalorder %s107, %s109
      %p113 = scmp.eq.s32.totalorder %s12, 0
      %p114 = por %p112, %p113
      %p115 = scmp.ne.s32.totalorder %s107, %s109
      %p116 = scmp.eq.s32.totalorder %s17, 15
      %p117 = por %p115, %p116
      %p118 = scmp.ne.s32.totalorder %s109, %s110
      %p119 = scmp.eq.s32.totalorder %s17, 0
      %p120 = por %p118, %p119
      %p121 = scmp.ne.s32.totalorder %s109, %s110
      %p122 = scmp.eq.s32.totalorder %s18, 15
      %p123 = por %p121, %p122
      %p125 = scmp.ne.s32.totalorder %s110, %s124
      %p126 = scmp.eq.s32.totalorder %s18, 0
      %p127 = por %p125, %p126
      %s128 = ssub.s32 %s19, %s31
      %p129 = scmp.eq.s32.totalorder %s128, 0
      %s131 = sadd.s32 %s130, 1
      %s132 = scalar_select %p129, %s130, %s131
      %p135 = pneg %p129
      %p136 = scmp.eq.s32.totalorder %s12, 15
      %p137 = por %p135, %p136
      %p138 = scmp.ne.s32.totalorder %s130, %s133
      %p139 = scmp.eq.s32.totalorder %s12, 0
      %p140 = por %p138, %p139
      %p141 = scmp.ne.s32.totalorder %s130, %s133
      %p142 = scmp.eq.s32.totalorder %s17, 15
      %p143 = por %p141, %p142
      %p144 = scmp.ne.s32.totalorder %s133, %s134
      %p145 = scmp.eq.s32.totalorder %s17, 0
      %p146 = por %p144, %p145
      %p147 = scmp.ne.s32.totalorder %s133, %s134
      %p148 = scmp.eq.s32.totalorder %s18, 15
      %p149 = por %p147, %p148
      %p151 = scmp.ne.s32.totalorder %s134, %s150
      %p152 = scmp.eq.s32.totalorder %s18, 0
      %p153 = por %p151, %p152
      %p154 = scmp.le.s32.totalorder 1, %s12
      %p155 = scmp.lt.s32.totalorder %s12, 17
      %p156 = pnand %p154, %p155
      %p157 = pneg %p156
      // Predicated region
      $region9: #{generator_forward.6} parent=5 // pred_check
        _
      $region10: #{generator_forward.6} parent=5 // pred_check_branch
        %159 = sbr.rel (%p156) target = $region12
      $region11: #{generator_forward.6} parent=5 // pred_region
        %s160 = ssub.s32 %s12, 1
        // Predicated region
        $region13: #{generator_forward.6} parent=11 // pred_check
          %p161 = pneg %p99
        $region14: #{generator_forward.6} parent=11 // pred_check_branch
          %163 = sbr.rel (%p161) target = $region16
        $region15: #{generator_forward.6} parent=11 // pred_region
          %s165 = ssub.s32 32, 32
          %166 = vsyncadd [#allocation5], %s165
          %s168 = sshll.u32 [#allocation4], 4
          %s169 = int_to_ptr.vmem [resolvable:$true] %s168
          %171 = dma.hbm_to_vmem [thread:$0]  %s2, 32, %s169, [#allocation5]
        $region16: #{generator_forward.6} parent=11 // pred_fallthru
          _
        // Predicated region
        $region17: #{generator_forward.6} parent=11 // pred_check
          %p172 = pneg %p120
        $region18: #{generator_forward.6} parent=11 // pred_check_branch
          %174 = sbr.rel (%p172) target = $region20
        $region19: #{generator_forward.6} parent=11 // pred_region
          %s176 = ssub.s32 32, 32
          %177 = vsyncadd [#allocation7], %s176
          %s179 = sshll.u32 [#allocation6], 4
          %s180 = int_to_ptr.vmem [resolvable:$true] %s179
          %182 = dma.hbm_to_vmem [thread:$0]  %s3, 32, %s180, [#allocation7]
        $region20: #{generator_forward.6} parent=11 // pred_fallthru
          _
      $region12: #{generator_forward.6} parent=5 // pred_fallthru
        _
      %p183 = scmp.lt.s32.totalorder %s12, 16
      // Predicated region
      $region21: #{generator_forward.6} parent=5 // pred_check
        %p184 = pneg %p183
      $region22: #{generator_forward.6} parent=5 // pred_check_branch
        %186 = sbr.rel (%p184) target = $region24
      $region23: #{generator_forward.6} parent=5 // pred_region
        // Predicated region
        $region25: #{generator_forward.6} parent=23 // pred_check
          %p187 = pneg %p46
        $region26: #{generator_forward.6} parent=23 // pred_check_branch
          %189 = sbr.rel (%p187) target = $region28
        $region27: #{generator_forward.6} parent=23 // pred_region
          %s190 = smul.u32 8, %s19
          %p191 = scmp.lt.s32.totalorder %s20, 7
          %s192 = scalar_select %p191, %s20, 7
          %p193 = scmp.lt.s32.totalorder %s190, 15
          %s194 = scalar_select %p193, %s190, 15
          %s195 = smul.addr %s192, 16
          %s196 = sadd.s32 %s194, %s195
          %s197 = smul.addr %s196, 4
          %s198 = scalar_lea.vmem %s0, %s197
          %s199 = smul.u32 8, %s19
        $region28: #{generator_forward.6} parent=23 // pred_fallthru
          _
        // Predicated region
        $region29: #{generator_forward.6} parent=23 // pred_check
          %p200 = pneg %p72
        $region30: #{generator_forward.6} parent=23 // pred_check_branch
          %202 = sbr.rel (%p200) target = $region32
        $region31: #{generator_forward.6} parent=23 // pred_region
          %s203 = smul.u32 8, %s19
          %p204 = scmp.lt.s32.totalorder %s203, 15
          %s205 = scalar_select %p204, %s203, 15
          %s206 = smul.addr %s205, 4
          %s207 = scalar_lea.vmem %s1, %s206
          %s208 = smul.u32 8, %s19
        $region32: #{generator_forward.6} parent=23 // pred_fallthru
          _
      $region24: #{generator_forward.6} parent=5 // pred_fallthru
        _
      %p209 = scmp.le.s32.totalorder 1, %s12
      %p210 = scmp.lt.s32.totalorder %s12, 17
      %p211 = pnand %p209, %p210
      %p212 = pneg %p211
      // Predicated region
      $region33: #{generator_forward.6} parent=5 // pred_check
        _
      $region34: #{generator_forward.6} parent=5 // pred_check_branch
        %214 = sbr.rel (%p211) target = $region36
      $region35: #{generator_forward.6} parent=5 // pred_region
        %s215 = ssub.s32 %s12, 1
        // Predicated region
        $region37: #{generator_forward.6} parent=35 // pred_check
          %p216 = pneg %p99
        $region38: #{generator_forward.6} parent=35 // pred_check_branch
          %218 = sbr.rel (%p216) target = $region40
        $region39: #{generator_forward.6} parent=35 // pred_region
          %219 = dma.done [#allocation5], 32
        $region40: #{generator_forward.6} parent=35 // pred_fallthru
          _
        // Predicated region
        $region41: #{generator_forward.6} parent=35 // pred_check
          %p220 = pneg %p120
        $region42: #{generator_forward.6} parent=35 // pred_check_branch
          %222 = sbr.rel (%p220) target = $region44
        $region43: #{generator_forward.6} parent=35 // pred_region
          %223 = dma.done [#allocation7], 32
        $region44: #{generator_forward.6} parent=35 // pred_fallthru
          _
        %s224 = smul.u32 8, %s21
        %p225 = scmp.lt.s32.totalorder %s22, 7
        %s226 = scalar_select %p225, %s22, 7
        %p227 = scmp.lt.s32.totalorder %s224, 15
        %s228 = scalar_select %p227, %s224, 15
        %s229 = smul.addr %s226, 16
        %s230 = sadd.s32 %s228, %s229
        %s231 = smul.addr %s230, 4
        %s232 = scalar_lea.vmem %s0, %s231
        %p233 = pneg %p52
        %p234 = pneg %p49
        %s235 = smul.u32 8, %s21
        %p236 = scmp.lt.s32.totalorder %s235, 15
        %s237 = scalar_select %p236, %s235, 15
        %s238 = smul.addr %s237, 4
        %s239 = scalar_lea.vmem %s1, %s238
        %p240 = pneg %p78
        %p241 = pneg %p75
        %p242 = pneg %p99
        %p243 = pneg %p96
        %p244 = pneg %p120
        %p245 = pneg %p117
        %p246 = pneg %p146
        %p247 = pneg %p143
        %s248 = smul.u32 8, %s21
        %p249 = scmp.lt.s32.totalorder %s248, 15
        %s250 = scalar_select %p249, %s248, 15
        %s251 = smul.addr %s250, 8
        %s252 = scalar_lea.vmem %s4, %s251
        %s253 = smul.u32 8, %s21
        %p254 = scmp.lt.s32.totalorder %s22, 7
        %s255 = scalar_select %p254, %s22, 7
        %p256 = scmp.lt.s32.totalorder %s253, 15
        %s257 = scalar_select %p256, %s253, 15
        %s258 = smul.addr %s255, 16
        %s259 = sadd.s32 %s257, %s258
        %s260 = smul.addr %s259, 4
        %s261 = scalar_lea.vmem %s0, %s260
        %s262 = smul.u32 8, %s21
        %s263 = smul.u32 8, %s21
        %p264 = scmp.lt.s32.totalorder %s263, 15
        %s265 = scalar_select %p264, %s263, 15
        %s266 = smul.addr %s265, 4
        %s267 = scalar_lea.vmem %s1, %s266
        %s268 = smul.u32 8, %s21
        %s269 = smul.u32 8, %s21
        %p270 = scmp.lt.s32.totalorder %s269, 15
        %s271 = scalar_select %p270, %s269, 15
        %s272 = smul.addr %s271, 8
        %s273 = scalar_lea.vmem %s4, %s272
        %s274 = smul.u32 8, %s21
        %p276 = scmp.eq.s32.totalorder %s22, 0
        // Predicated region
        $region45: #{generator_forward.6} parent=35 // pred_check
          %p277 = pneg %p276
        $region46: #{generator_forward.6} parent=35 // pred_check_branch
          %279 = sbr.rel (%p277) target = $region48
        $region47: #{generator_forward.6} parent=35 // pred_region
          %v280 = vld [vmem:[%s267] sm:$0xf]
          %v281 = vld [vmem:[%s267 + $0x4] sm:$0xf]
          %v282 = vld [vmem:[%s267 + $0x8] sm:$0xf]
          %v283 = vld [vmem:[%s267 + $0xc] sm:$0xf]
          %v284 = vld [vmem:[%s267 + $0x10] sm:$0xf]
          %v285 = vld [vmem:[%s267 + $0x14] sm:$0xf]
          %v286 = vld [vmem:[%s267 + $0x18] sm:$0xf]
          %v287 = vld [vmem:[%s267 + $0x1c] sm:$0xf]
          %v288 = vld [vmem:[#allocation6] sm:$0x3]
          %v297 = vunpack.c.l.b16 %v280
          %v298 = vunpack.c.l.b16 %v281
          %v299 = vunpack.c.l.b16 %v282
          %v300 = vunpack.c.l.b16 %v283
          %v301 = vunpack.c.l.b16 %v284
          %v302 = vunpack.c.l.b16 %v285
          %v303 = vunpack.c.l.b16 %v286
          %v304 = vunpack.c.l.b16 %v287
          %v305 = vpack.c.b16 %v298, %v297
          %v306 = vpack.c.b16 %v300, %v299
          %v307 = vpack.c.b16 %v302, %v301
          %v308 = vpack.c.b16 %v304, %v303
          %vm309 = vcmask 23552
          %v311 = vsel %vm309, %v305, 0
          %v314 = vsel %vm309, %v306, 0
          %v317 = vsel %vm309, %v307, 0
          %v320 = vsel %vm309, %v308, 0
          %vm322 = vcmask 1040384
          %vm323 = vcmask 1041408
          %v324 = vsel %vm322, 4294967295, 65535
          %v325 = vsel %vm323, %v324, 0
          %v327 = vand.u32 %v288, %v325
          %329 = vmatprep.subr.bf16.mxu0 0
          %330 = vmatpush1.bf16.msra.mxu0 %v327
          %331 = vmatprep.subr.bf16.mxu0 0
          %332 = vmatpush1.bf16.msra.mxu0 0
          %333 = vmatprep.subr.bf16.mxu0 0
          %334 = vmatpush1.bf16.msra.mxu0 0
          %335 = vmatprep.subr.bf16.mxu0 0
          %336 = vmatpush1.bf16.msra.mxu0 0
          %337 = vmatprep.subr.bf16.mxu0 0
          %338 = vmatpush1.bf16.msra.mxu0 0
          %339 = vmatprep.subr.bf16.mxu0 0
          %340 = vmatpush1.bf16.msra.mxu0 0
          %341 = vmatprep.subr.bf16.mxu0 0
          %342 = vmatpush1.bf16.msra.mxu0 0
          %343 = vmatprep.subr.bf16.mxu0 0
          %344 = vmatpush1.bf16.msra.mxu0 0
          %345 = vmatprep.subr.bf16.mxu0 0
          %346 = vmatpush1.bf16.msra.mxu0 0
          %347 = vmatprep.subr.bf16.mxu0 0
          %348 = vmatpush1.bf16.msra.mxu0 0
          %349 = vmatprep.subr.bf16.mxu0 0
          %350 = vmatpush1.bf16.msra.mxu0 0
          %351 = vmatprep.subr.bf16.mxu0 0
          %352 = vmatpush1.bf16.msra.mxu0 0
          %353 = vmatprep.subr.bf16.mxu0 0
          %354 = vmatpush1.bf16.msra.mxu0 0
          %355 = vmatprep.subr.bf16.mxu0 0
          %356 = vmatpush1.bf16.msra.mxu0 0
          %357 = vmatprep.subr.bf16.mxu0 0
          %358 = vmatpush1.bf16.msra.mxu0 0
          %359 = vmatprep.subr.bf16.mxu0 0
          %360 = vmatpush1.bf16.msra.mxu0 0
          %361 = vmatprep.mubr.bf16.mxu0 0
          %362 = vmatmul.mubr.bf16.gmra.mrb[0].mxu0 %v311
          %v363 = vpop.f32.mrb[0].mxu0
          %v364 = vadd.f32 0.0, %v363
          %v365 = vpop.f32.mrb[0].mxu0
          %v366 = vpop.f32.mrb[0].mxu0
          %v367 = vadd.f32 0.0, %v366
          %v368 = vpop.f32.mrb[0].mxu0
          %369 = vmatprep.mubr.bf16.mxu0 0
          %370 = vmatmul.mubr.bf16.gmra.mrb[0].mxu0 %v314
          %v371 = vpop.f32.mrb[0].mxu0
          %v372 = vadd.f32 0.0, %v371
          %v373 = vpop.f32.mrb[0].mxu0
          %v374 = vpop.f32.mrb[0].mxu0
          %v375 = vadd.f32 0.0, %v374
          %v376 = vpop.f32.mrb[0].mxu0
          %377 = vmatprep.mubr.bf16.mxu0 0
          %378 = vmatmul.mubr.bf16.gmra.mrb[0].mxu0 %v317
          %v379 = vpop.f32.mrb[0].mxu0
          %v380 = vadd.f32 0.0, %v379
          %v381 = vpop.f32.mrb[0].mxu0
          %v382 = vpop.f32.mrb[0].mxu0
          %v383 = vadd.f32 0.0, %v382
          %v384 = vpop.f32.mrb[0].mxu0
          %385 = vmatprep.mubr.bf16.mxu0 0
          %386 = vmatmul.mubr.bf16.gmra.mrb[0].mxu0 %v320
          %v387 = vpop.f32.mrb[0].mxu0
          %v388 = vadd.f32 0.0, %v387
          %v389 = vpop.f32.mrb[0].mxu0
          %v390 = vpop.f32.mrb[0].mxu0
          %v391 = vadd.f32 0.0, %v390
          %v392 = vpop.f32.mrb[0].mxu0
          %393 = vdwg.mxu0
          %vm394 = vcmask 523264
          %395 = vst.msk [vmem:[#allocation3] sm:$0xff] %vm394, %v364
          %396 = vst.msk [vmem:[#allocation3 + $0x8] sm:$0xff] %vm394, %v367
          %397 = vst.msk [vmem:[#allocation3 + $0x10] sm:$0xff] %vm394, %v372
          %398 = vst.msk [vmem:[#allocation3 + $0x18] sm:$0xff] %vm394, %v375
          %399 = vst.msk [vmem:[#allocation3 + $0x20] sm:$0xff] %vm394, %v380
          %400 = vst.msk [vmem:[#allocation3 + $0x28] sm:$0xff] %vm394, %v383
          %401 = vst.msk [vmem:[#allocation3 + $0x30] sm:$0xff] %vm394, %v388
          %402 = vst.msk [vmem:[#allocation3 + $0x38] sm:$0xff] %vm394, %v391
          %403 = vst.msk [vmem:[#allocation2] sm:$0xff] %vm394, -inf
          %404 = vst.msk [vmem:[#allocation2 + $0x8] sm:$0xff] %vm394, -inf
          %405 = vst.msk [vmem:[#allocation2 + $0x10] sm:$0xff] %vm394, -inf
          %406 = vst.msk [vmem:[#allocation2 + $0x18] sm:$0xff] %vm394, -inf
          %407 = vst.msk [vmem:[#allocation2 + $0x20] sm:$0xff] %vm394, -inf
          %408 = vst.msk [vmem:[#allocation2 + $0x28] sm:$0xff] %vm394, -inf
          %409 = vst.msk [vmem:[#allocation2 + $0x30] sm:$0xff] %vm394, -inf
          %410 = vst.msk [vmem:[#allocation2 + $0x38] sm:$0xff] %vm394, -inf
        $region48: #{generator_forward.6} parent=35 // pred_fallthru
          _
        %v411 = vld [vmem:[%s261] sm:$0xf]
        %v412 = vld [vmem:[%s261 + $0x4] sm:$0xf]
        %v413 = vld [vmem:[%s261 + $0x8] sm:$0xf]
        %v414 = vld [vmem:[%s261 + $0xc] sm:$0xf]
        %v415 = vld [vmem:[%s261 + $0x10] sm:$0xf]
        %v416 = vld [vmem:[%s261 + $0x14] sm:$0xf]
        %v417 = vld [vmem:[%s261 + $0x18] sm:$0xf]
        %v418 = vld [vmem:[%s261 + $0x1c] sm:$0xf]
        %v419 = vld [vmem:[#allocation4] sm:$0x3]
        %v420 = vld [vmem:[#allocation3] sm:$0xff]
        %v421 = vld [vmem:[#allocation3 + $0x8] sm:$0xff]
        %v422 = vld [vmem:[#allocation3 + $0x10] sm:$0xff]
        %v423 = vld [vmem:[#allocation3 + $0x18] sm:$0xff]
        %v424 = vld [vmem:[#allocation3 + $0x20] sm:$0xff]
        %v425 = vld [vmem:[#allocation3 + $0x28] sm:$0xff]
        %v426 = vld [vmem:[#allocation3 + $0x30] sm:$0xff]
        %v427 = vld [vmem:[#allocation3 + $0x38] sm:$0xff]
        %v436 = vunpack.c.l.b16 %v411
        %v437 = vunpack.c.l.b16 %v412
        %v438 = vunpack.c.l.b16 %v413
        %v439 = vunpack.c.l.b16 %v414
        %v440 = vunpack.c.l.b16 %v415
        %v441 = vunpack.c.l.b16 %v416
        %v442 = vunpack.c.l.b16 %v417
        %v443 = vunpack.c.l.b16 %v418
        %v444 = vpack.c.b16 %v437, %v436
        %v445 = vpack.c.b16 %v439, %v438
        %v446 = vpack.c.b16 %v441, %v440
        %v447 = vpack.c.b16 %v443, %v442
        %vm448 = vcmask 23552
        %v450 = vsel %vm448, %v444, 0
        %v453 = vsel %vm448, %v445, 0
        %v456 = vsel %vm448, %v446, 0
        %v459 = vsel %vm448, %v447, 0
        %vm461 = vcmask 1040384
        %vm462 = vcmask 1041408
        %v463 = vsel %vm461, 4294967295, 65535
        %v464 = vsel %vm462, %v463, 0
        %v466 = vand.u32 %v419, %v464
        %468 = vmatprep.subr.bf16.mxu0 0
        %469 = vmatpush1.bf16.msra.mxu0 %v466
        %470 = vmatprep.subr.bf16.mxu0 0
        %471 = vmatpush1.bf16.msra.mxu0 0
        %472 = vmatprep.subr.bf16.mxu0 0
        %473 = vmatpush1.bf16.msra.mxu0 0
        %474 = vmatprep.subr.bf16.mxu0 0
        %475 = vmatpush1.bf16.msra.mxu0 0
        %476 = vmatprep.subr.bf16.mxu0 0
        %477 = vmatpush1.bf16.msra.mxu0 0
        %478 = vmatprep.subr.bf16.mxu0 0
        %479 = vmatpush1.bf16.msra.mxu0 0
        %480 = vmatprep.subr.bf16.mxu0 0
        %481 = vmatpush1.bf16.msra.mxu0 0
        %482 = vmatprep.subr.bf16.mxu0 0
        %483 = vmatpush1.bf16.msra.mxu0 0
        %484 = vmatprep.subr.bf16.mxu0 0
        %485 = vmatpush1.bf16.msra.mxu0 0
        %486 = vmatprep.subr.bf16.mxu0 0
        %487 = vmatpush1.bf16.msra.mxu0 0
        %488 = vmatprep.subr.bf16.mxu0 0
        %489 = vmatpush1.bf16.msra.mxu0 0
        %490 = vmatprep.subr.bf16.mxu0 0
        %491 = vmatpush1.bf16.msra.mxu0 0
        %492 = vmatprep.subr.bf16.mxu0 0
        %493 = vmatpush1.bf16.msra.mxu0 0
        %494 = vmatprep.subr.bf16.mxu0 0
        %495 = vmatpush1.bf16.msra.mxu0 0
        %496 = vmatprep.subr.bf16.mxu0 0
        %497 = vmatpush1.bf16.msra.mxu0 0
        %498 = vmatprep.subr.bf16.mxu0 0
        %499 = vmatpush1.bf16.msra.mxu0 0
        %500 = vmatprep.mubr.bf16.mxu0 0
        %501 = vmatmul.mubr.bf16.gmra.mrb[0].mxu0 %v450
        %v502 = vpop.f32.mrb[0].mxu0
        %v503 = vadd.f32 %v420, %v502
        %v504 = vpop.f32.mrb[0].mxu0
        %v505 = vpop.f32.mrb[0].mxu0
        %v506 = vadd.f32 %v421, %v505
        %v507 = vpop.f32.mrb[0].mxu0
        %508 = vmatprep.mubr.bf16.mxu0 0
        %509 = vmatmul.mubr.bf16.gmra.mrb[0].mxu0 %v453
        %v510 = vpop.f32.mrb[0].mxu0
        %v511 = vadd.f32 %v422, %v510
        %v512 = vpop.f32.mrb[0].mxu0
        %v513 = vpop.f32.mrb[0].mxu0
        %v514 = vadd.f32 %v423, %v513
        %v515 = vpop.f32.mrb[0].mxu0
        %516 = vmatprep.mubr.bf16.mxu0 0
        %517 = vmatmul.mubr.bf16.gmra.mrb[0].mxu0 %v456
        %v518 = vpop.f32.mrb[0].mxu0
        %v519 = vadd.f32 %v424, %v518
        %v520 = vpop.f32.mrb[0].mxu0
        %v521 = vpop.f32.mrb[0].mxu0
        %v522 = vadd.f32 %v425, %v521
        %v523 = vpop.f32.mrb[0].mxu0
        %524 = vmatprep.mubr.bf16.mxu0 0
        %525 = vmatmul.mubr.bf16.gmra.mrb[0].mxu0 %v459
        %v526 = vpop.f32.mrb[0].mxu0
        %v527 = vadd.f32 %v426, %v526
        %v528 = vpop.f32.mrb[0].mxu0
        %v529 = vpop.f32.mrb[0].mxu0
        %v530 = vadd.f32 %v427, %v529
        %v531 = vpop.f32.mrb[0].mxu0
        %532 = vdwg.mxu0
        %vm533 = vcmp.gt.f32.partialorder %v503, 0.0
        %vm534 = vcmp.gt.f32.partialorder %v506, 0.0
        %vm535 = vcmp.gt.f32.partialorder %v511, 0.0
        %vm536 = vcmp.gt.f32.partialorder %v514, 0.0
        %vm537 = vcmp.gt.f32.partialorder %v519, 0.0
        %vm538 = vcmp.gt.f32.partialorder %v522, 0.0
        %vm539 = vcmp.gt.f32.partialorder %v527, 0.0
        %vm540 = vcmp.gt.f32.partialorder %v530, 0.0
        %v541 = vmul.f32 %v503, 0.2
        %v542 = vmul.f32 %v506, 0.2
        %v543 = vmul.f32 %v511, 0.2
        %v544 = vmul.f32 %v514, 0.2
        %v545 = vmul.f32 %v519, 0.2
        %v546 = vmul.f32 %v522, 0.2
        %v547 = vmul.f32 %v527, 0.2
        %v548 = vmul.f32 %v530, 0.2
        %v549 = vsel %vm533, %v503, %v541
        %v550 = vsel %vm534, %v506, %v542
        %v551 = vsel %vm535, %v511, %v543
        %v552 = vsel %vm536, %v514, %v544
        %v553 = vsel %vm537, %v519, %v545
        %v554 = vsel %vm538, %v522, %v546
        %v555 = vsel %vm539, %v527, %v547
        %v556 = vsel %vm540, %v530, %v548
        %v557 = vld [vmem:[#allocation2] sm:$0xff]
        %v558 = vld [vmem:[#allocation2 + $0x8] sm:$0xff]
        %v559 = vld [vmem:[#allocation2 + $0x10] sm:$0xff]
        %v560 = vld [vmem:[#allocation2 + $0x18] sm:$0xff]
        %v561 = vld [vmem:[#allocation2 + $0x20] sm:$0xff]
        %v562 = vld [vmem:[#allocation2 + $0x28] sm:$0xff]
        %v563 = vld [vmem:[#allocation2 + $0x30] sm:$0xff]
        %v564 = vld [vmem:[#allocation2 + $0x38] sm:$0xff]
        %v565 = vmax.f32 %v557, %v549
        %v566 = vmax.f32 %v558, %v550
        %v567 = vmax.f32 %v559, %v551
        %v568 = vmax.f32 %v560, %v552
        %v569 = vmax.f32 %v561, %v553
        %v570 = vmax.f32 %v562, %v554
        %v571 = vmax.f32 %v563, %v555
        %v572 = vmax.f32 %v564, %v556
        %vm573 = vcmask 523264
        %574 = vst.msk [vmem:[#allocation2] sm:$0xff] %vm573, %v565
        %575 = vst.msk [vmem:[#allocation2 + $0x8] sm:$0xff] %vm573, %v566
        %576 = vst.msk [vmem:[#allocation2 + $0x10] sm:$0xff] %vm573, %v567
        %577 = vst.msk [vmem:[#allocation2 + $0x18] sm:$0xff] %vm573, %v568
        %578 = vst.msk [vmem:[#allocation2 + $0x20] sm:$0xff] %vm573, %v569
        %579 = vst.msk [vmem:[#allocation2 + $0x28] sm:$0xff] %vm573, %v570
        %580 = vst.msk [vmem:[#allocation2 + $0x30] sm:$0xff] %vm573, %v571
        %581 = vst.msk [vmem:[#allocation2 + $0x38] sm:$0xff] %vm573, %v572
        %p582 = scmp.eq.s32.totalorder %s22, 7
        // Predicated region
        $region49: #{generator_forward.6} parent=35 // pred_check
          %p583 = pneg %p582
        $region50: #{generator_forward.6} parent=35 // pred_check_branch
          %585 = sbr.rel (%p583) target = $region52
        $region51: #{generator_forward.6} parent=35 // pred_region
          %v586 = vld [vmem:[#allocation2] sm:$0xff]
          %v587 = vld [vmem:[#allocation2 + $0x8] sm:$0xff]
          %v588 = vld [vmem:[#allocation2 + $0x10] sm:$0xff]
          %v589 = vld [vmem:[#allocation2 + $0x18] sm:$0xff]
          %v590 = vld [vmem:[#allocation2 + $0x20] sm:$0xff]
          %v591 = vld [vmem:[#allocation2 + $0x28] sm:$0xff]
          %v592 = vld [vmem:[#allocation2 + $0x30] sm:$0xff]
          %v593 = vld [vmem:[#allocation2 + $0x38] sm:$0xff]
          %594 = vst.msk [vmem:[%s273] sm:$0xff] %vm573, %v586
          %595 = vst.msk [vmem:[%s273 + $0x8] sm:$0xff] %vm573, %v587
          %596 = vst.msk [vmem:[%s273 + $0x10] sm:$0xff] %vm573, %v588
          %597 = vst.msk [vmem:[%s273 + $0x18] sm:$0xff] %vm573, %v589
          %598 = vst.msk [vmem:[%s273 + $0x20] sm:$0xff] %vm573, %v590
          %599 = vst.msk [vmem:[%s273 + $0x28] sm:$0xff] %vm573, %v591
          %600 = vst.msk [vmem:[%s273 + $0x30] sm:$0xff] %vm573, %v592
          %601 = vst.msk [vmem:[%s273 + $0x38] sm:$0xff] %vm573, %v593
        $region52: #{generator_forward.6} parent=35 // pred_fallthru
          _
        %s602 = smul.u32 8, %s21
        %p603 = scmp.lt.s32.totalorder %s602, 15
        %s604 = scalar_select %p603, %s602, 15
        %s605 = smul.addr %s604, 8
        %s606 = scalar_lea.vmem %s4, %s605
        // Predicated region
        $region53: #{generator_forward.6} parent=35 // pred_check
          %p607 = pneg %p143
        $region54: #{generator_forward.6} parent=35 // pred_check_branch
          %609 = sbr.rel (%p607) target = $region56
        $region55: #{generator_forward.6} parent=35 // pred_region
          %s610 = smul.u32 8, %s21
        $region56: #{generator_forward.6} parent=35 // pred_fallthru
          _
      $region36: #{generator_forward.6} parent=5 // pred_fallthru
        _
      %p611 = scmp.le.s32.totalorder 2, %s12
      // Predicated region
      $region57: #{generator_forward.6} parent=5 // pred_check
        %p612 = pneg %p611
      $region58: #{generator_forward.6} parent=5 // pred_check_branch
        %614 = sbr.rel (%p612) target = $region60
      $region59: #{generator_forward.6} parent=5 // pred_region
        %s615 = ssub.s32 %s12, 2
        // Predicated region
        $region61: #{generator_forward.6} parent=59 // pred_check
          %p616 = pneg %p149
        $region62: #{generator_forward.6} parent=59 // pred_check_branch
          %618 = sbr.rel (%p616) target = $region64
        $region63: #{generator_forward.6} parent=59 // pred_region
          %s619 = smul.u32 8, %s23
          %p620 = scmp.lt.s32.totalorder %s619, 15
          %s621 = scalar_select %p620, %s619, 15
          %s622 = smul.addr %s621, 8
          %s623 = scalar_lea.vmem %s4, %s622
        $region64: #{generator_forward.6} parent=59 // pred_fallthru
          _
      $region60: #{generator_forward.6} parent=5 // pred_fallthru
        _
    $region6: #{generator_forward.6} parent=1 // loop_footer
      %s16 = sadd.s32 1, %s12
    $region7: #{generator_forward.6} parent=1 // loop_footer_branch
      %11 = sbr.rel target = $region3
    $region8: #{generator_forward.6} parent=1 // loop_exit
      _
    %624 = vsyncpa [#allocation5], 1
    %s625 = scalar_lea.sflag [#allocation5], 1
    %626 = vsyncpa %s625, 1
    %627 = vsyncpa [#allocation7], 1

// kernel: generator_forward.7
$region0: #{generator_forward.7}
  #allocation0 [shape = 'u32[]', space=smem, size = 0x4, offset = 0x4, fixed_abs, tag = 'smem constant byte address 0x4 - core index']
  #allocation1 [shape = 'u32[144,128]{1,0:T(1,128)}', space=vmem, size = 0x12000, scoped, tag = 'internal scratch']
  #allocation2 [shape = 'f32[64,64]{1,0:T(8,128)}', space=vmem, size = 0x8000, scoped, tag = 'scratch operand']
  #allocation3 [shape = 'f32[64,64]{1,0:T(8,128)}', space=vmem, size = 0x8000, scoped, tag = 'scratch operand']
  %s0 = inlined_call_operand.vmem [shape: bf16[8,128,64], index: 0, kind: input, shape index: {}]
  %s1 = inlined_call_operand.vmem [shape: bf16[128,64], index: 1, kind: input, shape index: {}]
  %s2 = inlined_call_operand.vmem [shape: bf16[64,64], index: 2, kind: input, shape index: {}]
  %s3 = inlined_call_operand.vmem [shape: bf16[64,64], index: 3, kind: input, shape index: {}]
  %s4 = inlined_call_operand.vmem [shape: f32[128,64], index: 4, kind: output, shape index: {}]
  %s5 = sld [smem:[#allocation0]]
  $region57: #{generator_forward.7} parent=0
    _
  %s7 = ssub.s32 1, %s5
  %s8 = scalar_select 0, %s7, %s5
  loop: start=0, step=1, limit=18
  $region2: #{generator_forward.7} parent=0 // loop_pre_header
    _
  $region3: #{generator_forward.7} parent=0 // loop_header
    %s10 = sphi 0, %s14
    %p11 = scmp.ge.s32.totalorder %s10, 18
    %s17 = sphi 0, %s29
    %s18 = sphi 0, %s25
    %s19 = sphi 0, %s17
    %s20 = sphi 0, %s18
    %s21 = sphi 0, %s19
    %s22 = sphi 0, %s20
    %s34 = sphi 0, %s36
    %s37 = sphi 0, %s34
    %s38 = sphi 0, %s37
    %s54 = sphi 0, %s38
    %s60 = sphi 0, %s62
    %s63 = sphi 0, %s60
    %s64 = sphi 0, %s63
    %s80 = sphi 0, %s64
    %s84 = sphi 0, %s84
    %s86 = sphi 0, %s84
    %s87 = sphi 0, %s86
    %s101 = sphi 0, %s87
    %s105 = sphi 0, %s105
    %s107 = sphi 0, %s105
    %s108 = sphi 0, %s107
    %s122 = sphi 0, %s108
    %s128 = sphi 0, %s130
    %s131 = sphi 0, %s128
    %s132 = sphi 0, %s131
    %s148 = sphi 0, %s132
  $region4: #{generator_forward.7} parent=0 // loop_header_branch
    %13 = sbr.rel (%p11) target = $region8
  $region5: #{generator_forward.7} parent=0 // loop_body
    %s15 = ssub.s32 %s10, 1
    %s16 = ssub.s32 %s10, 2
    %s23 = sadd.s32 1, %s18
    %p24 = scmp.ge.s32.totalorder %s23, 8
    %s25 = scalar_select %p24, 0, %s23
    %s26 = sadd.s32 1, %s17
    %s27 = scalar_select %p24, %s26, %s17
    %p28 = scmp.ge.s32.totalorder %s27, 2
    %s29 = scalar_select %p28, 0, %s27
    %s30 = ssub.s32 %s18, %s25
    %s31 = ssub.s32 %s17, %s29
    %s32 = sor.u32 %s30, %s31
    %p33 = scmp.eq.s32.totalorder %s32, 0
    %s35 = sadd.s32 %s34, 1
    %s36 = scalar_select %p33, %s34, %s35
    %p39 = pneg %p33
    %p40 = scmp.eq.s32.totalorder %s10, 15
    %p41 = por %p39, %p40
    %p42 = scmp.ne.s32.totalorder %s34, %s37
    %p43 = scmp.eq.s32.totalorder %s10, 0
    %p44 = por %p42, %p43
    %p45 = scmp.ne.s32.totalorder %s34, %s37
    %p46 = scmp.eq.s32.totalorder %s15, 15
    %p47 = por %p45, %p46
    %p48 = scmp.ne.s32.totalorder %s37, %s38
    %p49 = scmp.eq.s32.totalorder %s15, 0
    %p50 = por %p48, %p49
    %p51 = scmp.ne.s32.totalorder %s37, %s38
    %p52 = scmp.eq.s32.totalorder %s16, 15
    %p53 = por %p51, %p52
    %p55 = scmp.ne.s32.totalorder %s38, %s54
    %p56 = scmp.eq.s32.totalorder %s16, 0
    %p57 = por %p55, %p56
    %s58 = ssub.s32 %s17, %s29
    %p59 = scmp.eq.s32.totalorder %s58, 0
    %s61 = sadd.s32 %s60, 1
    %s62 = scalar_select %p59, %s60, %s61
    %p65 = pneg %p59
    %p66 = scmp.eq.s32.totalorder %s10, 15
    %p67 = por %p65, %p66
    %p68 = scmp.ne.s32.totalorder %s60, %s63
    %p69 = scmp.eq.s32.totalorder %s10, 0
    %p70 = por %p68, %p69
    %p71 = scmp.ne.s32.totalorder %s60, %s63
    %p72 = scmp.eq.s32.totalorder %s15, 15
    %p73 = por %p71, %p72
    %p74 = scmp.ne.s32.totalorder %s63, %s64
    %p75 = scmp.eq.s32.totalorder %s15, 0
    %p76 = por %p74, %p75
    %p77 = scmp.ne.s32.totalorder %s63, %s64
    %p78 = scmp.eq.s32.totalorder %s16, 15
    %p79 = por %p77, %p78
    %p81 = scmp.ne.s32.totalorder %s64, %s80
    %p82 = scmp.eq.s32.totalorder %s16, 0
    %p83 = por %p81, %p82
    %s85 = sadd.s32 %s84, 1
    %p88 = scmp.eq.s32.totalorder %s10, 15
    %p89 = scmp.ne.s32.totalorder %s84, %s86
    %p90 = scmp.eq.s32.totalorder %s10, 0
    %p91 = por %p89, %p90
    %p92 = scmp.ne.s32.totalorder %s84, %s86
    %p93 = scmp.eq.s32.totalorder %s15, 15
    %p94 = por %p92, %p93
    %p95 = scmp.ne.s32.totalorder %s86, %s87
    %p96 = scmp.eq.s32.totalorder %s15, 0
    %p97 = por %p95, %p96
    %p98 = scmp.ne.s32.totalorder %s86, %s87
    %p99 = scmp.eq.s32.totalorder %s16, 15
    %p100 = por %p98, %p99
    %p102 = scmp.ne.s32.totalorder %s87, %s101
    %p103 = scmp.eq.s32.totalorder %s16, 0
    %p104 = por %p102, %p103
    %s106 = sadd.s32 %s105, 1
    %p109 = scmp.eq.s32.totalorder %s10, 15
    %p110 = scmp.ne.s32.totalorder %s105, %s107
    %p111 = scmp.eq.s32.totalorder %s10, 0
    %p112 = por %p110, %p111
    %p113 = scmp.ne.s32.totalorder %s105, %s107
    %p114 = scmp.eq.s32.totalorder %s15, 15
    %p115 = por %p113, %p114
    %p116 = scmp.ne.s32.totalorder %s107, %s108
    %p117 = scmp.eq.s32.totalorder %s15, 0
    %p118 = por %p116, %p117
    %p119 = scmp.ne.s32.totalorder %s107, %s108
    %p120 = scmp.eq.s32.totalorder %s16, 15
    %p121 = por %p119, %p120
    %p123 = scmp.ne.s32.totalorder %s108, %s122
    %p124 = scmp.eq.s32.totalorder %s16, 0
    %p125 = por %p123, %p124
    %s126 = ssub.s32 %s17, %s29
    %p127 = scmp.eq.s32.totalorder %s126, 0
    %s129 = sadd.s32 %s128, 1
    %s130 = scalar_select %p127, %s128, %s129
    %p133 = pneg %p127
    %p134 = scmp.eq.s32.totalorder %s10, 15
    %p135 = por %p133, %p134
    %p136 = scmp.ne.s32.totalorder %s128, %s131
    %p137 = scmp.eq.s32.totalorder %s10, 0
    %p138 = por %p136, %p137
    %p139 = scmp.ne.s32.totalorder %s128, %s131
    %p140 = scmp.eq.s32.totalorder %s15, 15
    %p141 = por %p139, %p140
    %p142 = scmp.ne.s32.totalorder %s131, %s132
    %p143 = scmp.eq.s32.totalorder %s15, 0
    %p144 = por %p142, %p143
    %p145 = scmp.ne.s32.totalorder %s131, %s132
    %p146 = scmp.eq.s32.totalorder %s16, 15
    %p147 = por %p145, %p146
    %p149 = scmp.ne.s32.totalorder %s132, %s148
    %p150 = scmp.eq.s32.totalorder %s16, 0
    %p151 = por %p149, %p150
    %p152 = scmp.le.s32.totalorder 1, %s10
    %p153 = scmp.lt.s32.totalorder %s10, 17
    %p154 = pnand %p152, %p153
    %p155 = pneg %p154
    // Predicated region
    $region9: #{generator_forward.7} parent=5 // pred_check
      _
    $region10: #{generator_forward.7} parent=5 // pred_check_branch
      %157 = sbr.rel (%p154) target = $region12
    $region11: #{generator_forward.7} parent=5 // pred_region
      %s158 = ssub.s32 %s10, 1
      // Predicated region
      $region13: #{generator_forward.7} parent=11 // pred_check
        %p159 = pneg %p97
      $region14: #{generator_forward.7} parent=11 // pred_check_branch
        %161 = sbr.rel (%p159) target = $region16
      $region15: #{generator_forward.7} parent=11 // pred_region
        _
      $region16: #{generator_forward.7} parent=11 // pred_fallthru
        _
      // Predicated region
      $region17: #{generator_forward.7} parent=11 // pred_check
        %p162 = pneg %p118
      $region18: #{generator_forward.7} parent=11 // pred_check_branch
        %164 = sbr.rel (%p162) target = $region20
      $region19: #{generator_forward.7} parent=11 // pred_region
        _
      $region20: #{generator_forward.7} parent=11 // pred_fallthru
        _
    $region12: #{generator_forward.7} parent=5 // pred_fallthru
      _
    %p165 = scmp.lt.s32.totalorder %s10, 16
    // Predicated region
    $region21: #{generator_forward.7} parent=5 // pred_check
      %p166 = pneg %p165
    $region22: #{generator_forward.7} parent=5 // pred_check_branch
      %168 = sbr.rel (%p166) target = $region24
    $region23: #{generator_forward.7} parent=5 // pred_region
      // Predicated region
      $region25: #{generator_forward.7} parent=23 // pred_check
        %p169 = pneg %p44
      $region26: #{generator_forward.7} parent=23 // pred_check_branch
        %171 = sbr.rel (%p169) target = $region28
      $region27: #{generator_forward.7} parent=23 // pred_region
        %s172 = smul.u32 8, %s17
        %p173 = scmp.lt.s32.totalorder %s18, 7
        %s174 = scalar_select %p173, %s18, 7
        %p175 = scmp.lt.s32.totalorder %s172, 15
        %s176 = scalar_select %p175, %s172, 15
        %s177 = smul.addr %s174, 16
        %s178 = sadd.s32 %s176, %s177
        %s179 = smul.addr %s178, 4
        %s180 = scalar_lea.vmem %s0, %s179
        %s181 = smul.u32 8, %s17
      $region28: #{generator_forward.7} parent=23 // pred_fallthru
        _
      // Predicated region
      $region29: #{generator_forward.7} parent=23 // pred_check
        %p182 = pneg %p70
      $region30: #{generator_forward.7} parent=23 // pred_check_branch
        %184 = sbr.rel (%p182) target = $region32
      $region31: #{generator_forward.7} parent=23 // pred_region
        %s185 = smul.u32 8, %s17
        %p186 = scmp.lt.s32.totalorder %s185, 15
        %s187 = scalar_select %p186, %s185, 15
        %s188 = smul.addr %s187, 4
        %s189 = scalar_lea.vmem %s1, %s188
        %s190 = smul.u32 8, %s17
      $region32: #{generator_forward.7} parent=23 // pred_fallthru
        _
    $region24: #{generator_forward.7} parent=5 // pred_fallthru
      _
    %p191 = scmp.le.s32.totalorder 1, %s10
    %p192 = scmp.lt.s32.totalorder %s10, 17
    %p193 = pnand %p191, %p192
    %p194 = pneg %p193
    // Predicated region
    $region33: #{generator_forward.7} parent=5 // pred_check
      _
    $region34: #{generator_forward.7} parent=5 // pred_check_branch
      %196 = sbr.rel (%p193) target = $region36
    $region35: #{generator_forward.7} parent=5 // pred_region
      %s197 = ssub.s32 %s10, 1
      %s198 = smul.u32 8, %s19
      %p199 = scmp.lt.s32.totalorder %s20, 7
      %s200 = scalar_select %p199, %s20, 7
      %p201 = scmp.lt.s32.totalorder %s198, 15
      %s202 = scalar_select %p201, %s198, 15
      %s203 = smul.addr %s200, 16
      %s204 = sadd.s32 %s202, %s203
      %s205 = smul.addr %s204, 4
      %s206 = scalar_lea.vmem %s0, %s205
      %p207 = pneg %p50
      %p208 = pneg %p47
      %s209 = smul.u32 8, %s19
      %p210 = scmp.lt.s32.totalorder %s209, 15
      %s211 = scalar_select %p210, %s209, 15
      %s212 = smul.addr %s211, 4
      %s213 = scalar_lea.vmem %s1, %s212
      %p214 = pneg %p76
      %p215 = pneg %p73
      %p216 = pneg %p97
      %p217 = pneg %p94
      %p218 = pneg %p118
      %p219 = pneg %p115
      %p220 = pneg %p144
      %p221 = pneg %p141
      %s222 = smul.u32 8, %s19
      %p223 = scmp.lt.s32.totalorder %s222, 15
      %s224 = scalar_select %p223, %s222, 15
      %s225 = smul.addr %s224, 8
      %s226 = scalar_lea.vmem %s4, %s225
      %s227 = smul.u32 8, %s19
      %p228 = scmp.lt.s32.totalorder %s20, 7
      %s229 = scalar_select %p228, %s20, 7
      %p230 = scmp.lt.s32.totalorder %s227, 15
      %s231 = scalar_select %p230, %s227, 15
      %s232 = smul.addr %s229, 16
      %s233 = sadd.s32 %s231, %s232
      %s234 = smul.addr %s233, 4
      %s235 = scalar_lea.vmem %s0, %s234
      %s236 = smul.u32 8, %s19
      %s237 = smul.u32 8, %s19
      %p238 = scmp.lt.s32.totalorder %s237, 15
      %s239 = scalar_select %p238, %s237, 15
      %s240 = smul.addr %s239, 4
      %s241 = scalar_lea.vmem %s1, %s240
      %s242 = smul.u32 8, %s19
      %s243 = smul.u32 8, %s19
      %p244 = scmp.lt.s32.totalorder %s243, 15
      %s245 = scalar_select %p244, %s243, 15
      %s246 = smul.addr %s245, 8
      %s247 = scalar_lea.vmem %s4, %s246
      %s248 = smul.u32 8, %s19
      %p250 = scmp.eq.s32.totalorder %s20, 0
      // Predicated region
      $region37: #{generator_forward.7} parent=35 // pred_check
        %p251 = pneg %p250
      $region38: #{generator_forward.7} parent=35 // pred_check_branch
        %253 = sbr.rel (%p251) target = $region40
      $region39: #{generator_forward.7} parent=35 // pred_region
        %v254 = vld [vmem:[%s241] sm:$0xf]
        %v255 = vld [vmem:[%s241 + $0x4] sm:$0xf]
        %v256 = vld [vmem:[%s241 + $0x8] sm:$0xf]
        %v257 = vld [vmem:[%s241 + $0xc] sm:$0xf]
        %v258 = vld [vmem:[%s241 + $0x10] sm:$0xf]
        %v259 = vld [vmem:[%s241 + $0x14] sm:$0xf]
        %v260 = vld [vmem:[%s241 + $0x18] sm:$0xf]
        %v261 = vld [vmem:[%s241 + $0x1c] sm:$0xf]
        %v262 = vld [vmem:[%s3] sm:$0xf]
        %v263 = vld [vmem:[%s3 + $0x4] sm:$0xf]
        %v264 = vld [vmem:[%s3 + $0x8] sm:$0xf]
        %v265 = vld [vmem:[%s3 + $0xc] sm:$0xf]
        %v266 = vld [vmem:[%s3 + $0x10] sm:$0xf]
        %v267 = vld [vmem:[%s3 + $0x14] sm:$0xf]
        %v268 = vld [vmem:[%s3 + $0x18] sm:$0xf]
        %v269 = vld [vmem:[%s3 + $0x1c] sm:$0xf]
        %v278 = vunpack.c.l.b16 %v254
        %v279 = vunpack.c.l.b16 %v255
        %v280 = vunpack.c.l.b16 %v256
        %v281 = vunpack.c.l.b16 %v257
        %v282 = vunpack.c.l.b16 %v258
        %v283 = vunpack.c.l.b16 %v259
        %v284 = vunpack.c.l.b16 %v260
        %v285 = vunpack.c.l.b16 %v261
        %v286 = vpack.c.b16 %v279, %v278
        %v287 = vpack.c.b16 %v281, %v280
        %v288 = vpack.c.b16 %v283, %v282
        %v289 = vpack.c.b16 %v285, %v284
        %v298 = vunpack.c.l.b16 %v262
        %v299 = vunpack.c.l.b16 %v263
        %v300 = vunpack.c.l.b16 %v264
        %v301 = vunpack.c.l.b16 %v265
        %v302 = vunpack.c.l.b16 %v266
        %v303 = vunpack.c.l.b16 %v267
        %v304 = vunpack.c.l.b16 %v268
        %v305 = vunpack.c.l.b16 %v269
        %v306 = vpack.c.b16 %v299, %v298
        %v307 = vpack.c.b16 %v301, %v300
        %v308 = vpack.c.b16 %v303, %v302
        %v309 = vpack.c.b16 %v305, %v304
        %vm314 = vcmask 523264
        %v316 = vsel %vm314, %v286, 0
        %v319 = vsel %vm314, %v287, 0
        %v322 = vsel %vm314, %v288, 0
        %v325 = vsel %vm314, %v289, 0
        %327 = vmatprep.subr.bf16.mxu0 0
        %328 = vmatpush1.bf16.msra.mxu0 %v306
        %329 = vmatprep.subr.bf16.mxu0 0
        %330 = vmatpush1.bf16.msra.mxu0 %v307
        %331 = vmatprep.subr.bf16.mxu0 0
        %332 = vmatpush1.bf16.msra.mxu0 %v308
        %333 = vmatprep.subr.bf16.mxu0 0
        %334 = vmatpush1.bf16.msra.mxu0 %v309
        %335 = vmatprep.subr.bf16.mxu0 0
        %336 = vmatpush1.bf16.msra.mxu0 0
        %337 = vmatprep.subr.bf16.mxu0 0
        %338 = vmatpush1.bf16.msra.mxu0 0
        %339 = vmatprep.subr.bf16.mxu0 0
        %340 = vmatpush1.bf16.msra.mxu0 0
        %341 = vmatprep.subr.bf16.mxu0 0
        %342 = vmatpush1.bf16.msra.mxu0 0
        %343 = vmatprep.subr.bf16.mxu0 0
        %344 = vmatpush1.bf16.msra.mxu0 0
        %345 = vmatprep.subr.bf16.mxu0 0
        %346 = vmatpush1.bf16.msra.mxu0 0
        %347 = vmatprep.subr.bf16.mxu0 0
        %348 = vmatpush1.bf16.msra.mxu0 0
        %349 = vmatprep.subr.bf16.mxu0 0
        %350 = vmatpush1.bf16.msra.mxu0 0
        %351 = vmatprep.subr.bf16.mxu0 0
        %352 = vmatpush1.bf16.msra.mxu0 0
        %353 = vmatprep.subr.bf16.mxu0 0
        %354 = vmatpush1.bf16.msra.mxu0 0
        %355 = vmatprep.subr.bf16.mxu0 0
        %356 = vmatpush1.bf16.msra.mxu0 0
        %357 = vmatprep.subr.bf16.mxu0 0
        %358 = vmatpush1.bf16.msra.mxu0 0
        %359 = vmatprep.mubr.bf16.mxu0 0
        %360 = vmatmul.mubr.bf16.gmra.mrb[0].mxu0 %v316
        %v361 = vpop.f32.mrb[0].mxu0
        %v362 = vadd.f32 0.0, %v361
        %v363 = vpop.f32.mrb[0].mxu0
        %v364 = vpop.f32.mrb[0].mxu0
        %v365 = vadd.f32 0.0, %v364
        %v366 = vpop.f32.mrb[0].mxu0
        %367 = vmatprep.mubr.bf16.mxu0 0
        %368 = vmatmul.mubr.bf16.gmra.mrb[0].mxu0 %v319
        %v369 = vpop.f32.mrb[0].mxu0
        %v370 = vadd.f32 0.0, %v369
        %v371 = vpop.f32.mrb[0].mxu0
        %v372 = vpop.f32.mrb[0].mxu0
        %v373 = vadd.f32 0.0, %v372
        %v374 = vpop.f32.mrb[0].mxu0
        %375 = vmatprep.mubr.bf16.mxu0 0
        %376 = vmatmul.mubr.bf16.gmra.mrb[0].mxu0 %v322
        %v377 = vpop.f32.mrb[0].mxu0
        %v378 = vadd.f32 0.0, %v377
        %v379 = vpop.f32.mrb[0].mxu0
        %v380 = vpop.f32.mrb[0].mxu0
        %v381 = vadd.f32 0.0, %v380
        %v382 = vpop.f32.mrb[0].mxu0
        %383 = vmatprep.mubr.bf16.mxu0 0
        %384 = vmatmul.mubr.bf16.gmra.mrb[0].mxu0 %v325
        %v385 = vpop.f32.mrb[0].mxu0
        %v386 = vadd.f32 0.0, %v385
        %v387 = vpop.f32.mrb[0].mxu0
        %v388 = vpop.f32.mrb[0].mxu0
        %v389 = vadd.f32 0.0, %v388
        %v390 = vpop.f32.mrb[0].mxu0
        %391 = vdwg.mxu0
        %392 = vst.msk [vmem:[#allocation3] sm:$0xff] %vm314, %v362
        %393 = vst.msk [vmem:[#allocation3 + $0x8] sm:$0xff] %vm314, %v365
        %394 = vst.msk [vmem:[#allocation3 + $0x10] sm:$0xff] %vm314, %v370
        %395 = vst.msk [vmem:[#allocation3 + $0x18] sm:$0xff] %vm314, %v373
        %396 = vst.msk [vmem:[#allocation3 + $0x20] sm:$0xff] %vm314, %v378
        %397 = vst.msk [vmem:[#allocation3 + $0x28] sm:$0xff] %vm314, %v381
        %398 = vst.msk [vmem:[#allocation3 + $0x30] sm:$0xff] %vm314, %v386
        %399 = vst.msk [vmem:[#allocation3 + $0x38] sm:$0xff] %vm314, %v389
        %400 = vst.msk [vmem:[#allocation2] sm:$0xff] %vm314, -inf
        %401 = vst.msk [vmem:[#allocation2 + $0x8] sm:$0xff] %vm314, -inf
        %402 = vst.msk [vmem:[#allocation2 + $0x10] sm:$0xff] %vm314, -inf
        %403 = vst.msk [vmem:[#allocation2 + $0x18] sm:$0xff] %vm314, -inf
        %404 = vst.msk [vmem:[#allocation2 + $0x20] sm:$0xff] %vm314, -inf
        %405 = vst.msk [vmem:[#allocation2 + $0x28] sm:$0xff] %vm314, -inf
        %406 = vst.msk [vmem:[#allocation2 + $0x30] sm:$0xff] %vm314, -inf
        %407 = vst.msk [vmem:[#allocation2 + $0x38] sm:$0xff] %vm314, -inf
      $region40: #{generator_forward.7} parent=35 // pred_fallthru
        _
      %v408 = vld [vmem:[%s235] sm:$0xf]
      %v409 = vld [vmem:[%s235 + $0x4] sm:$0xf]
      %v410 = vld [vmem:[%s235 + $0x8] sm:$0xf]
      %v411 = vld [vmem:[%s235 + $0xc] sm:$0xf]
      %v412 = vld [vmem:[%s235 + $0x10] sm:$0xf]
      %v413 = vld [vmem:[%s235 + $0x14] sm:$0xf]
      %v414 = vld [vmem:[%s235 + $0x18] sm:$0xf]
      %v415 = vld [vmem:[%s235 + $0x1c] sm:$0xf]
      %v416 = vld [vmem:[%s2] sm:$0xf]
      %v417 = vld [vmem:[%s2 + $0x4] sm:$0xf]
      %v418 = vld [vmem:[%s2 + $0x8] sm:$0xf]
      %v419 = vld [vmem:[%s2 + $0xc] sm:$0xf]
      %v420 = vld [vmem:[%s2 + $0x10] sm:$0xf]
      %v421 = vld [vmem:[%s2 + $0x14] sm:$0xf]
      %v422 = vld [vmem:[%s2 + $0x18] sm:$0xf]
      %v423 = vld [vmem:[%s2 + $0x1c] sm:$0xf]
      %v424 = vld [vmem:[#allocation3] sm:$0xff]
      %v425 = vld [vmem:[#allocation3 + $0x8] sm:$0xff]
      %v426 = vld [vmem:[#allocation3 + $0x10] sm:$0xff]
      %v427 = vld [vmem:[#allocation3 + $0x18] sm:$0xff]
      %v428 = vld [vmem:[#allocation3 + $0x20] sm:$0xff]
      %v429 = vld [vmem:[#allocation3 + $0x28] sm:$0xff]
      %v430 = vld [vmem:[#allocation3 + $0x30] sm:$0xff]
      %v431 = vld [vmem:[#allocation3 + $0x38] sm:$0xff]
      %v440 = vunpack.c.l.b16 %v408
      %v441 = vunpack.c.l.b16 %v409
      %v442 = vunpack.c.l.b16 %v410
      %v443 = vunpack.c.l.b16 %v411
      %v444 = vunpack.c.l.b16 %v412
      %v445 = vunpack.c.l.b16 %v413
      %v446 = vunpack.c.l.b16 %v414
      %v447 = vunpack.c.l.b16 %v415
      %v448 = vpack.c.b16 %v441, %v440
      %v449 = vpack.c.b16 %v443, %v442
      %v450 = vpack.c.b16 %v445, %v444
      %v451 = vpack.c.b16 %v447, %v446
      %v460 = vunpack.c.l.b16 %v416
      %v461 = vunpack.c.l.b16 %v417
      %v462 = vunpack.c.l.b16 %v418
      %v463 = vunpack.c.l.b16 %v419
      %v464 = vunpack.c.l.b16 %v420
      %v465 = vunpack.c.l.b16 %v421
      %v466 = vunpack.c.l.b16 %v422
      %v467 = vunpack.c.l.b16 %v423
      %v468 = vpack.c.b16 %v461, %v460
      %v469 = vpack.c.b16 %v463, %v462
      %v470 = vpack.c.b16 %v465, %v464
      %v471 = vpack.c.b16 %v467, %v466
      %vm476 = vcmask 523264
      %v478 = vsel %vm476, %v448, 0
      %v481 = vsel %vm476, %v449, 0
      %v484 = vsel %vm476, %v450, 0
      %v487 = vsel %vm476, %v451, 0
      %489 = vmatprep.subr.bf16.mxu0 0
      %490 = vmatpush1.bf16.msra.mxu0 %v468
      %491 = vmatprep.subr.bf16.mxu0 0
      %492 = vmatpush1.bf16.msra.mxu0 %v469
      %493 = vmatprep.subr.bf16.mxu0 0
      %494 = vmatpush1.bf16.msra.mxu0 %v470
      %495 = vmatprep.subr.bf16.mxu0 0
      %496 = vmatpush1.bf16.msra.mxu0 %v471
      %497 = vmatprep.subr.bf16.mxu0 0
      %498 = vmatpush1.bf16.msra.mxu0 0
      %499 = vmatprep.subr.bf16.mxu0 0
      %500 = vmatpush1.bf16.msra.mxu0 0
      %501 = vmatprep.subr.bf16.mxu0 0
      %502 = vmatpush1.bf16.msra.mxu0 0
      %503 = vmatprep.subr.bf16.mxu0 0
      %504 = vmatpush1.bf16.msra.mxu0 0
      %505 = vmatprep.subr.bf16.mxu0 0
      %506 = vmatpush1.bf16.msra.mxu0 0
      %507 = vmatprep.subr.bf16.mxu0 0
      %508 = vmatpush1.bf16.msra.mxu0 0
      %509 = vmatprep.subr.bf16.mxu0 0
      %510 = vmatpush1.bf16.msra.mxu0 0
      %511 = vmatprep.subr.bf16.mxu0 0
      %512 = vmatpush1.bf16.msra.mxu0 0
      %513 = vmatprep.subr.bf16.mxu0 0
      %514 = vmatpush1.bf16.msra.mxu0 0
      %515 = vmatprep.subr.bf16.mxu0 0
      %516 = vmatpush1.bf16.msra.mxu0 0
      %517 = vmatprep.subr.bf16.mxu0 0
      %518 = vmatpush1.bf16.msra.mxu0 0
      %519 = vmatprep.subr.bf16.mxu0 0
      %520 = vmatpush1.bf16.msra.mxu0 0
      %521 = vmatprep.mubr.bf16.mxu0 0
      %522 = vmatmul.mubr.bf16.gmra.mrb[0].mxu0 %v478
      %v523 = vpop.f32.mrb[0].mxu0
      %v524 = vadd.f32 %v424, %v523
      %v525 = vpop.f32.mrb[0].mxu0
      %v526 = vpop.f32.mrb[0].mxu0
      %v527 = vadd.f32 %v425, %v526
      %v528 = vpop.f32.mrb[0].mxu0
      %529 = vmatprep.mubr.bf16.mxu0 0
      %530 = vmatmul.mubr.bf16.gmra.mrb[0].mxu0 %v481
      %v531 = vpop.f32.mrb[0].mxu0
      %v532 = vadd.f32 %v426, %v531
      %v533 = vpop.f32.mrb[0].mxu0
      %v534 = vpop.f32.mrb[0].mxu0
      %v535 = vadd.f32 %v427, %v534
      %v536 = vpop.f32.mrb[0].mxu0
      %537 = vmatprep.mubr.bf16.mxu0 0
      %538 = vmatmul.mubr.bf16.gmra.mrb[0].mxu0 %v484
      %v539 = vpop.f32.mrb[0].mxu0
      %v540 = vadd.f32 %v428, %v539
      %v541 = vpop.f32.mrb[0].mxu0
      %v542 = vpop.f32.mrb[0].mxu0
      %v543 = vadd.f32 %v429, %v542
      %v544 = vpop.f32.mrb[0].mxu0
      %545 = vmatprep.mubr.bf16.mxu0 0
      %546 = vmatmul.mubr.bf16.gmra.mrb[0].mxu0 %v487
      %v547 = vpop.f32.mrb[0].mxu0
      %v548 = vadd.f32 %v430, %v547
      %v549 = vpop.f32.mrb[0].mxu0
      %v550 = vpop.f32.mrb[0].mxu0
      %v551 = vadd.f32 %v431, %v550
      %v552 = vpop.f32.mrb[0].mxu0
      %553 = vdwg.mxu0
      %vm554 = vcmp.gt.f32.partialorder %v524, 0.0
      %vm555 = vcmp.gt.f32.partialorder %v527, 0.0
      %vm556 = vcmp.gt.f32.partialorder %v532, 0.0
      %vm557 = vcmp.gt.f32.partialorder %v535, 0.0
      %vm558 = vcmp.gt.f32.partialorder %v540, 0.0
      %vm559 = vcmp.gt.f32.partialorder %v543, 0.0
      %vm560 = vcmp.gt.f32.partialorder %v548, 0.0
      %vm561 = vcmp.gt.f32.partialorder %v551, 0.0
      %v562 = vmul.f32 %v524, 0.2
      %v563 = vmul.f32 %v527, 0.2
      %v564 = vmul.f32 %v532, 0.2
      %v565 = vmul.f32 %v535, 0.2
      %v566 = vmul.f32 %v540, 0.2
      %v567 = vmul.f32 %v543, 0.2
      %v568 = vmul.f32 %v548, 0.2
      %v569 = vmul.f32 %v551, 0.2
      %v570 = vsel %vm554, %v524, %v562
      %v571 = vsel %vm555, %v527, %v563
      %v572 = vsel %vm556, %v532, %v564
      %v573 = vsel %vm557, %v535, %v565
      %v574 = vsel %vm558, %v540, %v566
      %v575 = vsel %vm559, %v543, %v567
      %v576 = vsel %vm560, %v548, %v568
      %v577 = vsel %vm561, %v551, %v569
      %v578 = vld [vmem:[#allocation2] sm:$0xff]
      %v579 = vld [vmem:[#allocation2 + $0x8] sm:$0xff]
      %v580 = vld [vmem:[#allocation2 + $0x10] sm:$0xff]
      %v581 = vld [vmem:[#allocation2 + $0x18] sm:$0xff]
      %v582 = vld [vmem:[#allocation2 + $0x20] sm:$0xff]
      %v583 = vld [vmem:[#allocation2 + $0x28] sm:$0xff]
      %v584 = vld [vmem:[#allocation2 + $0x30] sm:$0xff]
      %v585 = vld [vmem:[#allocation2 + $0x38] sm:$0xff]
      %v586 = vmax.f32 %v578, %v570
      %v587 = vmax.f32 %v579, %v571
      %v588 = vmax.f32 %v580, %v572
      %v589 = vmax.f32 %v581, %v573
      %v590 = vmax.f32 %v582, %v574
      %v591 = vmax.f32 %v583, %v575
      %v592 = vmax.f32 %v584, %v576
      %v593 = vmax.f32 %v585, %v577
      %594 = vst.msk [vmem:[#allocation2] sm:$0xff] %vm476, %v586
      %595 = vst.msk [vmem:[#allocation2 + $0x8] sm:$0xff] %vm476, %v587
      %596 = vst.msk [vmem:[#allocation2 + $0x10] sm:$0xff] %vm476, %v588
      %597 = vst.msk [vmem:[#allocation2 + $0x18] sm:$0xff] %vm476, %v589
      %598 = vst.msk [vmem:[#allocation2 + $0x20] sm:$0xff] %vm476, %v590
      %599 = vst.msk [vmem:[#allocation2 + $0x28] sm:$0xff] %vm476, %v591
      %600 = vst.msk [vmem:[#allocation2 + $0x30] sm:$0xff] %vm476, %v592
      %601 = vst.msk [vmem:[#allocation2 + $0x38] sm:$0xff] %vm476, %v593
      %p602 = scmp.eq.s32.totalorder %s20, 7
      // Predicated region
      $region41: #{generator_forward.7} parent=35 // pred_check
        %p603 = pneg %p602
      $region42: #{generator_forward.7} parent=35 // pred_check_branch
        %605 = sbr.rel (%p603) target = $region44
      $region43: #{generator_forward.7} parent=35 // pred_region
        %v606 = vld [vmem:[#allocation2] sm:$0xff]
        %v607 = vld [vmem:[#allocation2 + $0x8] sm:$0xff]
        %v608 = vld [vmem:[#allocation2 + $0x10] sm:$0xff]
        %v609 = vld [vmem:[#allocation2 + $0x18] sm:$0xff]
        %v610 = vld [vmem:[#allocation2 + $0x20] sm:$0xff]
        %v611 = vld [vmem:[#allocation2 + $0x28] sm:$0xff]
        %v612 = vld [vmem:[#allocation2 + $0x30] sm:$0xff]
        %v613 = vld [vmem:[#allocation2 + $0x38] sm:$0xff]
        %614 = vst.msk [vmem:[%s247] sm:$0xff] %vm476, %v606
        %615 = vst.msk [vmem:[%s247 + $0x8] sm:$0xff] %vm476, %v607
        %616 = vst.msk [vmem:[%s247 + $0x10] sm:$0xff] %vm476, %v608
        %617 = vst.msk [vmem:[%s247 + $0x18] sm:$0xff] %vm476, %v609
        %618 = vst.msk [vmem:[%s247 + $0x20] sm:$0xff] %vm476, %v610
        %619 = vst.msk [vmem:[%s247 + $0x28] sm:$0xff] %vm476, %v611
        %620 = vst.msk [vmem:[%s247 + $0x30] sm:$0xff] %vm476, %v612
        %621 = vst.msk [vmem:[%s247 + $0x38] sm:$0xff] %vm476, %v613
      $region44: #{generator_forward.7} parent=35 // pred_fallthru
        _
      %s622 = smul.u32 8, %s19
      %p623 = scmp.lt.s32.totalorder %s622, 15
      %s624 = scalar_select %p623, %s622, 15
      %s625 = smul.addr %s624, 8
      %s626 = scalar_lea.vmem %s4, %s625
      // Predicated region
      $region45: #{generator_forward.7} parent=35 // pred_check
        %p627 = pneg %p141
      $region46: #{generator_forward.7} parent=35 // pred_check_branch
        %629 = sbr.rel (%p627) target = $region48
      $region47: #{generator_forward.7} parent=35 // pred_region
        %s630 = smul.u32 8, %s19
      $region48: #{generator_forward.7} parent=35 // pred_fallthru
        _
    $region36: #{generator_forward.7} parent=5 // pred_fallthru
      _
    %p631 = scmp.le.s32.totalorder 2, %s10
    // Predicated region
    $region49: #{generator_forward.7} parent=5 // pred_check
      %p632 = pneg %p631
    $region50: #{generator_forward.7} parent=5 // pred_check_branch
      %634 = sbr.rel (%p632) target = $region52
    $region51: #{generator_forward.7} parent=5 // pred_region
      %s635 = ssub.s32 %s10, 2
      // Predicated region
      $region53: #{generator_forward.7} parent=51 // pred_check
        %p636 = pneg %p147
      $region54: #{generator_forward.7} parent=51 // pred_check_branch
        %638 = sbr.rel (%p636) target = $region56
      $region55: #{generator_forward.7} parent=51 // pred_region
        %s639 = smul.u32 8, %s21
        %p640 = scmp.lt.s32.totalorder %s639, 15
        %s641 = scalar_select %p640, %s639, 15
        %s642 = smul.addr %s641, 8
        %s643 = scalar_lea.vmem %s4, %s642
      $region56: #{generator_forward.7} parent=51 // pred_fallthru
        _
    $region52: #{generator_forward.7} parent=5 // pred_fallthru
      _
  $region6: #{generator_forward.7} parent=0 // loop_footer
    %s14 = sadd.s32 1, %s10
  $region7: #{generator_forward.7} parent=0 // loop_footer_branch
    %9 = sbr.rel target = $region3
  $region8: #{generator_forward.7} parent=0 // loop_exit
    _

// kernel: generator_forward.8
$region0: #{generator_forward.8}
  #allocation0 [shape = 'u32[]', space=smem, size = 0x4, offset = 0x4, fixed_abs, tag = 'smem constant byte address 0x4 - core index']
  #allocation1 [shape = 'u32[144,128]{1,0:T(1,128)}', space=vmem, size = 0x12000, scoped, tag = 'internal scratch']
  #allocation2 [shape = 'f32[64,128]{1,0:T(8,128)}', space=vmem, size = 0x8000, scoped, tag = 'scratch operand']
  #allocation3 [shape = 'f32[64,128]{1,0:T(8,128)}', space=vmem, size = 0x8000, scoped, tag = 'scratch operand']
  %s0 = inlined_call_operand.vmem [shape: bf16[8,128,64], index: 0, kind: input, shape index: {}]
  %s1 = inlined_call_operand.vmem [shape: bf16[128,64], index: 1, kind: input, shape index: {}]
  %s2 = inlined_call_operand.vmem [shape: bf16[64,128], index: 2, kind: input, shape index: {}]
  %s3 = inlined_call_operand.vmem [shape: bf16[64,128], index: 3, kind: input, shape index: {}]
  %s4 = inlined_call_operand.vmem [shape: f32[128,128], index: 4, kind: output, shape index: {}]
  %s5 = sld [smem:[#allocation0]]
  $region57: #{generator_forward.8} parent=0
    _
  %s7 = ssub.s32 1, %s5
  %s8 = scalar_select 0, %s7, %s5
  loop: start=0, step=1, limit=18
  $region2: #{generator_forward.8} parent=0 // loop_pre_header
    _
  $region3: #{generator_forward.8} parent=0 // loop_header
    %s10 = sphi 0, %s14
    %p11 = scmp.ge.s32.totalorder %s10, 18
    %s17 = sphi 0, %s29
    %s18 = sphi 0, %s25
    %s19 = sphi 0, %s17
    %s20 = sphi 0, %s18
    %s21 = sphi 0, %s19
    %s22 = sphi 0, %s20
    %s34 = sphi 0, %s36
    %s37 = sphi 0, %s34
    %s38 = sphi 0, %s37
    %s54 = sphi 0, %s38
    %s60 = sphi 0, %s62
    %s63 = sphi 0, %s60
    %s64 = sphi 0, %s63
    %s80 = sphi 0, %s64
    %s84 = sphi 0, %s84
    %s86 = sphi 0, %s84
    %s87 = sphi 0, %s86
    %s101 = sphi 0, %s87
    %s105 = sphi 0, %s105
    %s107 = sphi 0, %s105
    %s108 = sphi 0, %s107
    %s122 = sphi 0, %s108
    %s128 = sphi 0, %s130
    %s131 = sphi 0, %s128
    %s132 = sphi 0, %s131
    %s148 = sphi 0, %s132
  $region4: #{generator_forward.8} parent=0 // loop_header_branch
    %13 = sbr.rel (%p11) target = $region8
  $region5: #{generator_forward.8} parent=0 // loop_body
    %s15 = ssub.s32 %s10, 1
    %s16 = ssub.s32 %s10, 2
    %s23 = sadd.s32 1, %s18
    %p24 = scmp.ge.s32.totalorder %s23, 8
    %s25 = scalar_select %p24, 0, %s23
    %s26 = sadd.s32 1, %s17
    %s27 = scalar_select %p24, %s26, %s17
    %p28 = scmp.ge.s32.totalorder %s27, 2
    %s29 = scalar_select %p28, 0, %s27
    %s30 = ssub.s32 %s18, %s25
    %s31 = ssub.s32 %s17, %s29
    %s32 = sor.u32 %s30, %s31
    %p33 = scmp.eq.s32.totalorder %s32, 0
    %s35 = sadd.s32 %s34, 1
    %s36 = scalar_select %p33, %s34, %s35
    %p39 = pneg %p33
    %p40 = scmp.eq.s32.totalorder %s10, 15
    %p41 = por %p39, %p40
    %p42 = scmp.ne.s32.totalorder %s34, %s37
    %p43 = scmp.eq.s32.totalorder %s10, 0
    %p44 = por %p42, %p43
    %p45 = scmp.ne.s32.totalorder %s34, %s37
    %p46 = scmp.eq.s32.totalorder %s15, 15
    %p47 = por %p45, %p46
    %p48 = scmp.ne.s32.totalorder %s37, %s38
    %p49 = scmp.eq.s32.totalorder %s15, 0
    %p50 = por %p48, %p49
    %p51 = scmp.ne.s32.totalorder %s37, %s38
    %p52 = scmp.eq.s32.totalorder %s16, 15
    %p53 = por %p51, %p52
    %p55 = scmp.ne.s32.totalorder %s38, %s54
    %p56 = scmp.eq.s32.totalorder %s16, 0
    %p57 = por %p55, %p56
    %s58 = ssub.s32 %s17, %s29
    %p59 = scmp.eq.s32.totalorder %s58, 0
    %s61 = sadd.s32 %s60, 1
    %s62 = scalar_select %p59, %s60, %s61
    %p65 = pneg %p59
    %p66 = scmp.eq.s32.totalorder %s10, 15
    %p67 = por %p65, %p66
    %p68 = scmp.ne.s32.totalorder %s60, %s63
    %p69 = scmp.eq.s32.totalorder %s10, 0
    %p70 = por %p68, %p69
    %p71 = scmp.ne.s32.totalorder %s60, %s63
    %p72 = scmp.eq.s32.totalorder %s15, 15
    %p73 = por %p71, %p72
    %p74 = scmp.ne.s32.totalorder %s63, %s64
    %p75 = scmp.eq.s32.totalorder %s15, 0
    %p76 = por %p74, %p75
    %p77 = scmp.ne.s32.totalorder %s63, %s64
    %p78 = scmp.eq.s32.totalorder %s16, 15
    %p79 = por %p77, %p78
    %p81 = scmp.ne.s32.totalorder %s64, %s80
    %p82 = scmp.eq.s32.totalorder %s16, 0
    %p83 = por %p81, %p82
    %s85 = sadd.s32 %s84, 1
    %p88 = scmp.eq.s32.totalorder %s10, 15
    %p89 = scmp.ne.s32.totalorder %s84, %s86
    %p90 = scmp.eq.s32.totalorder %s10, 0
    %p91 = por %p89, %p90
    %p92 = scmp.ne.s32.totalorder %s84, %s86
    %p93 = scmp.eq.s32.totalorder %s15, 15
    %p94 = por %p92, %p93
    %p95 = scmp.ne.s32.totalorder %s86, %s87
    %p96 = scmp.eq.s32.totalorder %s15, 0
    %p97 = por %p95, %p96
    %p98 = scmp.ne.s32.totalorder %s86, %s87
    %p99 = scmp.eq.s32.totalorder %s16, 15
    %p100 = por %p98, %p99
    %p102 = scmp.ne.s32.totalorder %s87, %s101
    %p103 = scmp.eq.s32.totalorder %s16, 0
    %p104 = por %p102, %p103
    %s106 = sadd.s32 %s105, 1
    %p109 = scmp.eq.s32.totalorder %s10, 15
    %p110 = scmp.ne.s32.totalorder %s105, %s107
    %p111 = scmp.eq.s32.totalorder %s10, 0
    %p112 = por %p110, %p111
    %p113 = scmp.ne.s32.totalorder %s105, %s107
    %p114 = scmp.eq.s32.totalorder %s15, 15
    %p115 = por %p113, %p114
    %p116 = scmp.ne.s32.totalorder %s107, %s108
    %p117 = scmp.eq.s32.totalorder %s15, 0
    %p118 = por %p116, %p117
    %p119 = scmp.ne.s32.totalorder %s107, %s108
    %p120 = scmp.eq.s32.totalorder %s16, 15
    %p121 = por %p119, %p120
    %p123 = scmp.ne.s32.totalorder %s108, %s122
    %p124 = scmp.eq.s32.totalorder %s16, 0
    %p125 = por %p123, %p124
    %s126 = ssub.s32 %s17, %s29
    %p127 = scmp.eq.s32.totalorder %s126, 0
    %s129 = sadd.s32 %s128, 1
    %s130 = scalar_select %p127, %s128, %s129
    %p133 = pneg %p127
    %p134 = scmp.eq.s32.totalorder %s10, 15
    %p135 = por %p133, %p134
    %p136 = scmp.ne.s32.totalorder %s128, %s131
    %p137 = scmp.eq.s32.totalorder %s10, 0
    %p138 = por %p136, %p137
    %p139 = scmp.ne.s32.totalorder %s128, %s131
    %p140 = scmp.eq.s32.totalorder %s15, 15
    %p141 = por %p139, %p140
    %p142 = scmp.ne.s32.totalorder %s131, %s132
    %p143 = scmp.eq.s32.totalorder %s15, 0
    %p144 = por %p142, %p143
    %p145 = scmp.ne.s32.totalorder %s131, %s132
    %p146 = scmp.eq.s32.totalorder %s16, 15
    %p147 = por %p145, %p146
    %p149 = scmp.ne.s32.totalorder %s132, %s148
    %p150 = scmp.eq.s32.totalorder %s16, 0
    %p151 = por %p149, %p150
    %p152 = scmp.le.s32.totalorder 1, %s10
    %p153 = scmp.lt.s32.totalorder %s10, 17
    %p154 = pnand %p152, %p153
    %p155 = pneg %p154
    // Predicated region
    $region9: #{generator_forward.8} parent=5 // pred_check
      _
    $region10: #{generator_forward.8} parent=5 // pred_check_branch
      %157 = sbr.rel (%p154) target = $region12
    $region11: #{generator_forward.8} parent=5 // pred_region
      %s158 = ssub.s32 %s10, 1
      // Predicated region
      $region13: #{generator_forward.8} parent=11 // pred_check
        %p159 = pneg %p97
      $region14: #{generator_forward.8} parent=11 // pred_check_branch
        %161 = sbr.rel (%p159) target = $region16
      $region15: #{generator_forward.8} parent=11 // pred_region
        _
      $region16: #{generator_forward.8} parent=11 // pred_fallthru
        _
      // Predicated region
      $region17: #{generator_forward.8} parent=11 // pred_check
        %p162 = pneg %p118
      $region18: #{generator_forward.8} parent=11 // pred_check_branch
        %164 = sbr.rel (%p162) target = $region20
      $region19: #{generator_forward.8} parent=11 // pred_region
        _
      $region20: #{generator_forward.8} parent=11 // pred_fallthru
        _
    $region12: #{generator_forward.8} parent=5 // pred_fallthru
      _
    %p165 = scmp.lt.s32.totalorder %s10, 16
    // Predicated region
    $region21: #{generator_forward.8} parent=5 // pred_check
      %p166 = pneg %p165
    $region22: #{generator_forward.8} parent=5 // pred_check_branch
      %168 = sbr.rel (%p166) target = $region24
    $region23: #{generator_forward.8} parent=5 // pred_region
      // Predicated region
      $region25: #{generator_forward.8} parent=23 // pred_check
        %p169 = pneg %p44
      $region26: #{generator_forward.8} parent=23 // pred_check_branch
        %171 = sbr.rel (%p169) target = $region28
      $region27: #{generator_forward.8} parent=23 // pred_region
        %s172 = smul.u32 8, %s17
        %p173 = scmp.lt.s32.totalorder %s18, 7
        %s174 = scalar_select %p173, %s18, 7
        %p175 = scmp.lt.s32.totalorder %s172, 15
        %s176 = scalar_select %p175, %s172, 15
        %s177 = smul.addr %s174, 16
        %s178 = sadd.s32 %s176, %s177
        %s179 = smul.addr %s178, 4
        %s180 = scalar_lea.vmem %s0, %s179
        %s181 = smul.u32 8, %s17
      $region28: #{generator_forward.8} parent=23 // pred_fallthru
        _
      // Predicated region
      $region29: #{generator_forward.8} parent=23 // pred_check
        %p182 = pneg %p70
      $region30: #{generator_forward.8} parent=23 // pred_check_branch
        %184 = sbr.rel (%p182) target = $region32
      $region31: #{generator_forward.8} parent=23 // pred_region
        %s185 = smul.u32 8, %s17
        %p186 = scmp.lt.s32.totalorder %s185, 15
        %s187 = scalar_select %p186, %s185, 15
        %s188 = smul.addr %s187, 4
        %s189 = scalar_lea.vmem %s1, %s188
        %s190 = smul.u32 8, %s17
      $region32: #{generator_forward.8} parent=23 // pred_fallthru
        _
    $region24: #{generator_forward.8} parent=5 // pred_fallthru
      _
    %p191 = scmp.le.s32.totalorder 1, %s10
    %p192 = scmp.lt.s32.totalorder %s10, 17
    %p193 = pnand %p191, %p192
    %p194 = pneg %p193
    // Predicated region
    $region33: #{generator_forward.8} parent=5 // pred_check
      _
    $region34: #{generator_forward.8} parent=5 // pred_check_branch
      %196 = sbr.rel (%p193) target = $region36
    $region35: #{generator_forward.8} parent=5 // pred_region
      %s197 = ssub.s32 %s10, 1
      %s198 = smul.u32 8, %s19
      %p199 = scmp.lt.s32.totalorder %s20, 7
      %s200 = scalar_select %p199, %s20, 7
      %p201 = scmp.lt.s32.totalorder %s198, 15
      %s202 = scalar_select %p201, %s198, 15
      %s203 = smul.addr %s200, 16
      %s204 = sadd.s32 %s202, %s203
      %s205 = smul.addr %s204, 4
      %s206 = scalar_lea.vmem %s0, %s205
      %p207 = pneg %p50
      %p208 = pneg %p47
      %s209 = smul.u32 8, %s19
      %p210 = scmp.lt.s32.totalorder %s209, 15
      %s211 = scalar_select %p210, %s209, 15
      %s212 = smul.addr %s211, 4
      %s213 = scalar_lea.vmem %s1, %s212
      %p214 = pneg %p76
      %p215 = pneg %p73
      %p216 = pneg %p97
      %p217 = pneg %p94
      %p218 = pneg %p118
      %p219 = pneg %p115
      %p220 = pneg %p144
      %p221 = pneg %p141
      %s222 = smul.u32 8, %s19
      %p223 = scmp.lt.s32.totalorder %s222, 15
      %s224 = scalar_select %p223, %s222, 15
      %s225 = smul.addr %s224, 8
      %s226 = scalar_lea.vmem %s4, %s225
      %s227 = smul.u32 8, %s19
      %p228 = scmp.lt.s32.totalorder %s20, 7
      %s229 = scalar_select %p228, %s20, 7
      %p230 = scmp.lt.s32.totalorder %s227, 15
      %s231 = scalar_select %p230, %s227, 15
      %s232 = smul.addr %s229, 16
      %s233 = sadd.s32 %s231, %s232
      %s234 = smul.addr %s233, 4
      %s235 = scalar_lea.vmem %s0, %s234
      %s236 = smul.u32 8, %s19
      %s237 = smul.u32 8, %s19
      %p238 = scmp.lt.s32.totalorder %s237, 15
      %s239 = scalar_select %p238, %s237, 15
      %s240 = smul.addr %s239, 4
      %s241 = scalar_lea.vmem %s1, %s240
      %s242 = smul.u32 8, %s19
      %s243 = smul.u32 8, %s19
      %p244 = scmp.lt.s32.totalorder %s243, 15
      %s245 = scalar_select %p244, %s243, 15
      %s246 = smul.addr %s245, 8
      %s247 = scalar_lea.vmem %s4, %s246
      %s248 = smul.u32 8, %s19
      %p250 = scmp.eq.s32.totalorder %s20, 0
      // Predicated region
      $region37: #{generator_forward.8} parent=35 // pred_check
        %p251 = pneg %p250
      $region38: #{generator_forward.8} parent=35 // pred_check_branch
        %253 = sbr.rel (%p251) target = $region40
      $region39: #{generator_forward.8} parent=35 // pred_region
        %v254 = vld [vmem:[%s241] sm:$0xf]
        %v255 = vld [vmem:[%s241 + $0x4] sm:$0xf]
        %v256 = vld [vmem:[%s241 + $0x8] sm:$0xf]
        %v257 = vld [vmem:[%s241 + $0xc] sm:$0xf]
        %v258 = vld [vmem:[%s241 + $0x10] sm:$0xf]
        %v259 = vld [vmem:[%s241 + $0x14] sm:$0xf]
        %v260 = vld [vmem:[%s241 + $0x18] sm:$0xf]
        %v261 = vld [vmem:[%s241 + $0x1c] sm:$0xf]
        %v262 = vld [vmem:[%s3] sm:$0xf]
        %v263 = vld [vmem:[%s3 + $0x4] sm:$0xf]
        %v264 = vld [vmem:[%s3 + $0x8] sm:$0xf]
        %v265 = vld [vmem:[%s3 + $0xc] sm:$0xf]
        %v266 = vld [vmem:[%s3 + $0x10] sm:$0xf]
        %v267 = vld [vmem:[%s3 + $0x14] sm:$0xf]
        %v268 = vld [vmem:[%s3 + $0x18] sm:$0xf]
        %v269 = vld [vmem:[%s3 + $0x1c] sm:$0xf]
        %v278 = vunpack.c.l.b16 %v254
        %v279 = vunpack.c.l.b16 %v255
        %v280 = vunpack.c.l.b16 %v256
        %v281 = vunpack.c.l.b16 %v257
        %v282 = vunpack.c.l.b16 %v258
        %v283 = vunpack.c.l.b16 %v259
        %v284 = vunpack.c.l.b16 %v260
        %v285 = vunpack.c.l.b16 %v261
        %v286 = vpack.c.b16 %v279, %v278
        %v287 = vpack.c.b16 %v281, %v280
        %v288 = vpack.c.b16 %v283, %v282
        %v289 = vpack.c.b16 %v285, %v284
        %v298 = vunpack.c.l.b16 %v262
        %v299 = vunpack.c.l.b16 %v263
        %v300 = vunpack.c.l.b16 %v264
        %v301 = vunpack.c.l.b16 %v265
        %v302 = vunpack.c.l.b16 %v266
        %v303 = vunpack.c.l.b16 %v267
        %v304 = vunpack.c.l.b16 %v268
        %v305 = vunpack.c.l.b16 %v269
        %v306 = vpack.c.b16 %v299, %v298
        %v307 = vpack.c.b16 %v301, %v300
        %v308 = vpack.c.b16 %v303, %v302
        %v309 = vpack.c.b16 %v305, %v304
        %vm314 = vcmask 523264
        %v316 = vsel %vm314, %v286, 0
        %v319 = vsel %vm314, %v287, 0
        %v322 = vsel %vm314, %v288, 0
        %v325 = vsel %vm314, %v289, 0
        %327 = vmatprep.subr.bf16.mxu0 0
        %328 = vmatpush1.bf16.msra.mxu0 %v306
        %329 = vmatprep.subr.bf16.mxu0 0
        %330 = vmatpush1.bf16.msra.mxu0 %v307
        %331 = vmatprep.subr.bf16.mxu0 0
        %332 = vmatpush1.bf16.msra.mxu0 %v308
        %333 = vmatprep.subr.bf16.mxu0 0
        %334 = vmatpush1.bf16.msra.mxu0 %v309
        %335 = vmatprep.subr.bf16.mxu0 0
        %336 = vmatpush1.bf16.msra.mxu0 0
        %337 = vmatprep.subr.bf16.mxu0 0
        %338 = vmatpush1.bf16.msra.mxu0 0
        %339 = vmatprep.subr.bf16.mxu0 0
        %340 = vmatpush1.bf16.msra.mxu0 0
        %341 = vmatprep.subr.bf16.mxu0 0
        %342 = vmatpush1.bf16.msra.mxu0 0
        %343 = vmatprep.subr.bf16.mxu0 0
        %344 = vmatpush1.bf16.msra.mxu0 0
        %345 = vmatprep.subr.bf16.mxu0 0
        %346 = vmatpush1.bf16.msra.mxu0 0
        %347 = vmatprep.subr.bf16.mxu0 0
        %348 = vmatpush1.bf16.msra.mxu0 0
        %349 = vmatprep.subr.bf16.mxu0 0
        %350 = vmatpush1.bf16.msra.mxu0 0
        %351 = vmatprep.subr.bf16.mxu0 0
        %352 = vmatpush1.bf16.msra.mxu0 0
        %353 = vmatprep.subr.bf16.mxu0 0
        %354 = vmatpush1.bf16.msra.mxu0 0
        %355 = vmatprep.subr.bf16.mxu0 0
        %356 = vmatpush1.bf16.msra.mxu0 0
        %357 = vmatprep.subr.bf16.mxu0 0
        %358 = vmatpush1.bf16.msra.mxu0 0
        %359 = vmatprep.mubr.bf16.mxu0 0
        %360 = vmatmul.mubr.bf16.gmra.mrb[0].mxu0 %v316
        %v361 = vpop.f32.mrb[0].mxu0
        %v362 = vadd.f32 0.0, %v361
        %v363 = vpop.f32.mrb[0].mxu0
        %v364 = vpop.f32.mrb[0].mxu0
        %v365 = vadd.f32 0.0, %v364
        %v366 = vpop.f32.mrb[0].mxu0
        %367 = vmatprep.mubr.bf16.mxu0 0
        %368 = vmatmul.mubr.bf16.gmra.mrb[0].mxu0 %v319
        %v369 = vpop.f32.mrb[0].mxu0
        %v370 = vadd.f32 0.0, %v369
        %v371 = vpop.f32.mrb[0].mxu0
        %v372 = vpop.f32.mrb[0].mxu0
        %v373 = vadd.f32 0.0, %v372
        %v374 = vpop.f32.mrb[0].mxu0
        %375 = vmatprep.mubr.bf16.mxu0 0
        %376 = vmatmul.mubr.bf16.gmra.mrb[0].mxu0 %v322
        %v377 = vpop.f32.mrb[0].mxu0
        %v378 = vadd.f32 0.0, %v377
        %v379 = vpop.f32.mrb[0].mxu0
        %v380 = vpop.f32.mrb[0].mxu0
        %v381 = vadd.f32 0.0, %v380
        %v382 = vpop.f32.mrb[0].mxu0
        %383 = vmatprep.mubr.bf16.mxu0 0
        %384 = vmatmul.mubr.bf16.gmra.mrb[0].mxu0 %v325
        %v385 = vpop.f32.mrb[0].mxu0
        %v386 = vadd.f32 0.0, %v385
        %v387 = vpop.f32.mrb[0].mxu0
        %v388 = vpop.f32.mrb[0].mxu0
        %v389 = vadd.f32 0.0, %v388
        %v390 = vpop.f32.mrb[0].mxu0
        %391 = vdwg.mxu0
        %392 = vst [vmem:[#allocation3] sm:$0xff] %v362
        %393 = vst [vmem:[#allocation3 + $0x8] sm:$0xff] %v365
        %394 = vst [vmem:[#allocation3 + $0x10] sm:$0xff] %v370
        %395 = vst [vmem:[#allocation3 + $0x18] sm:$0xff] %v373
        %396 = vst [vmem:[#allocation3 + $0x20] sm:$0xff] %v378
        %397 = vst [vmem:[#allocation3 + $0x28] sm:$0xff] %v381
        %398 = vst [vmem:[#allocation3 + $0x30] sm:$0xff] %v386
        %399 = vst [vmem:[#allocation3 + $0x38] sm:$0xff] %v389
        %400 = vst [vmem:[#allocation2] sm:$0xff] -inf
        %401 = vst [vmem:[#allocation2 + $0x8] sm:$0xff] -inf
        %402 = vst [vmem:[#allocation2 + $0x10] sm:$0xff] -inf
        %403 = vst [vmem:[#allocation2 + $0x18] sm:$0xff] -inf
        %404 = vst [vmem:[#allocation2 + $0x20] sm:$0xff] -inf
        %405 = vst [vmem:[#allocation2 + $0x28] sm:$0xff] -inf
        %406 = vst [vmem:[#allocation2 + $0x30] sm:$0xff] -inf
        %407 = vst [vmem:[#allocation2 + $0x38] sm:$0xff] -inf
      $region40: #{generator_forward.8} parent=35 // pred_fallthru
        _
      %v408 = vld [vmem:[%s235] sm:$0xf]
      %v409 = vld [vmem:[%s235 + $0x4] sm:$0xf]
      %v410 = vld [vmem:[%s235 + $0x8] sm:$0xf]
      %v411 = vld [vmem:[%s235 + $0xc] sm:$0xf]
      %v412 = vld [vmem:[%s235 + $0x10] sm:$0xf]
      %v413 = vld [vmem:[%s235 + $0x14] sm:$0xf]
      %v414 = vld [vmem:[%s235 + $0x18] sm:$0xf]
      %v415 = vld [vmem:[%s235 + $0x1c] sm:$0xf]
      %v416 = vld [vmem:[%s2] sm:$0xf]
      %v417 = vld [vmem:[%s2 + $0x4] sm:$0xf]
      %v418 = vld [vmem:[%s2 + $0x8] sm:$0xf]
      %v419 = vld [vmem:[%s2 + $0xc] sm:$0xf]
      %v420 = vld [vmem:[%s2 + $0x10] sm:$0xf]
      %v421 = vld [vmem:[%s2 + $0x14] sm:$0xf]
      %v422 = vld [vmem:[%s2 + $0x18] sm:$0xf]
      %v423 = vld [vmem:[%s2 + $0x1c] sm:$0xf]
      %v424 = vld [vmem:[#allocation3] sm:$0xff]
      %v425 = vld [vmem:[#allocation3 + $0x8] sm:$0xff]
      %v426 = vld [vmem:[#allocation3 + $0x10] sm:$0xff]
      %v427 = vld [vmem:[#allocation3 + $0x18] sm:$0xff]
      %v428 = vld [vmem:[#allocation3 + $0x20] sm:$0xff]
      %v429 = vld [vmem:[#allocation3 + $0x28] sm:$0xff]
      %v430 = vld [vmem:[#allocation3 + $0x30] sm:$0xff]
      %v431 = vld [vmem:[#allocation3 + $0x38] sm:$0xff]
      %v440 = vunpack.c.l.b16 %v408
      %v441 = vunpack.c.l.b16 %v409
      %v442 = vunpack.c.l.b16 %v410
      %v443 = vunpack.c.l.b16 %v411
      %v444 = vunpack.c.l.b16 %v412
      %v445 = vunpack.c.l.b16 %v413
      %v446 = vunpack.c.l.b16 %v414
      %v447 = vunpack.c.l.b16 %v415
      %v448 = vpack.c.b16 %v441, %v440
      %v449 = vpack.c.b16 %v443, %v442
      %v450 = vpack.c.b16 %v445, %v444
      %v451 = vpack.c.b16 %v447, %v446
      %v460 = vunpack.c.l.b16 %v416
      %v461 = vunpack.c.l.b16 %v417
      %v462 = vunpack.c.l.b16 %v418
      %v463 = vunpack.c.l.b16 %v419
      %v464 = vunpack.c.l.b16 %v420
      %v465 = vunpack.c.l.b16 %v421
      %v466 = vunpack.c.l.b16 %v422
      %v467 = vunpack.c.l.b16 %v423
      %v468 = vpack.c.b16 %v461, %v460
      %v469 = vpack.c.b16 %v463, %v462
      %v470 = vpack.c.b16 %v465, %v464
      %v471 = vpack.c.b16 %v467, %v466
      %vm476 = vcmask 523264
      %v478 = vsel %vm476, %v448, 0
      %v481 = vsel %vm476, %v449, 0
      %v484 = vsel %vm476, %v450, 0
      %v487 = vsel %vm476, %v451, 0
      %489 = vmatprep.subr.bf16.mxu0 0
      %490 = vmatpush1.bf16.msra.mxu0 %v468
      %491 = vmatprep.subr.bf16.mxu0 0
      %492 = vmatpush1.bf16.msra.mxu0 %v469
      %493 = vmatprep.subr.bf16.mxu0 0
      %494 = vmatpush1.bf16.msra.mxu0 %v470
      %495 = vmatprep.subr.bf16.mxu0 0
      %496 = vmatpush1.bf16.msra.mxu0 %v471
      %497 = vmatprep.subr.bf16.mxu0 0
      %498 = vmatpush1.bf16.msra.mxu0 0
      %499 = vmatprep.subr.bf16.mxu0 0
      %500 = vmatpush1.bf16.msra.mxu0 0
      %501 = vmatprep.subr.bf16.mxu0 0
      %502 = vmatpush1.bf16.msra.mxu0 0
      %503 = vmatprep.subr.bf16.mxu0 0
      %504 = vmatpush1.bf16.msra.mxu0 0
      %505 = vmatprep.subr.bf16.mxu0 0
      %506 = vmatpush1.bf16.msra.mxu0 0
      %507 = vmatprep.subr.bf16.mxu0 0
      %508 = vmatpush1.bf16.msra.mxu0 0
      %509 = vmatprep.subr.bf16.mxu0 0
      %510 = vmatpush1.bf16.msra.mxu0 0
      %511 = vmatprep.subr.bf16.mxu0 0
      %512 = vmatpush1.bf16.msra.mxu0 0
      %513 = vmatprep.subr.bf16.mxu0 0
      %514 = vmatpush1.bf16.msra.mxu0 0
      %515 = vmatprep.subr.bf16.mxu0 0
      %516 = vmatpush1.bf16.msra.mxu0 0
      %517 = vmatprep.subr.bf16.mxu0 0
      %518 = vmatpush1.bf16.msra.mxu0 0
      %519 = vmatprep.subr.bf16.mxu0 0
      %520 = vmatpush1.bf16.msra.mxu0 0
      %521 = vmatprep.mubr.bf16.mxu0 0
      %522 = vmatmul.mubr.bf16.gmra.mrb[0].mxu0 %v478
      %v523 = vpop.f32.mrb[0].mxu0
      %v524 = vadd.f32 %v424, %v523
      %v525 = vpop.f32.mrb[0].mxu0
      %v526 = vpop.f32.mrb[0].mxu0
      %v527 = vadd.f32 %v425, %v526
      %v528 = vpop.f32.mrb[0].mxu0
      %529 = vmatprep.mubr.bf16.mxu0 0
      %530 = vmatmul.mubr.bf16.gmra.mrb[0].mxu0 %v481
      %v531 = vpop.f32.mrb[0].mxu0
      %v532 = vadd.f32 %v426, %v531
      %v533 = vpop.f32.mrb[0].mxu0
      %v534 = vpop.f32.mrb[0].mxu0
      %v535 = vadd.f32 %v427, %v534
      %v536 = vpop.f32.mrb[0].mxu0
      %537 = vmatprep.mubr.bf16.mxu0 0
      %538 = vmatmul.mubr.bf16.gmra.mrb[0].mxu0 %v484
      %v539 = vpop.f32.mrb[0].mxu0
      %v540 = vadd.f32 %v428, %v539
      %v541 = vpop.f32.mrb[0].mxu0
      %v542 = vpop.f32.mrb[0].mxu0
      %v543 = vadd.f32 %v429, %v542
      %v544 = vpop.f32.mrb[0].mxu0
      %545 = vmatprep.mubr.bf16.mxu0 0
      %546 = vmatmul.mubr.bf16.gmra.mrb[0].mxu0 %v487
      %v547 = vpop.f32.mrb[0].mxu0
      %v548 = vadd.f32 %v430, %v547
      %v549 = vpop.f32.mrb[0].mxu0
      %v550 = vpop.f32.mrb[0].mxu0
      %v551 = vadd.f32 %v431, %v550
      %v552 = vpop.f32.mrb[0].mxu0
      %553 = vdwg.mxu0
      %vm554 = vcmp.gt.f32.partialorder %v524, 0.0
      %vm555 = vcmp.gt.f32.partialorder %v527, 0.0
      %vm556 = vcmp.gt.f32.partialorder %v532, 0.0
      %vm557 = vcmp.gt.f32.partialorder %v535, 0.0
      %vm558 = vcmp.gt.f32.partialorder %v540, 0.0
      %vm559 = vcmp.gt.f32.partialorder %v543, 0.0
      %vm560 = vcmp.gt.f32.partialorder %v548, 0.0
      %vm561 = vcmp.gt.f32.partialorder %v551, 0.0
      %v562 = vmul.f32 %v524, 0.2
      %v563 = vmul.f32 %v527, 0.2
      %v564 = vmul.f32 %v532, 0.2
      %v565 = vmul.f32 %v535, 0.2
      %v566 = vmul.f32 %v540, 0.2
      %v567 = vmul.f32 %v543, 0.2
      %v568 = vmul.f32 %v548, 0.2
      %v569 = vmul.f32 %v551, 0.2
      %v570 = vsel %vm554, %v524, %v562
      %v571 = vsel %vm555, %v527, %v563
      %v572 = vsel %vm556, %v532, %v564
      %v573 = vsel %vm557, %v535, %v565
      %v574 = vsel %vm558, %v540, %v566
      %v575 = vsel %vm559, %v543, %v567
      %v576 = vsel %vm560, %v548, %v568
      %v577 = vsel %vm561, %v551, %v569
      %v578 = vld [vmem:[#allocation2] sm:$0xff]
      %v579 = vld [vmem:[#allocation2 + $0x8] sm:$0xff]
      %v580 = vld [vmem:[#allocation2 + $0x10] sm:$0xff]
      %v581 = vld [vmem:[#allocation2 + $0x18] sm:$0xff]
      %v582 = vld [vmem:[#allocation2 + $0x20] sm:$0xff]
      %v583 = vld [vmem:[#allocation2 + $0x28] sm:$0xff]
      %v584 = vld [vmem:[#allocation2 + $0x30] sm:$0xff]
      %v585 = vld [vmem:[#allocation2 + $0x38] sm:$0xff]
      %v586 = vmax.f32 %v578, %v570
      %v587 = vmax.f32 %v579, %v571
      %v588 = vmax.f32 %v580, %v572
      %v589 = vmax.f32 %v581, %v573
      %v590 = vmax.f32 %v582, %v574
      %v591 = vmax.f32 %v583, %v575
      %v592 = vmax.f32 %v584, %v576
      %v593 = vmax.f32 %v585, %v577
      %594 = vst [vmem:[#allocation2] sm:$0xff] %v586
      %595 = vst [vmem:[#allocation2 + $0x8] sm:$0xff] %v587
      %596 = vst [vmem:[#allocation2 + $0x10] sm:$0xff] %v588
      %597 = vst [vmem:[#allocation2 + $0x18] sm:$0xff] %v589
      %598 = vst [vmem:[#allocation2 + $0x20] sm:$0xff] %v590
      %599 = vst [vmem:[#allocation2 + $0x28] sm:$0xff] %v591
      %600 = vst [vmem:[#allocation2 + $0x30] sm:$0xff] %v592
      %601 = vst [vmem:[#allocation2 + $0x38] sm:$0xff] %v593
      %p602 = scmp.eq.s32.totalorder %s20, 7
      // Predicated region
      $region41: #{generator_forward.8} parent=35 // pred_check
        %p603 = pneg %p602
      $region42: #{generator_forward.8} parent=35 // pred_check_branch
        %605 = sbr.rel (%p603) target = $region44
      $region43: #{generator_forward.8} parent=35 // pred_region
        %v606 = vld [vmem:[#allocation2] sm:$0xff]
        %v607 = vld [vmem:[#allocation2 + $0x8] sm:$0xff]
        %v608 = vld [vmem:[#allocation2 + $0x10] sm:$0xff]
        %v609 = vld [vmem:[#allocation2 + $0x18] sm:$0xff]
        %v610 = vld [vmem:[#allocation2 + $0x20] sm:$0xff]
        %v611 = vld [vmem:[#allocation2 + $0x28] sm:$0xff]
        %v612 = vld [vmem:[#allocation2 + $0x30] sm:$0xff]
        %v613 = vld [vmem:[#allocation2 + $0x38] sm:$0xff]
        %614 = vst [vmem:[%s247] sm:$0xff] %v606
        %615 = vst [vmem:[%s247 + $0x8] sm:$0xff] %v607
        %616 = vst [vmem:[%s247 + $0x10] sm:$0xff] %v608
        %617 = vst [vmem:[%s247 + $0x18] sm:$0xff] %v609
        %618 = vst [vmem:[%s247 + $0x20] sm:$0xff] %v610
        %619 = vst [vmem:[%s247 + $0x28] sm:$0xff] %v611
        %620 = vst [vmem:[%s247 + $0x30] sm:$0xff] %v612
        %621 = vst [vmem:[%s247 + $0x38] sm:$0xff] %v613
      $region44: #{generator_forward.8} parent=35 // pred_fallthru
        _
      %s622 = smul.u32 8, %s19
      %p623 = scmp.lt.s32.totalorder %s622, 15
      %s624 = scalar_select %p623, %s622, 15
      %s625 = smul.addr %s624, 8
      %s626 = scalar_lea.vmem %s4, %s625
      // Predicated region
      $region45: #{generator_forward.8} parent=35 // pred_check
        %p627 = pneg %p141
      $region46: #{generator_forward.8} parent=35 // pred_check_branch
        %629 = sbr.rel (%p627) target = $region48
      $region47: #{generator_forward.8} parent=35 // pred_region
        %s630 = smul.u32 8, %s19
      $region48: #{generator_forward.8} parent=35 // pred_fallthru
        _
    $region36: #{generator_forward.8} parent=5 // pred_fallthru
      _
    %p631 = scmp.le.s32.totalorder 2, %s10
    // Predicated region
    $region49: #{generator_forward.8} parent=5 // pred_check
      %p632 = pneg %p631
    $region50: #{generator_forward.8} parent=5 // pred_check_branch
      %634 = sbr.rel (%p632) target = $region52
    $region51: #{generator_forward.8} parent=5 // pred_region
      %s635 = ssub.s32 %s10, 2
      // Predicated region
      $region53: #{generator_forward.8} parent=51 // pred_check
        %p636 = pneg %p147
      $region54: #{generator_forward.8} parent=51 // pred_check_branch
        %638 = sbr.rel (%p636) target = $region56
      $region55: #{generator_forward.8} parent=51 // pred_region
        %s639 = smul.u32 8, %s21
        %p640 = scmp.lt.s32.totalorder %s639, 15
        %s641 = scalar_select %p640, %s639, 15
        %s642 = smul.addr %s641, 8
        %s643 = scalar_lea.vmem %s4, %s642
      $region56: #{generator_forward.8} parent=51 // pred_fallthru
        _
    $region52: #{generator_forward.8} parent=5 // pred_fallthru
      _
  $region6: #{generator_forward.8} parent=0 // loop_footer
    %s14 = sadd.s32 1, %s10
  $region7: #{generator_forward.8} parent=0 // loop_footer_branch
    %9 = sbr.rel target = $region3
  $region8: #{generator_forward.8} parent=0 // loop_exit
    _

// kernel: generator_forward.9
$region0: #{generator_forward.9}
  #allocation0 [shape = 'u32[]', space=smem, size = 0x4, offset = 0x4, fixed_abs, tag = 'smem constant byte address 0x4 - core index']
  #allocation1 [shape = 'u32[144,128]{1,0:T(1,128)}', space=vmem, size = 0x12000, scoped, tag = 'internal scratch']
  %s0 = inlined_call_operand.vmem [shape: bf16[2,64,128], index: 0, kind: input, shape index: {}]
  %s1 = inlined_call_operand.vmem [shape: bf16[128,1024], index: 1, kind: input, shape index: {}]
  %s2 = inlined_call_operand.vmem [shape: f32[2,1,1024], index: 2, kind: output, shape index: {}]
  %s3 = sld [smem:[#allocation0]]
  $region45: #{generator_forward.9} parent=0
    _
  %s5 = ssub.s32 1, %s3
  %s6 = scalar_select 0, %s5, %s3
  loop: start=0, step=1, limit=6
  $region2: #{generator_forward.9} parent=0 // loop_pre_header
    _
  $region3: #{generator_forward.9} parent=0 // loop_header
    %s8 = sphi 0, %s12
    %p9 = scmp.ge.s32.totalorder %s8, 6
    %s15 = sphi 0, %s27
    %s16 = sphi 0, %s23
    %s17 = sphi 0, %s15
    %s18 = sphi 0, %s16
    %s19 = sphi 0, %s17
    %s20 = sphi 0, %s18
    %s32 = sphi 0, %s34
    %s35 = sphi 0, %s32
    %s36 = sphi 0, %s35
    %s52 = sphi 0, %s36
    %s56 = sphi 0, %s56
    %s58 = sphi 0, %s56
    %s59 = sphi 0, %s58
    %s73 = sphi 0, %s59
    %s79 = sphi 0, %s81
    %s82 = sphi 0, %s79
    %s83 = sphi 0, %s82
    %s99 = sphi 0, %s83
  $region4: #{generator_forward.9} parent=0 // loop_header_branch
    %11 = sbr.rel (%p9) target = $region8
  $region5: #{generator_forward.9} parent=0 // loop_body
    %s13 = ssub.s32 %s8, 1
    %s14 = ssub.s32 %s8, 2
    %s21 = sadd.s32 1, %s16
    %p22 = scmp.ge.s32.totalorder %s21, 2
    %s23 = scalar_select %p22, 0, %s21
    %s24 = sadd.s32 1, %s15
    %s25 = scalar_select %p22, %s24, %s15
    %p26 = scmp.ge.s32.totalorder %s25, 2
    %s27 = scalar_select %p26, 0, %s25
    %s28 = ssub.s32 %s15, %s27
    %s29 = ssub.s32 %s16, %s23
    %s30 = sor.u32 %s28, %s29
    %p31 = scmp.eq.s32.totalorder %s30, 0
    %s33 = sadd.s32 %s32, 1
    %s34 = scalar_select %p31, %s32, %s33
    %p37 = pneg %p31
    %p38 = scmp.eq.s32.totalorder %s8, 3
    %p39 = por %p37, %p38
    %p40 = scmp.ne.s32.totalorder %s32, %s35
    %p41 = scmp.eq.s32.totalorder %s8, 0
    %p42 = por %p40, %p41
    %p43 = scmp.ne.s32.totalorder %s32, %s35
    %p44 = scmp.eq.s32.totalorder %s13, 3
    %p45 = por %p43, %p44
    %p46 = scmp.ne.s32.totalorder %s35, %s36
    %p47 = scmp.eq.s32.totalorder %s13, 0
    %p48 = por %p46, %p47
    %p49 = scmp.ne.s32.totalorder %s35, %s36
    %p50 = scmp.eq.s32.totalorder %s14, 3
    %p51 = por %p49, %p50
    %p53 = scmp.ne.s32.totalorder %s36, %s52
    %p54 = scmp.eq.s32.totalorder %s14, 0
    %p55 = por %p53, %p54
    %s57 = sadd.s32 %s56, 1
    %p60 = scmp.eq.s32.totalorder %s8, 3
    %p61 = scmp.ne.s32.totalorder %s56, %s58
    %p62 = scmp.eq.s32.totalorder %s8, 0
    %p63 = por %p61, %p62
    %p64 = scmp.ne.s32.totalorder %s56, %s58
    %p65 = scmp.eq.s32.totalorder %s13, 3
    %p66 = por %p64, %p65
    %p67 = scmp.ne.s32.totalorder %s58, %s59
    %p68 = scmp.eq.s32.totalorder %s13, 0
    %p69 = por %p67, %p68
    %p70 = scmp.ne.s32.totalorder %s58, %s59
    %p71 = scmp.eq.s32.totalorder %s14, 3
    %p72 = por %p70, %p71
    %p74 = scmp.ne.s32.totalorder %s59, %s73
    %p75 = scmp.eq.s32.totalorder %s14, 0
    %p76 = por %p74, %p75
    %s77 = ssub.s32 %s15, %s27
    %p78 = scmp.eq.s32.totalorder %s77, 0
    %s80 = sadd.s32 %s79, 1
    %s81 = scalar_select %p78, %s79, %s80
    %p84 = pneg %p78
    %p85 = scmp.eq.s32.totalorder %s8, 3
    %p86 = por %p84, %p85
    %p87 = scmp.ne.s32.totalorder %s79, %s82
    %p88 = scmp.eq.s32.totalorder %s8, 0
    %p89 = por %p87, %p88
    %p90 = scmp.ne.s32.totalorder %s79, %s82
    %p91 = scmp.eq.s32.totalorder %s13, 3
    %p92 = por %p90, %p91
    %p93 = scmp.ne.s32.totalorder %s82, %s83
    %p94 = scmp.eq.s32.totalorder %s13, 0
    %p95 = por %p93, %p94
    %p96 = scmp.ne.s32.totalorder %s82, %s83
    %p97 = scmp.eq.s32.totalorder %s14, 3
    %p98 = por %p96, %p97
    %p100 = scmp.ne.s32.totalorder %s83, %s99
    %p101 = scmp.eq.s32.totalorder %s14, 0
    %p102 = por %p100, %p101
    %p103 = scmp.le.s32.totalorder 1, %s8
    %p104 = scmp.lt.s32.totalorder %s8, 5
    %p105 = pnand %p103, %p104
    %p106 = pneg %p105
    // Predicated region
    $region9: #{generator_forward.9} parent=5 // pred_check
      _
    $region10: #{generator_forward.9} parent=5 // pred_check_branch
      %108 = sbr.rel (%p105) target = $region12
    $region11: #{generator_forward.9} parent=5 // pred_region
      %s109 = ssub.s32 %s8, 1
      // Predicated region
      $region13: #{generator_forward.9} parent=11 // pred_check
        %p110 = pneg %p69
      $region14: #{generator_forward.9} parent=11 // pred_check_branch
        %112 = sbr.rel (%p110) target = $region16
      $region15: #{generator_forward.9} parent=11 // pred_region
        _
      $region16: #{generator_forward.9} parent=11 // pred_fallthru
        _
    $region12: #{generator_forward.9} parent=5 // pred_fallthru
      _
    %p113 = scmp.lt.s32.totalorder %s8, 4
    // Predicated region
    $region17: #{generator_forward.9} parent=5 // pred_check
      %p114 = pneg %p113
    $region18: #{generator_forward.9} parent=5 // pred_check_branch
      %116 = sbr.rel (%p114) target = $region20
    $region19: #{generator_forward.9} parent=5 // pred_region
      // Predicated region
      $region21: #{generator_forward.9} parent=19 // pred_check
        %p117 = pneg %p42
      $region22: #{generator_forward.9} parent=19 // pred_check_branch
        %119 = sbr.rel (%p117) target = $region24
      $region23: #{generator_forward.9} parent=19 // pred_region
        %s120 = smul.u32 4, %s16
        %p121 = scmp.lt.s32.totalorder %s15, 1
        %s122 = scalar_select %p121, %s15, 1
        %p123 = scmp.lt.s32.totalorder %s120, 7
        %s124 = scalar_select %p123, %s120, 7
        %s125 = smul.addr %s122, 8
        %s126 = sadd.s32 %s124, %s125
        %s127 = smul.addr %s126, 4
        %s128 = scalar_lea.vmem %s0, %s127
        %s129 = smul.u32 4, %s16
      $region24: #{generator_forward.9} parent=19 // pred_fallthru
        _
    $region20: #{generator_forward.9} parent=5 // pred_fallthru
      _
    %p130 = scmp.le.s32.totalorder 1, %s8
    %p131 = scmp.lt.s32.totalorder %s8, 5
    %p132 = pnand %p130, %p131
    %p133 = pneg %p132
    // Predicated region
    $region25: #{generator_forward.9} parent=5 // pred_check
      _
    $region26: #{generator_forward.9} parent=5 // pred_check_branch
      %135 = sbr.rel (%p132) target = $region28
    $region27: #{generator_forward.9} parent=5 // pred_region
      %s136 = ssub.s32 %s8, 1
      %s137 = smul.u32 4, %s18
      %p138 = scmp.lt.s32.totalorder %s17, 1
      %s139 = scalar_select %p138, %s17, 1
      %p140 = scmp.lt.s32.totalorder %s137, 7
      %s141 = scalar_select %p140, %s137, 7
      %s142 = smul.addr %s139, 8
      %s143 = sadd.s32 %s141, %s142
      %s144 = smul.addr %s143, 4
      %s145 = scalar_lea.vmem %s0, %s144
      %p146 = pneg %p48
      %p147 = pneg %p45
      %p148 = pneg %p69
      %p149 = pneg %p66
      %p150 = pneg %p95
      %p151 = pneg %p92
      %p152 = scmp.lt.s32.totalorder %s17, 1
      %s153 = scalar_select %p152, %s17, 1
      %s154 = smul.addr %s153, 8
      %s155 = scalar_lea.vmem %s2, %s154
      %s156 = smul.u32 4, %s18
      %p157 = scmp.lt.s32.totalorder %s17, 1
      %s158 = scalar_select %p157, %s17, 1
      %p159 = scmp.lt.s32.totalorder %s156, 7
      %s160 = scalar_select %p159, %s156, 7
      %s161 = smul.addr %s158, 8
      %s162 = sadd.s32 %s160, %s161
      %s163 = smul.addr %s162, 4
      %s164 = scalar_lea.vmem %s0, %s163
      %s165 = smul.u32 4, %s18
      %p166 = scmp.lt.s32.totalorder %s17, 1
      %s167 = scalar_select %p166, %s17, 1
      %s168 = smul.addr %s167, 8
      %s169 = scalar_lea.vmem %s2, %s168
      %p171 = scmp.eq.s32.totalorder %s18, 0
      // Predicated region
      $region29: #{generator_forward.9} parent=27 // pred_check
        %p172 = pneg %p171
      $region30: #{generator_forward.9} parent=27 // pred_check_branch
        %174 = sbr.rel (%p172) target = $region32
      $region31: #{generator_forward.9} parent=27 // pred_region
        %175 = vst [vmem:[%s169] sm:$0xff] -inf
      $region32: #{generator_forward.9} parent=27 // pred_fallthru
        _
      %v176 = vld [vmem:[%s164] sm:$0xf]
      %v177 = vld [vmem:[%s164 + $0x4] sm:$0xf]
      %v178 = vld [vmem:[%s164 + $0x8] sm:$0xf]
      %v179 = vld [vmem:[%s164 + $0xc] sm:$0xf]
      %v180 = vld [vmem:[%s1] sm:$0xff]
      %v181 = vld [vmem:[%s1 + $0x8] sm:$0xff]
      %v182 = vld [vmem:[%s1 + $0x10] sm:$0xff]
      %v183 = vld [vmem:[%s1 + $0x18] sm:$0xff]
      %v184 = vld [vmem:[%s1 + $0x20] sm:$0xff]
      %v185 = vld [vmem:[%s1 + $0x28] sm:$0xff]
      %v186 = vld [vmem:[%s1 + $0x30] sm:$0xff]
      %v187 = vld [vmem:[%s1 + $0x38] sm:$0xff]
      %v188 = vld [vmem:[%s1 + $0x40] sm:$0xff]
      %v189 = vld [vmem:[%s1 + $0x48] sm:$0xff]
      %v190 = vld [vmem:[%s1 + $0x50] sm:$0xff]
      %v191 = vld [vmem:[%s1 + $0x58] sm:$0xff]
      %v192 = vld [vmem:[%s1 + $0x60] sm:$0xff]
      %v193 = vld [vmem:[%s1 + $0x68] sm:$0xff]
      %v194 = vld [vmem:[%s1 + $0x70] sm:$0xff]
      %v195 = vld [vmem:[%s1 + $0x78] sm:$0xff]
      %v196 = vld [vmem:[%s1 + $0x80] sm:$0xff]
      %v197 = vld [vmem:[%s1 + $0x88] sm:$0xff]
      %v198 = vld [vmem:[%s1 + $0x90] sm:$0xff]
      %v199 = vld [vmem:[%s1 + $0x98] sm:$0xff]
      %v200 = vld [vmem:[%s1 + $0xa0] sm:$0xff]
      %v201 = vld [vmem:[%s1 + $0xa8] sm:$0xff]
      %v202 = vld [vmem:[%s1 + $0xb0] sm:$0xff]
      %v203 = vld [vmem:[%s1 + $0xb8] sm:$0xff]
      %v204 = vld [vmem:[%s1 + $0xc0] sm:$0xff]
      %v205 = vld [vmem:[%s1 + $0xc8] sm:$0xff]
      %v206 = vld [vmem:[%s1 + $0xd0] sm:$0xff]
      %v207 = vld [vmem:[%s1 + $0xd8] sm:$0xff]
      %v208 = vld [vmem:[%s1 + $0xe0] sm:$0xff]
      %v209 = vld [vmem:[%s1 + $0xe8] sm:$0xff]
      %v210 = vld [vmem:[%s1 + $0xf0] sm:$0xff]
      %v211 = vld [vmem:[%s1 + $0xf8] sm:$0xff]
      %v212 = vld [vmem:[%s1 + $0x100] sm:$0xff]
      %v213 = vld [vmem:[%s1 + $0x108] sm:$0xff]
      %v214 = vld [vmem:[%s1 + $0x110] sm:$0xff]
      %v215 = vld [vmem:[%s1 + $0x118] sm:$0xff]
      %v216 = vld [vmem:[%s1 + $0x120] sm:$0xff]
      %v217 = vld [vmem:[%s1 + $0x128] sm:$0xff]
      %v218 = vld [vmem:[%s1 + $0x130] sm:$0xff]
      %v219 = vld [vmem:[%s1 + $0x138] sm:$0xff]
      %v220 = vld [vmem:[%s1 + $0x140] sm:$0xff]
      %v221 = vld [vmem:[%s1 + $0x148] sm:$0xff]
      %v222 = vld [vmem:[%s1 + $0x150] sm:$0xff]
      %v223 = vld [vmem:[%s1 + $0x158] sm:$0xff]
      %v224 = vld [vmem:[%s1 + $0x160] sm:$0xff]
      %v225 = vld [vmem:[%s1 + $0x168] sm:$0xff]
      %v226 = vld [vmem:[%s1 + $0x170] sm:$0xff]
      %v227 = vld [vmem:[%s1 + $0x178] sm:$0xff]
      %v228 = vld [vmem:[%s1 + $0x180] sm:$0xff]
      %v229 = vld [vmem:[%s1 + $0x188] sm:$0xff]
      %v230 = vld [vmem:[%s1 + $0x190] sm:$0xff]
      %v231 = vld [vmem:[%s1 + $0x198] sm:$0xff]
      %v232 = vld [vmem:[%s1 + $0x1a0] sm:$0xff]
      %v233 = vld [vmem:[%s1 + $0x1a8] sm:$0xff]
      %v234 = vld [vmem:[%s1 + $0x1b0] sm:$0xff]
      %v235 = vld [vmem:[%s1 + $0x1b8] sm:$0xff]
      %v236 = vld [vmem:[%s1 + $0x1c0] sm:$0xff]
      %v237 = vld [vmem:[%s1 + $0x1c8] sm:$0xff]
      %v238 = vld [vmem:[%s1 + $0x1d0] sm:$0xff]
      %v239 = vld [vmem:[%s1 + $0x1d8] sm:$0xff]
      %v240 = vld [vmem:[%s1 + $0x1e0] sm:$0xff]
      %v241 = vld [vmem:[%s1 + $0x1e8] sm:$0xff]
      %v242 = vld [vmem:[%s1 + $0x1f0] sm:$0xff]
      %v243 = vld [vmem:[%s1 + $0x1f8] sm:$0xff]
      %v248 = vunpack.c.l.b16 %v176
      %v249 = vunpack.c.l.b16 %v177
      %v250 = vunpack.c.l.b16 %v178
      %v251 = vunpack.c.l.b16 %v179
      %v252 = vpack.c.b16 %v249, %v248
      %v253 = vpack.c.b16 %v251, %v250
      %v320 = vunpack.c.l.b16 %v180
      %v321 = vunpack.c.h.b16 %v180
      %v322 = vunpack.c.l.b16 %v181
      %v323 = vunpack.c.h.b16 %v181
      %v324 = vunpack.c.l.b16 %v182
      %v325 = vunpack.c.h.b16 %v182
      %v326 = vunpack.c.l.b16 %v183
      %v327 = vunpack.c.h.b16 %v183
      %v328 = vunpack.c.l.b16 %v184
      %v329 = vunpack.c.h.b16 %v184
      %v330 = vunpack.c.l.b16 %v185
      %v331 = vunpack.c.h.b16 %v185
      %v332 = vunpack.c.l.b16 %v186
      %v333 = vunpack.c.h.b16 %v186
      %v334 = vunpack.c.l.b16 %v187
      %v335 = vunpack.c.h.b16 %v187
      %v336 = vunpack.c.l.b16 %v188
      %v337 = vunpack.c.h.b16 %v188
      %v338 = vunpack.c.l.b16 %v189
      %v339 = vunpack.c.h.b16 %v189
      %v340 = vunpack.c.l.b16 %v190
      %v341 = vunpack.c.h.b16 %v190
      %v342 = vunpack.c.l.b16 %v191
      %v343 = vunpack.c.h.b16 %v191
      %v344 = vunpack.c.l.b16 %v192
      %v345 = vunpack.c.h.b16 %v192
      %v346 = vunpack.c.l.b16 %v193
      %v347 = vunpack.c.h.b16 %v193
      %v348 = vunpack.c.l.b16 %v194
      %v349 = vunpack.c.h.b16 %v194
      %v350 = vunpack.c.l.b16 %v195
      %v351 = vunpack.c.h.b16 %v195
      %v352 = vunpack.c.l.b16 %v196
      %v353 = vunpack.c.h.b16 %v196
      %v354 = vunpack.c.l.b16 %v197
      %v355 = vunpack.c.h.b16 %v197
      %v356 = vunpack.c.l.b16 %v198
      %v357 = vunpack.c.h.b16 %v198
      %v358 = vunpack.c.l.b16 %v199
      %v359 = vunpack.c.h.b16 %v199
      %v360 = vunpack.c.l.b16 %v200
      %v361 = vunpack.c.h.b16 %v200
      %v362 = vunpack.c.l.b16 %v201
      %v363 = vunpack.c.h.b16 %v201
      %v364 = vunpack.c.l.b16 %v202
      %v365 = vunpack.c.h.b16 %v202
      %v366 = vunpack.c.l.b16 %v203
      %v367 = vunpack.c.h.b16 %v203
      %v368 = vunpack.c.l.b16 %v204
      %v369 = vunpack.c.h.b16 %v204
      %v370 = vunpack.c.l.b16 %v205
      %v371 = vunpack.c.h.b16 %v205
      %v372 = vunpack.c.l.b16 %v206
      %v373 = vunpack.c.h.b16 %v206
      %v374 = vunpack.c.l.b16 %v207
      %v375 = vunpack.c.h.b16 %v207
      %v376 = vunpack.c.l.b16 %v208
      %v377 = vunpack.c.h.b16 %v208
      %v378 = vunpack.c.l.b16 %v209
      %v379 = vunpack.c.h.b16 %v209
      %v380 = vunpack.c.l.b16 %v210
      %v381 = vunpack.c.h.b16 %v210
      %v382 = vunpack.c.l.b16 %v211
      %v383 = vunpack.c.h.b16 %v211
      %v384 = vunpack.c.l.b16 %v212
      %v385 = vunpack.c.h.b16 %v212
      %v386 = vunpack.c.l.b16 %v213
      %v387 = vunpack.c.h.b16 %v213
      %v388 = vunpack.c.l.b16 %v214
      %v389 = vunpack.c.h.b16 %v214
      %v390 = vunpack.c.l.b16 %v215
      %v391 = vunpack.c.h.b16 %v215
      %v392 = vunpack.c.l.b16 %v216
      %v393 = vunpack.c.h.b16 %v216
      %v394 = vunpack.c.l.b16 %v217
      %v395 = vunpack.c.h.b16 %v217
      %v396 = vunpack.c.l.b16 %v218
      %v397 = vunpack.c.h.b16 %v218
      %v398 = vunpack.c.l.b16 %v219
      %v399 = vunpack.c.h.b16 %v219
      %v400 = vunpack.c.l.b16 %v220
      %v401 = vunpack.c.h.b16 %v220
      %v402 = vunpack.c.l.b16 %v221
      %v403 = vunpack.c.h.b16 %v221
      %v404 = vunpack.c.l.b16 %v222
      %v405 = vunpack.c.h.b16 %v222
      %v406 = vunpack.c.l.b16 %v223
      %v407 = vunpack.c.h.b16 %v223
      %v408 = vunpack.c.l.b16 %v224
      %v409 = vunpack.c.h.b16 %v224
      %v410 = vunpack.c.l.b16 %v225
      %v411 = vunpack.c.h.b16 %v225
      %v412 = vunpack.c.l.b16 %v226
      %v413 = vunpack.c.h.b16 %v226
      %v414 = vunpack.c.l.b16 %v227
      %v415 = vunpack.c.h.b16 %v227
      %v416 = vunpack.c.l.b16 %v228
      %v417 = vunpack.c.h.b16 %v228
      %v418 = vunpack.c.l.b16 %v229
      %v419 = vunpack.c.h.b16 %v229
      %v420 = vunpack.c.l.b16 %v230
      %v421 = vunpack.c.h.b16 %v230
      %v422 = vunpack.c.l.b16 %v231
      %v423 = vunpack.c.h.b16 %v231
      %v424 = vunpack.c.l.b16 %v232
      %v425 = vunpack.c.h.b16 %v232
      %v426 = vunpack.c.l.b16 %v233
      %v427 = vunpack.c.h.b16 %v233
      %v428 = vunpack.c.l.b16 %v234
      %v429 = vunpack.c.h.b16 %v234
      %v430 = vunpack.c.l.b16 %v235
      %v431 = vunpack.c.h.b16 %v235
      %v432 = vunpack.c.l.b16 %v236
      %v433 = vunpack.c.h.b16 %v236
      %v434 = vunpack.c.l.b16 %v237
      %v435 = vunpack.c.h.b16 %v237
      %v436 = vunpack.c.l.b16 %v238
      %v437 = vunpack.c.h.b16 %v238
      %v438 = vunpack.c.l.b16 %v239
      %v439 = vunpack.c.h.b16 %v239
      %v440 = vunpack.c.l.b16 %v240
      %v441 = vunpack.c.h.b16 %v240
      %v442 = vunpack.c.l.b16 %v241
      %v443 = vunpack.c.h.b16 %v241
      %v444 = vunpack.c.l.b16 %v242
      %v445 = vunpack.c.h.b16 %v242
      %v446 = vunpack.c.l.b16 %v243
      %v447 = vunpack.c.h.b16 %v243
      %v448 = vpack.c.b16 %v328, %v320
      %v449 = vpack.c.b16 %v329, %v321
      %v450 = vpack.c.b16 %v330, %v322
      %v451 = vpack.c.b16 %v331, %v323
      %v452 = vpack.c.b16 %v332, %v324
      %v453 = vpack.c.b16 %v333, %v325
      %v454 = vpack.c.b16 %v334, %v326
      %v455 = vpack.c.b16 %v335, %v327
      %v456 = vpack.c.b16 %v344, %v336
      %v457 = vpack.c.b16 %v345, %v337
      %v458 = vpack.c.b16 %v346, %v338
      %v459 = vpack.c.b16 %v347, %v339
      %v460 = vpack.c.b16 %v348, %v340
      %v461 = vpack.c.b16 %v349, %v341
      %v462 = vpack.c.b16 %v350, %v342
      %v463 = vpack.c.b16 %v351, %v343
      %v464 = vpack.c.b16 %v360, %v352
      %v465 = vpack.c.b16 %v361, %v353
      %v466 = vpack.c.b16 %v362, %v354
      %v467 = vpack.c.b16 %v363, %v355
      %v468 = vpack.c.b16 %v364, %v356
      %v469 = vpack.c.b16 %v365, %v357
      %v470 = vpack.c.b16 %v366, %v358
      %v471 = vpack.c.b16 %v367, %v359
      %v472 = vpack.c.b16 %v376, %v368
      %v473 = vpack.c.b16 %v377, %v369
      %v474 = vpack.c.b16 %v378, %v370
      %v475 = vpack.c.b16 %v379, %v371
      %v476 = vpack.c.b16 %v380, %v372
      %v477 = vpack.c.b16 %v381, %v373
      %v478 = vpack.c.b16 %v382, %v374
      %v479 = vpack.c.b16 %v383, %v375
      %v480 = vpack.c.b16 %v392, %v384
      %v481 = vpack.c.b16 %v393, %v385
      %v482 = vpack.c.b16 %v394, %v386
      %v483 = vpack.c.b16 %v395, %v387
      %v484 = vpack.c.b16 %v396, %v388
      %v485 = vpack.c.b16 %v397, %v389
      %v486 = vpack.c.b16 %v398, %v390
      %v487 = vpack.c.b16 %v399, %v391
      %v488 = vpack.c.b16 %v408, %v400
      %v489 = vpack.c.b16 %v409, %v401
      %v490 = vpack.c.b16 %v410, %v402
      %v491 = vpack.c.b16 %v411, %v403
      %v492 = vpack.c.b16 %v412, %v404
      %v493 = vpack.c.b16 %v413, %v405
      %v494 = vpack.c.b16 %v414, %v406
      %v495 = vpack.c.b16 %v415, %v407
      %v496 = vpack.c.b16 %v424, %v416
      %v497 = vpack.c.b16 %v425, %v417
      %v498 = vpack.c.b16 %v426, %v418
      %v499 = vpack.c.b16 %v427, %v419
      %v500 = vpack.c.b16 %v428, %v420
      %v501 = vpack.c.b16 %v429, %v421
      %v502 = vpack.c.b16 %v430, %v422
      %v503 = vpack.c.b16 %v431, %v423
      %v504 = vpack.c.b16 %v440, %v432
      %v505 = vpack.c.b16 %v441, %v433
      %v506 = vpack.c.b16 %v442, %v434
      %v507 = vpack.c.b16 %v443, %v435
      %v508 = vpack.c.b16 %v444, %v436
      %v509 = vpack.c.b16 %v445, %v437
      %v510 = vpack.c.b16 %v446, %v438
      %v511 = vpack.c.b16 %v447, %v439
      %576 = vmatprep.subr.bf16.mxu0 %v449
      %577 = vmatpush1.bf16.msra.mxu0 %v448
      %578 = vmatprep.subr.bf16.mxu0 %v457
      %579 = vmatpush1.bf16.msra.mxu0 %v456
      %580 = vmatprep.subr.bf16.mxu0 %v465
      %581 = vmatpush1.bf16.msra.mxu0 %v464
      %582 = vmatprep.subr.bf16.mxu0 %v473
      %583 = vmatpush1.bf16.msra.mxu0 %v472
      %584 = vmatprep.subr.bf16.mxu0 %v481
      %585 = vmatpush1.bf16.msra.mxu0 %v480
      %586 = vmatprep.subr.bf16.mxu0 %v489
      %587 = vmatpush1.bf16.msra.mxu0 %v488
      %588 = vmatprep.subr.bf16.mxu0 %v497
      %589 = vmatpush1.bf16.msra.mxu0 %v496
      %590 = vmatprep.subr.bf16.mxu0 %v505
      %591 = vmatpush1.bf16.msra.mxu0 %v504
      %592 = vmatprep.subr.bf16.mxu0 0
      %593 = vmatpush1.bf16.msra.mxu0 0
      %594 = vmatprep.subr.bf16.mxu0 0
      %595 = vmatpush1.bf16.msra.mxu0 0
      %596 = vmatprep.subr.bf16.mxu0 0
      %597 = vmatpush1.bf16.msra.mxu0 0
      %598 = vmatprep.subr.bf16.mxu0 0
      %599 = vmatpush1.bf16.msra.mxu0 0
      %600 = vmatprep.subr.bf16.mxu0 0
      %601 = vmatpush1.bf16.msra.mxu0 0
      %602 = vmatprep.subr.bf16.mxu0 0
      %603 = vmatpush1.bf16.msra.mxu0 0
      %604 = vmatprep.subr.bf16.mxu0 0
      %605 = vmatpush1.bf16.msra.mxu0 0
      %606 = vmatprep.subr.bf16.mxu0 0
      %607 = vmatpush1.bf16.msra.mxu0 0
      %608 = vmatprep.mubr.bf16.mxu0 0
      %609 = vmatmul.mubr.bf16.gmra.mrb[0].mxu0 %v252
      %v610 = vpop.f32.mrb[0].mxu0
      %v611 = vadd.f32 0.0, %v610
      %v612 = vpop.f32.mrb[0].mxu0
      %v613 = vadd.f32 0.0, %v612
      %v614 = vpop.f32.mrb[0].mxu0
      %v615 = vadd.f32 0.0, %v614
      %v616 = vpop.f32.mrb[0].mxu0
      %v617 = vadd.f32 0.0, %v616
      %618 = vmatprep.mubr.bf16.mxu0 0
      %619 = vmatmul.mubr.bf16.gmra.mrb[0].mxu0 %v253
      %v620 = vpop.f32.mrb[0].mxu0
      %v621 = vadd.f32 0.0, %v620
      %v622 = vpop.f32.mrb[0].mxu0
      %v623 = vadd.f32 0.0, %v622
      %v624 = vpop.f32.mrb[0].mxu0
      %v625 = vadd.f32 0.0, %v624
      %v626 = vpop.f32.mrb[0].mxu0
      %v627 = vadd.f32 0.0, %v626
      %628 = vdwg.mxu0
      %629 = vmatprep.subr.bf16.mxu0 %v451
      %630 = vmatpush1.bf16.msra.mxu0 %v450
      %631 = vmatprep.subr.bf16.mxu0 %v459
      %632 = vmatpush1.bf16.msra.mxu0 %v458
      %633 = vmatprep.subr.bf16.mxu0 %v467
      %634 = vmatpush1.bf16.msra.mxu0 %v466
      %635 = vmatprep.subr.bf16.mxu0 %v475
      %636 = vmatpush1.bf16.msra.mxu0 %v474
      %637 = vmatprep.subr.bf16.mxu0 %v483
      %638 = vmatpush1.bf16.msra.mxu0 %v482
      %639 = vmatprep.subr.bf16.mxu0 %v491
      %640 = vmatpush1.bf16.msra.mxu0 %v490
      %641 = vmatprep.subr.bf16.mxu0 %v499
      %642 = vmatpush1.bf16.msra.mxu0 %v498
      %643 = vmatprep.subr.bf16.mxu0 %v507
      %644 = vmatpush1.bf16.msra.mxu0 %v506
      %645 = vmatprep.subr.bf16.mxu0 0
      %646 = vmatpush1.bf16.msra.mxu0 0
      %647 = vmatprep.subr.bf16.mxu0 0
      %648 = vmatpush1.bf16.msra.mxu0 0
      %649 = vmatprep.subr.bf16.mxu0 0
      %650 = vmatpush1.bf16.msra.mxu0 0
      %651 = vmatprep.subr.bf16.mxu0 0
      %652 = vmatpush1.bf16.msra.mxu0 0
      %653 = vmatprep.subr.bf16.mxu0 0
      %654 = vmatpush1.bf16.msra.mxu0 0
      %655 = vmatprep.subr.bf16.mxu0 0
      %656 = vmatpush1.bf16.msra.mxu0 0
      %657 = vmatprep.subr.bf16.mxu0 0
      %658 = vmatpush1.bf16.msra.mxu0 0
      %659 = vmatprep.subr.bf16.mxu0 0
      %660 = vmatpush1.bf16.msra.mxu0 0
      %661 = vmatprep.mubr.bf16.mxu0 0
      %662 = vmatmul.mubr.bf16.gmra.mrb[0].mxu0 %v252
      %v663 = vpop.f32.mrb[0].mxu0
      %v664 = vadd.f32 0.0, %v663
      %v665 = vpop.f32.mrb[0].mxu0
      %v666 = vadd.f32 0.0, %v665
      %v667 = vpop.f32.mrb[0].mxu0
      %v668 = vadd.f32 0.0, %v667
      %v669 = vpop.f32.mrb[0].mxu0
      %v670 = vadd.f32 0.0, %v669
      %671 = vmatprep.mubr.bf16.mxu0 0
      %672 = vmatmul.mubr.bf16.gmra.mrb[0].mxu0 %v253
      %v673 = vpop.f32.mrb[0].mxu0
      %v674 = vadd.f32 0.0, %v673
      %v675 = vpop.f32.mrb[0].mxu0
      %v676 = vadd.f32 0.0, %v675
      %v677 = vpop.f32.mrb[0].mxu0
      %v678 = vadd.f32 0.0, %v677
      %v679 = vpop.f32.mrb[0].mxu0
      %v680 = vadd.f32 0.0, %v679
      %681 = vdwg.mxu0
      %682 = vmatprep.subr.bf16.mxu0 %v453
      %683 = vmatpush1.bf16.msra.mxu0 %v452
      %684 = vmatprep.subr.bf16.mxu0 %v461
      %685 = vmatpush1.bf16.msra.mxu0 %v460
      %686 = vmatprep.subr.bf16.mxu0 %v469
      %687 = vmatpush1.bf16.msra.mxu0 %v468
      %688 = vmatprep.subr.bf16.mxu0 %v477
      %689 = vmatpush1.bf16.msra.mxu0 %v476
      %690 = vmatprep.subr.bf16.mxu0 %v485
      %691 = vmatpush1.bf16.msra.mxu0 %v484
      %692 = vmatprep.subr.bf16.mxu0 %v493
      %693 = vmatpush1.bf16.msra.mxu0 %v492
      %694 = vmatprep.subr.bf16.mxu0 %v501
      %695 = vmatpush1.bf16.msra.mxu0 %v500
      %696 = vmatprep.subr.bf16.mxu0 %v509
      %697 = vmatpush1.bf16.msra.mxu0 %v508
      %698 = vmatprep.subr.bf16.mxu0 0
      %699 = vmatpush1.bf16.msra.mxu0 0
      %700 = vmatprep.subr.bf16.mxu0 0
      %701 = vmatpush1.bf16.msra.mxu0 0
      %702 = vmatprep.subr.bf16.mxu0 0
      %703 = vmatpush1.bf16.msra.mxu0 0
      %704 = vmatprep.subr.bf16.mxu0 0
      %705 = vmatpush1.bf16.msra.mxu0 0
      %706 = vmatprep.subr.bf16.mxu0 0
      %707 = vmatpush1.bf16.msra.mxu0 0
      %708 = vmatprep.subr.bf16.mxu0 0
      %709 = vmatpush1.bf16.msra.mxu0 0
      %710 = vmatprep.subr.bf16.mxu0 0
      %711 = vmatpush1.bf16.msra.mxu0 0
      %712 = vmatprep.subr.bf16.mxu0 0
      %713 = vmatpush1.bf16.msra.mxu0 0
      %714 = vmatprep.mubr.bf16.mxu0 0
      %715 = vmatmul.mubr.bf16.gmra.mrb[0].mxu0 %v252
      %v716 = vpop.f32.mrb[0].mxu0
      %v717 = vadd.f32 0.0, %v716
      %v718 = vpop.f32.mrb[0].mxu0
      %v719 = vadd.f32 0.0, %v718
      %v720 = vpop.f32.mrb[0].mxu0
      %v721 = vadd.f32 0.0, %v720
      %v722 = vpop.f32.mrb[0].mxu0
      %v723 = vadd.f32 0.0, %v722
      %724 = vmatprep.mubr.bf16.mxu0 0
      %725 = vmatmul.mubr.bf16.gmra.mrb[0].mxu0 %v253
      %v726 = vpop.f32.mrb[0].mxu0
      %v727 = vadd.f32 0.0, %v726
      %v728 = vpop.f32.mrb[0].mxu0
      %v729 = vadd.f32 0.0, %v728
      %v730 = vpop.f32.mrb[0].mxu0
      %v731 = vadd.f32 0.0, %v730
      %v732 = vpop.f32.mrb[0].mxu0
      %v733 = vadd.f32 0.0, %v732
      %734 = vdwg.mxu0
      %735 = vmatprep.subr.bf16.mxu0 %v455
      %736 = vmatpush1.bf16.msra.mxu0 %v454
      %737 = vmatprep.subr.bf16.mxu0 %v463
      %738 = vmatpush1.bf16.msra.mxu0 %v462
      %739 = vmatprep.subr.bf16.mxu0 %v471
      %740 = vmatpush1.bf16.msra.mxu0 %v470
      %741 = vmatprep.subr.bf16.mxu0 %v479
      %742 = vmatpush1.bf16.msra.mxu0 %v478
      %743 = vmatprep.subr.bf16.mxu0 %v487
      %744 = vmatpush1.bf16.msra.mxu0 %v486
      %745 = vmatprep.subr.bf16.mxu0 %v495
      %746 = vmatpush1.bf16.msra.mxu0 %v494
      %747 = vmatprep.subr.bf16.mxu0 %v503
      %748 = vmatpush1.bf16.msra.mxu0 %v502
      %749 = vmatprep.subr.bf16.mxu0 %v511
      %750 = vmatpush1.bf16.msra.mxu0 %v510
      %751 = vmatprep.subr.bf16.mxu0 0
      %752 = vmatpush1.bf16.msra.mxu0 0
      %753 = vmatprep.subr.bf16.mxu0 0
      %754 = vmatpush1.bf16.msra.mxu0 0
      %755 = vmatprep.subr.bf16.mxu0 0
      %756 = vmatpush1.bf16.msra.mxu0 0
      %757 = vmatprep.subr.bf16.mxu0 0
      %758 = vmatpush1.bf16.msra.mxu0 0
      %759 = vmatprep.subr.bf16.mxu0 0
      %760 = vmatpush1.bf16.msra.mxu0 0
      %761 = vmatprep.subr.bf16.mxu0 0
      %762 = vmatpush1.bf16.msra.mxu0 0
      %763 = vmatprep.subr.bf16.mxu0 0
      %764 = vmatpush1.bf16.msra.mxu0 0
      %765 = vmatprep.subr.bf16.mxu0 0
      %766 = vmatpush1.bf16.msra.mxu0 0
      %767 = vmatprep.mubr.bf16.mxu0 0
      %768 = vmatmul.mubr.bf16.gmra.mrb[0].mxu0 %v252
      %v769 = vpop.f32.mrb[0].mxu0
      %v770 = vadd.f32 0.0, %v769
      %v771 = vpop.f32.mrb[0].mxu0
      %v772 = vadd.f32 0.0, %v771
      %v773 = vpop.f32.mrb[0].mxu0
      %v774 = vadd.f32 0.0, %v773
      %v775 = vpop.f32.mrb[0].mxu0
      %v776 = vadd.f32 0.0, %v775
      %777 = vmatprep.mubr.bf16.mxu0 0
      %778 = vmatmul.mubr.bf16.gmra.mrb[0].mxu0 %v253
      %v779 = vpop.f32.mrb[0].mxu0
      %v780 = vadd.f32 0.0, %v779
      %v781 = vpop.f32.mrb[0].mxu0
      %v782 = vadd.f32 0.0, %v781
      %v783 = vpop.f32.mrb[0].mxu0
      %v784 = vadd.f32 0.0, %v783
      %v785 = vpop.f32.mrb[0].mxu0
      %v786 = vadd.f32 0.0, %v785
      %787 = vdwg.mxu0
      %vm788 = vcmp.gt.f32.partialorder %v611, 0.0
      %vm789 = vcmp.gt.f32.partialorder %v613, 0.0
      %vm790 = vcmp.gt.f32.partialorder %v664, 0.0
      %vm791 = vcmp.gt.f32.partialorder %v666, 0.0
      %vm792 = vcmp.gt.f32.partialorder %v717, 0.0
      %vm793 = vcmp.gt.f32.partialorder %v719, 0.0
      %vm794 = vcmp.gt.f32.partialorder %v770, 0.0
      %vm795 = vcmp.gt.f32.partialorder %v772, 0.0
      %vm796 = vcmp.gt.f32.partialorder %v615, 0.0
      %vm797 = vcmp.gt.f32.partialorder %v617, 0.0
      %vm798 = vcmp.gt.f32.partialorder %v668, 0.0
      %vm799 = vcmp.gt.f32.partialorder %v670, 0.0
      %vm800 = vcmp.gt.f32.partialorder %v721, 0.0
      %vm801 = vcmp.gt.f32.partialorder %v723, 0.0
      %vm802 = vcmp.gt.f32.partialorder %v774, 0.0
      %vm803 = vcmp.gt.f32.partialorder %v776, 0.0
      %vm804 = vcmp.gt.f32.partialorder %v621, 0.0
      %vm805 = vcmp.gt.f32.partialorder %v623, 0.0
      %vm806 = vcmp.gt.f32.partialorder %v674, 0.0
      %vm807 = vcmp.gt.f32.partialorder %v676, 0.0
      %vm808 = vcmp.gt.f32.partialorder %v727, 0.0
      %vm809 = vcmp.gt.f32.partialorder %v729, 0.0
      %vm810 = vcmp.gt.f32.partialorder %v780, 0.0
      %vm811 = vcmp.gt.f32.partialorder %v782, 0.0
      %vm812 = vcmp.gt.f32.partialorder %v625, 0.0
      %vm813 = vcmp.gt.f32.partialorder %v627, 0.0
      %vm814 = vcmp.gt.f32.partialorder %v678, 0.0
      %vm815 = vcmp.gt.f32.partialorder %v680, 0.0
      %vm816 = vcmp.gt.f32.partialorder %v731, 0.0
      %vm817 = vcmp.gt.f32.partialorder %v733, 0.0
      %vm818 = vcmp.gt.f32.partialorder %v784, 0.0
      %vm819 = vcmp.gt.f32.partialorder %v786, 0.0
      %v820 = vmul.f32 %v611, 0.2
      %v821 = vmul.f32 %v613, 0.2
      %v822 = vmul.f32 %v664, 0.2
      %v823 = vmul.f32 %v666, 0.2
      %v824 = vmul.f32 %v717, 0.2
      %v825 = vmul.f32 %v719, 0.2
      %v826 = vmul.f32 %v770, 0.2
      %v827 = vmul.f32 %v772, 0.2
      %v828 = vmul.f32 %v615, 0.2
      %v829 = vmul.f32 %v617, 0.2
      %v830 = vmul.f32 %v668, 0.2
      %v831 = vmul.f32 %v670, 0.2
      %v832 = vmul.f32 %v721, 0.2
      %v833 = vmul.f32 %v723, 0.2
      %v834 = vmul.f32 %v774, 0.2
      %v835 = vmul.f32 %v776, 0.2
      %v836 = vmul.f32 %v621, 0.2
      %v837 = vmul.f32 %v623, 0.2
      %v838 = vmul.f32 %v674, 0.2
      %v839 = vmul.f32 %v676, 0.2
      %v840 = vmul.f32 %v727, 0.2
      %v841 = vmul.f32 %v729, 0.2
      %v842 = vmul.f32 %v780, 0.2
      %v843 = vmul.f32 %v782, 0.2
      %v844 = vmul.f32 %v625, 0.2
      %v845 = vmul.f32 %v627, 0.2
      %v846 = vmul.f32 %v678, 0.2
      %v847 = vmul.f32 %v680, 0.2
      %v848 = vmul.f32 %v731, 0.2
      %v849 = vmul.f32 %v733, 0.2
      %v850 = vmul.f32 %v784, 0.2
      %v851 = vmul.f32 %v786, 0.2
      %v852 = vsel %vm788, %v611, %v820
      %v853 = vsel %vm789, %v613, %v821
      %v854 = vsel %vm790, %v664, %v822
      %v855 = vsel %vm791, %v666, %v823
      %v856 = vsel %vm792, %v717, %v824
      %v857 = vsel %vm793, %v719, %v825
      %v858 = vsel %vm794, %v770, %v826
      %v859 = vsel %vm795, %v772, %v827
      %v860 = vsel %vm796, %v615, %v828
      %v861 = vsel %vm797, %v617, %v829
      %v862 = vsel %vm798, %v668, %v830
      %v863 = vsel %vm799, %v670, %v831
      %v864 = vsel %vm800, %v721, %v832
      %v865 = vsel %vm801, %v723, %v833
      %v866 = vsel %vm802, %v774, %v834
      %v867 = vsel %vm803, %v776, %v835
      %v868 = vsel %vm804, %v621, %v836
      %v869 = vsel %vm805, %v623, %v837
      %v870 = vsel %vm806, %v674, %v838
      %v871 = vsel %vm807, %v676, %v839
      %v872 = vsel %vm808, %v727, %v840
      %v873 = vsel %vm809, %v729, %v841
      %v874 = vsel %vm810, %v780, %v842
      %v875 = vsel %vm811, %v782, %v843
      %v876 = vsel %vm812, %v625, %v844
      %v877 = vsel %vm813, %v627, %v845
      %v878 = vsel %vm814, %v678, %v846
      %v879 = vsel %vm815, %v680, %v847
      %v880 = vsel %vm816, %v731, %v848
      %v881 = vsel %vm817, %v733, %v849
      %v882 = vsel %vm818, %v784, %v850
      %v883 = vsel %vm819, %v786, %v851
      %v884 = vld [vmem:[%s169] sm:$0xff]
      %v885 = vmax.f32 %v852, %v860
      %v886 = vmax.f32 %v885, %v868
      %v887 = vmax.f32 %v886, %v876
      %v888 = vrot.slane %v887, 4
      %v889 = vmax.f32 %v887, %v888
      %v890 = vrot.slane %v889, 2
      %v891 = vmax.f32 %v889, %v890
      %v892 = vrot.slane %v891, 1
      %v893 = vmax.f32 %v891, %v892
      %v894 = vmax.f32 %v853, %v861
      %v895 = vmax.f32 %v894, %v869
      %v896 = vmax.f32 %v895, %v877
      %v897 = vrot.slane %v896, 4
      %v898 = vmax.f32 %v896, %v897
      %v899 = vrot.slane %v898, 2
      %v900 = vmax.f32 %v898, %v899
      %v901 = vrot.slane %v900, 1
      %v902 = vmax.f32 %v900, %v901
      %v903 = vmax.f32 %v854, %v862
      %v904 = vmax.f32 %v903, %v870
      %v905 = vmax.f32 %v904, %v878
      %v906 = vrot.slane %v905, 4
      %v907 = vmax.f32 %v905, %v906
      %v908 = vrot.slane %v907, 2
      %v909 = vmax.f32 %v907, %v908
      %v910 = vrot.slane %v909, 1
      %v911 = vmax.f32 %v909, %v910
      %v912 = vmax.f32 %v855, %v863
      %v913 = vmax.f32 %v912, %v871
      %v914 = vmax.f32 %v913, %v879
      %v915 = vrot.slane %v914, 4
      %v916 = vmax.f32 %v914, %v915
      %v917 = vrot.slane %v916, 2
      %v918 = vmax.f32 %v916, %v917
      %v919 = vrot.slane %v918, 1
      %v920 = vmax.f32 %v918, %v919
      %v921 = vmax.f32 %v856, %v864
      %v922 = vmax.f32 %v921, %v872
      %v923 = vmax.f32 %v922, %v880
      %v924 = vrot.slane %v923, 4
      %v925 = vmax.f32 %v923, %v924
      %v926 = vrot.slane %v925, 2
      %v927 = vmax.f32 %v925, %v926
      %v928 = vrot.slane %v927, 1
      %v929 = vmax.f32 %v927, %v928
      %v930 = vmax.f32 %v857, %v865
      %v931 = vmax.f32 %v930, %v873
      %v932 = vmax.f32 %v931, %v881
      %v933 = vrot.slane %v932, 4
      %v934 = vmax.f32 %v932, %v933
      %v935 = vrot.slane %v934, 2
      %v936 = vmax.f32 %v934, %v935
      %v937 = vrot.slane %v936, 1
      %v938 = vmax.f32 %v936, %v937
      %v939 = vmax.f32 %v858, %v866
      %v940 = vmax.f32 %v939, %v874
      %v941 = vmax.f32 %v940, %v882
      %v942 = vrot.slane %v941, 4
      %v943 = vmax.f32 %v941, %v942
      %v944 = vrot.slane %v943, 2
      %v945 = vmax.f32 %v943, %v944
      %v946 = vrot.slane %v945, 1
      %v947 = vmax.f32 %v945, %v946
      %v948 = vmax.f32 %v859, %v867
      %v949 = vmax.f32 %v948, %v875
      %v950 = vmax.f32 %v949, %v883
      %v951 = vrot.slane %v950, 4
      %v952 = vmax.f32 %v950, %v951
      %v953 = vrot.slane %v952, 2
      %v954 = vmax.f32 %v952, %v953
      %v955 = vrot.slane %v954, 1
      %v956 = vmax.f32 %v954, %v955
      %v965 = vcombine.low %v893, %v902
      %v966 = vcombine.low %v911, %v920
      %v967 = vcombine.low %v929, %v938
      %v968 = vcombine.low %v947, %v956
      %v970 = vunpack.c.l.s4 1966171168
      %v971 = vunpack.c.0.s8 %v970
      %v972 = vlaneseq
      %v973 = vshrl.u32 %v972, 7
      %v974 = vsub.s32 %v971, %v973
      %v975 = vrot.slane %v965, %v974
      %v977 = vunpack.c.l.s4 1966171168
      %v978 = vunpack.c.0.s8 %v977
      %v979 = vlaneseq
      %v980 = vshrl.u32 %v979, 7
      %v981 = vsub.s32 %v978, %v980
      %v982 = vrot.slane %v966, %v981
      %v984 = vunpack.c.l.s4 1966171168
      %v985 = vunpack.c.0.s8 %v984
      %v986 = vlaneseq
      %v987 = vshrl.u32 %v986, 7
      %v988 = vsub.s32 %v985, %v987
      %v989 = vrot.slane %v967, %v988
      %v991 = vunpack.c.l.s4 1966171168
      %v992 = vunpack.c.0.s8 %v991
      %v993 = vlaneseq
      %v994 = vshrl.u32 %v993, 7
      %v995 = vsub.s32 %v992, %v994
      %v996 = vrot.slane %v968, %v995
      %v997 = vcombine.low %v975, %v982
      %v998 = vcombine.low %v989, %v996
      %v1000 = vunpack.c.l.s4 1966171168
      %v1001 = vunpack.c.0.s8 %v1000
      %v1002 = vlaneseq
      %v1003 = vshrl.u32 %v1002, 7
      %v1004 = vsub.s32 %v1001, %v1003
      %v1005 = vrot.slane %v997, %v1004
      %v1007 = vunpack.c.l.s4 1966171168
      %v1008 = vunpack.c.0.s8 %v1007
      %v1009 = vlaneseq
      %v1010 = vshrl.u32 %v1009, 7
      %v1011 = vsub.s32 %v1008, %v1010
      %v1012 = vrot.slane %v998, %v1011
      %v1013 = vcombine.low %v1005, %v1012
      %v1015 = vmax.f32 %v884, %v1013
      %1016 = vst [vmem:[%s169] sm:$0xff] %v1015
      %p1017 = scmp.lt.s32.totalorder %s17, 1
      %s1018 = scalar_select %p1017, %s17, 1
      %s1019 = smul.addr %s1018, 8
      %s1020 = scalar_lea.vmem %s2, %s1019
      // Predicated region
      $region33: #{generator_forward.9} parent=27 // pred_check
        %p1021 = pneg %p92
      $region34: #{generator_forward.9} parent=27 // pred_check_branch
        %1023 = sbr.rel (%p1021) target = $region36
      $region35: #{generator_forward.9} parent=27 // pred_region
        _
      $region36: #{generator_forward.9} parent=27 // pred_fallthru
        _
    $region28: #{generator_forward.9} parent=5 // pred_fallthru
      _
    %p1024 = scmp.le.s32.totalorder 2, %s8
    // Predicated region
    $region37: #{generator_forward.9} parent=5 // pred_check
      %p1025 = pneg %p1024
    $region38: #{generator_forward.9} parent=5 // pred_check_branch
      %1027 = sbr.rel (%p1025) target = $region40
    $region39: #{generator_forward.9} parent=5 // pred_region
      %s1028 = ssub.s32 %s8, 2
      // Predicated region
      $region41: #{generator_forward.9} parent=39 // pred_check
        %p1029 = pneg %p98
      $region42: #{generator_forward.9} parent=39 // pred_check_branch
        %1031 = sbr.rel (%p1029) target = $region44
      $region43: #{generator_forward.9} parent=39 // pred_region
        %p1032 = scmp.lt.s32.totalorder %s19, 1
        %s1033 = scalar_select %p1032, %s19, 1
        %s1034 = smul.addr %s1033, 8
        %s1035 = scalar_lea.vmem %s2, %s1034
      $region44: #{generator_forward.9} parent=39 // pred_fallthru
        _
    $region40: #{generator_forward.9} parent=5 // pred_fallthru
      _
  $region6: #{generator_forward.9} parent=0 // loop_footer
    %s12 = sadd.s32 1, %s8
  $region7: #{generator_forward.9} parent=0 // loop_footer_branch
    %7 = sbr.rel target = $region3
  $region8: #{generator_forward.9} parent=0 // loop_exit
    _

// kernel: generator_forward.11
$region0: #{generator_forward.11}
  #allocation0 [shape = 'u32[]', space=smem, size = 0x4, offset = 0x4, fixed_abs, tag = 'smem constant byte address 0x4 - core index']
  #allocation1 [shape = 'u32[144,128]{1,0:T(1,128)}', space=vmem, size = 0x12000, scoped, tag = 'internal scratch']
  %s0 = inlined_call_operand.vmem [shape: bf16[2,64,64], index: 0, kind: input, shape index: {}]
  %s1 = inlined_call_operand.vmem [shape: f32[2,1,1024], index: 1, kind: input, shape index: {}]
  %s2 = inlined_call_operand.vmem [shape: bf16[64,1024], index: 2, kind: input, shape index: {}]
  %s3 = inlined_call_operand.vmem [shape: bf16[1024,512], index: 3, kind: input, shape index: {}]
  %s4 = inlined_call_operand.vmem [shape: f32[1,512], index: 4, kind: input, shape index: {}]
  %s5 = inlined_call_operand.vmem [shape: bf16[512,64], index: 5, kind: input, shape index: {}]
  %s6 = inlined_call_operand.vmem [shape: f32[1,64], index: 6, kind: input, shape index: {}]
  %s7 = inlined_call_operand.vmem [shape: bf16[64,3], index: 7, kind: input, shape index: {}]
  %s8 = inlined_call_operand.vmem [shape: f32[1,3], index: 8, kind: input, shape index: {}]
  %s9 = inlined_call_operand.vmem [shape: f32[2,64,3], index: 9, kind: output, shape index: {}]
  %s10 = sld [smem:[#allocation0]]
  $region69: #{generator_forward.11} parent=0
    _
  %s12 = ssub.s32 1, %s10
  %s13 = scalar_select 0, %s12, %s10
  loop: start=0, step=1, limit=6
  $region2: #{generator_forward.11} parent=0 // loop_pre_header
    _
  $region3: #{generator_forward.11} parent=0 // loop_header
    %s15 = sphi 0, %s19
    %p16 = scmp.ge.s32.totalorder %s15, 6
    %s22 = sphi 0, %s34
    %s23 = sphi 0, %s30
    %s24 = sphi 0, %s22
    %s25 = sphi 0, %s23
    %s26 = sphi 0, %s24
    %s27 = sphi 0, %s25
    %s39 = sphi 0, %s41
    %s42 = sphi 0, %s39
    %s43 = sphi 0, %s42
    %s59 = sphi 0, %s43
    %s65 = sphi 0, %s67
    %s68 = sphi 0, %s65
    %s69 = sphi 0, %s68
    %s85 = sphi 0, %s69
    %s89 = sphi 0, %s89
    %s91 = sphi 0, %s89
    %s92 = sphi 0, %s91
    %s106 = sphi 0, %s92
    %s110 = sphi 0, %s110
    %s112 = sphi 0, %s110
    %s113 = sphi 0, %s112
    %s127 = sphi 0, %s113
    %s131 = sphi 0, %s131
    %s133 = sphi 0, %s131
    %s134 = sphi 0, %s133
    %s148 = sphi 0, %s134
    %s152 = sphi 0, %s152
    %s154 = sphi 0, %s152
    %s155 = sphi 0, %s154
    %s169 = sphi 0, %s155
    %s173 = sphi 0, %s173
    %s175 = sphi 0, %s173
    %s176 = sphi 0, %s175
    %s190 = sphi 0, %s176
    %s194 = sphi 0, %s194
    %s196 = sphi 0, %s194
    %s197 = sphi 0, %s196
    %s211 = sphi 0, %s197
    %s215 = sphi 0, %s215
    %s217 = sphi 0, %s215
    %s218 = sphi 0, %s217
    %s232 = sphi 0, %s218
    %s240 = sphi 0, %s242
    %s243 = sphi 0, %s240
    %s244 = sphi 0, %s243
    %s260 = sphi 0, %s244
  $region4: #{generator_forward.11} parent=0 // loop_header_branch
    %18 = sbr.rel (%p16) target = $region8
  $region5: #{generator_forward.11} parent=0 // loop_body
    %s20 = ssub.s32 %s15, 1
    %s21 = ssub.s32 %s15, 2
    %s28 = sadd.s32 1, %s23
    %p29 = scmp.ge.s32.totalorder %s28, 2
    %s30 = scalar_select %p29, 0, %s28
    %s31 = sadd.s32 1, %s22
    %s32 = scalar_select %p29, %s31, %s22
    %p33 = scmp.ge.s32.totalorder %s32, 2
    %s34 = scalar_select %p33, 0, %s32
    %s35 = ssub.s32 %s22, %s34
    %s36 = ssub.s32 %s23, %s30
    %s37 = sor.u32 %s35, %s36
    %p38 = scmp.eq.s32.totalorder %s37, 0
    %s40 = sadd.s32 %s39, 1
    %s41 = scalar_select %p38, %s39, %s40
    %p44 = pneg %p38
    %p45 = scmp.eq.s32.totalorder %s15, 3
    %p46 = por %p44, %p45
    %p47 = scmp.ne.s32.totalorder %s39, %s42
    %p48 = scmp.eq.s32.totalorder %s15, 0
    %p49 = por %p47, %p48
    %p50 = scmp.ne.s32.totalorder %s39, %s42
    %p51 = scmp.eq.s32.totalorder %s20, 3
    %p52 = por %p50, %p51
    %p53 = scmp.ne.s32.totalorder %s42, %s43
    %p54 = scmp.eq.s32.totalorder %s20, 0
    %p55 = por %p53, %p54
    %p56 = scmp.ne.s32.totalorder %s42, %s43
    %p57 = scmp.eq.s32.totalorder %s21, 3
    %p58 = por %p56, %p57
    %p60 = scmp.ne.s32.totalorder %s43, %s59
    %p61 = scmp.eq.s32.totalorder %s21, 0
    %p62 = por %p60, %p61
    %s63 = ssub.s32 %s22, %s34
    %p64 = scmp.eq.s32.totalorder %s63, 0
    %s66 = sadd.s32 %s65, 1
    %s67 = scalar_select %p64, %s65, %s66
    %p70 = pneg %p64
    %p71 = scmp.eq.s32.totalorder %s15, 3
    %p72 = por %p70, %p71
    %p73 = scmp.ne.s32.totalorder %s65, %s68
    %p74 = scmp.eq.s32.totalorder %s15, 0
    %p75 = por %p73, %p74
    %p76 = scmp.ne.s32.totalorder %s65, %s68
    %p77 = scmp.eq.s32.totalorder %s20, 3
    %p78 = por %p76, %p77
    %p79 = scmp.ne.s32.totalorder %s68, %s69
    %p80 = scmp.eq.s32.totalorder %s20, 0
    %p81 = por %p79, %p80
    %p82 = scmp.ne.s32.totalorder %s68, %s69
    %p83 = scmp.eq.s32.totalorder %s21, 3
    %p84 = por %p82, %p83
    %p86 = scmp.ne.s32.totalorder %s69, %s85
    %p87 = scmp.eq.s32.totalorder %s21, 0
    %p88 = por %p86, %p87
    %s90 = sadd.s32 %s89, 1
    %p93 = scmp.eq.s32.totalorder %s15, 3
    %p94 = scmp.ne.s32.totalorder %s89, %s91
    %p95 = scmp.eq.s32.totalorder %s15, 0
    %p96 = por %p94, %p95
    %p97 = scmp.ne.s32.totalorder %s89, %s91
    %p98 = scmp.eq.s32.totalorder %s20, 3
    %p99 = por %p97, %p98
    %p100 = scmp.ne.s32.totalorder %s91, %s92
    %p101 = scmp.eq.s32.totalorder %s20, 0
    %p102 = por %p100, %p101
    %p103 = scmp.ne.s32.totalorder %s91, %s92
    %p104 = scmp.eq.s32.totalorder %s21, 3
    %p105 = por %p103, %p104
    %p107 = scmp.ne.s32.totalorder %s92, %s106
    %p108 = scmp.eq.s32.totalorder %s21, 0
    %p109 = por %p107, %p108
    %s111 = sadd.s32 %s110, 1
    %p114 = scmp.eq.s32.totalorder %s15, 3
    %p115 = scmp.ne.s32.totalorder %s110, %s112
    %p116 = scmp.eq.s32.totalorder %s15, 0
    %p117 = por %p115, %p116
    %p118 = scmp.ne.s32.totalorder %s110, %s112
    %p119 = scmp.eq.s32.totalorder %s20, 3
    %p120 = por %p118, %p119
    %p121 = scmp.ne.s32.totalorder %s112, %s113
    %p122 = scmp.eq.s32.totalorder %s20, 0
    %p123 = por %p121, %p122
    %p124 = scmp.ne.s32.totalorder %s112, %s113
    %p125 = scmp.eq.s32.totalorder %s21, 3
    %p126 = por %p124, %p125
    %p128 = scmp.ne.s32.totalorder %s113, %s127
    %p129 = scmp.eq.s32.totalorder %s21, 0
    %p130 = por %p128, %p129
    %s132 = sadd.s32 %s131, 1
    %p135 = scmp.eq.s32.totalorder %s15, 3
    %p136 = scmp.ne.s32.totalorder %s131, %s133
    %p137 = scmp.eq.s32.totalorder %s15, 0
    %p138 = por %p136, %p137
    %p139 = scmp.ne.s32.totalorder %s131, %s133
    %p140 = scmp.eq.s32.totalorder %s20, 3
    %p141 = por %p139, %p140
    %p142 = scmp.ne.s32.totalorder %s133, %s134
    %p143 = scmp.eq.s32.totalorder %s20, 0
    %p144 = por %p142, %p143
    %p145 = scmp.ne.s32.totalorder %s133, %s134
    %p146 = scmp.eq.s32.totalorder %s21, 3
    %p147 = por %p145, %p146
    %p149 = scmp.ne.s32.totalorder %s134, %s148
    %p150 = scmp.eq.s32.totalorder %s21, 0
    %p151 = por %p149, %p150
    %s153 = sadd.s32 %s152, 1
    %p156 = scmp.eq.s32.totalorder %s15, 3
    %p157 = scmp.ne.s32.totalorder %s152, %s154
    %p158 = scmp.eq.s32.totalorder %s15, 0
    %p159 = por %p157, %p158
    %p160 = scmp.ne.s32.totalorder %s152, %s154
    %p161 = scmp.eq.s32.totalorder %s20, 3
    %p162 = por %p160, %p161
    %p163 = scmp.ne.s32.totalorder %s154, %s155
    %p164 = scmp.eq.s32.totalorder %s20, 0
    %p165 = por %p163, %p164
    %p166 = scmp.ne.s32.totalorder %s154, %s155
    %p167 = scmp.eq.s32.totalorder %s21, 3
    %p168 = por %p166, %p167
    %p170 = scmp.ne.s32.totalorder %s155, %s169
    %p171 = scmp.eq.s32.totalorder %s21, 0
    %p172 = por %p170, %p171
    %s174 = sadd.s32 %s173, 1
    %p177 = scmp.eq.s32.totalorder %s15, 3
    %p178 = scmp.ne.s32.totalorder %s173, %s175
    %p179 = scmp.eq.s32.totalorder %s15, 0
    %p180 = por %p178, %p179
    %p181 = scmp.ne.s32.totalorder %s173, %s175
    %p182 = scmp.eq.s32.totalorder %s20, 3
    %p183 = por %p181, %p182
    %p184 = scmp.ne.s32.totalorder %s175, %s176
    %p185 = scmp.eq.s32.totalorder %s20, 0
    %p186 = por %p184, %p185
    %p187 = scmp.ne.s32.totalorder %s175, %s176
    %p188 = scmp.eq.s32.totalorder %s21, 3
    %p189 = por %p187, %p188
    %p191 = scmp.ne.s32.totalorder %s176, %s190
    %p192 = scmp.eq.s32.totalorder %s21, 0
    %p193 = por %p191, %p192
    %s195 = sadd.s32 %s194, 1
    %p198 = scmp.eq.s32.totalorder %s15, 3
    %p199 = scmp.ne.s32.totalorder %s194, %s196
    %p200 = scmp.eq.s32.totalorder %s15, 0
    %p201 = por %p199, %p200
    %p202 = scmp.ne.s32.totalorder %s194, %s196
    %p203 = scmp.eq.s32.totalorder %s20, 3
    %p204 = por %p202, %p203
    %p205 = scmp.ne.s32.totalorder %s196, %s197
    %p206 = scmp.eq.s32.totalorder %s20, 0
    %p207 = por %p205, %p206
    %p208 = scmp.ne.s32.totalorder %s196, %s197
    %p209 = scmp.eq.s32.totalorder %s21, 3
    %p210 = por %p208, %p209
    %p212 = scmp.ne.s32.totalorder %s197, %s211
    %p213 = scmp.eq.s32.totalorder %s21, 0
    %p214 = por %p212, %p213
    %s216 = sadd.s32 %s215, 1
    %p219 = scmp.eq.s32.totalorder %s15, 3
    %p220 = scmp.ne.s32.totalorder %s215, %s217
    %p221 = scmp.eq.s32.totalorder %s15, 0
    %p222 = por %p220, %p221
    %p223 = scmp.ne.s32.totalorder %s215, %s217
    %p224 = scmp.eq.s32.totalorder %s20, 3
    %p225 = por %p223, %p224
    %p226 = scmp.ne.s32.totalorder %s217, %s218
    %p227 = scmp.eq.s32.totalorder %s20, 0
    %p228 = por %p226, %p227
    %p229 = scmp.ne.s32.totalorder %s217, %s218
    %p230 = scmp.eq.s32.totalorder %s21, 3
    %p231 = por %p229, %p230
    %p233 = scmp.ne.s32.totalorder %s218, %s232
    %p234 = scmp.eq.s32.totalorder %s21, 0
    %p235 = por %p233, %p234
    %s236 = ssub.s32 %s22, %s34
    %s237 = ssub.s32 %s23, %s30
    %s238 = sor.u32 %s236, %s237
    %p239 = scmp.eq.s32.totalorder %s238, 0
    %s241 = sadd.s32 %s240, 1
    %s242 = scalar_select %p239, %s240, %s241
    %p245 = pneg %p239
    %p246 = scmp.eq.s32.totalorder %s15, 3
    %p247 = por %p245, %p246
    %p248 = scmp.ne.s32.totalorder %s240, %s243
    %p249 = scmp.eq.s32.totalorder %s15, 0
    %p250 = por %p248, %p249
    %p251 = scmp.ne.s32.totalorder %s240, %s243
    %p252 = scmp.eq.s32.totalorder %s20, 3
    %p253 = por %p251, %p252
    %p254 = scmp.ne.s32.totalorder %s243, %s244
    %p255 = scmp.eq.s32.totalorder %s20, 0
    %p256 = por %p254, %p255
    %p257 = scmp.ne.s32.totalorder %s243, %s244
    %p258 = scmp.eq.s32.totalorder %s21, 3
    %p259 = por %p257, %p258
    %p261 = scmp.ne.s32.totalorder %s244, %s260
    %p262 = scmp.eq.s32.totalorder %s21, 0
    %p263 = por %p261, %p262
    %p264 = scmp.le.s32.totalorder 1, %s15
    %p265 = scmp.lt.s32.totalorder %s15, 5
    %p266 = pnand %p264, %p265
    %p267 = pneg %p266
    // Predicated region
    $region9: #{generator_forward.11} parent=5 // pred_check
      _
    $region10: #{generator_forward.11} parent=5 // pred_check_branch
      %269 = sbr.rel (%p266) target = $region12
    $region11: #{generator_forward.11} parent=5 // pred_region
      %s270 = ssub.s32 %s15, 1
      // Predicated region
      $region13: #{generator_forward.11} parent=11 // pred_check
        %p271 = pneg %p102
      $region14: #{generator_forward.11} parent=11 // pred_check_branch
        %273 = sbr.rel (%p271) target = $region16
      $region15: #{generator_forward.11} parent=11 // pred_region
        _
      $region16: #{generator_forward.11} parent=11 // pred_fallthru
        _
      // Predicated region
      $region17: #{generator_forward.11} parent=11 // pred_check
        %p274 = pneg %p123
      $region18: #{generator_forward.11} parent=11 // pred_check_branch
        %276 = sbr.rel (%p274) target = $region20
      $region19: #{generator_forward.11} parent=11 // pred_region
        _
      $region20: #{generator_forward.11} parent=11 // pred_fallthru
        _
      // Predicated region
      $region21: #{generator_forward.11} parent=11 // pred_check
        %p277 = pneg %p144
      $region22: #{generator_forward.11} parent=11 // pred_check_branch
        %279 = sbr.rel (%p277) target = $region24
      $region23: #{generator_forward.11} parent=11 // pred_region
        _
      $region24: #{generator_forward.11} parent=11 // pred_fallthru
        _
      // Predicated region
      $region25: #{generator_forward.11} parent=11 // pred_check
        %p280 = pneg %p165
      $region26: #{generator_forward.11} parent=11 // pred_check_branch
        %282 = sbr.rel (%p280) target = $region28
      $region27: #{generator_forward.11} parent=11 // pred_region
        _
      $region28: #{generator_forward.11} parent=11 // pred_fallthru
        _
      // Predicated region
      $region29: #{generator_forward.11} parent=11 // pred_check
        %p283 = pneg %p186
      $region30: #{generator_forward.11} parent=11 // pred_check_branch
        %285 = sbr.rel (%p283) target = $region32
      $region31: #{generator_forward.11} parent=11 // pred_region
        _
      $region32: #{generator_forward.11} parent=11 // pred_fallthru
        _
      // Predicated region
      $region33: #{generator_forward.11} parent=11 // pred_check
        %p286 = pneg %p207
      $region34: #{generator_forward.11} parent=11 // pred_check_branch
        %288 = sbr.rel (%p286) target = $region36
      $region35: #{generator_forward.11} parent=11 // pred_region
        _
      $region36: #{generator_forward.11} parent=11 // pred_fallthru
        _
      // Predicated region
      $region37: #{generator_forward.11} parent=11 // pred_check
        %p289 = pneg %p228
      $region38: #{generator_forward.11} parent=11 // pred_check_branch
        %291 = sbr.rel (%p289) target = $region40
      $region39: #{generator_forward.11} parent=11 // pred_region
        _
      $region40: #{generator_forward.11} parent=11 // pred_fallthru
        _
    $region12: #{generator_forward.11} parent=5 // pred_fallthru
      _
    %p292 = scmp.lt.s32.totalorder %s15, 4
    // Predicated region
    $region41: #{generator_forward.11} parent=5 // pred_check
      %p293 = pneg %p292
    $region42: #{generator_forward.11} parent=5 // pred_check_branch
      %295 = sbr.rel (%p293) target = $region44
    $region43: #{generator_forward.11} parent=5 // pred_region
      // Predicated region
      $region45: #{generator_forward.11} parent=43 // pred_check
        %p296 = pneg %p49
      $region46: #{generator_forward.11} parent=43 // pred_check_branch
        %298 = sbr.rel (%p296) target = $region48
      $region47: #{generator_forward.11} parent=43 // pred_region
        %s299 = smul.u32 4, %s23
        %p300 = scmp.lt.s32.totalorder %s22, 1
        %s301 = scalar_select %p300, %s22, 1
        %p302 = scmp.lt.s32.totalorder %s299, 7
        %s303 = scalar_select %p302, %s299, 7
        %s304 = smul.addr %s301, 8
        %s305 = sadd.s32 %s303, %s304
        %s306 = smul.addr %s305, 4
        %s307 = scalar_lea.vmem %s0, %s306
        %s308 = smul.u32 4, %s23
      $region48: #{generator_forward.11} parent=43 // pred_fallthru
        _
      // Predicated region
      $region49: #{generator_forward.11} parent=43 // pred_check
        %p309 = pneg %p75
      $region50: #{generator_forward.11} parent=43 // pred_check_branch
        %311 = sbr.rel (%p309) target = $region52
      $region51: #{generator_forward.11} parent=43 // pred_region
        %p312 = scmp.lt.s32.totalorder %s22, 1
        %s313 = scalar_select %p312, %s22, 1
        %s314 = smul.addr %s313, 8
        %s315 = scalar_lea.vmem %s1, %s314
      $region52: #{generator_forward.11} parent=43 // pred_fallthru
        _
    $region44: #{generator_forward.11} parent=5 // pred_fallthru
      _
    %p316 = scmp.le.s32.totalorder 1, %s15
    %p317 = scmp.lt.s32.totalorder %s15, 5
    %p318 = pnand %p316, %p317
    %p319 = pneg %p318
    // Predicated region
    $region53: #{generator_forward.11} parent=5 // pred_check
      _
    $region54: #{generator_forward.11} parent=5 // pred_check_branch
      %321 = sbr.rel (%p318) target = $region56
    $region55: #{generator_forward.11} parent=5 // pred_region
      %s322 = ssub.s32 %s15, 1
      %s323 = smul.u32 4, %s25
      %p324 = scmp.lt.s32.totalorder %s24, 1
      %s325 = scalar_select %p324, %s24, 1
      %p326 = scmp.lt.s32.totalorder %s323, 7
      %s327 = scalar_select %p326, %s323, 7
      %s328 = smul.addr %s325, 8
      %s329 = sadd.s32 %s327, %s328
      %s330 = smul.addr %s329, 4
      %s331 = scalar_lea.vmem %s0, %s330
      %p332 = pneg %p55
      %p333 = pneg %p52
      %p334 = scmp.lt.s32.totalorder %s24, 1
      %s335 = scalar_select %p334, %s24, 1
      %s336 = smul.addr %s335, 8
      %s337 = scalar_lea.vmem %s1, %s336
      %p338 = pneg %p81
      %p339 = pneg %p78
      %p340 = pneg %p102
      %p341 = pneg %p99
      %p342 = pneg %p123
      %p343 = pneg %p120
      %p344 = pneg %p144
      %p345 = pneg %p141
      %p346 = pneg %p165
      %p347 = pneg %p162
      %p348 = pneg %p186
      %p349 = pneg %p183
      %p350 = pneg %p207
      %p351 = pneg %p204
      %p352 = pneg %p228
      %p353 = pneg %p225
      %p354 = pneg %p256
      %p355 = pneg %p253
      %s356 = smul.u32 4, %s25
      %p357 = scmp.lt.s32.totalorder %s24, 1
      %s358 = scalar_select %p357, %s24, 1
      %p359 = scmp.lt.s32.totalorder %s356, 7
      %s360 = scalar_select %p359, %s356, 7
      %s361 = smul.addr %s358, 8
      %s362 = sadd.s32 %s360, %s361
      %s363 = smul.addr %s362, 8
      %s364 = scalar_lea.vmem %s9, %s363
      %s365 = smul.u32 4, %s25
      %p366 = scmp.lt.s32.totalorder %s24, 1
      %s367 = scalar_select %p366, %s24, 1
      %p368 = scmp.lt.s32.totalorder %s365, 7
      %s369 = scalar_select %p368, %s365, 7
      %s370 = smul.addr %s367, 8
      %s371 = sadd.s32 %s369, %s370
      %s372 = smul.addr %s371, 4
      %s373 = scalar_lea.vmem %s0, %s372
      %s374 = smul.u32 4, %s25
      %p375 = scmp.lt.s32.totalorder %s24, 1
      %s376 = scalar_select %p375, %s24, 1
      %s377 = smul.addr %s376, 8
      %s378 = scalar_lea.vmem %s1, %s377
      %s379 = smul.u32 4, %s25
      %p380 = scmp.lt.s32.totalorder %s24, 1
      %s381 = scalar_select %p380, %s24, 1
      %p382 = scmp.lt.s32.totalorder %s379, 7
      %s383 = scalar_select %p382, %s379, 7
      %s384 = smul.addr %s381, 8
      %s385 = sadd.s32 %s383, %s384
      %s386 = smul.addr %s385, 8
      %s387 = scalar_lea.vmem %s9, %s386
      %s388 = smul.u32 4, %s25
      %v390 = vld [vmem:[%s373] sm:$0xf]
      %v391 = vld [vmem:[%s373 + $0x4] sm:$0xf]
      %v392 = vld [vmem:[%s373 + $0x8] sm:$0xf]
      %v393 = vld [vmem:[%s373 + $0xc] sm:$0xf]
      %v394 = vld [vmem:[%s2] sm:$0xff]
      %v395 = vld [vmem:[%s2 + $0x8] sm:$0xff]
      %v396 = vld [vmem:[%s2 + $0x10] sm:$0xff]
      %v397 = vld [vmem:[%s2 + $0x18] sm:$0xff]
      %v398 = vld [vmem:[%s2 + $0x20] sm:$0xff]
      %v399 = vld [vmem:[%s2 + $0x28] sm:$0xff]
      %v400 = vld [vmem:[%s2 + $0x30] sm:$0xff]
      %v401 = vld [vmem:[%s2 + $0x38] sm:$0xff]
      %v402 = vld [vmem:[%s2 + $0x40] sm:$0xff]
      %v403 = vld [vmem:[%s2 + $0x48] sm:$0xff]
      %v404 = vld [vmem:[%s2 + $0x50] sm:$0xff]
      %v405 = vld [vmem:[%s2 + $0x58] sm:$0xff]
      %v406 = vld [vmem:[%s2 + $0x60] sm:$0xff]
      %v407 = vld [vmem:[%s2 + $0x68] sm:$0xff]
      %v408 = vld [vmem:[%s2 + $0x70] sm:$0xff]
      %v409 = vld [vmem:[%s2 + $0x78] sm:$0xff]
      %v410 = vld [vmem:[%s2 + $0x80] sm:$0xff]
      %v411 = vld [vmem:[%s2 + $0x88] sm:$0xff]
      %v412 = vld [vmem:[%s2 + $0x90] sm:$0xff]
      %v413 = vld [vmem:[%s2 + $0x98] sm:$0xff]
      %v414 = vld [vmem:[%s2 + $0xa0] sm:$0xff]
      %v415 = vld [vmem:[%s2 + $0xa8] sm:$0xff]
      %v416 = vld [vmem:[%s2 + $0xb0] sm:$0xff]
      %v417 = vld [vmem:[%s2 + $0xb8] sm:$0xff]
      %v418 = vld [vmem:[%s2 + $0xc0] sm:$0xff]
      %v419 = vld [vmem:[%s2 + $0xc8] sm:$0xff]
      %v420 = vld [vmem:[%s2 + $0xd0] sm:$0xff]
      %v421 = vld [vmem:[%s2 + $0xd8] sm:$0xff]
      %v422 = vld [vmem:[%s2 + $0xe0] sm:$0xff]
      %v423 = vld [vmem:[%s2 + $0xe8] sm:$0xff]
      %v424 = vld [vmem:[%s2 + $0xf0] sm:$0xff]
      %v425 = vld [vmem:[%s2 + $0xf8] sm:$0xff]
      %v426 = vld [vmem:[%s378] sm:$0xff]
      %v428 = vlaneseq
      %v429 = vshrl.u32 %v428, 7
      %v430 = vsub.s32 0, %v429
      %v431 = vrot.slane %v426, %v430
      %v432 = vlaneseq
      %v433 = vshrl.u32 %v432, 7
      %v434 = vsub.s32 1, %v433
      %v435 = vrot.slane %v426, %v434
      %v436 = vlaneseq
      %v437 = vshrl.u32 %v436, 7
      %v438 = vsub.s32 2, %v437
      %v439 = vrot.slane %v426, %v438
      %v440 = vlaneseq
      %v441 = vshrl.u32 %v440, 7
      %v442 = vsub.s32 3, %v441
      %v443 = vrot.slane %v426, %v442
      %v444 = vlaneseq
      %v445 = vshrl.u32 %v444, 7
      %v446 = vsub.s32 4, %v445
      %v447 = vrot.slane %v426, %v446
      %v448 = vlaneseq
      %v449 = vshrl.u32 %v448, 7
      %v450 = vsub.s32 5, %v449
      %v451 = vrot.slane %v426, %v450
      %v452 = vlaneseq
      %v453 = vshrl.u32 %v452, 7
      %v454 = vsub.s32 6, %v453
      %v455 = vrot.slane %v426, %v454
      %v456 = vlaneseq
      %v457 = vshrl.u32 %v456, 7
      %v458 = vsub.s32 7, %v457
      %v459 = vrot.slane %v426, %v458
      %v472 = vunpack.c.l.b16 %v390
      %v473 = vunpack.c.l.b16 %v391
      %v474 = vunpack.c.l.b16 %v392
      %v475 = vunpack.c.l.b16 %v393
      %v476 = vpack.c.b16 %v473, %v472
      %v477 = vpack.c.b16 %v475, %v474
      %v510 = vunpack.c.l.b16 %v394
      %v511 = vunpack.c.h.b16 %v394
      %v512 = vunpack.c.l.b16 %v395
      %v513 = vunpack.c.h.b16 %v395
      %v514 = vunpack.c.l.b16 %v396
      %v515 = vunpack.c.h.b16 %v396
      %v516 = vunpack.c.l.b16 %v397
      %v517 = vunpack.c.h.b16 %v397
      %v518 = vunpack.c.l.b16 %v398
      %v519 = vunpack.c.h.b16 %v398
      %v520 = vunpack.c.l.b16 %v399
      %v521 = vunpack.c.h.b16 %v399
      %v522 = vunpack.c.l.b16 %v400
      %v523 = vunpack.c.h.b16 %v400
      %v524 = vunpack.c.l.b16 %v401
      %v525 = vunpack.c.h.b16 %v401
      %v526 = vunpack.c.l.b16 %v402
      %v527 = vunpack.c.h.b16 %v402
      %v528 = vunpack.c.l.b16 %v403
      %v529 = vunpack.c.h.b16 %v403
      %v530 = vunpack.c.l.b16 %v404
      %v531 = vunpack.c.h.b16 %v404
      %v532 = vunpack.c.l.b16 %v405
      %v533 = vunpack.c.h.b16 %v405
      %v534 = vunpack.c.l.b16 %v406
      %v535 = vunpack.c.h.b16 %v406
      %v536 = vunpack.c.l.b16 %v407
      %v537 = vunpack.c.h.b16 %v407
      %v538 = vunpack.c.l.b16 %v408
      %v539 = vunpack.c.h.b16 %v408
      %v540 = vunpack.c.l.b16 %v409
      %v541 = vunpack.c.h.b16 %v409
      %v542 = vunpack.c.l.b16 %v410
      %v543 = vunpack.c.h.b16 %v410
      %v544 = vunpack.c.l.b16 %v411
      %v545 = vunpack.c.h.b16 %v411
      %v546 = vunpack.c.l.b16 %v412
      %v547 = vunpack.c.h.b16 %v412
      %v548 = vunpack.c.l.b16 %v413
      %v549 = vunpack.c.h.b16 %v413
      %v550 = vunpack.c.l.b16 %v414
      %v551 = vunpack.c.h.b16 %v414
      %v552 = vunpack.c.l.b16 %v415
      %v553 = vunpack.c.h.b16 %v415
      %v554 = vunpack.c.l.b16 %v416
      %v555 = vunpack.c.h.b16 %v416
      %v556 = vunpack.c.l.b16 %v417
      %v557 = vunpack.c.h.b16 %v417
      %v558 = vunpack.c.l.b16 %v418
      %v559 = vunpack.c.h.b16 %v418
      %v560 = vunpack.c.l.b16 %v419
      %v561 = vunpack.c.h.b16 %v419
      %v562 = vunpack.c.l.b16 %v420
      %v563 = vunpack.c.h.b16 %v420
      %v564 = vunpack.c.l.b16 %v421
      %v565 = vunpack.c.h.b16 %v421
      %v566 = vunpack.c.l.b16 %v422
      %v567 = vunpack.c.h.b16 %v422
      %v568 = vunpack.c.l.b16 %v423
      %v569 = vunpack.c.h.b16 %v423
      %v570 = vunpack.c.l.b16 %v424
      %v571 = vunpack.c.h.b16 %v424
      %v572 = vunpack.c.l.b16 %v425
      %v573 = vunpack.c.h.b16 %v425
      %v574 = vpack.c.b16 %v518, %v510
      %v575 = vpack.c.b16 %v519, %v511
      %v576 = vpack.c.b16 %v520, %v512
      %v577 = vpack.c.b16 %v521, %v513
      %v578 = vpack.c.b16 %v522, %v514
      %v579 = vpack.c.b16 %v523, %v515
      %v580 = vpack.c.b16 %v524, %v516
      %v581 = vpack.c.b16 %v525, %v517
      %v582 = vpack.c.b16 %v534, %v526
      %v583 = vpack.c.b16 %v535, %v527
      %v584 = vpack.c.b16 %v536, %v528
      %v585 = vpack.c.b16 %v537, %v529
      %v586 = vpack.c.b16 %v538, %v530
      %v587 = vpack.c.b16 %v539, %v531
      %v588 = vpack.c.b16 %v540, %v532
      %v589 = vpack.c.b16 %v541, %v533
      %v590 = vpack.c.b16 %v550, %v542
      %v591 = vpack.c.b16 %v551, %v543
      %v592 = vpack.c.b16 %v552, %v544
      %v593 = vpack.c.b16 %v553, %v545
      %v594 = vpack.c.b16 %v554, %v546
      %v595 = vpack.c.b16 %v555, %v547
      %v596 = vpack.c.b16 %v556, %v548
      %v597 = vpack.c.b16 %v557, %v549
      %v598 = vpack.c.b16 %v566, %v558
      %v599 = vpack.c.b16 %v567, %v559
      %v600 = vpack.c.b16 %v568, %v560
      %v601 = vpack.c.b16 %v569, %v561
      %v602 = vpack.c.b16 %v570, %v562
      %v603 = vpack.c.b16 %v571, %v563
      %v604 = vpack.c.b16 %v572, %v564
      %v605 = vpack.c.b16 %v573, %v565
      %vm638 = vcmask 523264
      %v640 = vsel %vm638, %v476, 0
      %v643 = vsel %vm638, %v477, 0
      %645 = vmatprep.subr.bf16.mxu0 %v575
      %646 = vmatpush1.bf16.msra.mxu0 %v574
      %647 = vmatprep.subr.bf16.mxu0 %v583
      %648 = vmatpush1.bf16.msra.mxu0 %v582
      %649 = vmatprep.subr.bf16.mxu0 %v591
      %650 = vmatpush1.bf16.msra.mxu0 %v590
      %651 = vmatprep.subr.bf16.mxu0 %v599
      %652 = vmatpush1.bf16.msra.mxu0 %v598
      %653 = vmatprep.subr.bf16.mxu0 0
      %654 = vmatpush1.bf16.msra.mxu0 0
      %655 = vmatprep.subr.bf16.mxu0 0
      %656 = vmatpush1.bf16.msra.mxu0 0
      %657 = vmatprep.subr.bf16.mxu0 0
      %658 = vmatpush1.bf16.msra.mxu0 0
      %659 = vmatprep.subr.bf16.mxu0 0
      %660 = vmatpush1.bf16.msra.mxu0 0
      %661 = vmatprep.subr.bf16.mxu0 0
      %662 = vmatpush1.bf16.msra.mxu0 0
      %663 = vmatprep.subr.bf16.mxu0 0
      %664 = vmatpush1.bf16.msra.mxu0 0
      %665 = vmatprep.subr.bf16.mxu0 0
      %666 = vmatpush1.bf16.msra.mxu0 0
      %667 = vmatprep.subr.bf16.mxu0 0
      %668 = vmatpush1.bf16.msra.mxu0 0
      %669 = vmatprep.subr.bf16.mxu0 0
      %670 = vmatpush1.bf16.msra.mxu0 0
      %671 = vmatprep.subr.bf16.mxu0 0
      %672 = vmatpush1.bf16.msra.mxu0 0
      %673 = vmatprep.subr.bf16.mxu0 0
      %674 = vmatpush1.bf16.msra.mxu0 0
      %675 = vmatprep.subr.bf16.mxu0 0
      %676 = vmatpush1.bf16.msra.mxu0 0
      %677 = vmatprep.mubr.bf16.mxu0 0
      %678 = vmatmul.mubr.bf16.gmra.mrb[0].mxu0 %v640
      %v679 = vpop.f32.mrb[0].mxu0
      %v680 = vadd.f32 %v431, %v679
      %v681 = vpop.f32.mrb[0].mxu0
      %v682 = vadd.f32 %v435, %v681
      %v683 = vpop.f32.mrb[0].mxu0
      %v684 = vadd.f32 %v431, %v683
      %v685 = vpop.f32.mrb[0].mxu0
      %v686 = vadd.f32 %v435, %v685
      %687 = vmatprep.mubr.bf16.mxu0 0
      %688 = vmatmul.mubr.bf16.gmra.mrb[0].mxu0 %v643
      %v689 = vpop.f32.mrb[0].mxu0
      %v690 = vadd.f32 %v431, %v689
      %v691 = vpop.f32.mrb[0].mxu0
      %v692 = vadd.f32 %v435, %v691
      %v693 = vpop.f32.mrb[0].mxu0
      %v694 = vadd.f32 %v431, %v693
      %v695 = vpop.f32.mrb[0].mxu0
      %v696 = vadd.f32 %v435, %v695
      %697 = vdwg.mxu0
      %698 = vmatprep.subr.bf16.mxu0 %v577
      %699 = vmatpush1.bf16.msra.mxu0 %v576
      %700 = vmatprep.subr.bf16.mxu0 %v585
      %701 = vmatpush1.bf16.msra.mxu0 %v584
      %702 = vmatprep.subr.bf16.mxu0 %v593
      %703 = vmatpush1.bf16.msra.mxu0 %v592
      %704 = vmatprep.subr.bf16.mxu0 %v601
      %705 = vmatpush1.bf16.msra.mxu0 %v600
      %706 = vmatprep.subr.bf16.mxu0 0
      %707 = vmatpush1.bf16.msra.mxu0 0
      %708 = vmatprep.subr.bf16.mxu0 0
      %709 = vmatpush1.bf16.msra.mxu0 0
      %710 = vmatprep.subr.bf16.mxu0 0
      %711 = vmatpush1.bf16.msra.mxu0 0
      %712 = vmatprep.subr.bf16.mxu0 0
      %713 = vmatpush1.bf16.msra.mxu0 0
      %714 = vmatprep.subr.bf16.mxu0 0
      %715 = vmatpush1.bf16.msra.mxu0 0
      %716 = vmatprep.subr.bf16.mxu0 0
      %717 = vmatpush1.bf16.msra.mxu0 0
      %718 = vmatprep.subr.bf16.mxu0 0
      %719 = vmatpush1.bf16.msra.mxu0 0
      %720 = vmatprep.subr.bf16.mxu0 0
      %721 = vmatpush1.bf16.msra.mxu0 0
      %722 = vmatprep.subr.bf16.mxu0 0
      %723 = vmatpush1.bf16.msra.mxu0 0
      %724 = vmatprep.subr.bf16.mxu0 0
      %725 = vmatpush1.bf16.msra.mxu0 0
      %726 = vmatprep.subr.bf16.mxu0 0
      %727 = vmatpush1.bf16.msra.mxu0 0
      %728 = vmatprep.subr.bf16.mxu0 0
      %729 = vmatpush1.bf16.msra.mxu0 0
      %730 = vmatprep.mubr.bf16.mxu0 0
      %731 = vmatmul.mubr.bf16.gmra.mrb[0].mxu0 %v640
      %v732 = vpop.f32.mrb[0].mxu0
      %v733 = vadd.f32 %v439, %v732
      %v734 = vpop.f32.mrb[0].mxu0
      %v735 = vadd.f32 %v443, %v734
      %v736 = vpop.f32.mrb[0].mxu0
      %v737 = vadd.f32 %v439, %v736
      %v738 = vpop.f32.mrb[0].mxu0
      %v739 = vadd.f32 %v443, %v738
      %740 = vmatprep.mubr.bf16.mxu0 0
      %741 = vmatmul.mubr.bf16.gmra.mrb[0].mxu0 %v643
      %v742 = vpop.f32.mrb[0].mxu0
      %v743 = vadd.f32 %v439, %v742
      %v744 = vpop.f32.mrb[0].mxu0
      %v745 = vadd.f32 %v443, %v744
      %v746 = vpop.f32.mrb[0].mxu0
      %v747 = vadd.f32 %v439, %v746
      %v748 = vpop.f32.mrb[0].mxu0
      %v749 = vadd.f32 %v443, %v748
      %750 = vdwg.mxu0
      %751 = vmatprep.subr.bf16.mxu0 %v579
      %752 = vmatpush1.bf16.msra.mxu0 %v578
      %753 = vmatprep.subr.bf16.mxu0 %v587
      %754 = vmatpush1.bf16.msra.mxu0 %v586
      %755 = vmatprep.subr.bf16.mxu0 %v595
      %756 = vmatpush1.bf16.msra.mxu0 %v594
      %757 = vmatprep.subr.bf16.mxu0 %v603
      %758 = vmatpush1.bf16.msra.mxu0 %v602
      %759 = vmatprep.subr.bf16.mxu0 0
      %760 = vmatpush1.bf16.msra.mxu0 0
      %761 = vmatprep.subr.bf16.mxu0 0
      %762 = vmatpush1.bf16.msra.mxu0 0
      %763 = vmatprep.subr.bf16.mxu0 0
      %764 = vmatpush1.bf16.msra.mxu0 0
      %765 = vmatprep.subr.bf16.mxu0 0
      %766 = vmatpush1.bf16.msra.mxu0 0
      %767 = vmatprep.subr.bf16.mxu0 0
      %768 = vmatpush1.bf16.msra.mxu0 0
      %769 = vmatprep.subr.bf16.mxu0 0
      %770 = vmatpush1.bf16.msra.mxu0 0
      %771 = vmatprep.subr.bf16.mxu0 0
      %772 = vmatpush1.bf16.msra.mxu0 0
      %773 = vmatprep.subr.bf16.mxu0 0
      %774 = vmatpush1.bf16.msra.mxu0 0
      %775 = vmatprep.subr.bf16.mxu0 0
      %776 = vmatpush1.bf16.msra.mxu0 0
      %777 = vmatprep.subr.bf16.mxu0 0
      %778 = vmatpush1.bf16.msra.mxu0 0
      %779 = vmatprep.subr.bf16.mxu0 0
      %780 = vmatpush1.bf16.msra.mxu0 0
      %781 = vmatprep.subr.bf16.mxu0 0
      %782 = vmatpush1.bf16.msra.mxu0 0
      %783 = vmatprep.mubr.bf16.mxu0 0
      %784 = vmatmul.mubr.bf16.gmra.mrb[0].mxu0 %v640
      %v785 = vpop.f32.mrb[0].mxu0
      %v786 = vadd.f32 %v447, %v785
      %v787 = vpop.f32.mrb[0].mxu0
      %v788 = vadd.f32 %v451, %v787
      %v789 = vpop.f32.mrb[0].mxu0
      %v790 = vadd.f32 %v447, %v789
      %v791 = vpop.f32.mrb[0].mxu0
      %v792 = vadd.f32 %v451, %v791
      %793 = vmatprep.mubr.bf16.mxu0 0
      %794 = vmatmul.mubr.bf16.gmra.mrb[0].mxu0 %v643
      %v795 = vpop.f32.mrb[0].mxu0
      %v796 = vadd.f32 %v447, %v795
      %v797 = vpop.f32.mrb[0].mxu0
      %v798 = vadd.f32 %v451, %v797
      %v799 = vpop.f32.mrb[0].mxu0
      %v800 = vadd.f32 %v447, %v799
      %v801 = vpop.f32.mrb[0].mxu0
      %v802 = vadd.f32 %v451, %v801
      %803 = vdwg.mxu0
      %804 = vmatprep.subr.bf16.mxu0 %v581
      %805 = vmatpush1.bf16.msra.mxu0 %v580
      %806 = vmatprep.subr.bf16.mxu0 %v589
      %807 = vmatpush1.bf16.msra.mxu0 %v588
      %808 = vmatprep.subr.bf16.mxu0 %v597
      %809 = vmatpush1.bf16.msra.mxu0 %v596
      %810 = vmatprep.subr.bf16.mxu0 %v605
      %811 = vmatpush1.bf16.msra.mxu0 %v604
      %812 = vmatprep.subr.bf16.mxu0 0
      %813 = vmatpush1.bf16.msra.mxu0 0
      %814 = vmatprep.subr.bf16.mxu0 0
      %815 = vmatpush1.bf16.msra.mxu0 0
      %816 = vmatprep.subr.bf16.mxu0 0
      %817 = vmatpush1.bf16.msra.mxu0 0
      %818 = vmatprep.subr.bf16.mxu0 0
      %819 = vmatpush1.bf16.msra.mxu0 0
      %820 = vmatprep.subr.bf16.mxu0 0
      %821 = vmatpush1.bf16.msra.mxu0 0
      %822 = vmatprep.subr.bf16.mxu0 0
      %823 = vmatpush1.bf16.msra.mxu0 0
      %824 = vmatprep.subr.bf16.mxu0 0
      %825 = vmatpush1.bf16.msra.mxu0 0
      %826 = vmatprep.subr.bf16.mxu0 0
      %827 = vmatpush1.bf16.msra.mxu0 0
      %828 = vmatprep.subr.bf16.mxu0 0
      %829 = vmatpush1.bf16.msra.mxu0 0
      %830 = vmatprep.subr.bf16.mxu0 0
      %831 = vmatpush1.bf16.msra.mxu0 0
      %832 = vmatprep.subr.bf16.mxu0 0
      %833 = vmatpush1.bf16.msra.mxu0 0
      %834 = vmatprep.subr.bf16.mxu0 0
      %835 = vmatpush1.bf16.msra.mxu0 0
      %836 = vmatprep.mubr.bf16.mxu0 0
      %837 = vmatmul.mubr.bf16.gmra.mrb[0].mxu0 %v640
      %v838 = vpop.f32.mrb[0].mxu0
      %v839 = vadd.f32 %v455, %v838
      %v840 = vpop.f32.mrb[0].mxu0
      %v841 = vadd.f32 %v459, %v840
      %v842 = vpop.f32.mrb[0].mxu0
      %v843 = vadd.f32 %v455, %v842
      %v844 = vpop.f32.mrb[0].mxu0
      %v845 = vadd.f32 %v459, %v844
      %846 = vmatprep.mubr.bf16.mxu0 0
      %847 = vmatmul.mubr.bf16.gmra.mrb[0].mxu0 %v643
      %v848 = vpop.f32.mrb[0].mxu0
      %v849 = vadd.f32 %v455, %v848
      %v850 = vpop.f32.mrb[0].mxu0
      %v851 = vadd.f32 %v459, %v850
      %v852 = vpop.f32.mrb[0].mxu0
      %v853 = vadd.f32 %v455, %v852
      %v854 = vpop.f32.mrb[0].mxu0
      %v855 = vadd.f32 %v459, %v854
      %856 = vdwg.mxu0
      %v857 = vmax.f32 %v680, 0.0
      %v858 = vmax.f32 %v682, 0.0
      %v859 = vmax.f32 %v733, 0.0
      %v860 = vmax.f32 %v735, 0.0
      %v861 = vmax.f32 %v786, 0.0
      %v862 = vmax.f32 %v788, 0.0
      %v863 = vmax.f32 %v839, 0.0
      %v864 = vmax.f32 %v841, 0.0
      %v865 = vmax.f32 %v684, 0.0
      %v866 = vmax.f32 %v686, 0.0
      %v867 = vmax.f32 %v737, 0.0
      %v868 = vmax.f32 %v739, 0.0
      %v869 = vmax.f32 %v790, 0.0
      %v870 = vmax.f32 %v792, 0.0
      %v871 = vmax.f32 %v843, 0.0
      %v872 = vmax.f32 %v845, 0.0
      %v873 = vmax.f32 %v690, 0.0
      %v874 = vmax.f32 %v692, 0.0
      %v875 = vmax.f32 %v743, 0.0
      %v876 = vmax.f32 %v745, 0.0
      %v877 = vmax.f32 %v796, 0.0
      %v878 = vmax.f32 %v798, 0.0
      %v879 = vmax.f32 %v849, 0.0
      %v880 = vmax.f32 %v851, 0.0
      %v881 = vmax.f32 %v694, 0.0
      %v882 = vmax.f32 %v696, 0.0
      %v883 = vmax.f32 %v747, 0.0
      %v884 = vmax.f32 %v749, 0.0
      %v885 = vmax.f32 %v800, 0.0
      %v886 = vmax.f32 %v802, 0.0
      %v887 = vmax.f32 %v853, 0.0
      %v888 = vmax.f32 %v855, 0.0
      %v889 = vpack.c.bf16 %v865, %v857
      %v890 = vpack.c.bf16 %v866, %v858
      %v891 = vpack.c.bf16 %v867, %v859
      %v892 = vpack.c.bf16 %v868, %v860
      %v893 = vpack.c.bf16 %v869, %v861
      %v894 = vpack.c.bf16 %v870, %v862
      %v895 = vpack.c.bf16 %v871, %v863
      %v896 = vpack.c.bf16 %v872, %v864
      %v897 = vpack.c.bf16 %v881, %v873
      %v898 = vpack.c.bf16 %v882, %v874
      %v899 = vpack.c.bf16 %v883, %v875
      %v900 = vpack.c.bf16 %v884, %v876
      %v901 = vpack.c.bf16 %v885, %v877
      %v902 = vpack.c.bf16 %v886, %v878
      %v903 = vpack.c.bf16 %v887, %v879
      %v904 = vpack.c.bf16 %v888, %v880
      %v905 = vld [vmem:[%s3] sm:$0xff]
      %v906 = vld [vmem:[%s3 + $0x8] sm:$0xff]
      %v907 = vld [vmem:[%s3 + $0x10] sm:$0xff]
      %v908 = vld [vmem:[%s3 + $0x18] sm:$0xff]
      %v909 = vld [vmem:[%s3 + $0x20] sm:$0xff]
      %v910 = vld [vmem:[%s3 + $0x28] sm:$0xff]
      %v911 = vld [vmem:[%s3 + $0x30] sm:$0xff]
      %v912 = vld [vmem:[%s3 + $0x38] sm:$0xff]
      %v913 = vld [vmem:[%s3 + $0x40] sm:$0xff]
      %v914 = vld [vmem:[%s3 + $0x48] sm:$0xff]
      %v915 = vld [vmem:[%s3 + $0x50] sm:$0xff]
      %v916 = vld [vmem:[%s3 + $0x58] sm:$0xff]
      %v917 = vld [vmem:[%s3 + $0x60] sm:$0xff]
      %v918 = vld [vmem:[%s3 + $0x68] sm:$0xff]
      %v919 = vld [vmem:[%s3 + $0x70] sm:$0xff]
      %v920 = vld [vmem:[%s3 + $0x78] sm:$0xff]
      %v921 = vld [vmem:[%s3 + $0x80] sm:$0xff]
      %v922 = vld [vmem:[%s3 + $0x88] sm:$0xff]
      %v923 = vld [vmem:[%s3 + $0x90] sm:$0xff]
      %v924 = vld [vmem:[%s3 + $0x98] sm:$0xff]
      %v925 = vld [vmem:[%s3 + $0xa0] sm:$0xff]
      %v926 = vld [vmem:[%s3 + $0xa8] sm:$0xff]
      %v927 = vld [vmem:[%s3 + $0xb0] sm:$0xff]
      %v928 = vld [vmem:[%s3 + $0xb8] sm:$0xff]
      %v929 = vld [vmem:[%s3 + $0xc0] sm:$0xff]
      %v930 = vld [vmem:[%s3 + $0xc8] sm:$0xff]
      %v931 = vld [vmem:[%s3 + $0xd0] sm:$0xff]
      %v932 = vld [vmem:[%s3 + $0xd8] sm:$0xff]
      %v933 = vld [vmem:[%s3 + $0xe0] sm:$0xff]
      %v934 = vld [vmem:[%s3 + $0xe8] sm:$0xff]
      %v935 = vld [vmem:[%s3 + $0xf0] sm:$0xff]
      %v936 = vld [vmem:[%s3 + $0xf8] sm:$0xff]
      %v937 = vld [vmem:[%s3 + $0x100] sm:$0xff]
      %v938 = vld [vmem:[%s3 + $0x108] sm:$0xff]
      %v939 = vld [vmem:[%s3 + $0x110] sm:$0xff]
      %v940 = vld [vmem:[%s3 + $0x118] sm:$0xff]
      %v941 = vld [vmem:[%s3 + $0x120] sm:$0xff]
      %v942 = vld [vmem:[%s3 + $0x128] sm:$0xff]
      %v943 = vld [vmem:[%s3 + $0x130] sm:$0xff]
      %v944 = vld [vmem:[%s3 + $0x138] sm:$0xff]
      %v945 = vld [vmem:[%s3 + $0x140] sm:$0xff]
      %v946 = vld [vmem:[%s3 + $0x148] sm:$0xff]
      %v947 = vld [vmem:[%s3 + $0x150] sm:$0xff]
      %v948 = vld [vmem:[%s3 + $0x158] sm:$0xff]
      %v949 = vld [vmem:[%s3 + $0x160] sm:$0xff]
      %v950 = vld [vmem:[%s3 + $0x168] sm:$0xff]
      %v951 = vld [vmem:[%s3 + $0x170] sm:$0xff]
      %v952 = vld [vmem:[%s3 + $0x178] sm:$0xff]
      %v953 = vld [vmem:[%s3 + $0x180] sm:$0xff]
      %v954 = vld [vmem:[%s3 + $0x188] sm:$0xff]
      %v955 = vld [vmem:[%s3 + $0x190] sm:$0xff]
      %v956 = vld [vmem:[%s3 + $0x198] sm:$0xff]
      %v957 = vld [vmem:[%s3 + $0x1a0] sm:$0xff]
      %v958 = vld [vmem:[%s3 + $0x1a8] sm:$0xff]
      %v959 = vld [vmem:[%s3 + $0x1b0] sm:$0xff]
      %v960 = vld [vmem:[%s3 + $0x1b8] sm:$0xff]
      %v961 = vld [vmem:[%s3 + $0x1c0] sm:$0xff]
      %v962 = vld [vmem:[%s3 + $0x1c8] sm:$0xff]
      %v963 = vld [vmem:[%s3 + $0x1d0] sm:$0xff]
      %v964 = vld [vmem:[%s3 + $0x1d8] sm:$0xff]
      %v965 = vld [vmem:[%s3 + $0x1e0] sm:$0xff]
      %v966 = vld [vmem:[%s3 + $0x1e8] sm:$0xff]
      %v967 = vld [vmem:[%s3 + $0x1f0] sm:$0xff]
      %v968 = vld [vmem:[%s3 + $0x1f8] sm:$0xff]
      %v969 = vld [vmem:[%s3 + $0x200] sm:$0xff]
      %v970 = vld [vmem:[%s3 + $0x208] sm:$0xff]
      %v971 = vld [vmem:[%s3 + $0x210] sm:$0xff]
      %v972 = vld [vmem:[%s3 + $0x218] sm:$0xff]
      %v973 = vld [vmem:[%s3 + $0x220] sm:$0xff]
      %v974 = vld [vmem:[%s3 + $0x228] sm:$0xff]
      %v975 = vld [vmem:[%s3 + $0x230] sm:$0xff]
      %v976 = vld [vmem:[%s3 + $0x238] sm:$0xff]
      %v977 = vld [vmem:[%s3 + $0x240] sm:$0xff]
      %v978 = vld [vmem:[%s3 + $0x248] sm:$0xff]
      %v979 = vld [vmem:[%s3 + $0x250] sm:$0xff]
      %v980 = vld [vmem:[%s3 + $0x258] sm:$0xff]
      %v981 = vld [vmem:[%s3 + $0x260] sm:$0xff]
      %v982 = vld [vmem:[%s3 + $0x268] sm:$0xff]
      %v983 = vld [vmem:[%s3 + $0x270] sm:$0xff]
      %v984 = vld [vmem:[%s3 + $0x278] sm:$0xff]
      %v985 = vld [vmem:[%s3 + $0x280] sm:$0xff]
      %v986 = vld [vmem:[%s3 + $0x288] sm:$0xff]
      %v987 = vld [vmem:[%s3 + $0x290] sm:$0xff]
      %v988 = vld [vmem:[%s3 + $0x298] sm:$0xff]
      %v989 = vld [vmem:[%s3 + $0x2a0] sm:$0xff]
      %v990 = vld [vmem:[%s3 + $0x2a8] sm:$0xff]
      %v991 = vld [vmem:[%s3 + $0x2b0] sm:$0xff]
      %v992 = vld [vmem:[%s3 + $0x2b8] sm:$0xff]
      %v993 = vld [vmem:[%s3 + $0x2c0] sm:$0xff]
      %v994 = vld [vmem:[%s3 + $0x2c8] sm:$0xff]
      %v995 = vld [vmem:[%s3 + $0x2d0] sm:$0xff]
      %v996 = vld [vmem:[%s3 + $0x2d8] sm:$0xff]
      %v997 = vld [vmem:[%s3 + $0x2e0] sm:$0xff]
      %v998 = vld [vmem:[%s3 + $0x2e8] sm:$0xff]
      %v999 = vld [vmem:[%s3 + $0x2f0] sm:$0xff]
      %v1000 = vld [vmem:[%s3 + $0x2f8] sm:$0xff]
      %v1001 = vld [vmem:[%s3 + $0x300] sm:$0xff]
      %v1002 = vld [vmem:[%s3 + $0x308] sm:$0xff]
      %v1003 = vld [vmem:[%s3 + $0x310] sm:$0xff]
      %v1004 = vld [vmem:[%s3 + $0x318] sm:$0xff]
      %v1005 = vld [vmem:[%s3 + $0x320] sm:$0xff]
      %v1006 = vld [vmem:[%s3 + $0x328] sm:$0xff]
      %v1007 = vld [vmem:[%s3 + $0x330] sm:$0xff]
      %v1008 = vld [vmem:[%s3 + $0x338] sm:$0xff]
      %v1009 = vld [vmem:[%s3 + $0x340] sm:$0xff]
      %v1010 = vld [vmem:[%s3 + $0x348] sm:$0xff]
      %v1011 = vld [vmem:[%s3 + $0x350] sm:$0xff]
      %v1012 = vld [vmem:[%s3 + $0x358] sm:$0xff]
      %v1013 = vld [vmem:[%s3 + $0x360] sm:$0xff]
      %v1014 = vld [vmem:[%s3 + $0x368] sm:$0xff]
      %v1015 = vld [vmem:[%s3 + $0x370] sm:$0xff]
      %v1016 = vld [vmem:[%s3 + $0x378] sm:$0xff]
      %v1017 = vld [vmem:[%s3 + $0x380] sm:$0xff]
      %v1018 = vld [vmem:[%s3 + $0x388] sm:$0xff]
      %v1019 = vld [vmem:[%s3 + $0x390] sm:$0xff]
      %v1020 = vld [vmem:[%s3 + $0x398] sm:$0xff]
      %v1021 = vld [vmem:[%s3 + $0x3a0] sm:$0xff]
      %v1022 = vld [vmem:[%s3 + $0x3a8] sm:$0xff]
      %v1023 = vld [vmem:[%s3 + $0x3b0] sm:$0xff]
      %v1024 = vld [vmem:[%s3 + $0x3b8] sm:$0xff]
      %v1025 = vld [vmem:[%s3 + $0x3c0] sm:$0xff]
      %v1026 = vld [vmem:[%s3 + $0x3c8] sm:$0xff]
      %v1027 = vld [vmem:[%s3 + $0x3d0] sm:$0xff]
      %v1028 = vld [vmem:[%s3 + $0x3d8] sm:$0xff]
      %v1029 = vld [vmem:[%s3 + $0x3e0] sm:$0xff]
      %v1030 = vld [vmem:[%s3 + $0x3e8] sm:$0xff]
      %v1031 = vld [vmem:[%s3 + $0x3f0] sm:$0xff]
      %v1032 = vld [vmem:[%s3 + $0x3f8] sm:$0xff]
      %v1033 = vld [vmem:[%s3 + $0x400] sm:$0xff]
      %v1034 = vld [vmem:[%s3 + $0x408] sm:$0xff]
      %v1035 = vld [vmem:[%s3 + $0x410] sm:$0xff]
      %v1036 = vld [vmem:[%s3 + $0x418] sm:$0xff]
      %v1037 = vld [vmem:[%s3 + $0x420] sm:$0xff]
      %v1038 = vld [vmem:[%s3 + $0x428] sm:$0xff]
      %v1039 = vld [vmem:[%s3 + $0x430] sm:$0xff]
      %v1040 = vld [vmem:[%s3 + $0x438] sm:$0xff]
      %v1041 = vld [vmem:[%s3 + $0x440] sm:$0xff]
      %v1042 = vld [vmem:[%s3 + $0x448] sm:$0xff]
      %v1043 = vld [vmem:[%s3 + $0x450] sm:$0xff]
      %v1044 = vld [vmem:[%s3 + $0x458] sm:$0xff]
      %v1045 = vld [vmem:[%s3 + $0x460] sm:$0xff]
      %v1046 = vld [vmem:[%s3 + $0x468] sm:$0xff]
      %v1047 = vld [vmem:[%s3 + $0x470] sm:$0xff]
      %v1048 = vld [vmem:[%s3 + $0x478] sm:$0xff]
      %v1049 = vld [vmem:[%s3 + $0x480] sm:$0xff]
      %v1050 = vld [vmem:[%s3 + $0x488] sm:$0xff]
      %v1051 = vld [vmem:[%s3 + $0x490] sm:$0xff]
      %v1052 = vld [vmem:[%s3 + $0x498] sm:$0xff]
      %v1053 = vld [vmem:[%s3 + $0x4a0] sm:$0xff]
      %v1054 = vld [vmem:[%s3 + $0x4a8] sm:$0xff]
      %v1055 = vld [vmem:[%s3 + $0x4b0] sm:$0xff]
      %v1056 = vld [vmem:[%s3 + $0x4b8] sm:$0xff]
      %v1057 = vld [vmem:[%s3 + $0x4c0] sm:$0xff]
      %v1058 = vld [vmem:[%s3 + $0x4c8] sm:$0xff]
      %v1059 = vld [vmem:[%s3 + $0x4d0] sm:$0xff]
      %v1060 = vld [vmem:[%s3 + $0x4d8] sm:$0xff]
      %v1061 = vld [vmem:[%s3 + $0x4e0] sm:$0xff]
      %v1062 = vld [vmem:[%s3 + $0x4e8] sm:$0xff]
      %v1063 = vld [vmem:[%s3 + $0x4f0] sm:$0xff]
      %v1064 = vld [vmem:[%s3 + $0x4f8] sm:$0xff]
      %v1065 = vld [vmem:[%s3 + $0x500] sm:$0xff]
      %v1066 = vld [vmem:[%s3 + $0x508] sm:$0xff]
      %v1067 = vld [vmem:[%s3 + $0x510] sm:$0xff]
      %v1068 = vld [vmem:[%s3 + $0x518] sm:$0xff]
      %v1069 = vld [vmem:[%s3 + $0x520] sm:$0xff]
      %v1070 = vld [vmem:[%s3 + $0x528] sm:$0xff]
      %v1071 = vld [vmem:[%s3 + $0x530] sm:$0xff]
      %v1072 = vld [vmem:[%s3 + $0x538] sm:$0xff]
      %v1073 = vld [vmem:[%s3 + $0x540] sm:$0xff]
      %v1074 = vld [vmem:[%s3 + $0x548] sm:$0xff]
      %v1075 = vld [vmem:[%s3 + $0x550] sm:$0xff]
      %v1076 = vld [vmem:[%s3 + $0x558] sm:$0xff]
      %v1077 = vld [vmem:[%s3 + $0x560] sm:$0xff]
      %v1078 = vld [vmem:[%s3 + $0x568] sm:$0xff]
      %v1079 = vld [vmem:[%s3 + $0x570] sm:$0xff]
      %v1080 = vld [vmem:[%s3 + $0x578] sm:$0xff]
      %v1081 = vld [vmem:[%s3 + $0x580] sm:$0xff]
      %v1082 = vld [vmem:[%s3 + $0x588] sm:$0xff]
      %v1083 = vld [vmem:[%s3 + $0x590] sm:$0xff]
      %v1084 = vld [vmem:[%s3 + $0x598] sm:$0xff]
      %v1085 = vld [vmem:[%s3 + $0x5a0] sm:$0xff]
      %v1086 = vld [vmem:[%s3 + $0x5a8] sm:$0xff]
      %v1087 = vld [vmem:[%s3 + $0x5b0] sm:$0xff]
      %v1088 = vld [vmem:[%s3 + $0x5b8] sm:$0xff]
      %v1089 = vld [vmem:[%s3 + $0x5c0] sm:$0xff]
      %v1090 = vld [vmem:[%s3 + $0x5c8] sm:$0xff]
      %v1091 = vld [vmem:[%s3 + $0x5d0] sm:$0xff]
      %v1092 = vld [vmem:[%s3 + $0x5d8] sm:$0xff]
      %v1093 = vld [vmem:[%s3 + $0x5e0] sm:$0xff]
      %v1094 = vld [vmem:[%s3 + $0x5e8] sm:$0xff]
      %v1095 = vld [vmem:[%s3 + $0x5f0] sm:$0xff]
      %v1096 = vld [vmem:[%s3 + $0x5f8] sm:$0xff]
      %v1097 = vld [vmem:[%s3 + $0x600] sm:$0xff]
      %v1098 = vld [vmem:[%s3 + $0x608] sm:$0xff]
      %v1099 = vld [vmem:[%s3 + $0x610] sm:$0xff]
      %v1100 = vld [vmem:[%s3 + $0x618] sm:$0xff]
      %v1101 = vld [vmem:[%s3 + $0x620] sm:$0xff]
      %v1102 = vld [vmem:[%s3 + $0x628] sm:$0xff]
      %v1103 = vld [vmem:[%s3 + $0x630] sm:$0xff]
      %v1104 = vld [vmem:[%s3 + $0x638] sm:$0xff]
      %v1105 = vld [vmem:[%s3 + $0x640] sm:$0xff]
      %v1106 = vld [vmem:[%s3 + $0x648] sm:$0xff]
      %v1107 = vld [vmem:[%s3 + $0x650] sm:$0xff]
      %v1108 = vld [vmem:[%s3 + $0x658] sm:$0xff]
      %v1109 = vld [vmem:[%s3 + $0x660] sm:$0xff]
      %v1110 = vld [vmem:[%s3 + $0x668] sm:$0xff]
      %v1111 = vld [vmem:[%s3 + $0x670] sm:$0xff]
      %v1112 = vld [vmem:[%s3 + $0x678] sm:$0xff]
      %v1113 = vld [vmem:[%s3 + $0x680] sm:$0xff]
      %v1114 = vld [vmem:[%s3 + $0x688] sm:$0xff]
      %v1115 = vld [vmem:[%s3 + $0x690] sm:$0xff]
      %v1116 = vld [vmem:[%s3 + $0x698] sm:$0xff]
      %v1117 = vld [vmem:[%s3 + $0x6a0] sm:$0xff]
      %v1118 = vld [vmem:[%s3 + $0x6a8] sm:$0xff]
      %v1119 = vld [vmem:[%s3 + $0x6b0] sm:$0xff]
      %v1120 = vld [vmem:[%s3 + $0x6b8] sm:$0xff]
      %v1121 = vld [vmem:[%s3 + $0x6c0] sm:$0xff]
      %v1122 = vld [vmem:[%s3 + $0x6c8] sm:$0xff]
      %v1123 = vld [vmem:[%s3 + $0x6d0] sm:$0xff]
      %v1124 = vld [vmem:[%s3 + $0x6d8] sm:$0xff]
      %v1125 = vld [vmem:[%s3 + $0x6e0] sm:$0xff]
      %v1126 = vld [vmem:[%s3 + $0x6e8] sm:$0xff]
      %v1127 = vld [vmem:[%s3 + $0x6f0] sm:$0xff]
      %v1128 = vld [vmem:[%s3 + $0x6f8] sm:$0xff]
      %v1129 = vld [vmem:[%s3 + $0x700] sm:$0xff]
      %v1130 = vld [vmem:[%s3 + $0x708] sm:$0xff]
      %v1131 = vld [vmem:[%s3 + $0x710] sm:$0xff]
      %v1132 = vld [vmem:[%s3 + $0x718] sm:$0xff]
      %v1133 = vld [vmem:[%s3 + $0x720] sm:$0xff]
      %v1134 = vld [vmem:[%s3 + $0x728] sm:$0xff]
      %v1135 = vld [vmem:[%s3 + $0x730] sm:$0xff]
      %v1136 = vld [vmem:[%s3 + $0x738] sm:$0xff]
      %v1137 = vld [vmem:[%s3 + $0x740] sm:$0xff]
      %v1138 = vld [vmem:[%s3 + $0x748] sm:$0xff]
      %v1139 = vld [vmem:[%s3 + $0x750] sm:$0xff]
      %v1140 = vld [vmem:[%s3 + $0x758] sm:$0xff]
      %v1141 = vld [vmem:[%s3 + $0x760] sm:$0xff]
      %v1142 = vld [vmem:[%s3 + $0x768] sm:$0xff]
      %v1143 = vld [vmem:[%s3 + $0x770] sm:$0xff]
      %v1144 = vld [vmem:[%s3 + $0x778] sm:$0xff]
      %v1145 = vld [vmem:[%s3 + $0x780] sm:$0xff]
      %v1146 = vld [vmem:[%s3 + $0x788] sm:$0xff]
      %v1147 = vld [vmem:[%s3 + $0x790] sm:$0xff]
      %v1148 = vld [vmem:[%s3 + $0x798] sm:$0xff]
      %v1149 = vld [vmem:[%s3 + $0x7a0] sm:$0xff]
      %v1150 = vld [vmem:[%s3 + $0x7a8] sm:$0xff]
      %v1151 = vld [vmem:[%s3 + $0x7b0] sm:$0xff]
      %v1152 = vld [vmem:[%s3 + $0x7b8] sm:$0xff]
      %v1153 = vld [vmem:[%s3 + $0x7c0] sm:$0xff]
      %v1154 = vld [vmem:[%s3 + $0x7c8] sm:$0xff]
      %v1155 = vld [vmem:[%s3 + $0x7d0] sm:$0xff]
      %v1156 = vld [vmem:[%s3 + $0x7d8] sm:$0xff]
      %v1157 = vld [vmem:[%s3 + $0x7e0] sm:$0xff]
      %v1158 = vld [vmem:[%s3 + $0x7e8] sm:$0xff]
      %v1159 = vld [vmem:[%s3 + $0x7f0] sm:$0xff]
      %v1160 = vld [vmem:[%s3 + $0x7f8] sm:$0xff]
      %v1161 = vld [vmem:[%s4] sm:$0xf]
      %v1163 = vlaneseq
      %v1164 = vshrl.u32 %v1163, 7
      %v1165 = vsub.s32 0, %v1164
      %v1166 = vrot.slane %v1161, %v1165
      %v1167 = vlaneseq
      %v1168 = vshrl.u32 %v1167, 7
      %v1169 = vsub.s32 1, %v1168
      %v1170 = vrot.slane %v1161, %v1169
      %v1171 = vlaneseq
      %v1172 = vshrl.u32 %v1171, 7
      %v1173 = vsub.s32 2, %v1172
      %v1174 = vrot.slane %v1161, %v1173
      %v1175 = vlaneseq
      %v1176 = vshrl.u32 %v1175, 7
      %v1177 = vsub.s32 3, %v1176
      %v1178 = vrot.slane %v1161, %v1177
      %v1439 = vunpack.c.l.b16 %v905
      %v1440 = vunpack.c.h.b16 %v905
      %v1441 = vunpack.c.l.b16 %v906
      %v1442 = vunpack.c.h.b16 %v906
      %v1443 = vunpack.c.l.b16 %v907
      %v1444 = vunpack.c.h.b16 %v907
      %v1445 = vunpack.c.l.b16 %v908
      %v1446 = vunpack.c.h.b16 %v908
      %v1447 = vunpack.c.l.b16 %v909
      %v1448 = vunpack.c.h.b16 %v909
      %v1449 = vunpack.c.l.b16 %v910
      %v1450 = vunpack.c.h.b16 %v910
      %v1451 = vunpack.c.l.b16 %v911
      %v1452 = vunpack.c.h.b16 %v911
      %v1453 = vunpack.c.l.b16 %v912
      %v1454 = vunpack.c.h.b16 %v912
      %v1455 = vunpack.c.l.b16 %v913
      %v1456 = vunpack.c.h.b16 %v913
      %v1457 = vunpack.c.l.b16 %v914
      %v1458 = vunpack.c.h.b16 %v914
      %v1459 = vunpack.c.l.b16 %v915
      %v1460 = vunpack.c.h.b16 %v915
      %v1461 = vunpack.c.l.b16 %v916
      %v1462 = vunpack.c.h.b16 %v916
      %v1463 = vunpack.c.l.b16 %v917
      %v1464 = vunpack.c.h.b16 %v917
      %v1465 = vunpack.c.l.b16 %v918
      %v1466 = vunpack.c.h.b16 %v918
      %v1467 = vunpack.c.l.b16 %v919
      %v1468 = vunpack.c.h.b16 %v919
      %v1469 = vunpack.c.l.b16 %v920
      %v1470 = vunpack.c.h.b16 %v920
      %v1471 = vunpack.c.l.b16 %v921
      %v1472 = vunpack.c.h.b16 %v921
      %v1473 = vunpack.c.l.b16 %v922
      %v1474 = vunpack.c.h.b16 %v922
      %v1475 = vunpack.c.l.b16 %v923
      %v1476 = vunpack.c.h.b16 %v923
      %v1477 = vunpack.c.l.b16 %v924
      %v1478 = vunpack.c.h.b16 %v924
      %v1479 = vunpack.c.l.b16 %v925
      %v1480 = vunpack.c.h.b16 %v925
      %v1481 = vunpack.c.l.b16 %v926
      %v1482 = vunpack.c.h.b16 %v926
      %v1483 = vunpack.c.l.b16 %v927
      %v1484 = vunpack.c.h.b16 %v927
      %v1485 = vunpack.c.l.b16 %v928
      %v1486 = vunpack.c.h.b16 %v928
      %v1487 = vunpack.c.l.b16 %v929
      %v1488 = vunpack.c.h.b16 %v929
      %v1489 = vunpack.c.l.b16 %v930
      %v1490 = vunpack.c.h.b16 %v930
      %v1491 = vunpack.c.l.b16 %v931
      %v1492 = vunpack.c.h.b16 %v931
      %v1493 = vunpack.c.l.b16 %v932
      %v1494 = vunpack.c.h.b16 %v932
      %v1495 = vunpack.c.l.b16 %v933
      %v1496 = vunpack.c.h.b16 %v933
      %v1497 = vunpack.c.l.b16 %v934
      %v1498 = vunpack.c.h.b16 %v934
      %v1499 = vunpack.c.l.b16 %v935
      %v1500 = vunpack.c.h.b16 %v935
      %v1501 = vunpack.c.l.b16 %v936
      %v1502 = vunpack.c.h.b16 %v936
      %v1503 = vunpack.c.l.b16 %v937
      %v1504 = vunpack.c.h.b16 %v937
      %v1505 = vunpack.c.l.b16 %v938
      %v1506 = vunpack.c.h.b16 %v938
      %v1507 = vunpack.c.l.b16 %v939
      %v1508 = vunpack.c.h.b16 %v939
      %v1509 = vunpack.c.l.b16 %v940
      %v1510 = vunpack.c.h.b16 %v940
      %v1511 = vunpack.c.l.b16 %v941
      %v1512 = vunpack.c.h.b16 %v941
      %v1513 = vunpack.c.l.b16 %v942
      %v1514 = vunpack.c.h.b16 %v942
      %v1515 = vunpack.c.l.b16 %v943
      %v1516 = vunpack.c.h.b16 %v943
      %v1517 = vunpack.c.l.b16 %v944
      %v1518 = vunpack.c.h.b16 %v944
      %v1519 = vunpack.c.l.b16 %v945
      %v1520 = vunpack.c.h.b16 %v945
      %v1521 = vunpack.c.l.b16 %v946
      %v1522 = vunpack.c.h.b16 %v946
      %v1523 = vunpack.c.l.b16 %v947
      %v1524 = vunpack.c.h.b16 %v947
      %v1525 = vunpack.c.l.b16 %v948
      %v1526 = vunpack.c.h.b16 %v948
      %v1527 = vunpack.c.l.b16 %v949
      %v1528 = vunpack.c.h.b16 %v949
      %v1529 = vunpack.c.l.b16 %v950
      %v1530 = vunpack.c.h.b16 %v950
      %v1531 = vunpack.c.l.b16 %v951
      %v1532 = vunpack.c.h.b16 %v951
      %v1533 = vunpack.c.l.b16 %v952
      %v1534 = vunpack.c.h.b16 %v952
      %v1535 = vunpack.c.l.b16 %v953
      %v1536 = vunpack.c.h.b16 %v953
      %v1537 = vunpack.c.l.b16 %v954
      %v1538 = vunpack.c.h.b16 %v954
      %v1539 = vunpack.c.l.b16 %v955
      %v1540 = vunpack.c.h.b16 %v955
      %v1541 = vunpack.c.l.b16 %v956
      %v1542 = vunpack.c.h.b16 %v956
      %v1543 = vunpack.c.l.b16 %v957
      %v1544 = vunpack.c.h.b16 %v957
      %v1545 = vunpack.c.l.b16 %v958
      %v1546 = vunpack.c.h.b16 %v958
      %v1547 = vunpack.c.l.b16 %v959
      %v1548 = vunpack.c.h.b16 %v959
      %v1549 = vunpack.c.l.b16 %v960
      %v1550 = vunpack.c.h.b16 %v960
      %v1551 = vunpack.c.l.b16 %v961
      %v1552 = vunpack.c.h.b16 %v961
      %v1553 = vunpack.c.l.b16 %v962
      %v1554 = vunpack.c.h.b16 %v962
      %v1555 = vunpack.c.l.b16 %v963
      %v1556 = vunpack.c.h.b16 %v963
      %v1557 = vunpack.c.l.b16 %v964
      %v1558 = vunpack.c.h.b16 %v964
      %v1559 = vunpack.c.l.b16 %v965
      %v1560 = vunpack.c.h.b16 %v965
      %v1561 = vunpack.c.l.b16 %v966
      %v1562 = vunpack.c.h.b16 %v966
      %v1563 = vunpack.c.l.b16 %v967
      %v1564 = vunpack.c.h.b16 %v967
      %v1565 = vunpack.c.l.b16 %v968
      %v1566 = vunpack.c.h.b16 %v968
      %v1567 = vunpack.c.l.b16 %v969
      %v1568 = vunpack.c.h.b16 %v969
      %v1569 = vunpack.c.l.b16 %v970
      %v1570 = vunpack.c.h.b16 %v970
      %v1571 = vunpack.c.l.b16 %v971
      %v1572 = vunpack.c.h.b16 %v971
      %v1573 = vunpack.c.l.b16 %v972
      %v1574 = vunpack.c.h.b16 %v972
      %v1575 = vunpack.c.l.b16 %v973
      %v1576 = vunpack.c.h.b16 %v973
      %v1577 = vunpack.c.l.b16 %v974
      %v1578 = vunpack.c.h.b16 %v974
      %v1579 = vunpack.c.l.b16 %v975
      %v1580 = vunpack.c.h.b16 %v975
      %v1581 = vunpack.c.l.b16 %v976
      %v1582 = vunpack.c.h.b16 %v976
      %v1583 = vunpack.c.l.b16 %v977
      %v1584 = vunpack.c.h.b16 %v977
      %v1585 = vunpack.c.l.b16 %v978
      %v1586 = vunpack.c.h.b16 %v978
      %v1587 = vunpack.c.l.b16 %v979
      %v1588 = vunpack.c.h.b16 %v979
      %v1589 = vunpack.c.l.b16 %v980
      %v1590 = vunpack.c.h.b16 %v980
      %v1591 = vunpack.c.l.b16 %v981
      %v1592 = vunpack.c.h.b16 %v981
      %v1593 = vunpack.c.l.b16 %v982
      %v1594 = vunpack.c.h.b16 %v982
      %v1595 = vunpack.c.l.b16 %v983
      %v1596 = vunpack.c.h.b16 %v983
      %v1597 = vunpack.c.l.b16 %v984
      %v1598 = vunpack.c.h.b16 %v984
      %v1599 = vunpack.c.l.b16 %v985
      %v1600 = vunpack.c.h.b16 %v985
      %v1601 = vunpack.c.l.b16 %v986
      %v1602 = vunpack.c.h.b16 %v986
      %v1603 = vunpack.c.l.b16 %v987
      %v1604 = vunpack.c.h.b16 %v987
      %v1605 = vunpack.c.l.b16 %v988
      %v1606 = vunpack.c.h.b16 %v988
      %v1607 = vunpack.c.l.b16 %v989
      %v1608 = vunpack.c.h.b16 %v989
      %v1609 = vunpack.c.l.b16 %v990
      %v1610 = vunpack.c.h.b16 %v990
      %v1611 = vunpack.c.l.b16 %v991
      %v1612 = vunpack.c.h.b16 %v991
      %v1613 = vunpack.c.l.b16 %v992
      %v1614 = vunpack.c.h.b16 %v992
      %v1615 = vunpack.c.l.b16 %v993
      %v1616 = vunpack.c.h.b16 %v993
      %v1617 = vunpack.c.l.b16 %v994
      %v1618 = vunpack.c.h.b16 %v994
      %v1619 = vunpack.c.l.b16 %v995
      %v1620 = vunpack.c.h.b16 %v995
      %v1621 = vunpack.c.l.b16 %v996
      %v1622 = vunpack.c.h.b16 %v996
      %v1623 = vunpack.c.l.b16 %v997
      %v1624 = vunpack.c.h.b16 %v997
      %v1625 = vunpack.c.l.b16 %v998
      %v1626 = vunpack.c.h.b16 %v998
      %v1627 = vunpack.c.l.b16 %v999
      %v1628 = vunpack.c.h.b16 %v999
      %v1629 = vunpack.c.l.b16 %v1000
      %v1630 = vunpack.c.h.b16 %v1000
      %v1631 = vunpack.c.l.b16 %v1001
      %v1632 = vunpack.c.h.b16 %v1001
      %v1633 = vunpack.c.l.b16 %v1002
      %v1634 = vunpack.c.h.b16 %v1002
      %v1635 = vunpack.c.l.b16 %v1003
      %v1636 = vunpack.c.h.b16 %v1003
      %v1637 = vunpack.c.l.b16 %v1004
      %v1638 = vunpack.c.h.b16 %v1004
      %v1639 = vunpack.c.l.b16 %v1005
      %v1640 = vunpack.c.h.b16 %v1005
      %v1641 = vunpack.c.l.b16 %v1006
      %v1642 = vunpack.c.h.b16 %v1006
      %v1643 = vunpack.c.l.b16 %v1007
      %v1644 = vunpack.c.h.b16 %v1007
      %v1645 = vunpack.c.l.b16 %v1008
      %v1646 = vunpack.c.h.b16 %v1008
      %v1647 = vunpack.c.l.b16 %v1009
      %v1648 = vunpack.c.h.b16 %v1009
      %v1649 = vunpack.c.l.b16 %v1010
      %v1650 = vunpack.c.h.b16 %v1010
      %v1651 = vunpack.c.l.b16 %v1011
      %v1652 = vunpack.c.h.b16 %v1011
      %v1653 = vunpack.c.l.b16 %v1012
      %v1654 = vunpack.c.h.b16 %v1012
      %v1655 = vunpack.c.l.b16 %v1013
      %v1656 = vunpack.c.h.b16 %v1013
      %v1657 = vunpack.c.l.b16 %v1014
      %v1658 = vunpack.c.h.b16 %v1014
      %v1659 = vunpack.c.l.b16 %v1015
      %v1660 = vunpack.c.h.b16 %v1015
      %v1661 = vunpack.c.l.b16 %v1016
      %v1662 = vunpack.c.h.b16 %v1016
      %v1663 = vunpack.c.l.b16 %v1017
      %v1664 = vunpack.c.h.b16 %v1017
      %v1665 = vunpack.c.l.b16 %v1018
      %v1666 = vunpack.c.h.b16 %v1018
      %v1667 = vunpack.c.l.b16 %v1019
      %v1668 = vunpack.c.h.b16 %v1019
      %v1669 = vunpack.c.l.b16 %v1020
      %v1670 = vunpack.c.h.b16 %v1020
      %v1671 = vunpack.c.l.b16 %v1021
      %v1672 = vunpack.c.h.b16 %v1021
      %v1673 = vunpack.c.l.b16 %v1022
      %v1674 = vunpack.c.h.b16 %v1022
      %v1675 = vunpack.c.l.b16 %v1023
      %v1676 = vunpack.c.h.b16 %v1023
      %v1677 = vunpack.c.l.b16 %v1024
      %v1678 = vunpack.c.h.b16 %v1024
      %v1679 = vunpack.c.l.b16 %v1025
      %v1680 = vunpack.c.h.b16 %v1025
      %v1681 = vunpack.c.l.b16 %v1026
      %v1682 = vunpack.c.h.b16 %v1026
      %v1683 = vunpack.c.l.b16 %v1027
      %v1684 = vunpack.c.h.b16 %v1027
      %v1685 = vunpack.c.l.b16 %v1028
      %v1686 = vunpack.c.h.b16 %v1028
      %v1687 = vunpack.c.l.b16 %v1029
      %v1688 = vunpack.c.h.b16 %v1029
      %v1689 = vunpack.c.l.b16 %v1030
      %v1690 = vunpack.c.h.b16 %v1030
      %v1691 = vunpack.c.l.b16 %v1031
      %v1692 = vunpack.c.h.b16 %v1031
      %v1693 = vunpack.c.l.b16 %v1032
      %v1694 = vunpack.c.h.b16 %v1032
      %v1695 = vunpack.c.l.b16 %v1033
      %v1696 = vunpack.c.h.b16 %v1033
      %v1697 = vunpack.c.l.b16 %v1034
      %v1698 = vunpack.c.h.b16 %v1034
      %v1699 = vunpack.c.l.b16 %v1035
      %v1700 = vunpack.c.h.b16 %v1035
      %v1701 = vunpack.c.l.b16 %v1036
      %v1702 = vunpack.c.h.b16 %v1036
      %v1703 = vunpack.c.l.b16 %v1037
      %v1704 = vunpack.c.h.b16 %v1037
      %v1705 = vunpack.c.l.b16 %v1038
      %v1706 = vunpack.c.h.b16 %v1038
      %v1707 = vunpack.c.l.b16 %v1039
      %v1708 = vunpack.c.h.b16 %v1039
      %v1709 = vunpack.c.l.b16 %v1040
      %v1710 = vunpack.c.h.b16 %v1040
      %v1711 = vunpack.c.l.b16 %v1041
      %v1712 = vunpack.c.h.b16 %v1041
      %v1713 = vunpack.c.l.b16 %v1042
      %v1714 = vunpack.c.h.b16 %v1042
      %v1715 = vunpack.c.l.b16 %v1043
      %v1716 = vunpack.c.h.b16 %v1043
      %v1717 = vunpack.c.l.b16 %v1044
      %v1718 = vunpack.c.h.b16 %v1044
      %v1719 = vunpack.c.l.b16 %v1045
      %v1720 = vunpack.c.h.b16 %v1045
      %v1721 = vunpack.c.l.b16 %v1046
      %v1722 = vunpack.c.h.b16 %v1046
      %v1723 = vunpack.c.l.b16 %v1047
      %v1724 = vunpack.c.h.b16 %v1047
      %v1725 = vunpack.c.l.b16 %v1048
      %v1726 = vunpack.c.h.b16 %v1048
      %v1727 = vunpack.c.l.b16 %v1049
      %v1728 = vunpack.c.h.b16 %v1049
      %v1729 = vunpack.c.l.b16 %v1050
      %v1730 = vunpack.c.h.b16 %v1050
      %v1731 = vunpack.c.l.b16 %v1051
      %v1732 = vunpack.c.h.b16 %v1051
      %v1733 = vunpack.c.l.b16 %v1052
      %v1734 = vunpack.c.h.b16 %v1052
      %v1735 = vunpack.c.l.b16 %v1053
      %v1736 = vunpack.c.h.b16 %v1053
      %v1737 = vunpack.c.l.b16 %v1054
      %v1738 = vunpack.c.h.b16 %v1054
      %v1739 = vunpack.c.l.b16 %v1055
      %v1740 = vunpack.c.h.b16 %v1055
      %v1741 = vunpack.c.l.b16 %v1056
      %v1742 = vunpack.c.h.b16 %v1056
      %v1743 = vunpack.c.l.b16 %v1057
      %v1744 = vunpack.c.h.b16 %v1057
      %v1745 = vunpack.c.l.b16 %v1058
      %v1746 = vunpack.c.h.b16 %v1058
      %v1747 = vunpack.c.l.b16 %v1059
      %v1748 = vunpack.c.h.b16 %v1059
      %v1749 = vunpack.c.l.b16 %v1060
      %v1750 = vunpack.c.h.b16 %v1060
      %v1751 = vunpack.c.l.b16 %v1061
      %v1752 = vunpack.c.h.b16 %v1061
      %v1753 = vunpack.c.l.b16 %v1062
      %v1754 = vunpack.c.h.b16 %v1062
      %v1755 = vunpack.c.l.b16 %v1063
      %v1756 = vunpack.c.h.b16 %v1063
      %v1757 = vunpack.c.l.b16 %v1064
      %v1758 = vunpack.c.h.b16 %v1064
      %v1759 = vunpack.c.l.b16 %v1065
      %v1760 = vunpack.c.h.b16 %v1065
      %v1761 = vunpack.c.l.b16 %v1066
      %v1762 = vunpack.c.h.b16 %v1066
      %v1763 = vunpack.c.l.b16 %v1067
      %v1764 = vunpack.c.h.b16 %v1067
      %v1765 = vunpack.c.l.b16 %v1068
      %v1766 = vunpack.c.h.b16 %v1068
      %v1767 = vunpack.c.l.b16 %v1069
      %v1768 = vunpack.c.h.b16 %v1069
      %v1769 = vunpack.c.l.b16 %v1070
      %v1770 = vunpack.c.h.b16 %v1070
      %v1771 = vunpack.c.l.b16 %v1071
      %v1772 = vunpack.c.h.b16 %v1071
      %v1773 = vunpack.c.l.b16 %v1072
      %v1774 = vunpack.c.h.b16 %v1072
      %v1775 = vunpack.c.l.b16 %v1073
      %v1776 = vunpack.c.h.b16 %v1073
      %v1777 = vunpack.c.l.b16 %v1074
      %v1778 = vunpack.c.h.b16 %v1074
      %v1779 = vunpack.c.l.b16 %v1075
      %v1780 = vunpack.c.h.b16 %v1075
      %v1781 = vunpack.c.l.b16 %v1076
      %v1782 = vunpack.c.h.b16 %v1076
      %v1783 = vunpack.c.l.b16 %v1077
      %v1784 = vunpack.c.h.b16 %v1077
      %v1785 = vunpack.c.l.b16 %v1078
      %v1786 = vunpack.c.h.b16 %v1078
      %v1787 = vunpack.c.l.b16 %v1079
      %v1788 = vunpack.c.h.b16 %v1079
      %v1789 = vunpack.c.l.b16 %v1080
      %v1790 = vunpack.c.h.b16 %v1080
      %v1791 = vunpack.c.l.b16 %v1081
      %v1792 = vunpack.c.h.b16 %v1081
      %v1793 = vunpack.c.l.b16 %v1082
      %v1794 = vunpack.c.h.b16 %v1082
      %v1795 = vunpack.c.l.b16 %v1083
      %v1796 = vunpack.c.h.b16 %v1083
      %v1797 = vunpack.c.l.b16 %v1084
      %v1798 = vunpack.c.h.b16 %v1084
      %v1799 = vunpack.c.l.b16 %v1085
      %v1800 = vunpack.c.h.b16 %v1085
      %v1801 = vunpack.c.l.b16 %v1086
      %v1802 = vunpack.c.h.b16 %v1086
      %v1803 = vunpack.c.l.b16 %v1087
      %v1804 = vunpack.c.h.b16 %v1087
      %v1805 = vunpack.c.l.b16 %v1088
      %v1806 = vunpack.c.h.b16 %v1088
      %v1807 = vunpack.c.l.b16 %v1089
      %v1808 = vunpack.c.h.b16 %v1089
      %v1809 = vunpack.c.l.b16 %v1090
      %v1810 = vunpack.c.h.b16 %v1090
      %v1811 = vunpack.c.l.b16 %v1091
      %v1812 = vunpack.c.h.b16 %v1091
      %v1813 = vunpack.c.l.b16 %v1092
      %v1814 = vunpack.c.h.b16 %v1092
      %v1815 = vunpack.c.l.b16 %v1093
      %v1816 = vunpack.c.h.b16 %v1093
      %v1817 = vunpack.c.l.b16 %v1094
      %v1818 = vunpack.c.h.b16 %v1094
      %v1819 = vunpack.c.l.b16 %v1095
      %v1820 = vunpack.c.h.b16 %v1095
      %v1821 = vunpack.c.l.b16 %v1096
      %v1822 = vunpack.c.h.b16 %v1096
      %v1823 = vunpack.c.l.b16 %v1097
      %v1824 = vunpack.c.h.b16 %v1097
      %v1825 = vunpack.c.l.b16 %v1098
      %v1826 = vunpack.c.h.b16 %v1098
      %v1827 = vunpack.c.l.b16 %v1099
      %v1828 = vunpack.c.h.b16 %v1099
      %v1829 = vunpack.c.l.b16 %v1100
      %v1830 = vunpack.c.h.b16 %v1100
      %v1831 = vunpack.c.l.b16 %v1101
      %v1832 = vunpack.c.h.b16 %v1101
      %v1833 = vunpack.c.l.b16 %v1102
      %v1834 = vunpack.c.h.b16 %v1102
      %v1835 = vunpack.c.l.b16 %v1103
      %v1836 = vunpack.c.h.b16 %v1103
      %v1837 = vunpack.c.l.b16 %v1104
      %v1838 = vunpack.c.h.b16 %v1104
      %v1839 = vunpack.c.l.b16 %v1105
      %v1840 = vunpack.c.h.b16 %v1105
      %v1841 = vunpack.c.l.b16 %v1106
      %v1842 = vunpack.c.h.b16 %v1106
      %v1843 = vunpack.c.l.b16 %v1107
      %v1844 = vunpack.c.h.b16 %v1107
      %v1845 = vunpack.c.l.b16 %v1108
      %v1846 = vunpack.c.h.b16 %v1108
      %v1847 = vunpack.c.l.b16 %v1109
      %v1848 = vunpack.c.h.b16 %v1109
      %v1849 = vunpack.c.l.b16 %v1110
      %v1850 = vunpack.c.h.b16 %v1110
      %v1851 = vunpack.c.l.b16 %v1111
      %v1852 = vunpack.c.h.b16 %v1111
      %v1853 = vunpack.c.l.b16 %v1112
      %v1854 = vunpack.c.h.b16 %v1112
      %v1855 = vunpack.c.l.b16 %v1113
      %v1856 = vunpack.c.h.b16 %v1113
      %v1857 = vunpack.c.l.b16 %v1114
      %v1858 = vunpack.c.h.b16 %v1114
      %v1859 = vunpack.c.l.b16 %v1115
      %v1860 = vunpack.c.h.b16 %v1115
      %v1861 = vunpack.c.l.b16 %v1116
      %v1862 = vunpack.c.h.b16 %v1116
      %v1863 = vunpack.c.l.b16 %v1117
      %v1864 = vunpack.c.h.b16 %v1117
      %v1865 = vunpack.c.l.b16 %v1118
      %v1866 = vunpack.c.h.b16 %v1118
      %v1867 = vunpack.c.l.b16 %v1119
      %v1868 = vunpack.c.h.b16 %v1119
      %v1869 = vunpack.c.l.b16 %v1120
      %v1870 = vunpack.c.h.b16 %v1120
      %v1871 = vunpack.c.l.b16 %v1121
      %v1872 = vunpack.c.h.b16 %v1121
      %v1873 = vunpack.c.l.b16 %v1122
      %v1874 = vunpack.c.h.b16 %v1122
      %v1875 = vunpack.c.l.b16 %v1123
      %v1876 = vunpack.c.h.b16 %v1123
      %v1877 = vunpack.c.l.b16 %v1124
      %v1878 = vunpack.c.h.b16 %v1124
      %v1879 = vunpack.c.l.b16 %v1125
      %v1880 = vunpack.c.h.b16 %v1125
      %v1881 = vunpack.c.l.b16 %v1126
      %v1882 = vunpack.c.h.b16 %v1126
      %v1883 = vunpack.c.l.b16 %v1127
      %v1884 = vunpack.c.h.b16 %v1127
      %v1885 = vunpack.c.l.b16 %v1128
      %v1886 = vunpack.c.h.b16 %v1128
      %v1887 = vunpack.c.l.b16 %v1129
      %v1888 = vunpack.c.h.b16 %v1129
      %v1889 = vunpack.c.l.b16 %v1130
      %v1890 = vunpack.c.h.b16 %v1130
      %v1891 = vunpack.c.l.b16 %v1131
      %v1892 = vunpack.c.h.b16 %v1131
      %v1893 = vunpack.c.l.b16 %v1132
      %v1894 = vunpack.c.h.b16 %v1132
      %v1895 = vunpack.c.l.b16 %v1133
      %v1896 = vunpack.c.h.b16 %v1133
      %v1897 = vunpack.c.l.b16 %v1134
      %v1898 = vunpack.c.h.b16 %v1134
      %v1899 = vunpack.c.l.b16 %v1135
      %v1900 = vunpack.c.h.b16 %v1135
      %v1901 = vunpack.c.l.b16 %v1136
      %v1902 = vunpack.c.h.b16 %v1136
      %v1903 = vunpack.c.l.b16 %v1137
      %v1904 = vunpack.c.h.b16 %v1137
      %v1905 = vunpack.c.l.b16 %v1138
      %v1906 = vunpack.c.h.b16 %v1138
      %v1907 = vunpack.c.l.b16 %v1139
      %v1908 = vunpack.c.h.b16 %v1139
      %v1909 = vunpack.c.l.b16 %v1140
      %v1910 = vunpack.c.h.b16 %v1140
      %v1911 = vunpack.c.l.b16 %v1141
      %v1912 = vunpack.c.h.b16 %v1141
      %v1913 = vunpack.c.l.b16 %v1142
      %v1914 = vunpack.c.h.b16 %v1142
      %v1915 = vunpack.c.l.b16 %v1143
      %v1916 = vunpack.c.h.b16 %v1143
      %v1917 = vunpack.c.l.b16 %v1144
      %v1918 = vunpack.c.h.b16 %v1144
      %v1919 = vunpack.c.l.b16 %v1145
      %v1920 = vunpack.c.h.b16 %v1145
      %v1921 = vunpack.c.l.b16 %v1146
      %v1922 = vunpack.c.h.b16 %v1146
      %v1923 = vunpack.c.l.b16 %v1147
      %v1924 = vunpack.c.h.b16 %v1147
      %v1925 = vunpack.c.l.b16 %v1148
      %v1926 = vunpack.c.h.b16 %v1148
      %v1927 = vunpack.c.l.b16 %v1149
      %v1928 = vunpack.c.h.b16 %v1149
      %v1929 = vunpack.c.l.b16 %v1150
      %v1930 = vunpack.c.h.b16 %v1150
      %v1931 = vunpack.c.l.b16 %v1151
      %v1932 = vunpack.c.h.b16 %v1151
      %v1933 = vunpack.c.l.b16 %v1152
      %v1934 = vunpack.c.h.b16 %v1152
      %v1935 = vunpack.c.l.b16 %v1153
      %v1936 = vunpack.c.h.b16 %v1153
      %v1937 = vunpack.c.l.b16 %v1154
      %v1938 = vunpack.c.h.b16 %v1154
      %v1939 = vunpack.c.l.b16 %v1155
      %v1940 = vunpack.c.h.b16 %v1155
      %v1941 = vunpack.c.l.b16 %v1156
      %v1942 = vunpack.c.h.b16 %v1156
      %v1943 = vunpack.c.l.b16 %v1157
      %v1944 = vunpack.c.h.b16 %v1157
      %v1945 = vunpack.c.l.b16 %v1158
      %v1946 = vunpack.c.h.b16 %v1158
      %v1947 = vunpack.c.l.b16 %v1159
      %v1948 = vunpack.c.h.b16 %v1159
      %v1949 = vunpack.c.l.b16 %v1160
      %v1950 = vunpack.c.h.b16 %v1160
      %v1951 = vpack.c.b16 %v1443, %v1439
      %v1952 = vpack.c.b16 %v1444, %v1440
      %v1953 = vpack.c.b16 %v1445, %v1441
      %v1954 = vpack.c.b16 %v1446, %v1442
      %v1955 = vpack.c.b16 %v1451, %v1447
      %v1956 = vpack.c.b16 %v1452, %v1448
      %v1957 = vpack.c.b16 %v1453, %v1449
      %v1958 = vpack.c.b16 %v1454, %v1450
      %v1959 = vpack.c.b16 %v1459, %v1455
      %v1960 = vpack.c.b16 %v1460, %v1456
      %v1961 = vpack.c.b16 %v1461, %v1457
      %v1962 = vpack.c.b16 %v1462, %v1458
      %v1963 = vpack.c.b16 %v1467, %v1463
      %v1964 = vpack.c.b16 %v1468, %v1464
      %v1965 = vpack.c.b16 %v1469, %v1465
      %v1966 = vpack.c.b16 %v1470, %v1466
      %v1967 = vpack.c.b16 %v1475, %v1471
      %v1968 = vpack.c.b16 %v1476, %v1472
      %v1969 = vpack.c.b16 %v1477, %v1473
      %v1970 = vpack.c.b16 %v1478, %v1474
      %v1971 = vpack.c.b16 %v1483, %v1479
      %v1972 = vpack.c.b16 %v1484, %v1480
      %v1973 = vpack.c.b16 %v1485, %v1481
      %v1974 = vpack.c.b16 %v1486, %v1482
      %v1975 = vpack.c.b16 %v1491, %v1487
      %v1976 = vpack.c.b16 %v1492, %v1488
      %v1977 = vpack.c.b16 %v1493, %v1489
      %v1978 = vpack.c.b16 %v1494, %v1490
      %v1979 = vpack.c.b16 %v1499, %v1495
      %v1980 = vpack.c.b16 %v1500, %v1496
      %v1981 = vpack.c.b16 %v1501, %v1497
      %v1982 = vpack.c.b16 %v1502, %v1498
      %v1983 = vpack.c.b16 %v1507, %v1503
      %v1984 = vpack.c.b16 %v1508, %v1504
      %v1985 = vpack.c.b16 %v1509, %v1505
      %v1986 = vpack.c.b16 %v1510, %v1506
      %v1987 = vpack.c.b16 %v1515, %v1511
      %v1988 = vpack.c.b16 %v1516, %v1512
      %v1989 = vpack.c.b16 %v1517, %v1513
      %v1990 = vpack.c.b16 %v1518, %v1514
      %v1991 = vpack.c.b16 %v1523, %v1519
      %v1992 = vpack.c.b16 %v1524, %v1520
      %v1993 = vpack.c.b16 %v1525, %v1521
      %v1994 = vpack.c.b16 %v1526, %v1522
      %v1995 = vpack.c.b16 %v1531, %v1527
      %v1996 = vpack.c.b16 %v1532, %v1528
      %v1997 = vpack.c.b16 %v1533, %v1529
      %v1998 = vpack.c.b16 %v1534, %v1530
      %v1999 = vpack.c.b16 %v1539, %v1535
      %v2000 = vpack.c.b16 %v1540, %v1536
      %v2001 = vpack.c.b16 %v1541, %v1537
      %v2002 = vpack.c.b16 %v1542, %v1538
      %v2003 = vpack.c.b16 %v1547, %v1543
      %v2004 = vpack.c.b16 %v1548, %v1544
      %v2005 = vpack.c.b16 %v1549, %v1545
      %v2006 = vpack.c.b16 %v1550, %v1546
      %v2007 = vpack.c.b16 %v1555, %v1551
      %v2008 = vpack.c.b16 %v1556, %v1552
      %v2009 = vpack.c.b16 %v1557, %v1553
      %v2010 = vpack.c.b16 %v1558, %v1554
      %v2011 = vpack.c.b16 %v1563, %v1559
      %v2012 = vpack.c.b16 %v1564, %v1560
      %v2013 = vpack.c.b16 %v1565, %v1561
      %v2014 = vpack.c.b16 %v1566, %v1562
      %v2015 = vpack.c.b16 %v1571, %v1567
      %v2016 = vpack.c.b16 %v1572, %v1568
      %v2017 = vpack.c.b16 %v1573, %v1569
      %v2018 = vpack.c.b16 %v1574, %v1570
      %v2019 = vpack.c.b16 %v1579, %v1575
      %v2020 = vpack.c.b16 %v1580, %v1576
      %v2021 = vpack.c.b16 %v1581, %v1577
      %v2022 = vpack.c.b16 %v1582, %v1578
      %v2023 = vpack.c.b16 %v1587, %v1583
      %v2024 = vpack.c.b16 %v1588, %v1584
      %v2025 = vpack.c.b16 %v1589, %v1585
      %v2026 = vpack.c.b16 %v1590, %v1586
      %v2027 = vpack.c.b16 %v1595, %v1591
      %v2028 = vpack.c.b16 %v1596, %v1592
      %v2029 = vpack.c.b16 %v1597, %v1593
      %v2030 = vpack.c.b16 %v1598, %v1594
      %v2031 = vpack.c.b16 %v1603, %v1599
      %v2032 = vpack.c.b16 %v1604, %v1600
      %v2033 = vpack.c.b16 %v1605, %v1601
      %v2034 = vpack.c.b16 %v1606, %v1602
      %v2035 = vpack.c.b16 %v1611, %v1607
      %v2036 = vpack.c.b16 %v1612, %v1608
      %v2037 = vpack.c.b16 %v1613, %v1609
      %v2038 = vpack.c.b16 %v1614, %v1610
      %v2039 = vpack.c.b16 %v1619, %v1615
      %v2040 = vpack.c.b16 %v1620, %v1616
      %v2041 = vpack.c.b16 %v1621, %v1617
      %v2042 = vpack.c.b16 %v1622, %v1618
      %v2043 = vpack.c.b16 %v1627, %v1623
      %v2044 = vpack.c.b16 %v1628, %v1624
      %v2045 = vpack.c.b16 %v1629, %v1625
      %v2046 = vpack.c.b16 %v1630, %v1626
      %v2047 = vpack.c.b16 %v1635, %v1631
      %v2048 = vpack.c.b16 %v1636, %v1632
      %v2049 = vpack.c.b16 %v1637, %v1633
      %v2050 = vpack.c.b16 %v1638, %v1634
      %v2051 = vpack.c.b16 %v1643, %v1639
      %v2052 = vpack.c.b16 %v1644, %v1640
      %v2053 = vpack.c.b16 %v1645, %v1641
      %v2054 = vpack.c.b16 %v1646, %v1642
      %v2055 = vpack.c.b16 %v1651, %v1647
      %v2056 = vpack.c.b16 %v1652, %v1648
      %v2057 = vpack.c.b16 %v1653, %v1649
      %v2058 = vpack.c.b16 %v1654, %v1650
      %v2059 = vpack.c.b16 %v1659, %v1655
      %v2060 = vpack.c.b16 %v1660, %v1656
      %v2061 = vpack.c.b16 %v1661, %v1657
      %v2062 = vpack.c.b16 %v1662, %v1658
      %v2063 = vpack.c.b16 %v1667, %v1663
      %v2064 = vpack.c.b16 %v1668, %v1664
      %v2065 = vpack.c.b16 %v1669, %v1665
      %v2066 = vpack.c.b16 %v1670, %v1666
      %v2067 = vpack.c.b16 %v1675, %v1671
      %v2068 = vpack.c.b16 %v1676, %v1672
      %v2069 = vpack.c.b16 %v1677, %v1673
      %v2070 = vpack.c.b16 %v1678, %v1674
      %v2071 = vpack.c.b16 %v1683, %v1679
      %v2072 = vpack.c.b16 %v1684, %v1680
      %v2073 = vpack.c.b16 %v1685, %v1681
      %v2074 = vpack.c.b16 %v1686, %v1682
      %v2075 = vpack.c.b16 %v1691, %v1687
      %v2076 = vpack.c.b16 %v1692, %v1688
      %v2077 = vpack.c.b16 %v1693, %v1689
      %v2078 = vpack.c.b16 %v1694, %v1690
      %v2079 = vpack.c.b16 %v1699, %v1695
      %v2080 = vpack.c.b16 %v1700, %v1696
      %v2081 = vpack.c.b16 %v1701, %v1697
      %v2082 = vpack.c.b16 %v1702, %v1698
      %v2083 = vpack.c.b16 %v1707, %v1703
      %v2084 = vpack.c.b16 %v1708, %v1704
      %v2085 = vpack.c.b16 %v1709, %v1705
      %v2086 = vpack.c.b16 %v1710, %v1706
      %v2087 = vpack.c.b16 %v1715, %v1711
      %v2088 = vpack.c.b16 %v1716, %v1712
      %v2089 = vpack.c.b16 %v1717, %v1713
      %v2090 = vpack.c.b16 %v1718, %v1714
      %v2091 = vpack.c.b16 %v1723, %v1719
      %v2092 = vpack.c.b16 %v1724, %v1720
      %v2093 = vpack.c.b16 %v1725, %v1721
      %v2094 = vpack.c.b16 %v1726, %v1722
      %v2095 = vpack.c.b16 %v1731, %v1727
      %v2096 = vpack.c.b16 %v1732, %v1728
      %v2097 = vpack.c.b16 %v1733, %v1729
      %v2098 = vpack.c.b16 %v1734, %v1730
      %v2099 = vpack.c.b16 %v1739, %v1735
      %v2100 = vpack.c.b16 %v1740, %v1736
      %v2101 = vpack.c.b16 %v1741, %v1737
      %v2102 = vpack.c.b16 %v1742, %v1738
      %v2103 = vpack.c.b16 %v1747, %v1743
      %v2104 = vpack.c.b16 %v1748, %v1744
      %v2105 = vpack.c.b16 %v1749, %v1745
      %v2106 = vpack.c.b16 %v1750, %v1746
      %v2107 = vpack.c.b16 %v1755, %v1751
      %v2108 = vpack.c.b16 %v1756, %v1752
      %v2109 = vpack.c.b16 %v1757, %v1753
      %v2110 = vpack.c.b16 %v1758, %v1754
      %v2111 = vpack.c.b16 %v1763, %v1759
      %v2112 = vpack.c.b16 %v1764, %v1760
      %v2113 = vpack.c.b16 %v1765, %v1761
      %v2114 = vpack.c.b16 %v1766, %v1762
      %v2115 = vpack.c.b16 %v1771, %v1767
      %v2116 = vpack.c.b16 %v1772, %v1768
      %v2117 = vpack.c.b16 %v1773, %v1769
      %v2118 = vpack.c.b16 %v1774, %v1770
      %v2119 = vpack.c.b16 %v1779, %v1775
      %v2120 = vpack.c.b16 %v1780, %v1776
      %v2121 = vpack.c.b16 %v1781, %v1777
      %v2122 = vpack.c.b16 %v1782, %v1778
      %v2123 = vpack.c.b16 %v1787, %v1783
      %v2124 = vpack.c.b16 %v1788, %v1784
      %v2125 = vpack.c.b16 %v1789, %v1785
      %v2126 = vpack.c.b16 %v1790, %v1786
      %v2127 = vpack.c.b16 %v1795, %v1791
      %v2128 = vpack.c.b16 %v1796, %v1792
      %v2129 = vpack.c.b16 %v1797, %v1793
      %v2130 = vpack.c.b16 %v1798, %v1794
      %v2131 = vpack.c.b16 %v1803, %v1799
      %v2132 = vpack.c.b16 %v1804, %v1800
      %v2133 = vpack.c.b16 %v1805, %v1801
      %v2134 = vpack.c.b16 %v1806, %v1802
      %v2135 = vpack.c.b16 %v1811, %v1807
      %v2136 = vpack.c.b16 %v1812, %v1808
      %v2137 = vpack.c.b16 %v1813, %v1809
      %v2138 = vpack.c.b16 %v1814, %v1810
      %v2139 = vpack.c.b16 %v1819, %v1815
      %v2140 = vpack.c.b16 %v1820, %v1816
      %v2141 = vpack.c.b16 %v1821, %v1817
      %v2142 = vpack.c.b16 %v1822, %v1818
      %v2143 = vpack.c.b16 %v1827, %v1823
      %v2144 = vpack.c.b16 %v1828, %v1824
      %v2145 = vpack.c.b16 %v1829, %v1825
      %v2146 = vpack.c.b16 %v1830, %v1826
      %v2147 = vpack.c.b16 %v1835, %v1831
      %v2148 = vpack.c.b16 %v1836, %v1832
      %v2149 = vpack.c.b16 %v1837, %v1833
      %v2150 = vpack.c.b16 %v1838, %v1834
      %v2151 = vpack.c.b16 %v1843, %v1839
      %v2152 = vpack.c.b16 %v1844, %v1840
      %v2153 = vpack.c.b16 %v1845, %v1841
      %v2154 = vpack.c.b16 %v1846, %v1842
      %v2155 = vpack.c.b16 %v1851, %v1847
      %v2156 = vpack.c.b16 %v1852, %v1848
      %v2157 = vpack.c.b16 %v1853, %v1849
      %v2158 = vpack.c.b16 %v1854, %v1850
      %v2159 = vpack.c.b16 %v1859, %v1855
      %v2160 = vpack.c.b16 %v1860, %v1856
      %v2161 = vpack.c.b16 %v1861, %v1857
      %v2162 = vpack.c.b16 %v1862, %v1858
      %v2163 = vpack.c.b16 %v1867, %v1863
      %v2164 = vpack.c.b16 %v1868, %v1864
      %v2165 = vpack.c.b16 %v1869, %v1865
      %v2166 = vpack.c.b16 %v1870, %v1866
      %v2167 = vpack.c.b16 %v1875, %v1871
      %v2168 = vpack.c.b16 %v1876, %v1872
      %v2169 = vpack.c.b16 %v1877, %v1873
      %v2170 = vpack.c.b16 %v1878, %v1874
      %v2171 = vpack.c.b16 %v1883, %v1879
      %v2172 = vpack.c.b16 %v1884, %v1880
      %v2173 = vpack.c.b16 %v1885, %v1881
      %v2174 = vpack.c.b16 %v1886, %v1882
      %v2175 = vpack.c.b16 %v1891, %v1887
      %v2176 = vpack.c.b16 %v1892, %v1888
      %v2177 = vpack.c.b16 %v1893, %v1889
      %v2178 = vpack.c.b16 %v1894, %v1890
      %v2179 = vpack.c.b16 %v1899, %v1895
      %v2180 = vpack.c.b16 %v1900, %v1896
      %v2181 = vpack.c.b16 %v1901, %v1897
      %v2182 = vpack.c.b16 %v1902, %v1898
      %v2183 = vpack.c.b16 %v1907, %v1903
      %v2184 = vpack.c.b16 %v1908, %v1904
      %v2185 = vpack.c.b16 %v1909, %v1905
      %v2186 = vpack.c.b16 %v1910, %v1906
      %v2187 = vpack.c.b16 %v1915, %v1911
      %v2188 = vpack.c.b16 %v1916, %v1912
      %v2189 = vpack.c.b16 %v1917, %v1913
      %v2190 = vpack.c.b16 %v1918, %v1914
      %v2191 = vpack.c.b16 %v1923, %v1919
      %v2192 = vpack.c.b16 %v1924, %v1920
      %v2193 = vpack.c.b16 %v1925, %v1921
      %v2194 = vpack.c.b16 %v1926, %v1922
      %v2195 = vpack.c.b16 %v1931, %v1927
      %v2196 = vpack.c.b16 %v1932, %v1928
      %v2197 = vpack.c.b16 %v1933, %v1929
      %v2198 = vpack.c.b16 %v1934, %v1930
      %v2199 = vpack.c.b16 %v1939, %v1935
      %v2200 = vpack.c.b16 %v1940, %v1936
      %v2201 = vpack.c.b16 %v1941, %v1937
      %v2202 = vpack.c.b16 %v1942, %v1938
      %v2203 = vpack.c.b16 %v1947, %v1943
      %v2204 = vpack.c.b16 %v1948, %v1944
      %v2205 = vpack.c.b16 %v1949, %v1945
      %v2206 = vpack.c.b16 %v1950, %v1946
      %2463 = vmatprep.subr.bf16.mxu0 %v1952
      %2464 = vmatpush1.bf16.msra.mxu0 %v1951
      %2465 = vmatprep.subr.bf16.mxu0 %v1956
      %2466 = vmatpush1.bf16.msra.mxu0 %v1955
      %2467 = vmatprep.subr.bf16.mxu0 %v1960
      %2468 = vmatpush1.bf16.msra.mxu0 %v1959
      %2469 = vmatprep.subr.bf16.mxu0 %v1964
      %2470 = vmatpush1.bf16.msra.mxu0 %v1963
      %2471 = vmatprep.subr.bf16.mxu0 %v1968
      %2472 = vmatpush1.bf16.msra.mxu0 %v1967
      %2473 = vmatprep.subr.bf16.mxu0 %v1972
      %2474 = vmatpush1.bf16.msra.mxu0 %v1971
      %2475 = vmatprep.subr.bf16.mxu0 %v1976
      %2476 = vmatpush1.bf16.msra.mxu0 %v1975
      %2477 = vmatprep.subr.bf16.mxu0 %v1980
      %2478 = vmatpush1.bf16.msra.mxu0 %v1979
      %2479 = vmatprep.subr.bf16.mxu0 %v1984
      %2480 = vmatpush1.bf16.msra.mxu0 %v1983
      %2481 = vmatprep.subr.bf16.mxu0 %v1988
      %2482 = vmatpush1.bf16.msra.mxu0 %v1987
      %2483 = vmatprep.subr.bf16.mxu0 %v1992
      %2484 = vmatpush1.bf16.msra.mxu0 %v1991
      %2485 = vmatprep.subr.bf16.mxu0 %v1996
      %2486 = vmatpush1.bf16.msra.mxu0 %v1995
      %2487 = vmatprep.subr.bf16.mxu0 %v2000
      %2488 = vmatpush1.bf16.msra.mxu0 %v1999
      %2489 = vmatprep.subr.bf16.mxu0 %v2004
      %2490 = vmatpush1.bf16.msra.mxu0 %v2003
      %2491 = vmatprep.subr.bf16.mxu0 %v2008
      %2492 = vmatpush1.bf16.msra.mxu0 %v2007
      %2493 = vmatprep.subr.bf16.mxu0 %v2012
      %2494 = vmatpush1.bf16.msra.mxu0 %v2011
      %2495 = vmatprep.mubr.bf16.mxu0 %v890
      %2496 = vmatmul.mubr.bf16.gmra.mrb[0].mxu0 %v889
      %v2497 = vpop.f32.mrb[0].mxu0
      %v2498 = vadd.f32 %v1166, %v2497
      %v2499 = vpop.f32.mrb[0].mxu0
      %v2500 = vadd.f32 %v1170, %v2499
      %v2501 = vpop.f32.mrb[0].mxu0
      %v2502 = vadd.f32 %v1166, %v2501
      %v2503 = vpop.f32.mrb[0].mxu0
      %v2504 = vadd.f32 %v1170, %v2503
      %2505 = vmatprep.mubr.bf16.mxu0 %v898
      %2506 = vmatmul.mubr.bf16.gmra.mrb[0].mxu0 %v897
      %v2507 = vpop.f32.mrb[0].mxu0
      %v2508 = vadd.f32 %v1166, %v2507
      %v2509 = vpop.f32.mrb[0].mxu0
      %v2510 = vadd.f32 %v1170, %v2509
      %v2511 = vpop.f32.mrb[0].mxu0
      %v2512 = vadd.f32 %v1166, %v2511
      %v2513 = vpop.f32.mrb[0].mxu0
      %v2514 = vadd.f32 %v1170, %v2513
      %2515 = vdwg.mxu0
      %2516 = vmatprep.subr.bf16.mxu0 %v2016
      %2517 = vmatpush1.bf16.msra.mxu0 %v2015
      %2518 = vmatprep.subr.bf16.mxu0 %v2020
      %2519 = vmatpush1.bf16.msra.mxu0 %v2019
      %2520 = vmatprep.subr.bf16.mxu0 %v2024
      %2521 = vmatpush1.bf16.msra.mxu0 %v2023
      %2522 = vmatprep.subr.bf16.mxu0 %v2028
      %2523 = vmatpush1.bf16.msra.mxu0 %v2027
      %2524 = vmatprep.subr.bf16.mxu0 %v2032
      %2525 = vmatpush1.bf16.msra.mxu0 %v2031
      %2526 = vmatprep.subr.bf16.mxu0 %v2036
      %2527 = vmatpush1.bf16.msra.mxu0 %v2035
      %2528 = vmatprep.subr.bf16.mxu0 %v2040
      %2529 = vmatpush1.bf16.msra.mxu0 %v2039
      %2530 = vmatprep.subr.bf16.mxu0 %v2044
      %2531 = vmatpush1.bf16.msra.mxu0 %v2043
      %2532 = vmatprep.subr.bf16.mxu0 %v2048
      %2533 = vmatpush1.bf16.msra.mxu0 %v2047
      %2534 = vmatprep.subr.bf16.mxu0 %v2052
      %2535 = vmatpush1.bf16.msra.mxu0 %v2051
      %2536 = vmatprep.subr.bf16.mxu0 %v2056
      %2537 = vmatpush1.bf16.msra.mxu0 %v2055
      %2538 = vmatprep.subr.bf16.mxu0 %v2060
      %2539 = vmatpush1.bf16.msra.mxu0 %v2059
      %2540 = vmatprep.subr.bf16.mxu0 %v2064
      %2541 = vmatpush1.bf16.msra.mxu0 %v2063
      %2542 = vmatprep.subr.bf16.mxu0 %v2068
      %2543 = vmatpush1.bf16.msra.mxu0 %v2067
      %2544 = vmatprep.subr.bf16.mxu0 %v2072
      %2545 = vmatpush1.bf16.msra.mxu0 %v2071
      %2546 = vmatprep.subr.bf16.mxu0 %v2076
      %2547 = vmatpush1.bf16.msra.mxu0 %v2075
      %2548 = vmatprep.mubr.bf16.mxu0 %v892
      %2549 = vmatmul.mubr.bf16.gmra.mrb[0].mxu0 %v891
      %v2550 = vpop.f32.mrb[0].mxu0
      %v2551 = vadd.f32 %v2498, %v2550
      %v2552 = vpop.f32.mrb[0].mxu0
      %v2553 = vadd.f32 %v2500, %v2552
      %v2554 = vpop.f32.mrb[0].mxu0
      %v2555 = vadd.f32 %v2502, %v2554
      %v2556 = vpop.f32.mrb[0].mxu0
      %v2557 = vadd.f32 %v2504, %v2556
      %2558 = vmatprep.mubr.bf16.mxu0 %v900
      %2559 = vmatmul.mubr.bf16.gmra.mrb[0].mxu0 %v899
      %v2560 = vpop.f32.mrb[0].mxu0
      %v2561 = vadd.f32 %v2508, %v2560
      %v2562 = vpop.f32.mrb[0].mxu0
      %v2563 = vadd.f32 %v2510, %v2562
      %v2564 = vpop.f32.mrb[0].mxu0
      %v2565 = vadd.f32 %v2512, %v2564
      %v2566 = vpop.f32.mrb[0].mxu0
      %v2567 = vadd.f32 %v2514, %v2566
      %2568 = vdwg.mxu0
      %2569 = vmatprep.subr.bf16.mxu0 %v2080
      %2570 = vmatpush1.bf16.msra.mxu0 %v2079
      %2571 = vmatprep.subr.bf16.mxu0 %v2084
      %2572 = vmatpush1.bf16.msra.mxu0 %v2083
      %2573 = vmatprep.subr.bf16.mxu0 %v2088
      %2574 = vmatpush1.bf16.msra.mxu0 %v2087
      %2575 = vmatprep.subr.bf16.mxu0 %v2092
      %2576 = vmatpush1.bf16.msra.mxu0 %v2091
      %2577 = vmatprep.subr.bf16.mxu0 %v2096
      %2578 = vmatpush1.bf16.msra.mxu0 %v2095
      %2579 = vmatprep.subr.bf16.mxu0 %v2100
      %2580 = vmatpush1.bf16.msra.mxu0 %v2099
      %2581 = vmatprep.subr.bf16.mxu0 %v2104
      %2582 = vmatpush1.bf16.msra.mxu0 %v2103
      %2583 = vmatprep.subr.bf16.mxu0 %v2108
      %2584 = vmatpush1.bf16.msra.mxu0 %v2107
      %2585 = vmatprep.subr.bf16.mxu0 %v2112
      %2586 = vmatpush1.bf16.msra.mxu0 %v2111
      %2587 = vmatprep.subr.bf16.mxu0 %v2116
      %2588 = vmatpush1.bf16.msra.mxu0 %v2115
      %2589 = vmatprep.subr.bf16.mxu0 %v2120
      %2590 = vmatpush1.bf16.msra.mxu0 %v2119
      %2591 = vmatprep.subr.bf16.mxu0 %v2124
      %2592 = vmatpush1.bf16.msra.mxu0 %v2123
      %2593 = vmatprep.subr.bf16.mxu0 %v2128
      %2594 = vmatpush1.bf16.msra.mxu0 %v2127
      %2595 = vmatprep.subr.bf16.mxu0 %v2132
      %2596 = vmatpush1.bf16.msra.mxu0 %v2131
      %2597 = vmatprep.subr.bf16.mxu0 %v2136
      %2598 = vmatpush1.bf16.msra.mxu0 %v2135
      %2599 = vmatprep.subr.bf16.mxu0 %v2140
      %2600 = vmatpush1.bf16.msra.mxu0 %v2139
      %2601 = vmatprep.mubr.bf16.mxu0 %v894
      %2602 = vmatmul.mubr.bf16.gmra.mrb[0].mxu0 %v893
      %v2603 = vpop.f32.mrb[0].mxu0
      %v2604 = vadd.f32 %v2551, %v2603
      %v2605 = vpop.f32.mrb[0].mxu0
      %v2606 = vadd.f32 %v2553, %v2605
      %v2607 = vpop.f32.mrb[0].mxu0
      %v2608 = vadd.f32 %v2555, %v2607
      %v2609 = vpop.f32.mrb[0].mxu0
      %v2610 = vadd.f32 %v2557, %v2609
      %2611 = vmatprep.mubr.bf16.mxu0 %v902
      %2612 = vmatmul.mubr.bf16.gmra.mrb[0].mxu0 %v901
      %v2613 = vpop.f32.mrb[0].mxu0
      %v2614 = vadd.f32 %v2561, %v2613
      %v2615 = vpop.f32.mrb[0].mxu0
      %v2616 = vadd.f32 %v2563, %v2615
      %v2617 = vpop.f32.mrb[0].mxu0
      %v2618 = vadd.f32 %v2565, %v2617
      %v2619 = vpop.f32.mrb[0].mxu0
      %v2620 = vadd.f32 %v2567, %v2619
      %2621 = vdwg.mxu0
      %2622 = vmatprep.subr.bf16.mxu0 %v2144
      %2623 = vmatpush1.bf16.msra.mxu0 %v2143
      %2624 = vmatprep.subr.bf16.mxu0 %v2148
      %2625 = vmatpush1.bf16.msra.mxu0 %v2147
      %2626 = vmatprep.subr.bf16.mxu0 %v2152
      %2627 = vmatpush1.bf16.msra.mxu0 %v2151
      %2628 = vmatprep.subr.bf16.mxu0 %v2156
      %2629 = vmatpush1.bf16.msra.mxu0 %v2155
      %2630 = vmatprep.subr.bf16.mxu0 %v2160
      %2631 = vmatpush1.bf16.msra.mxu0 %v2159
      %2632 = vmatprep.subr.bf16.mxu0 %v2164
      %2633 = vmatpush1.bf16.msra.mxu0 %v2163
      %2634 = vmatprep.subr.bf16.mxu0 %v2168
      %2635 = vmatpush1.bf16.msra.mxu0 %v2167
      %2636 = vmatprep.subr.bf16.mxu0 %v2172
      %2637 = vmatpush1.bf16.msra.mxu0 %v2171
      %2638 = vmatprep.subr.bf16.mxu0 %v2176
      %2639 = vmatpush1.bf16.msra.mxu0 %v2175
      %2640 = vmatprep.subr.bf16.mxu0 %v2180
      %2641 = vmatpush1.bf16.msra.mxu0 %v2179
      %2642 = vmatprep.subr.bf16.mxu0 %v2184
      %2643 = vmatpush1.bf16.msra.mxu0 %v2183
      %2644 = vmatprep.subr.bf16.mxu0 %v2188
      %2645 = vmatpush1.bf16.msra.mxu0 %v2187
      %2646 = vmatprep.subr.bf16.mxu0 %v2192
      %2647 = vmatpush1.bf16.msra.mxu0 %v2191
      %2648 = vmatprep.subr.bf16.mxu0 %v2196
      %2649 = vmatpush1.bf16.msra.mxu0 %v2195
      %2650 = vmatprep.subr.bf16.mxu0 %v2200
      %2651 = vmatpush1.bf16.msra.mxu0 %v2199
      %2652 = vmatprep.subr.bf16.mxu0 %v2204
      %2653 = vmatpush1.bf16.msra.mxu0 %v2203
      %2654 = vmatprep.mubr.bf16.mxu0 %v896
      %2655 = vmatmul.mubr.bf16.gmra.mrb[0].mxu0 %v895
      %v2656 = vpop.f32.mrb[0].mxu0
      %v2657 = vadd.f32 %v2604, %v2656
      %v2658 = vpop.f32.mrb[0].mxu0
      %v2659 = vadd.f32 %v2606, %v2658
      %v2660 = vpop.f32.mrb[0].mxu0
      %v2661 = vadd.f32 %v2608, %v2660
      %v2662 = vpop.f32.mrb[0].mxu0
      %v2663 = vadd.f32 %v2610, %v2662
      %2664 = vmatprep.mubr.bf16.mxu0 %v904
      %2665 = vmatmul.mubr.bf16.gmra.mrb[0].mxu0 %v903
      %v2666 = vpop.f32.mrb[0].mxu0
      %v2667 = vadd.f32 %v2614, %v2666
      %v2668 = vpop.f32.mrb[0].mxu0
      %v2669 = vadd.f32 %v2616, %v2668
      %v2670 = vpop.f32.mrb[0].mxu0
      %v2671 = vadd.f32 %v2618, %v2670
      %v2672 = vpop.f32.mrb[0].mxu0
      %v2673 = vadd.f32 %v2620, %v2672
      %2674 = vdwg.mxu0
      %2675 = vmatprep.subr.bf16.mxu0 %v1954
      %2676 = vmatpush1.bf16.msra.mxu0 %v1953
      %2677 = vmatprep.subr.bf16.mxu0 %v1958
      %2678 = vmatpush1.bf16.msra.mxu0 %v1957
      %2679 = vmatprep.subr.bf16.mxu0 %v1962
      %2680 = vmatpush1.bf16.msra.mxu0 %v1961
      %2681 = vmatprep.subr.bf16.mxu0 %v1966
      %2682 = vmatpush1.bf16.msra.mxu0 %v1965
      %2683 = vmatprep.subr.bf16.mxu0 %v1970
      %2684 = vmatpush1.bf16.msra.mxu0 %v1969
      %2685 = vmatprep.subr.bf16.mxu0 %v1974
      %2686 = vmatpush1.bf16.msra.mxu0 %v1973
      %2687 = vmatprep.subr.bf16.mxu0 %v1978
      %2688 = vmatpush1.bf16.msra.mxu0 %v1977
      %2689 = vmatprep.subr.bf16.mxu0 %v1982
      %2690 = vmatpush1.bf16.msra.mxu0 %v1981
      %2691 = vmatprep.subr.bf16.mxu0 %v1986
      %2692 = vmatpush1.bf16.msra.mxu0 %v1985
      %2693 = vmatprep.subr.bf16.mxu0 %v1990
      %2694 = vmatpush1.bf16.msra.mxu0 %v1989
      %2695 = vmatprep.subr.bf16.mxu0 %v1994
      %2696 = vmatpush1.bf16.msra.mxu0 %v1993
      %2697 = vmatprep.subr.bf16.mxu0 %v1998
      %2698 = vmatpush1.bf16.msra.mxu0 %v1997
      %2699 = vmatprep.subr.bf16.mxu0 %v2002
      %2700 = vmatpush1.bf16.msra.mxu0 %v2001
      %2701 = vmatprep.subr.bf16.mxu0 %v2006
      %2702 = vmatpush1.bf16.msra.mxu0 %v2005
      %2703 = vmatprep.subr.bf16.mxu0 %v2010
      %2704 = vmatpush1.bf16.msra.mxu0 %v2009
      %2705 = vmatprep.subr.bf16.mxu0 %v2014
      %2706 = vmatpush1.bf16.msra.mxu0 %v2013
      %2707 = vmatprep.mubr.bf16.mxu0 %v890
      %2708 = vmatmul.mubr.bf16.gmra.mrb[0].mxu0 %v889
      %v2709 = vpop.f32.mrb[0].mxu0
      %v2710 = vadd.f32 %v1174, %v2709
      %v2711 = vpop.f32.mrb[0].mxu0
      %v2712 = vadd.f32 %v1178, %v2711
      %v2713 = vpop.f32.mrb[0].mxu0
      %v2714 = vadd.f32 %v1174, %v2713
      %v2715 = vpop.f32.mrb[0].mxu0
      %v2716 = vadd.f32 %v1178, %v2715
      %2717 = vmatprep.mubr.bf16.mxu0 %v898
      %2718 = vmatmul.mubr.bf16.gmra.mrb[0].mxu0 %v897
      %v2719 = vpop.f32.mrb[0].mxu0
      %v2720 = vadd.f32 %v1174, %v2719
      %v2721 = vpop.f32.mrb[0].mxu0
      %v2722 = vadd.f32 %v1178, %v2721
      %v2723 = vpop.f32.mrb[0].mxu0
      %v2724 = vadd.f32 %v1174, %v2723
      %v2725 = vpop.f32.mrb[0].mxu0
      %v2726 = vadd.f32 %v1178, %v2725
      %2727 = vdwg.mxu0
      %2728 = vmatprep.subr.bf16.mxu0 %v2018
      %2729 = vmatpush1.bf16.msra.mxu0 %v2017
      %2730 = vmatprep.subr.bf16.mxu0 %v2022
      %2731 = vmatpush1.bf16.msra.mxu0 %v2021
      %2732 = vmatprep.subr.bf16.mxu0 %v2026
      %2733 = vmatpush1.bf16.msra.mxu0 %v2025
      %2734 = vmatprep.subr.bf16.mxu0 %v2030
      %2735 = vmatpush1.bf16.msra.mxu0 %v2029
      %2736 = vmatprep.subr.bf16.mxu0 %v2034
      %2737 = vmatpush1.bf16.msra.mxu0 %v2033
      %2738 = vmatprep.subr.bf16.mxu0 %v2038
      %2739 = vmatpush1.bf16.msra.mxu0 %v2037
      %2740 = vmatprep.subr.bf16.mxu0 %v2042
      %2741 = vmatpush1.bf16.msra.mxu0 %v2041
      %2742 = vmatprep.subr.bf16.mxu0 %v2046
      %2743 = vmatpush1.bf16.msra.mxu0 %v2045
      %2744 = vmatprep.subr.bf16.mxu0 %v2050
      %2745 = vmatpush1.bf16.msra.mxu0 %v2049
      %2746 = vmatprep.subr.bf16.mxu0 %v2054
      %2747 = vmatpush1.bf16.msra.mxu0 %v2053
      %2748 = vmatprep.subr.bf16.mxu0 %v2058
      %2749 = vmatpush1.bf16.msra.mxu0 %v2057
      %2750 = vmatprep.subr.bf16.mxu0 %v2062
      %2751 = vmatpush1.bf16.msra.mxu0 %v2061
      %2752 = vmatprep.subr.bf16.mxu0 %v2066
      %2753 = vmatpush1.bf16.msra.mxu0 %v2065
      %2754 = vmatprep.subr.bf16.mxu0 %v2070
      %2755 = vmatpush1.bf16.msra.mxu0 %v2069
      %2756 = vmatprep.subr.bf16.mxu0 %v2074
      %2757 = vmatpush1.bf16.msra.mxu0 %v2073
      %2758 = vmatprep.subr.bf16.mxu0 %v2078
      %2759 = vmatpush1.bf16.msra.mxu0 %v2077
      %2760 = vmatprep.mubr.bf16.mxu0 %v892
      %2761 = vmatmul.mubr.bf16.gmra.mrb[0].mxu0 %v891
      %v2762 = vpop.f32.mrb[0].mxu0
      %v2763 = vadd.f32 %v2710, %v2762
      %v2764 = vpop.f32.mrb[0].mxu0
      %v2765 = vadd.f32 %v2712, %v2764
      %v2766 = vpop.f32.mrb[0].mxu0
      %v2767 = vadd.f32 %v2714, %v2766
      %v2768 = vpop.f32.mrb[0].mxu0
      %v2769 = vadd.f32 %v2716, %v2768
      %2770 = vmatprep.mubr.bf16.mxu0 %v900
      %2771 = vmatmul.mubr.bf16.gmra.mrb[0].mxu0 %v899
      %v2772 = vpop.f32.mrb[0].mxu0
      %v2773 = vadd.f32 %v2720, %v2772
      %v2774 = vpop.f32.mrb[0].mxu0
      %v2775 = vadd.f32 %v2722, %v2774
      %v2776 = vpop.f32.mrb[0].mxu0
      %v2777 = vadd.f32 %v2724, %v2776
      %v2778 = vpop.f32.mrb[0].mxu0
      %v2779 = vadd.f32 %v2726, %v2778
      %2780 = vdwg.mxu0
      %2781 = vmatprep.subr.bf16.mxu0 %v2082
      %2782 = vmatpush1.bf16.msra.mxu0 %v2081
      %2783 = vmatprep.subr.bf16.mxu0 %v2086
      %2784 = vmatpush1.bf16.msra.mxu0 %v2085
      %2785 = vmatprep.subr.bf16.mxu0 %v2090
      %2786 = vmatpush1.bf16.msra.mxu0 %v2089
      %2787 = vmatprep.subr.bf16.mxu0 %v2094
      %2788 = vmatpush1.bf16.msra.mxu0 %v2093
      %2789 = vmatprep.subr.bf16.mxu0 %v2098
      %2790 = vmatpush1.bf16.msra.mxu0 %v2097
      %2791 = vmatprep.subr.bf16.mxu0 %v2102
      %2792 = vmatpush1.bf16.msra.mxu0 %v2101
      %2793 = vmatprep.subr.bf16.mxu0 %v2106
      %2794 = vmatpush1.bf16.msra.mxu0 %v2105
      %2795 = vmatprep.subr.bf16.mxu0 %v2110
      %2796 = vmatpush1.bf16.msra.mxu0 %v2109
      %2797 = vmatprep.subr.bf16.mxu0 %v2114
      %2798 = vmatpush1.bf16.msra.mxu0 %v2113
      %2799 = vmatprep.subr.bf16.mxu0 %v2118
      %2800 = vmatpush1.bf16.msra.mxu0 %v2117
      %2801 = vmatprep.subr.bf16.mxu0 %v2122
      %2802 = vmatpush1.bf16.msra.mxu0 %v2121
      %2803 = vmatprep.subr.bf16.mxu0 %v2126
      %2804 = vmatpush1.bf16.msra.mxu0 %v2125
      %2805 = vmatprep.subr.bf16.mxu0 %v2130
      %2806 = vmatpush1.bf16.msra.mxu0 %v2129
      %2807 = vmatprep.subr.bf16.mxu0 %v2134
      %2808 = vmatpush1.bf16.msra.mxu0 %v2133
      %2809 = vmatprep.subr.bf16.mxu0 %v2138
      %2810 = vmatpush1.bf16.msra.mxu0 %v2137
      %2811 = vmatprep.subr.bf16.mxu0 %v2142
      %2812 = vmatpush1.bf16.msra.mxu0 %v2141
      %2813 = vmatprep.mubr.bf16.mxu0 %v894
      %2814 = vmatmul.mubr.bf16.gmra.mrb[0].mxu0 %v893
      %v2815 = vpop.f32.mrb[0].mxu0
      %v2816 = vadd.f32 %v2763, %v2815
      %v2817 = vpop.f32.mrb[0].mxu0
      %v2818 = vadd.f32 %v2765, %v2817
      %v2819 = vpop.f32.mrb[0].mxu0
      %v2820 = vadd.f32 %v2767, %v2819
      %v2821 = vpop.f32.mrb[0].mxu0
      %v2822 = vadd.f32 %v2769, %v2821
      %2823 = vmatprep.mubr.bf16.mxu0 %v902
      %2824 = vmatmul.mubr.bf16.gmra.mrb[0].mxu0 %v901
      %v2825 = vpop.f32.mrb[0].mxu0
      %v2826 = vadd.f32 %v2773, %v2825
      %v2827 = vpop.f32.mrb[0].mxu0
      %v2828 = vadd.f32 %v2775, %v2827
      %v2829 = vpop.f32.mrb[0].mxu0
      %v2830 = vadd.f32 %v2777, %v2829
      %v2831 = vpop.f32.mrb[0].mxu0
      %v2832 = vadd.f32 %v2779, %v2831
      %2833 = vdwg.mxu0
      %2834 = vmatprep.subr.bf16.mxu0 %v2146
      %2835 = vmatpush1.bf16.msra.mxu0 %v2145
      %2836 = vmatprep.subr.bf16.mxu0 %v2150
      %2837 = vmatpush1.bf16.msra.mxu0 %v2149
      %2838 = vmatprep.subr.bf16.mxu0 %v2154
      %2839 = vmatpush1.bf16.msra.mxu0 %v2153
      %2840 = vmatprep.subr.bf16.mxu0 %v2158
      %2841 = vmatpush1.bf16.msra.mxu0 %v2157
      %2842 = vmatprep.subr.bf16.mxu0 %v2162
      %2843 = vmatpush1.bf16.msra.mxu0 %v2161
      %2844 = vmatprep.subr.bf16.mxu0 %v2166
      %2845 = vmatpush1.bf16.msra.mxu0 %v2165
      %2846 = vmatprep.subr.bf16.mxu0 %v2170
      %2847 = vmatpush1.bf16.msra.mxu0 %v2169
      %2848 = vmatprep.subr.bf16.mxu0 %v2174
      %2849 = vmatpush1.bf16.msra.mxu0 %v2173
      %2850 = vmatprep.subr.bf16.mxu0 %v2178
      %2851 = vmatpush1.bf16.msra.mxu0 %v2177
      %2852 = vmatprep.subr.bf16.mxu0 %v2182
      %2853 = vmatpush1.bf16.msra.mxu0 %v2181
      %2854 = vmatprep.subr.bf16.mxu0 %v2186
      %2855 = vmatpush1.bf16.msra.mxu0 %v2185
      %2856 = vmatprep.subr.bf16.mxu0 %v2190
      %2857 = vmatpush1.bf16.msra.mxu0 %v2189
      %2858 = vmatprep.subr.bf16.mxu0 %v2194
      %2859 = vmatpush1.bf16.msra.mxu0 %v2193
      %2860 = vmatprep.subr.bf16.mxu0 %v2198
      %2861 = vmatpush1.bf16.msra.mxu0 %v2197
      %2862 = vmatprep.subr.bf16.mxu0 %v2202
      %2863 = vmatpush1.bf16.msra.mxu0 %v2201
      %2864 = vmatprep.subr.bf16.mxu0 %v2206
      %2865 = vmatpush1.bf16.msra.mxu0 %v2205
      %2866 = vmatprep.mubr.bf16.mxu0 %v896
      %2867 = vmatmul.mubr.bf16.gmra.mrb[0].mxu0 %v895
      %v2868 = vpop.f32.mrb[0].mxu0
      %v2869 = vadd.f32 %v2816, %v2868
      %v2870 = vpop.f32.mrb[0].mxu0
      %v2871 = vadd.f32 %v2818, %v2870
      %v2872 = vpop.f32.mrb[0].mxu0
      %v2873 = vadd.f32 %v2820, %v2872
      %v2874 = vpop.f32.mrb[0].mxu0
      %v2875 = vadd.f32 %v2822, %v2874
      %2876 = vmatprep.mubr.bf16.mxu0 %v904
      %2877 = vmatmul.mubr.bf16.gmra.mrb[0].mxu0 %v903
      %v2878 = vpop.f32.mrb[0].mxu0
      %v2879 = vadd.f32 %v2826, %v2878
      %v2880 = vpop.f32.mrb[0].mxu0
      %v2881 = vadd.f32 %v2828, %v2880
      %v2882 = vpop.f32.mrb[0].mxu0
      %v2883 = vadd.f32 %v2830, %v2882
      %v2884 = vpop.f32.mrb[0].mxu0
      %v2885 = vadd.f32 %v2832, %v2884
      %2886 = vdwg.mxu0
      %v2887 = vmax.f32 %v2657, 0.0
      %v2888 = vmax.f32 %v2659, 0.0
      %v2889 = vmax.f32 %v2869, 0.0
      %v2890 = vmax.f32 %v2871, 0.0
      %v2891 = vmax.f32 %v2661, 0.0
      %v2892 = vmax.f32 %v2663, 0.0
      %v2893 = vmax.f32 %v2873, 0.0
      %v2894 = vmax.f32 %v2875, 0.0
      %v2895 = vmax.f32 %v2667, 0.0
      %v2896 = vmax.f32 %v2669, 0.0
      %v2897 = vmax.f32 %v2879, 0.0
      %v2898 = vmax.f32 %v2881, 0.0
      %v2899 = vmax.f32 %v2671, 0.0
      %v2900 = vmax.f32 %v2673, 0.0
      %v2901 = vmax.f32 %v2883, 0.0
      %v2902 = vmax.f32 %v2885, 0.0
      %v2903 = vpack.c.bf16 %v2891, %v2887
      %v2904 = vpack.c.bf16 %v2892, %v2888
      %v2905 = vpack.c.bf16 %v2893, %v2889
      %v2906 = vpack.c.bf16 %v2894, %v2890
      %v2907 = vpack.c.bf16 %v2899, %v2895
      %v2908 = vpack.c.bf16 %v2900, %v2896
      %v2909 = vpack.c.bf16 %v2901, %v2897
      %v2910 = vpack.c.bf16 %v2902, %v2898
      %v2911 = vld [vmem:[%s5] sm:$0xf]
      %v2912 = vld [vmem:[%s5 + $0x4] sm:$0xf]
      %v2913 = vld [vmem:[%s5 + $0x8] sm:$0xf]
      %v2914 = vld [vmem:[%s5 + $0xc] sm:$0xf]
      %v2915 = vld [vmem:[%s5 + $0x10] sm:$0xf]
      %v2916 = vld [vmem:[%s5 + $0x14] sm:$0xf]
      %v2917 = vld [vmem:[%s5 + $0x18] sm:$0xf]
      %v2918 = vld [vmem:[%s5 + $0x1c] sm:$0xf]
      %v2919 = vld [vmem:[%s5 + $0x20] sm:$0xf]
      %v2920 = vld [vmem:[%s5 + $0x24] sm:$0xf]
      %v2921 = vld [vmem:[%s5 + $0x28] sm:$0xf]
      %v2922 = vld [vmem:[%s5 + $0x2c] sm:$0xf]
      %v2923 = vld [vmem:[%s5 + $0x30] sm:$0xf]
      %v2924 = vld [vmem:[%s5 + $0x34] sm:$0xf]
      %v2925 = vld [vmem:[%s5 + $0x38] sm:$0xf]
      %v2926 = vld [vmem:[%s5 + $0x3c] sm:$0xf]
      %v2927 = vld [vmem:[%s5 + $0x40] sm:$0xf]
      %v2928 = vld [vmem:[%s5 + $0x44] sm:$0xf]
      %v2929 = vld [vmem:[%s5 + $0x48] sm:$0xf]
      %v2930 = vld [vmem:[%s5 + $0x4c] sm:$0xf]
      %v2931 = vld [vmem:[%s5 + $0x50] sm:$0xf]
      %v2932 = vld [vmem:[%s5 + $0x54] sm:$0xf]
      %v2933 = vld [vmem:[%s5 + $0x58] sm:$0xf]
      %v2934 = vld [vmem:[%s5 + $0x5c] sm:$0xf]
      %v2935 = vld [vmem:[%s5 + $0x60] sm:$0xf]
      %v2936 = vld [vmem:[%s5 + $0x64] sm:$0xf]
      %v2937 = vld [vmem:[%s5 + $0x68] sm:$0xf]
      %v2938 = vld [vmem:[%s5 + $0x6c] sm:$0xf]
      %v2939 = vld [vmem:[%s5 + $0x70] sm:$0xf]
      %v2940 = vld [vmem:[%s5 + $0x74] sm:$0xf]
      %v2941 = vld [vmem:[%s5 + $0x78] sm:$0xf]
      %v2942 = vld [vmem:[%s5 + $0x7c] sm:$0xf]
      %v2943 = vld [vmem:[%s5 + $0x80] sm:$0xf]
      %v2944 = vld [vmem:[%s5 + $0x84] sm:$0xf]
      %v2945 = vld [vmem:[%s5 + $0x88] sm:$0xf]
      %v2946 = vld [vmem:[%s5 + $0x8c] sm:$0xf]
      %v2947 = vld [vmem:[%s5 + $0x90] sm:$0xf]
      %v2948 = vld [vmem:[%s5 + $0x94] sm:$0xf]
      %v2949 = vld [vmem:[%s5 + $0x98] sm:$0xf]
      %v2950 = vld [vmem:[%s5 + $0x9c] sm:$0xf]
      %v2951 = vld [vmem:[%s5 + $0xa0] sm:$0xf]
      %v2952 = vld [vmem:[%s5 + $0xa4] sm:$0xf]
      %v2953 = vld [vmem:[%s5 + $0xa8] sm:$0xf]
      %v2954 = vld [vmem:[%s5 + $0xac] sm:$0xf]
      %v2955 = vld [vmem:[%s5 + $0xb0] sm:$0xf]
      %v2956 = vld [vmem:[%s5 + $0xb4] sm:$0xf]
      %v2957 = vld [vmem:[%s5 + $0xb8] sm:$0xf]
      %v2958 = vld [vmem:[%s5 + $0xbc] sm:$0xf]
      %v2959 = vld [vmem:[%s5 + $0xc0] sm:$0xf]
      %v2960 = vld [vmem:[%s5 + $0xc4] sm:$0xf]
      %v2961 = vld [vmem:[%s5 + $0xc8] sm:$0xf]
      %v2962 = vld [vmem:[%s5 + $0xcc] sm:$0xf]
      %v2963 = vld [vmem:[%s5 + $0xd0] sm:$0xf]
      %v2964 = vld [vmem:[%s5 + $0xd4] sm:$0xf]
      %v2965 = vld [vmem:[%s5 + $0xd8] sm:$0xf]
      %v2966 = vld [vmem:[%s5 + $0xdc] sm:$0xf]
      %v2967 = vld [vmem:[%s5 + $0xe0] sm:$0xf]
      %v2968 = vld [vmem:[%s5 + $0xe4] sm:$0xf]
      %v2969 = vld [vmem:[%s5 + $0xe8] sm:$0xf]
      %v2970 = vld [vmem:[%s5 + $0xec] sm:$0xf]
      %v2971 = vld [vmem:[%s5 + $0xf0] sm:$0xf]
      %v2972 = vld [vmem:[%s5 + $0xf4] sm:$0xf]
      %v2973 = vld [vmem:[%s5 + $0xf8] sm:$0xf]
      %v2974 = vld [vmem:[%s5 + $0xfc] sm:$0xf]
      %v2975 = vld [vmem:[%s6] sm:$0x1]
      %v2977 = vlaneseq
      %v2978 = vshrl.u32 %v2977, 7
      %v2979 = vsub.s32 0, %v2978
      %v2980 = vrot.slane %v2975, %v2979
      %v3046 = vunpack.c.l.b16 %v2911
      %v3047 = vunpack.c.l.b16 %v2912
      %v3048 = vunpack.c.l.b16 %v2913
      %v3049 = vunpack.c.l.b16 %v2914
      %v3050 = vunpack.c.l.b16 %v2915
      %v3051 = vunpack.c.l.b16 %v2916
      %v3052 = vunpack.c.l.b16 %v2917
      %v3053 = vunpack.c.l.b16 %v2918
      %v3054 = vunpack.c.l.b16 %v2919
      %v3055 = vunpack.c.l.b16 %v2920
      %v3056 = vunpack.c.l.b16 %v2921
      %v3057 = vunpack.c.l.b16 %v2922
      %v3058 = vunpack.c.l.b16 %v2923
      %v3059 = vunpack.c.l.b16 %v2924
      %v3060 = vunpack.c.l.b16 %v2925
      %v3061 = vunpack.c.l.b16 %v2926
      %v3062 = vunpack.c.l.b16 %v2927
      %v3063 = vunpack.c.l.b16 %v2928
      %v3064 = vunpack.c.l.b16 %v2929
      %v3065 = vunpack.c.l.b16 %v2930
      %v3066 = vunpack.c.l.b16 %v2931
      %v3067 = vunpack.c.l.b16 %v2932
      %v3068 = vunpack.c.l.b16 %v2933
      %v3069 = vunpack.c.l.b16 %v2934
      %v3070 = vunpack.c.l.b16 %v2935
      %v3071 = vunpack.c.l.b16 %v2936
      %v3072 = vunpack.c.l.b16 %v2937
      %v3073 = vunpack.c.l.b16 %v2938
      %v3074 = vunpack.c.l.b16 %v2939
      %v3075 = vunpack.c.l.b16 %v2940
      %v3076 = vunpack.c.l.b16 %v2941
      %v3077 = vunpack.c.l.b16 %v2942
      %v3078 = vunpack.c.l.b16 %v2943
      %v3079 = vunpack.c.l.b16 %v2944
      %v3080 = vunpack.c.l.b16 %v2945
      %v3081 = vunpack.c.l.b16 %v2946
      %v3082 = vunpack.c.l.b16 %v2947
      %v3083 = vunpack.c.l.b16 %v2948
      %v3084 = vunpack.c.l.b16 %v2949
      %v3085 = vunpack.c.l.b16 %v2950
      %v3086 = vunpack.c.l.b16 %v2951
      %v3087 = vunpack.c.l.b16 %v2952
      %v3088 = vunpack.c.l.b16 %v2953
      %v3089 = vunpack.c.l.b16 %v2954
      %v3090 = vunpack.c.l.b16 %v2955
      %v3091 = vunpack.c.l.b16 %v2956
      %v3092 = vunpack.c.l.b16 %v2957
      %v3093 = vunpack.c.l.b16 %v2958
      %v3094 = vunpack.c.l.b16 %v2959
      %v3095 = vunpack.c.l.b16 %v2960
      %v3096 = vunpack.c.l.b16 %v2961
      %v3097 = vunpack.c.l.b16 %v2962
      %v3098 = vunpack.c.l.b16 %v2963
      %v3099 = vunpack.c.l.b16 %v2964
      %v3100 = vunpack.c.l.b16 %v2965
      %v3101 = vunpack.c.l.b16 %v2966
      %v3102 = vunpack.c.l.b16 %v2967
      %v3103 = vunpack.c.l.b16 %v2968
      %v3104 = vunpack.c.l.b16 %v2969
      %v3105 = vunpack.c.l.b16 %v2970
      %v3106 = vunpack.c.l.b16 %v2971
      %v3107 = vunpack.c.l.b16 %v2972
      %v3108 = vunpack.c.l.b16 %v2973
      %v3109 = vunpack.c.l.b16 %v2974
      %v3110 = vpack.c.b16 %v3047, %v3046
      %v3111 = vpack.c.b16 %v3049, %v3048
      %v3112 = vpack.c.b16 %v3051, %v3050
      %v3113 = vpack.c.b16 %v3053, %v3052
      %v3114 = vpack.c.b16 %v3055, %v3054
      %v3115 = vpack.c.b16 %v3057, %v3056
      %v3116 = vpack.c.b16 %v3059, %v3058
      %v3117 = vpack.c.b16 %v3061, %v3060
      %v3118 = vpack.c.b16 %v3063, %v3062
      %v3119 = vpack.c.b16 %v3065, %v3064
      %v3120 = vpack.c.b16 %v3067, %v3066
      %v3121 = vpack.c.b16 %v3069, %v3068
      %v3122 = vpack.c.b16 %v3071, %v3070
      %v3123 = vpack.c.b16 %v3073, %v3072
      %v3124 = vpack.c.b16 %v3075, %v3074
      %v3125 = vpack.c.b16 %v3077, %v3076
      %v3126 = vpack.c.b16 %v3079, %v3078
      %v3127 = vpack.c.b16 %v3081, %v3080
      %v3128 = vpack.c.b16 %v3083, %v3082
      %v3129 = vpack.c.b16 %v3085, %v3084
      %v3130 = vpack.c.b16 %v3087, %v3086
      %v3131 = vpack.c.b16 %v3089, %v3088
      %v3132 = vpack.c.b16 %v3091, %v3090
      %v3133 = vpack.c.b16 %v3093, %v3092
      %v3134 = vpack.c.b16 %v3095, %v3094
      %v3135 = vpack.c.b16 %v3097, %v3096
      %v3136 = vpack.c.b16 %v3099, %v3098
      %v3137 = vpack.c.b16 %v3101, %v3100
      %v3138 = vpack.c.b16 %v3103, %v3102
      %v3139 = vpack.c.b16 %v3105, %v3104
      %v3140 = vpack.c.b16 %v3107, %v3106
      %v3141 = vpack.c.b16 %v3109, %v3108
      %3174 = vmatprep.subr.bf16.mxu0 0
      %3175 = vmatpush1.bf16.msra.mxu0 %v3110
      %3176 = vmatprep.subr.bf16.mxu0 0
      %3177 = vmatpush1.bf16.msra.mxu0 %v3111
      %3178 = vmatprep.subr.bf16.mxu0 0
      %3179 = vmatpush1.bf16.msra.mxu0 %v3112
      %3180 = vmatprep.subr.bf16.mxu0 0
      %3181 = vmatpush1.bf16.msra.mxu0 %v3113
      %3182 = vmatprep.subr.bf16.mxu0 0
      %3183 = vmatpush1.bf16.msra.mxu0 %v3114
      %3184 = vmatprep.subr.bf16.mxu0 0
      %3185 = vmatpush1.bf16.msra.mxu0 %v3115
      %3186 = vmatprep.subr.bf16.mxu0 0
      %3187 = vmatpush1.bf16.msra.mxu0 %v3116
      %3188 = vmatprep.subr.bf16.mxu0 0
      %3189 = vmatpush1.bf16.msra.mxu0 %v3117
      %3190 = vmatprep.subr.bf16.mxu0 0
      %3191 = vmatpush1.bf16.msra.mxu0 %v3118
      %3192 = vmatprep.subr.bf16.mxu0 0
      %3193 = vmatpush1.bf16.msra.mxu0 %v3119
      %3194 = vmatprep.subr.bf16.mxu0 0
      %3195 = vmatpush1.bf16.msra.mxu0 %v3120
      %3196 = vmatprep.subr.bf16.mxu0 0
      %3197 = vmatpush1.bf16.msra.mxu0 %v3121
      %3198 = vmatprep.subr.bf16.mxu0 0
      %3199 = vmatpush1.bf16.msra.mxu0 %v3122
      %3200 = vmatprep.subr.bf16.mxu0 0
      %3201 = vmatpush1.bf16.msra.mxu0 %v3123
      %3202 = vmatprep.subr.bf16.mxu0 0
      %3203 = vmatpush1.bf16.msra.mxu0 %v3124
      %3204 = vmatprep.subr.bf16.mxu0 0
      %3205 = vmatpush1.bf16.msra.mxu0 %v3125
      %3206 = vmatprep.mubr.bf16.mxu0 %v2904
      %3207 = vmatmul.mubr.bf16.gmra.mrb[0].mxu0 %v2903
      %v3208 = vpop.f32.mrb[0].mxu0
      %v3209 = vadd.f32 %v2980, %v3208
      %v3210 = vpop.f32.mrb[0].mxu0
      %v3211 = vpop.f32.mrb[0].mxu0
      %v3212 = vadd.f32 %v2980, %v3211
      %v3213 = vpop.f32.mrb[0].mxu0
      %3214 = vmatprep.mubr.bf16.mxu0 %v2908
      %3215 = vmatmul.mubr.bf16.gmra.mrb[0].mxu0 %v2907
      %v3216 = vpop.f32.mrb[0].mxu0
      %v3217 = vadd.f32 %v2980, %v3216
      %v3218 = vpop.f32.mrb[0].mxu0
      %v3219 = vpop.f32.mrb[0].mxu0
      %v3220 = vadd.f32 %v2980, %v3219
      %v3221 = vpop.f32.mrb[0].mxu0
      %3222 = vdwg.mxu0
      %3223 = vmatprep.subr.bf16.mxu0 0
      %3224 = vmatpush1.bf16.msra.mxu0 %v3126
      %3225 = vmatprep.subr.bf16.mxu0 0
      %3226 = vmatpush1.bf16.msra.mxu0 %v3127
      %3227 = vmatprep.subr.bf16.mxu0 0
      %3228 = vmatpush1.bf16.msra.mxu0 %v3128
      %3229 = vmatprep.subr.bf16.mxu0 0
      %3230 = vmatpush1.bf16.msra.mxu0 %v3129
      %3231 = vmatprep.subr.bf16.mxu0 0
      %3232 = vmatpush1.bf16.msra.mxu0 %v3130
      %3233 = vmatprep.subr.bf16.mxu0 0
      %3234 = vmatpush1.bf16.msra.mxu0 %v3131
      %3235 = vmatprep.subr.bf16.mxu0 0
      %3236 = vmatpush1.bf16.msra.mxu0 %v3132
      %3237 = vmatprep.subr.bf16.mxu0 0
      %3238 = vmatpush1.bf16.msra.mxu0 %v3133
      %3239 = vmatprep.subr.bf16.mxu0 0
      %3240 = vmatpush1.bf16.msra.mxu0 %v3134
      %3241 = vmatprep.subr.bf16.mxu0 0
      %3242 = vmatpush1.bf16.msra.mxu0 %v3135
      %3243 = vmatprep.subr.bf16.mxu0 0
      %3244 = vmatpush1.bf16.msra.mxu0 %v3136
      %3245 = vmatprep.subr.bf16.mxu0 0
      %3246 = vmatpush1.bf16.msra.mxu0 %v3137
      %3247 = vmatprep.subr.bf16.mxu0 0
      %3248 = vmatpush1.bf16.msra.mxu0 %v3138
      %3249 = vmatprep.subr.bf16.mxu0 0
      %3250 = vmatpush1.bf16.msra.mxu0 %v3139
      %3251 = vmatprep.subr.bf16.mxu0 0
      %3252 = vmatpush1.bf16.msra.mxu0 %v3140
      %3253 = vmatprep.subr.bf16.mxu0 0
      %3254 = vmatpush1.bf16.msra.mxu0 %v3141
      %3255 = vmatprep.mubr.bf16.mxu0 %v2906
      %3256 = vmatmul.mubr.bf16.gmra.mrb[0].mxu0 %v2905
      %v3257 = vpop.f32.mrb[0].mxu0
      %v3258 = vadd.f32 %v3209, %v3257
      %v3259 = vpop.f32.mrb[0].mxu0
      %v3260 = vpop.f32.mrb[0].mxu0
      %v3261 = vadd.f32 %v3212, %v3260
      %v3262 = vpop.f32.mrb[0].mxu0
      %3263 = vmatprep.mubr.bf16.mxu0 %v2910
      %3264 = vmatmul.mubr.bf16.gmra.mrb[0].mxu0 %v2909
      %v3265 = vpop.f32.mrb[0].mxu0
      %v3266 = vadd.f32 %v3217, %v3265
      %v3267 = vpop.f32.mrb[0].mxu0
      %v3268 = vpop.f32.mrb[0].mxu0
      %v3269 = vadd.f32 %v3220, %v3268
      %v3270 = vpop.f32.mrb[0].mxu0
      %3271 = vdwg.mxu0
      %v3272 = vmax.f32 %v3258, 0.0
      %v3273 = vmax.f32 %v3261, 0.0
      %v3274 = vmax.f32 %v3266, 0.0
      %v3275 = vmax.f32 %v3269, 0.0
      %v3276 = vpack.c.bf16 %v3273, %v3272
      %v3277 = vpack.c.bf16 %v3275, %v3274
      %v3278 = vld [vmem:[%s7] sm:$0xf]
      %v3279 = vld [vmem:[%s7 + $0x4] sm:$0xf]
      %v3280 = vld [vmem:[%s7 + $0x8] sm:$0xf]
      %v3281 = vld [vmem:[%s7 + $0xc] sm:$0xf]
      %v3282 = vld [vmem:[%s7 + $0x10] sm:$0xf]
      %v3283 = vld [vmem:[%s7 + $0x14] sm:$0xf]
      %v3284 = vld [vmem:[%s7 + $0x18] sm:$0xf]
      %v3285 = vld [vmem:[%s7 + $0x1c] sm:$0xf]
      %v3286 = vld [vmem:[%s8] sm:$0x1]
      %v3288 = vlaneseq
      %v3289 = vshrl.u32 %v3288, 7
      %v3290 = vsub.s32 0, %v3289
      %v3291 = vrot.slane %v3286, %v3290
      %v3301 = vunpack.c.l.b16 %v3278
      %v3302 = vunpack.c.l.b16 %v3279
      %v3303 = vunpack.c.l.b16 %v3280
      %v3304 = vunpack.c.l.b16 %v3281
      %v3305 = vunpack.c.l.b16 %v3282
      %v3306 = vunpack.c.l.b16 %v3283
      %v3307 = vunpack.c.l.b16 %v3284
      %v3308 = vunpack.c.l.b16 %v3285
      %v3309 = vpack.c.b16 %v3302, %v3301
      %v3310 = vpack.c.b16 %v3304, %v3303
      %v3311 = vpack.c.b16 %v3306, %v3305
      %v3312 = vpack.c.b16 %v3308, %v3307
      %v3318 = vsel %vm638, %v3276, 0
      %v3321 = vsel %vm638, %v3277, 0
      %3323 = vmatprep.subr.bf16.mxu0 0
      %3324 = vmatpush1.bf16.msra.mxu0 %v3309
      %3325 = vmatprep.subr.bf16.mxu0 0
      %3326 = vmatpush1.bf16.msra.mxu0 %v3310
      %3327 = vmatprep.subr.bf16.mxu0 0
      %3328 = vmatpush1.bf16.msra.mxu0 %v3311
      %3329 = vmatprep.subr.bf16.mxu0 0
      %3330 = vmatpush1.bf16.msra.mxu0 %v3312
      %3331 = vmatprep.subr.bf16.mxu0 0
      %3332 = vmatpush1.bf16.msra.mxu0 0
      %3333 = vmatprep.subr.bf16.mxu0 0
      %3334 = vmatpush1.bf16.msra.mxu0 0
      %3335 = vmatprep.subr.bf16.mxu0 0
      %3336 = vmatpush1.bf16.msra.mxu0 0
      %3337 = vmatprep.subr.bf16.mxu0 0
      %3338 = vmatpush1.bf16.msra.mxu0 0
      %3339 = vmatprep.subr.bf16.mxu0 0
      %3340 = vmatpush1.bf16.msra.mxu0 0
      %3341 = vmatprep.subr.bf16.mxu0 0
      %3342 = vmatpush1.bf16.msra.mxu0 0
      %3343 = vmatprep.subr.bf16.mxu0 0
      %3344 = vmatpush1.bf16.msra.mxu0 0
      %3345 = vmatprep.subr.bf16.mxu0 0
      %3346 = vmatpush1.bf16.msra.mxu0 0
      %3347 = vmatprep.subr.bf16.mxu0 0
      %3348 = vmatpush1.bf16.msra.mxu0 0
      %3349 = vmatprep.subr.bf16.mxu0 0
      %3350 = vmatpush1.bf16.msra.mxu0 0
      %3351 = vmatprep.subr.bf16.mxu0 0
      %3352 = vmatpush1.bf16.msra.mxu0 0
      %3353 = vmatprep.subr.bf16.mxu0 0
      %3354 = vmatpush1.bf16.msra.mxu0 0
      %3355 = vmatprep.mubr.bf16.mxu0 0
      %3356 = vmatmul.mubr.bf16.gmra.mrb[0].mxu0 %v3318
      %v3357 = vpop.f32.mrb[0].mxu0
      %v3358 = vadd.f32 %v3291, %v3357
      %v3359 = vpop.f32.mrb[0].mxu0
      %v3360 = vpop.f32.mrb[0].mxu0
      %v3361 = vadd.f32 %v3291, %v3360
      %v3362 = vpop.f32.mrb[0].mxu0
      %3363 = vmatprep.mubr.bf16.mxu0 0
      %3364 = vmatmul.mubr.bf16.gmra.mrb[0].mxu0 %v3321
      %v3365 = vpop.f32.mrb[0].mxu0
      %v3366 = vadd.f32 %v3291, %v3365
      %v3367 = vpop.f32.mrb[0].mxu0
      %v3368 = vpop.f32.mrb[0].mxu0
      %v3369 = vadd.f32 %v3291, %v3368
      %v3370 = vpop.f32.mrb[0].mxu0
      %3371 = vdwg.mxu0
      %vm3372 = vcmask 23552
      %3373 = vst.msk [vmem:[%s387] sm:$0xff] %vm3372, %v3358
      %3374 = vst.msk [vmem:[%s387 + $0x8] sm:$0xff] %vm3372, %v3361
      %3375 = vst.msk [vmem:[%s387 + $0x10] sm:$0xff] %vm3372, %v3366
      %3376 = vst.msk [vmem:[%s387 + $0x18] sm:$0xff] %vm3372, %v3369
      %s3377 = smul.u32 4, %s25
      %p3378 = scmp.lt.s32.totalorder %s24, 1
      %s3379 = scalar_select %p3378, %s24, 1
      %p3380 = scmp.lt.s32.totalorder %s3377, 7
      %s3381 = scalar_select %p3380, %s3377, 7
      %s3382 = smul.addr %s3379, 8
      %s3383 = sadd.s32 %s3381, %s3382
      %s3384 = smul.addr %s3383, 8
      %s3385 = scalar_lea.vmem %s9, %s3384
      // Predicated region
      $region57: #{generator_forward.11} parent=55 // pred_check
        %p3386 = pneg %p253
      $region58: #{generator_forward.11} parent=55 // pred_check_branch
        %3388 = sbr.rel (%p3386) target = $region60
      $region59: #{generator_forward.11} parent=55 // pred_region
        %s3389 = smul.u32 4, %s25
      $region60: #{generator_forward.11} parent=55 // pred_fallthru
        _
    $region56: #{generator_forward.11} parent=5 // pred_fallthru
      _
    %p3390 = scmp.le.s32.totalorder 2, %s15
    // Predicated region
    $region61: #{generator_forward.11} parent=5 // pred_check
      %p3391 = pneg %p3390
    $region62: #{generator_forward.11} parent=5 // pred_check_branch
      %3393 = sbr.rel (%p3391) target = $region64
    $region63: #{generator_forward.11} parent=5 // pred_region
      %s3394 = ssub.s32 %s15, 2
      // Predicated region
      $region65: #{generator_forward.11} parent=63 // pred_check
        %p3395 = pneg %p259
      $region66: #{generator_forward.11} parent=63 // pred_check_branch
        %3397 = sbr.rel (%p3395) target = $region68
      $region67: #{generator_forward.11} parent=63 // pred_region
        %s3398 = smul.u32 4, %s27
        %p3399 = scmp.lt.s32.totalorder %s26, 1
        %s3400 = scalar_select %p3399, %s26, 1
        %p3401 = scmp.lt.s32.totalorder %s3398, 7
        %s3402 = scalar_select %p3401, %s3398, 7
        %s3403 = smul.addr %s3400, 8
        %s3404 = sadd.s32 %s3402, %s3403
        %s3405 = smul.addr %s3404, 8
        %s3406 = scalar_lea.vmem %s9, %s3405
      $region68: #{generator_forward.11} parent=63 // pred_fallthru
        _
    $region64: #{generator_forward.11} parent=5 // pred_fallthru
      _
  $region6: #{generator_forward.11} parent=0 // loop_footer
    %s19 = sadd.s32 1, %s15
  $region7: #{generator_forward.11} parent=0 // loop_footer_branch
    %14 = sbr.rel target = $region3
  $region8: #{generator_forward.11} parent=0 // loop_exit
    _

// kernel: generator_forward.10
$region0: #{generator_forward.10}
  #allocation0 [shape = 'u32[]', space=smem, size = 0x4, offset = 0x4, fixed_abs, tag = 'smem constant byte address 0x4 - core index']
  #allocation1 [shape = 'u32[144,128]{1,0:T(1,128)}', space=vmem, size = 0x12000, scoped, tag = 'internal scratch']
  %s0 = inlined_call_operand.vmem [shape: bf16[2,1088], index: 0, kind: input, shape index: {}]
  %s1 = inlined_call_operand.vmem [shape: bf16[1088,512], index: 1, kind: input, shape index: {}]
  %s2 = inlined_call_operand.vmem [shape: f32[1,512], index: 2, kind: input, shape index: {}]
  %s3 = inlined_call_operand.vmem [shape: bf16[512,256], index: 3, kind: input, shape index: {}]
  %s4 = inlined_call_operand.vmem [shape: f32[1,256], index: 4, kind: input, shape index: {}]
  %s5 = inlined_call_operand.vmem [shape: bf16[256,4], index: 5, kind: input, shape index: {}]
  %s6 = inlined_call_operand.vmem [shape: f32[1,4], index: 6, kind: input, shape index: {}]
  %s7 = inlined_call_operand.vmem [shape: f32[2,4], index: 7, kind: output, shape index: {}]
  %s8 = sld [smem:[#allocation0]]
  $region38: #{generator_forward.10} parent=0
    _
  %s10 = ssub.s32 1, %s8
  %s11 = scalar_select 0, %s10, %s8
  // Predicated region
  $region2: #{generator_forward.10} parent=0 // pred_check
    _
  $region3: #{generator_forward.10} parent=0 // pred_check_branch
    %13 = sbr.rel (0) target = $region5
  $region4: #{generator_forward.10} parent=0 // pred_region
    _
  $region5: #{generator_forward.10} parent=0 // pred_fallthru
    _
  // Predicated region
  $region6: #{generator_forward.10} parent=0 // pred_check
    _
  $region7: #{generator_forward.10} parent=0 // pred_check_branch
    %15 = sbr.rel (0) target = $region9
  $region8: #{generator_forward.10} parent=0 // pred_region
    _
  $region9: #{generator_forward.10} parent=0 // pred_fallthru
    _
  // Predicated region
  $region10: #{generator_forward.10} parent=0 // pred_check
    _
  $region11: #{generator_forward.10} parent=0 // pred_check_branch
    %17 = sbr.rel (0) target = $region13
  $region12: #{generator_forward.10} parent=0 // pred_region
    _
  $region13: #{generator_forward.10} parent=0 // pred_fallthru
    _
  // Predicated region
  $region14: #{generator_forward.10} parent=0 // pred_check
    _
  $region15: #{generator_forward.10} parent=0 // pred_check_branch
    %19 = sbr.rel (0) target = $region17
  $region16: #{generator_forward.10} parent=0 // pred_region
    _
  $region17: #{generator_forward.10} parent=0 // pred_fallthru
    _
  // Predicated region
  $region18: #{generator_forward.10} parent=0 // pred_check
    _
  $region19: #{generator_forward.10} parent=0 // pred_check_branch
    %21 = sbr.rel (0) target = $region21
  $region20: #{generator_forward.10} parent=0 // pred_region
    _
  $region21: #{generator_forward.10} parent=0 // pred_fallthru
    _
  // Predicated region
  $region22: #{generator_forward.10} parent=0 // pred_check
    _
  $region23: #{generator_forward.10} parent=0 // pred_check_branch
    %23 = sbr.rel (0) target = $region25
  $region24: #{generator_forward.10} parent=0 // pred_region
    _
  $region25: #{generator_forward.10} parent=0 // pred_fallthru
    _
  // Predicated region
  $region26: #{generator_forward.10} parent=0 // pred_check
    _
  $region27: #{generator_forward.10} parent=0 // pred_check_branch
    %25 = sbr.rel (0) target = $region29
  $region28: #{generator_forward.10} parent=0 // pred_region
    _
  $region29: #{generator_forward.10} parent=0 // pred_fallthru
    _
  %v27 = vld [vmem:[%s0] sm:$0xff]
  %v28 = vld [vmem:[%s0 + $0x8] sm:$0x1]
  %v29 = vld [vmem:[%s1] sm:$0xff]
  %v30 = vld [vmem:[%s1 + $0x8] sm:$0xff]
  %v31 = vld [vmem:[%s1 + $0x10] sm:$0xff]
  %v32 = vld [vmem:[%s1 + $0x18] sm:$0xff]
  %v33 = vld [vmem:[%s1 + $0x20] sm:$0xff]
  %v34 = vld [vmem:[%s1 + $0x28] sm:$0xff]
  %v35 = vld [vmem:[%s1 + $0x30] sm:$0xff]
  %v36 = vld [vmem:[%s1 + $0x38] sm:$0xff]
  %v37 = vld [vmem:[%s1 + $0x40] sm:$0xff]
  %v38 = vld [vmem:[%s1 + $0x48] sm:$0xff]
  %v39 = vld [vmem:[%s1 + $0x50] sm:$0xff]
  %v40 = vld [vmem:[%s1 + $0x58] sm:$0xff]
  %v41 = vld [vmem:[%s1 + $0x60] sm:$0xff]
  %v42 = vld [vmem:[%s1 + $0x68] sm:$0xff]
  %v43 = vld [vmem:[%s1 + $0x70] sm:$0xff]
  %v44 = vld [vmem:[%s1 + $0x78] sm:$0xff]
  %v45 = vld [vmem:[%s1 + $0x80] sm:$0xff]
  %v46 = vld [vmem:[%s1 + $0x88] sm:$0xff]
  %v47 = vld [vmem:[%s1 + $0x90] sm:$0xff]
  %v48 = vld [vmem:[%s1 + $0x98] sm:$0xff]
  %v49 = vld [vmem:[%s1 + $0xa0] sm:$0xff]
  %v50 = vld [vmem:[%s1 + $0xa8] sm:$0xff]
  %v51 = vld [vmem:[%s1 + $0xb0] sm:$0xff]
  %v52 = vld [vmem:[%s1 + $0xb8] sm:$0xff]
  %v53 = vld [vmem:[%s1 + $0xc0] sm:$0xff]
  %v54 = vld [vmem:[%s1 + $0xc8] sm:$0xff]
  %v55 = vld [vmem:[%s1 + $0xd0] sm:$0xff]
  %v56 = vld [vmem:[%s1 + $0xd8] sm:$0xff]
  %v57 = vld [vmem:[%s1 + $0xe0] sm:$0xff]
  %v58 = vld [vmem:[%s1 + $0xe8] sm:$0xff]
  %v59 = vld [vmem:[%s1 + $0xf0] sm:$0xff]
  %v60 = vld [vmem:[%s1 + $0xf8] sm:$0xff]
  %v61 = vld [vmem:[%s1 + $0x100] sm:$0xff]
  %v62 = vld [vmem:[%s1 + $0x108] sm:$0xff]
  %v63 = vld [vmem:[%s1 + $0x110] sm:$0xff]
  %v64 = vld [vmem:[%s1 + $0x118] sm:$0xff]
  %v65 = vld [vmem:[%s1 + $0x120] sm:$0xff]
  %v66 = vld [vmem:[%s1 + $0x128] sm:$0xff]
  %v67 = vld [vmem:[%s1 + $0x130] sm:$0xff]
  %v68 = vld [vmem:[%s1 + $0x138] sm:$0xff]
  %v69 = vld [vmem:[%s1 + $0x140] sm:$0xff]
  %v70 = vld [vmem:[%s1 + $0x148] sm:$0xff]
  %v71 = vld [vmem:[%s1 + $0x150] sm:$0xff]
  %v72 = vld [vmem:[%s1 + $0x158] sm:$0xff]
  %v73 = vld [vmem:[%s1 + $0x160] sm:$0xff]
  %v74 = vld [vmem:[%s1 + $0x168] sm:$0xff]
  %v75 = vld [vmem:[%s1 + $0x170] sm:$0xff]
  %v76 = vld [vmem:[%s1 + $0x178] sm:$0xff]
  %v77 = vld [vmem:[%s1 + $0x180] sm:$0xff]
  %v78 = vld [vmem:[%s1 + $0x188] sm:$0xff]
  %v79 = vld [vmem:[%s1 + $0x190] sm:$0xff]
  %v80 = vld [vmem:[%s1 + $0x198] sm:$0xff]
  %v81 = vld [vmem:[%s1 + $0x1a0] sm:$0xff]
  %v82 = vld [vmem:[%s1 + $0x1a8] sm:$0xff]
  %v83 = vld [vmem:[%s1 + $0x1b0] sm:$0xff]
  %v84 = vld [vmem:[%s1 + $0x1b8] sm:$0xff]
  %v85 = vld [vmem:[%s1 + $0x1c0] sm:$0xff]
  %v86 = vld [vmem:[%s1 + $0x1c8] sm:$0xff]
  %v87 = vld [vmem:[%s1 + $0x1d0] sm:$0xff]
  %v88 = vld [vmem:[%s1 + $0x1d8] sm:$0xff]
  %v89 = vld [vmem:[%s1 + $0x1e0] sm:$0xff]
  %v90 = vld [vmem:[%s1 + $0x1e8] sm:$0xff]
  %v91 = vld [vmem:[%s1 + $0x1f0] sm:$0xff]
  %v92 = vld [vmem:[%s1 + $0x1f8] sm:$0xff]
  %v93 = vld [vmem:[%s1 + $0x200] sm:$0xff]
  %v94 = vld [vmem:[%s1 + $0x208] sm:$0xff]
  %v95 = vld [vmem:[%s1 + $0x210] sm:$0xff]
  %v96 = vld [vmem:[%s1 + $0x218] sm:$0xff]
  %v97 = vld [vmem:[%s1 + $0x220] sm:$0xff]
  %v98 = vld [vmem:[%s1 + $0x228] sm:$0xff]
  %v99 = vld [vmem:[%s1 + $0x230] sm:$0xff]
  %v100 = vld [vmem:[%s1 + $0x238] sm:$0xff]
  %v101 = vld [vmem:[%s1 + $0x240] sm:$0xff]
  %v102 = vld [vmem:[%s1 + $0x248] sm:$0xff]
  %v103 = vld [vmem:[%s1 + $0x250] sm:$0xff]
  %v104 = vld [vmem:[%s1 + $0x258] sm:$0xff]
  %v105 = vld [vmem:[%s1 + $0x260] sm:$0xff]
  %v106 = vld [vmem:[%s1 + $0x268] sm:$0xff]
  %v107 = vld [vmem:[%s1 + $0x270] sm:$0xff]
  %v108 = vld [vmem:[%s1 + $0x278] sm:$0xff]
  %v109 = vld [vmem:[%s1 + $0x280] sm:$0xff]
  %v110 = vld [vmem:[%s1 + $0x288] sm:$0xff]
  %v111 = vld [vmem:[%s1 + $0x290] sm:$0xff]
  %v112 = vld [vmem:[%s1 + $0x298] sm:$0xff]
  %v113 = vld [vmem:[%s1 + $0x2a0] sm:$0xff]
  %v114 = vld [vmem:[%s1 + $0x2a8] sm:$0xff]
  %v115 = vld [vmem:[%s1 + $0x2b0] sm:$0xff]
  %v116 = vld [vmem:[%s1 + $0x2b8] sm:$0xff]
  %v117 = vld [vmem:[%s1 + $0x2c0] sm:$0xff]
  %v118 = vld [vmem:[%s1 + $0x2c8] sm:$0xff]
  %v119 = vld [vmem:[%s1 + $0x2d0] sm:$0xff]
  %v120 = vld [vmem:[%s1 + $0x2d8] sm:$0xff]
  %v121 = vld [vmem:[%s1 + $0x2e0] sm:$0xff]
  %v122 = vld [vmem:[%s1 + $0x2e8] sm:$0xff]
  %v123 = vld [vmem:[%s1 + $0x2f0] sm:$0xff]
  %v124 = vld [vmem:[%s1 + $0x2f8] sm:$0xff]
  %v125 = vld [vmem:[%s1 + $0x300] sm:$0xff]
  %v126 = vld [vmem:[%s1 + $0x308] sm:$0xff]
  %v127 = vld [vmem:[%s1 + $0x310] sm:$0xff]
  %v128 = vld [vmem:[%s1 + $0x318] sm:$0xff]
  %v129 = vld [vmem:[%s1 + $0x320] sm:$0xff]
  %v130 = vld [vmem:[%s1 + $0x328] sm:$0xff]
  %v131 = vld [vmem:[%s1 + $0x330] sm:$0xff]
  %v132 = vld [vmem:[%s1 + $0x338] sm:$0xff]
  %v133 = vld [vmem:[%s1 + $0x340] sm:$0xff]
  %v134 = vld [vmem:[%s1 + $0x348] sm:$0xff]
  %v135 = vld [vmem:[%s1 + $0x350] sm:$0xff]
  %v136 = vld [vmem:[%s1 + $0x358] sm:$0xff]
  %v137 = vld [vmem:[%s1 + $0x360] sm:$0xff]
  %v138 = vld [vmem:[%s1 + $0x368] sm:$0xff]
  %v139 = vld [vmem:[%s1 + $0x370] sm:$0xff]
  %v140 = vld [vmem:[%s1 + $0x378] sm:$0xff]
  %v141 = vld [vmem:[%s1 + $0x380] sm:$0xff]
  %v142 = vld [vmem:[%s1 + $0x388] sm:$0xff]
  %v143 = vld [vmem:[%s1 + $0x390] sm:$0xff]
  %v144 = vld [vmem:[%s1 + $0x398] sm:$0xff]
  %v145 = vld [vmem:[%s1 + $0x3a0] sm:$0xff]
  %v146 = vld [vmem:[%s1 + $0x3a8] sm:$0xff]
  %v147 = vld [vmem:[%s1 + $0x3b0] sm:$0xff]
  %v148 = vld [vmem:[%s1 + $0x3b8] sm:$0xff]
  %v149 = vld [vmem:[%s1 + $0x3c0] sm:$0xff]
  %v150 = vld [vmem:[%s1 + $0x3c8] sm:$0xff]
  %v151 = vld [vmem:[%s1 + $0x3d0] sm:$0xff]
  %v152 = vld [vmem:[%s1 + $0x3d8] sm:$0xff]
  %v153 = vld [vmem:[%s1 + $0x3e0] sm:$0xff]
  %v154 = vld [vmem:[%s1 + $0x3e8] sm:$0xff]
  %v155 = vld [vmem:[%s1 + $0x3f0] sm:$0xff]
  %v156 = vld [vmem:[%s1 + $0x3f8] sm:$0xff]
  %v157 = vld [vmem:[%s1 + $0x400] sm:$0xff]
  %v158 = vld [vmem:[%s1 + $0x408] sm:$0xff]
  %v159 = vld [vmem:[%s1 + $0x410] sm:$0xff]
  %v160 = vld [vmem:[%s1 + $0x418] sm:$0xff]
  %v161 = vld [vmem:[%s1 + $0x420] sm:$0xff]
  %v162 = vld [vmem:[%s1 + $0x428] sm:$0xff]
  %v163 = vld [vmem:[%s1 + $0x430] sm:$0xff]
  %v164 = vld [vmem:[%s1 + $0x438] sm:$0xff]
  %v165 = vld [vmem:[%s1 + $0x440] sm:$0xff]
  %v166 = vld [vmem:[%s1 + $0x448] sm:$0xff]
  %v167 = vld [vmem:[%s1 + $0x450] sm:$0xff]
  %v168 = vld [vmem:[%s1 + $0x458] sm:$0xff]
  %v169 = vld [vmem:[%s1 + $0x460] sm:$0xff]
  %v170 = vld [vmem:[%s1 + $0x468] sm:$0xff]
  %v171 = vld [vmem:[%s1 + $0x470] sm:$0xff]
  %v172 = vld [vmem:[%s1 + $0x478] sm:$0xff]
  %v173 = vld [vmem:[%s1 + $0x480] sm:$0xff]
  %v174 = vld [vmem:[%s1 + $0x488] sm:$0xff]
  %v175 = vld [vmem:[%s1 + $0x490] sm:$0xff]
  %v176 = vld [vmem:[%s1 + $0x498] sm:$0xff]
  %v177 = vld [vmem:[%s1 + $0x4a0] sm:$0xff]
  %v178 = vld [vmem:[%s1 + $0x4a8] sm:$0xff]
  %v179 = vld [vmem:[%s1 + $0x4b0] sm:$0xff]
  %v180 = vld [vmem:[%s1 + $0x4b8] sm:$0xff]
  %v181 = vld [vmem:[%s1 + $0x4c0] sm:$0xff]
  %v182 = vld [vmem:[%s1 + $0x4c8] sm:$0xff]
  %v183 = vld [vmem:[%s1 + $0x4d0] sm:$0xff]
  %v184 = vld [vmem:[%s1 + $0x4d8] sm:$0xff]
  %v185 = vld [vmem:[%s1 + $0x4e0] sm:$0xff]
  %v186 = vld [vmem:[%s1 + $0x4e8] sm:$0xff]
  %v187 = vld [vmem:[%s1 + $0x4f0] sm:$0xff]
  %v188 = vld [vmem:[%s1 + $0x4f8] sm:$0xff]
  %v189 = vld [vmem:[%s1 + $0x500] sm:$0xff]
  %v190 = vld [vmem:[%s1 + $0x508] sm:$0xff]
  %v191 = vld [vmem:[%s1 + $0x510] sm:$0xff]
  %v192 = vld [vmem:[%s1 + $0x518] sm:$0xff]
  %v193 = vld [vmem:[%s1 + $0x520] sm:$0xff]
  %v194 = vld [vmem:[%s1 + $0x528] sm:$0xff]
  %v195 = vld [vmem:[%s1 + $0x530] sm:$0xff]
  %v196 = vld [vmem:[%s1 + $0x538] sm:$0xff]
  %v197 = vld [vmem:[%s1 + $0x540] sm:$0xff]
  %v198 = vld [vmem:[%s1 + $0x548] sm:$0xff]
  %v199 = vld [vmem:[%s1 + $0x550] sm:$0xff]
  %v200 = vld [vmem:[%s1 + $0x558] sm:$0xff]
  %v201 = vld [vmem:[%s1 + $0x560] sm:$0xff]
  %v202 = vld [vmem:[%s1 + $0x568] sm:$0xff]
  %v203 = vld [vmem:[%s1 + $0x570] sm:$0xff]
  %v204 = vld [vmem:[%s1 + $0x578] sm:$0xff]
  %v205 = vld [vmem:[%s1 + $0x580] sm:$0xff]
  %v206 = vld [vmem:[%s1 + $0x588] sm:$0xff]
  %v207 = vld [vmem:[%s1 + $0x590] sm:$0xff]
  %v208 = vld [vmem:[%s1 + $0x598] sm:$0xff]
  %v209 = vld [vmem:[%s1 + $0x5a0] sm:$0xff]
  %v210 = vld [vmem:[%s1 + $0x5a8] sm:$0xff]
  %v211 = vld [vmem:[%s1 + $0x5b0] sm:$0xff]
  %v212 = vld [vmem:[%s1 + $0x5b8] sm:$0xff]
  %v213 = vld [vmem:[%s1 + $0x5c0] sm:$0xff]
  %v214 = vld [vmem:[%s1 + $0x5c8] sm:$0xff]
  %v215 = vld [vmem:[%s1 + $0x5d0] sm:$0xff]
  %v216 = vld [vmem:[%s1 + $0x5d8] sm:$0xff]
  %v217 = vld [vmem:[%s1 + $0x5e0] sm:$0xff]
  %v218 = vld [vmem:[%s1 + $0x5e8] sm:$0xff]
  %v219 = vld [vmem:[%s1 + $0x5f0] sm:$0xff]
  %v220 = vld [vmem:[%s1 + $0x5f8] sm:$0xff]
  %v221 = vld [vmem:[%s1 + $0x600] sm:$0xff]
  %v222 = vld [vmem:[%s1 + $0x608] sm:$0xff]
  %v223 = vld [vmem:[%s1 + $0x610] sm:$0xff]
  %v224 = vld [vmem:[%s1 + $0x618] sm:$0xff]
  %v225 = vld [vmem:[%s1 + $0x620] sm:$0xff]
  %v226 = vld [vmem:[%s1 + $0x628] sm:$0xff]
  %v227 = vld [vmem:[%s1 + $0x630] sm:$0xff]
  %v228 = vld [vmem:[%s1 + $0x638] sm:$0xff]
  %v229 = vld [vmem:[%s1 + $0x640] sm:$0xff]
  %v230 = vld [vmem:[%s1 + $0x648] sm:$0xff]
  %v231 = vld [vmem:[%s1 + $0x650] sm:$0xff]
  %v232 = vld [vmem:[%s1 + $0x658] sm:$0xff]
  %v233 = vld [vmem:[%s1 + $0x660] sm:$0xff]
  %v234 = vld [vmem:[%s1 + $0x668] sm:$0xff]
  %v235 = vld [vmem:[%s1 + $0x670] sm:$0xff]
  %v236 = vld [vmem:[%s1 + $0x678] sm:$0xff]
  %v237 = vld [vmem:[%s1 + $0x680] sm:$0xff]
  %v238 = vld [vmem:[%s1 + $0x688] sm:$0xff]
  %v239 = vld [vmem:[%s1 + $0x690] sm:$0xff]
  %v240 = vld [vmem:[%s1 + $0x698] sm:$0xff]
  %v241 = vld [vmem:[%s1 + $0x6a0] sm:$0xff]
  %v242 = vld [vmem:[%s1 + $0x6a8] sm:$0xff]
  %v243 = vld [vmem:[%s1 + $0x6b0] sm:$0xff]
  %v244 = vld [vmem:[%s1 + $0x6b8] sm:$0xff]
  %v245 = vld [vmem:[%s1 + $0x6c0] sm:$0xff]
  %v246 = vld [vmem:[%s1 + $0x6c8] sm:$0xff]
  %v247 = vld [vmem:[%s1 + $0x6d0] sm:$0xff]
  %v248 = vld [vmem:[%s1 + $0x6d8] sm:$0xff]
  %v249 = vld [vmem:[%s1 + $0x6e0] sm:$0xff]
  %v250 = vld [vmem:[%s1 + $0x6e8] sm:$0xff]
  %v251 = vld [vmem:[%s1 + $0x6f0] sm:$0xff]
  %v252 = vld [vmem:[%s1 + $0x6f8] sm:$0xff]
  %v253 = vld [vmem:[%s1 + $0x700] sm:$0xff]
  %v254 = vld [vmem:[%s1 + $0x708] sm:$0xff]
  %v255 = vld [vmem:[%s1 + $0x710] sm:$0xff]
  %v256 = vld [vmem:[%s1 + $0x718] sm:$0xff]
  %v257 = vld [vmem:[%s1 + $0x720] sm:$0xff]
  %v258 = vld [vmem:[%s1 + $0x728] sm:$0xff]
  %v259 = vld [vmem:[%s1 + $0x730] sm:$0xff]
  %v260 = vld [vmem:[%s1 + $0x738] sm:$0xff]
  %v261 = vld [vmem:[%s1 + $0x740] sm:$0xff]
  %v262 = vld [vmem:[%s1 + $0x748] sm:$0xff]
  %v263 = vld [vmem:[%s1 + $0x750] sm:$0xff]
  %v264 = vld [vmem:[%s1 + $0x758] sm:$0xff]
  %v265 = vld [vmem:[%s1 + $0x760] sm:$0xff]
  %v266 = vld [vmem:[%s1 + $0x768] sm:$0xff]
  %v267 = vld [vmem:[%s1 + $0x770] sm:$0xff]
  %v268 = vld [vmem:[%s1 + $0x778] sm:$0xff]
  %v269 = vld [vmem:[%s1 + $0x780] sm:$0xff]
  %v270 = vld [vmem:[%s1 + $0x788] sm:$0xff]
  %v271 = vld [vmem:[%s1 + $0x790] sm:$0xff]
  %v272 = vld [vmem:[%s1 + $0x798] sm:$0xff]
  %v273 = vld [vmem:[%s1 + $0x7a0] sm:$0xff]
  %v274 = vld [vmem:[%s1 + $0x7a8] sm:$0xff]
  %v275 = vld [vmem:[%s1 + $0x7b0] sm:$0xff]
  %v276 = vld [vmem:[%s1 + $0x7b8] sm:$0xff]
  %v277 = vld [vmem:[%s1 + $0x7c0] sm:$0xff]
  %v278 = vld [vmem:[%s1 + $0x7c8] sm:$0xff]
  %v279 = vld [vmem:[%s1 + $0x7d0] sm:$0xff]
  %v280 = vld [vmem:[%s1 + $0x7d8] sm:$0xff]
  %v281 = vld [vmem:[%s1 + $0x7e0] sm:$0xff]
  %v282 = vld [vmem:[%s1 + $0x7e8] sm:$0xff]
  %v283 = vld [vmem:[%s1 + $0x7f0] sm:$0xff]
  %v284 = vld [vmem:[%s1 + $0x7f8] sm:$0xff]
  %v285 = vld [vmem:[%s1 + $0x800] sm:$0xff]
  %v286 = vld [vmem:[%s1 + $0x808] sm:$0xff]
  %v287 = vld [vmem:[%s1 + $0x810] sm:$0xff]
  %v288 = vld [vmem:[%s1 + $0x818] sm:$0xff]
  %v289 = vld [vmem:[%s1 + $0x820] sm:$0xff]
  %v290 = vld [vmem:[%s1 + $0x828] sm:$0xff]
  %v291 = vld [vmem:[%s1 + $0x830] sm:$0xff]
  %v292 = vld [vmem:[%s1 + $0x838] sm:$0xff]
  %v293 = vld [vmem:[%s1 + $0x840] sm:$0xff]
  %v294 = vld [vmem:[%s1 + $0x848] sm:$0xff]
  %v295 = vld [vmem:[%s1 + $0x850] sm:$0xff]
  %v296 = vld [vmem:[%s1 + $0x858] sm:$0xff]
  %v297 = vld [vmem:[%s1 + $0x860] sm:$0xff]
  %v298 = vld [vmem:[%s1 + $0x868] sm:$0xff]
  %v299 = vld [vmem:[%s1 + $0x870] sm:$0xff]
  %v300 = vld [vmem:[%s1 + $0x878] sm:$0xff]
  %v301 = vld [vmem:[%s2] sm:$0xf]
  %v303 = vlaneseq
  %v304 = vshrl.u32 %v303, 7
  %v305 = vsub.s32 0, %v304
  %v306 = vrot.slane %v301, %v305
  %v307 = vlaneseq
  %v308 = vshrl.u32 %v307, 7
  %v309 = vsub.s32 1, %v308
  %v310 = vrot.slane %v301, %v309
  %v311 = vlaneseq
  %v312 = vshrl.u32 %v311, 7
  %v313 = vsub.s32 2, %v312
  %v314 = vrot.slane %v301, %v313
  %v315 = vlaneseq
  %v316 = vshrl.u32 %v315, 7
  %v317 = vsub.s32 3, %v316
  %v318 = vrot.slane %v301, %v317
  %v325 = vcombine.high %v27, %v27
  %v327 = vunpack.c.l.s4 1966171168
  %v328 = vunpack.c.0.s8 %v327
  %v329 = vlaneseq
  %v330 = vshrl.u32 %v329, 7
  %v331 = vsub.s32 %v328, %v330
  %v332 = vrot.slane %v27, %v331
  %v334 = vunpack.c.l.s4 1966171168
  %v335 = vunpack.c.0.s8 %v334
  %v336 = vlaneseq
  %v337 = vshrl.u32 %v336, 7
  %v338 = vsub.s32 %v335, %v337
  %v339 = vrot.slane %v325, %v338
  %v340 = vcombine.high %v332, %v332
  %v341 = vcombine.high %v339, %v339
  %v343 = vunpack.c.l.s4 1966171168
  %v344 = vunpack.c.0.s8 %v343
  %v345 = vlaneseq
  %v346 = vshrl.u32 %v345, 7
  %v347 = vsub.s32 %v344, %v346
  %v348 = vrot.slane %v332, %v347
  %v350 = vunpack.c.l.s4 1966171168
  %v351 = vunpack.c.0.s8 %v350
  %v352 = vlaneseq
  %v353 = vshrl.u32 %v352, 7
  %v354 = vsub.s32 %v351, %v353
  %v355 = vrot.slane %v339, %v354
  %v357 = vunpack.c.l.s4 1966171168
  %v358 = vunpack.c.0.s8 %v357
  %v359 = vlaneseq
  %v360 = vshrl.u32 %v359, 7
  %v361 = vsub.s32 %v358, %v360
  %v362 = vrot.slane %v340, %v361
  %v364 = vunpack.c.l.s4 1966171168
  %v365 = vunpack.c.0.s8 %v364
  %v366 = vlaneseq
  %v367 = vshrl.u32 %v366, 7
  %v368 = vsub.s32 %v365, %v367
  %v369 = vrot.slane %v341, %v368
  %v370 = vcombine.high %v348, %v348
  %v371 = vcombine.high %v355, %v355
  %v372 = vcombine.high %v362, %v362
  %v373 = vcombine.high %v369, %v369
  %v375 = vunpack.c.l.s4 1966171168
  %v376 = vunpack.c.0.s8 %v375
  %v377 = vlaneseq
  %v378 = vshrl.u32 %v377, 7
  %v379 = vsub.s32 %v376, %v378
  %v380 = vrot.slane %v28, %v379
  %v382 = vunpack.c.l.s4 1966171168
  %v383 = vunpack.c.0.s8 %v382
  %v384 = vlaneseq
  %v385 = vshrl.u32 %v384, 7
  %v386 = vsub.s32 %v383, %v385
  %v387 = vrot.slane %v380, %v386
  %v668 = vunpack.c.l.b16 %v29
  %v669 = vunpack.c.h.b16 %v29
  %v670 = vunpack.c.l.b16 %v30
  %v671 = vunpack.c.h.b16 %v30
  %v672 = vunpack.c.l.b16 %v31
  %v673 = vunpack.c.h.b16 %v31
  %v674 = vunpack.c.l.b16 %v32
  %v675 = vunpack.c.h.b16 %v32
  %v676 = vunpack.c.l.b16 %v33
  %v677 = vunpack.c.h.b16 %v33
  %v678 = vunpack.c.l.b16 %v34
  %v679 = vunpack.c.h.b16 %v34
  %v680 = vunpack.c.l.b16 %v35
  %v681 = vunpack.c.h.b16 %v35
  %v682 = vunpack.c.l.b16 %v36
  %v683 = vunpack.c.h.b16 %v36
  %v684 = vunpack.c.l.b16 %v37
  %v685 = vunpack.c.h.b16 %v37
  %v686 = vunpack.c.l.b16 %v38
  %v687 = vunpack.c.h.b16 %v38
  %v688 = vunpack.c.l.b16 %v39
  %v689 = vunpack.c.h.b16 %v39
  %v690 = vunpack.c.l.b16 %v40
  %v691 = vunpack.c.h.b16 %v40
  %v692 = vunpack.c.l.b16 %v41
  %v693 = vunpack.c.h.b16 %v41
  %v694 = vunpack.c.l.b16 %v42
  %v695 = vunpack.c.h.b16 %v42
  %v696 = vunpack.c.l.b16 %v43
  %v697 = vunpack.c.h.b16 %v43
  %v698 = vunpack.c.l.b16 %v44
  %v699 = vunpack.c.h.b16 %v44
  %v700 = vunpack.c.l.b16 %v45
  %v701 = vunpack.c.h.b16 %v45
  %v702 = vunpack.c.l.b16 %v46
  %v703 = vunpack.c.h.b16 %v46
  %v704 = vunpack.c.l.b16 %v47
  %v705 = vunpack.c.h.b16 %v47
  %v706 = vunpack.c.l.b16 %v48
  %v707 = vunpack.c.h.b16 %v48
  %v708 = vunpack.c.l.b16 %v49
  %v709 = vunpack.c.h.b16 %v49
  %v710 = vunpack.c.l.b16 %v50
  %v711 = vunpack.c.h.b16 %v50
  %v712 = vunpack.c.l.b16 %v51
  %v713 = vunpack.c.h.b16 %v51
  %v714 = vunpack.c.l.b16 %v52
  %v715 = vunpack.c.h.b16 %v52
  %v716 = vunpack.c.l.b16 %v53
  %v717 = vunpack.c.h.b16 %v53
  %v718 = vunpack.c.l.b16 %v54
  %v719 = vunpack.c.h.b16 %v54
  %v720 = vunpack.c.l.b16 %v55
  %v721 = vunpack.c.h.b16 %v55
  %v722 = vunpack.c.l.b16 %v56
  %v723 = vunpack.c.h.b16 %v56
  %v724 = vunpack.c.l.b16 %v57
  %v725 = vunpack.c.h.b16 %v57
  %v726 = vunpack.c.l.b16 %v58
  %v727 = vunpack.c.h.b16 %v58
  %v728 = vunpack.c.l.b16 %v59
  %v729 = vunpack.c.h.b16 %v59
  %v730 = vunpack.c.l.b16 %v60
  %v731 = vunpack.c.h.b16 %v60
  %v732 = vunpack.c.l.b16 %v61
  %v733 = vunpack.c.h.b16 %v61
  %v734 = vunpack.c.l.b16 %v62
  %v735 = vunpack.c.h.b16 %v62
  %v736 = vunpack.c.l.b16 %v63
  %v737 = vunpack.c.h.b16 %v63
  %v738 = vunpack.c.l.b16 %v64
  %v739 = vunpack.c.h.b16 %v64
  %v740 = vunpack.c.l.b16 %v65
  %v741 = vunpack.c.h.b16 %v65
  %v742 = vunpack.c.l.b16 %v66
  %v743 = vunpack.c.h.b16 %v66
  %v744 = vunpack.c.l.b16 %v67
  %v745 = vunpack.c.h.b16 %v67
  %v746 = vunpack.c.l.b16 %v68
  %v747 = vunpack.c.h.b16 %v68
  %v748 = vunpack.c.l.b16 %v69
  %v749 = vunpack.c.h.b16 %v69
  %v750 = vunpack.c.l.b16 %v70
  %v751 = vunpack.c.h.b16 %v70
  %v752 = vunpack.c.l.b16 %v71
  %v753 = vunpack.c.h.b16 %v71
  %v754 = vunpack.c.l.b16 %v72
  %v755 = vunpack.c.h.b16 %v72
  %v756 = vunpack.c.l.b16 %v73
  %v757 = vunpack.c.h.b16 %v73
  %v758 = vunpack.c.l.b16 %v74
  %v759 = vunpack.c.h.b16 %v74
  %v760 = vunpack.c.l.b16 %v75
  %v761 = vunpack.c.h.b16 %v75
  %v762 = vunpack.c.l.b16 %v76
  %v763 = vunpack.c.h.b16 %v76
  %v764 = vunpack.c.l.b16 %v77
  %v765 = vunpack.c.h.b16 %v77
  %v766 = vunpack.c.l.b16 %v78
  %v767 = vunpack.c.h.b16 %v78
  %v768 = vunpack.c.l.b16 %v79
  %v769 = vunpack.c.h.b16 %v79
  %v770 = vunpack.c.l.b16 %v80
  %v771 = vunpack.c.h.b16 %v80
  %v772 = vunpack.c.l.b16 %v81
  %v773 = vunpack.c.h.b16 %v81
  %v774 = vunpack.c.l.b16 %v82
  %v775 = vunpack.c.h.b16 %v82
  %v776 = vunpack.c.l.b16 %v83
  %v777 = vunpack.c.h.b16 %v83
  %v778 = vunpack.c.l.b16 %v84
  %v779 = vunpack.c.h.b16 %v84
  %v780 = vunpack.c.l.b16 %v85
  %v781 = vunpack.c.h.b16 %v85
  %v782 = vunpack.c.l.b16 %v86
  %v783 = vunpack.c.h.b16 %v86
  %v784 = vunpack.c.l.b16 %v87
  %v785 = vunpack.c.h.b16 %v87
  %v786 = vunpack.c.l.b16 %v88
  %v787 = vunpack.c.h.b16 %v88
  %v788 = vunpack.c.l.b16 %v89
  %v789 = vunpack.c.h.b16 %v89
  %v790 = vunpack.c.l.b16 %v90
  %v791 = vunpack.c.h.b16 %v90
  %v792 = vunpack.c.l.b16 %v91
  %v793 = vunpack.c.h.b16 %v91
  %v794 = vunpack.c.l.b16 %v92
  %v795 = vunpack.c.h.b16 %v92
  %v796 = vunpack.c.l.b16 %v93
  %v797 = vunpack.c.h.b16 %v93
  %v798 = vunpack.c.l.b16 %v94
  %v799 = vunpack.c.h.b16 %v94
  %v800 = vunpack.c.l.b16 %v95
  %v801 = vunpack.c.h.b16 %v95
  %v802 = vunpack.c.l.b16 %v96
  %v803 = vunpack.c.h.b16 %v96
  %v804 = vunpack.c.l.b16 %v97
  %v805 = vunpack.c.h.b16 %v97
  %v806 = vunpack.c.l.b16 %v98
  %v807 = vunpack.c.h.b16 %v98
  %v808 = vunpack.c.l.b16 %v99
  %v809 = vunpack.c.h.b16 %v99
  %v810 = vunpack.c.l.b16 %v100
  %v811 = vunpack.c.h.b16 %v100
  %v812 = vunpack.c.l.b16 %v101
  %v813 = vunpack.c.h.b16 %v101
  %v814 = vunpack.c.l.b16 %v102
  %v815 = vunpack.c.h.b16 %v102
  %v816 = vunpack.c.l.b16 %v103
  %v817 = vunpack.c.h.b16 %v103
  %v818 = vunpack.c.l.b16 %v104
  %v819 = vunpack.c.h.b16 %v104
  %v820 = vunpack.c.l.b16 %v105
  %v821 = vunpack.c.h.b16 %v105
  %v822 = vunpack.c.l.b16 %v106
  %v823 = vunpack.c.h.b16 %v106
  %v824 = vunpack.c.l.b16 %v107
  %v825 = vunpack.c.h.b16 %v107
  %v826 = vunpack.c.l.b16 %v108
  %v827 = vunpack.c.h.b16 %v108
  %v828 = vunpack.c.l.b16 %v109
  %v829 = vunpack.c.h.b16 %v109
  %v830 = vunpack.c.l.b16 %v110
  %v831 = vunpack.c.h.b16 %v110
  %v832 = vunpack.c.l.b16 %v111
  %v833 = vunpack.c.h.b16 %v111
  %v834 = vunpack.c.l.b16 %v112
  %v835 = vunpack.c.h.b16 %v112
  %v836 = vunpack.c.l.b16 %v113
  %v837 = vunpack.c.h.b16 %v113
  %v838 = vunpack.c.l.b16 %v114
  %v839 = vunpack.c.h.b16 %v114
  %v840 = vunpack.c.l.b16 %v115
  %v841 = vunpack.c.h.b16 %v115
  %v842 = vunpack.c.l.b16 %v116
  %v843 = vunpack.c.h.b16 %v116
  %v844 = vunpack.c.l.b16 %v117
  %v845 = vunpack.c.h.b16 %v117
  %v846 = vunpack.c.l.b16 %v118
  %v847 = vunpack.c.h.b16 %v118
  %v848 = vunpack.c.l.b16 %v119
  %v849 = vunpack.c.h.b16 %v119
  %v850 = vunpack.c.l.b16 %v120
  %v851 = vunpack.c.h.b16 %v120
  %v852 = vunpack.c.l.b16 %v121
  %v853 = vunpack.c.h.b16 %v121
  %v854 = vunpack.c.l.b16 %v122
  %v855 = vunpack.c.h.b16 %v122
  %v856 = vunpack.c.l.b16 %v123
  %v857 = vunpack.c.h.b16 %v123
  %v858 = vunpack.c.l.b16 %v124
  %v859 = vunpack.c.h.b16 %v124
  %v860 = vunpack.c.l.b16 %v125
  %v861 = vunpack.c.h.b16 %v125
  %v862 = vunpack.c.l.b16 %v126
  %v863 = vunpack.c.h.b16 %v126
  %v864 = vunpack.c.l.b16 %v127
  %v865 = vunpack.c.h.b16 %v127
  %v866 = vunpack.c.l.b16 %v128
  %v867 = vunpack.c.h.b16 %v128
  %v868 = vunpack.c.l.b16 %v129
  %v869 = vunpack.c.h.b16 %v129
  %v870 = vunpack.c.l.b16 %v130
  %v871 = vunpack.c.h.b16 %v130
  %v872 = vunpack.c.l.b16 %v131
  %v873 = vunpack.c.h.b16 %v131
  %v874 = vunpack.c.l.b16 %v132
  %v875 = vunpack.c.h.b16 %v132
  %v876 = vunpack.c.l.b16 %v133
  %v877 = vunpack.c.h.b16 %v133
  %v878 = vunpack.c.l.b16 %v134
  %v879 = vunpack.c.h.b16 %v134
  %v880 = vunpack.c.l.b16 %v135
  %v881 = vunpack.c.h.b16 %v135
  %v882 = vunpack.c.l.b16 %v136
  %v883 = vunpack.c.h.b16 %v136
  %v884 = vunpack.c.l.b16 %v137
  %v885 = vunpack.c.h.b16 %v137
  %v886 = vunpack.c.l.b16 %v138
  %v887 = vunpack.c.h.b16 %v138
  %v888 = vunpack.c.l.b16 %v139
  %v889 = vunpack.c.h.b16 %v139
  %v890 = vunpack.c.l.b16 %v140
  %v891 = vunpack.c.h.b16 %v140
  %v892 = vunpack.c.l.b16 %v141
  %v893 = vunpack.c.h.b16 %v141
  %v894 = vunpack.c.l.b16 %v142
  %v895 = vunpack.c.h.b16 %v142
  %v896 = vunpack.c.l.b16 %v143
  %v897 = vunpack.c.h.b16 %v143
  %v898 = vunpack.c.l.b16 %v144
  %v899 = vunpack.c.h.b16 %v144
  %v900 = vunpack.c.l.b16 %v145
  %v901 = vunpack.c.h.b16 %v145
  %v902 = vunpack.c.l.b16 %v146
  %v903 = vunpack.c.h.b16 %v146
  %v904 = vunpack.c.l.b16 %v147
  %v905 = vunpack.c.h.b16 %v147
  %v906 = vunpack.c.l.b16 %v148
  %v907 = vunpack.c.h.b16 %v148
  %v908 = vunpack.c.l.b16 %v149
  %v909 = vunpack.c.h.b16 %v149
  %v910 = vunpack.c.l.b16 %v150
  %v911 = vunpack.c.h.b16 %v150
  %v912 = vunpack.c.l.b16 %v151
  %v913 = vunpack.c.h.b16 %v151
  %v914 = vunpack.c.l.b16 %v152
  %v915 = vunpack.c.h.b16 %v152
  %v916 = vunpack.c.l.b16 %v153
  %v917 = vunpack.c.h.b16 %v153
  %v918 = vunpack.c.l.b16 %v154
  %v919 = vunpack.c.h.b16 %v154
  %v920 = vunpack.c.l.b16 %v155
  %v921 = vunpack.c.h.b16 %v155
  %v922 = vunpack.c.l.b16 %v156
  %v923 = vunpack.c.h.b16 %v156
  %v924 = vunpack.c.l.b16 %v157
  %v925 = vunpack.c.h.b16 %v157
  %v926 = vunpack.c.l.b16 %v158
  %v927 = vunpack.c.h.b16 %v158
  %v928 = vunpack.c.l.b16 %v159
  %v929 = vunpack.c.h.b16 %v159
  %v930 = vunpack.c.l.b16 %v160
  %v931 = vunpack.c.h.b16 %v160
  %v932 = vunpack.c.l.b16 %v161
  %v933 = vunpack.c.h.b16 %v161
  %v934 = vunpack.c.l.b16 %v162
  %v935 = vunpack.c.h.b16 %v162
  %v936 = vunpack.c.l.b16 %v163
  %v937 = vunpack.c.h.b16 %v163
  %v938 = vunpack.c.l.b16 %v164
  %v939 = vunpack.c.h.b16 %v164
  %v940 = vunpack.c.l.b16 %v165
  %v941 = vunpack.c.h.b16 %v165
  %v942 = vunpack.c.l.b16 %v166
  %v943 = vunpack.c.h.b16 %v166
  %v944 = vunpack.c.l.b16 %v167
  %v945 = vunpack.c.h.b16 %v167
  %v946 = vunpack.c.l.b16 %v168
  %v947 = vunpack.c.h.b16 %v168
  %v948 = vunpack.c.l.b16 %v169
  %v949 = vunpack.c.h.b16 %v169
  %v950 = vunpack.c.l.b16 %v170
  %v951 = vunpack.c.h.b16 %v170
  %v952 = vunpack.c.l.b16 %v171
  %v953 = vunpack.c.h.b16 %v171
  %v954 = vunpack.c.l.b16 %v172
  %v955 = vunpack.c.h.b16 %v172
  %v956 = vunpack.c.l.b16 %v173
  %v957 = vunpack.c.h.b16 %v173
  %v958 = vunpack.c.l.b16 %v174
  %v959 = vunpack.c.h.b16 %v174
  %v960 = vunpack.c.l.b16 %v175
  %v961 = vunpack.c.h.b16 %v175
  %v962 = vunpack.c.l.b16 %v176
  %v963 = vunpack.c.h.b16 %v176
  %v964 = vunpack.c.l.b16 %v177
  %v965 = vunpack.c.h.b16 %v177
  %v966 = vunpack.c.l.b16 %v178
  %v967 = vunpack.c.h.b16 %v178
  %v968 = vunpack.c.l.b16 %v179
  %v969 = vunpack.c.h.b16 %v179
  %v970 = vunpack.c.l.b16 %v180
  %v971 = vunpack.c.h.b16 %v180
  %v972 = vunpack.c.l.b16 %v181
  %v973 = vunpack.c.h.b16 %v181
  %v974 = vunpack.c.l.b16 %v182
  %v975 = vunpack.c.h.b16 %v182
  %v976 = vunpack.c.l.b16 %v183
  %v977 = vunpack.c.h.b16 %v183
  %v978 = vunpack.c.l.b16 %v184
  %v979 = vunpack.c.h.b16 %v184
  %v980 = vunpack.c.l.b16 %v185
  %v981 = vunpack.c.h.b16 %v185
  %v982 = vunpack.c.l.b16 %v186
  %v983 = vunpack.c.h.b16 %v186
  %v984 = vunpack.c.l.b16 %v187
  %v985 = vunpack.c.h.b16 %v187
  %v986 = vunpack.c.l.b16 %v188
  %v987 = vunpack.c.h.b16 %v188
  %v988 = vunpack.c.l.b16 %v189
  %v989 = vunpack.c.h.b16 %v189
  %v990 = vunpack.c.l.b16 %v190
  %v991 = vunpack.c.h.b16 %v190
  %v992 = vunpack.c.l.b16 %v191
  %v993 = vunpack.c.h.b16 %v191
  %v994 = vunpack.c.l.b16 %v192
  %v995 = vunpack.c.h.b16 %v192
  %v996 = vunpack.c.l.b16 %v193
  %v997 = vunpack.c.h.b16 %v193
  %v998 = vunpack.c.l.b16 %v194
  %v999 = vunpack.c.h.b16 %v194
  %v1000 = vunpack.c.l.b16 %v195
  %v1001 = vunpack.c.h.b16 %v195
  %v1002 = vunpack.c.l.b16 %v196
  %v1003 = vunpack.c.h.b16 %v196
  %v1004 = vunpack.c.l.b16 %v197
  %v1005 = vunpack.c.h.b16 %v197
  %v1006 = vunpack.c.l.b16 %v198
  %v1007 = vunpack.c.h.b16 %v198
  %v1008 = vunpack.c.l.b16 %v199
  %v1009 = vunpack.c.h.b16 %v199
  %v1010 = vunpack.c.l.b16 %v200
  %v1011 = vunpack.c.h.b16 %v200
  %v1012 = vunpack.c.l.b16 %v201
  %v1013 = vunpack.c.h.b16 %v201
  %v1014 = vunpack.c.l.b16 %v202
  %v1015 = vunpack.c.h.b16 %v202
  %v1016 = vunpack.c.l.b16 %v203
  %v1017 = vunpack.c.h.b16 %v203
  %v1018 = vunpack.c.l.b16 %v204
  %v1019 = vunpack.c.h.b16 %v204
  %v1020 = vunpack.c.l.b16 %v205
  %v1021 = vunpack.c.h.b16 %v205
  %v1022 = vunpack.c.l.b16 %v206
  %v1023 = vunpack.c.h.b16 %v206
  %v1024 = vunpack.c.l.b16 %v207
  %v1025 = vunpack.c.h.b16 %v207
  %v1026 = vunpack.c.l.b16 %v208
  %v1027 = vunpack.c.h.b16 %v208
  %v1028 = vunpack.c.l.b16 %v209
  %v1029 = vunpack.c.h.b16 %v209
  %v1030 = vunpack.c.l.b16 %v210
  %v1031 = vunpack.c.h.b16 %v210
  %v1032 = vunpack.c.l.b16 %v211
  %v1033 = vunpack.c.h.b16 %v211
  %v1034 = vunpack.c.l.b16 %v212
  %v1035 = vunpack.c.h.b16 %v212
  %v1036 = vunpack.c.l.b16 %v213
  %v1037 = vunpack.c.h.b16 %v213
  %v1038 = vunpack.c.l.b16 %v214
  %v1039 = vunpack.c.h.b16 %v214
  %v1040 = vunpack.c.l.b16 %v215
  %v1041 = vunpack.c.h.b16 %v215
  %v1042 = vunpack.c.l.b16 %v216
  %v1043 = vunpack.c.h.b16 %v216
  %v1044 = vunpack.c.l.b16 %v217
  %v1045 = vunpack.c.h.b16 %v217
  %v1046 = vunpack.c.l.b16 %v218
  %v1047 = vunpack.c.h.b16 %v218
  %v1048 = vunpack.c.l.b16 %v219
  %v1049 = vunpack.c.h.b16 %v219
  %v1050 = vunpack.c.l.b16 %v220
  %v1051 = vunpack.c.h.b16 %v220
  %v1052 = vunpack.c.l.b16 %v221
  %v1053 = vunpack.c.h.b16 %v221
  %v1054 = vunpack.c.l.b16 %v222
  %v1055 = vunpack.c.h.b16 %v222
  %v1056 = vunpack.c.l.b16 %v223
  %v1057 = vunpack.c.h.b16 %v223
  %v1058 = vunpack.c.l.b16 %v224
  %v1059 = vunpack.c.h.b16 %v224
  %v1060 = vunpack.c.l.b16 %v225
  %v1061 = vunpack.c.h.b16 %v225
  %v1062 = vunpack.c.l.b16 %v226
  %v1063 = vunpack.c.h.b16 %v226
  %v1064 = vunpack.c.l.b16 %v227
  %v1065 = vunpack.c.h.b16 %v227
  %v1066 = vunpack.c.l.b16 %v228
  %v1067 = vunpack.c.h.b16 %v228
  %v1068 = vunpack.c.l.b16 %v229
  %v1069 = vunpack.c.h.b16 %v229
  %v1070 = vunpack.c.l.b16 %v230
  %v1071 = vunpack.c.h.b16 %v230
  %v1072 = vunpack.c.l.b16 %v231
  %v1073 = vunpack.c.h.b16 %v231
  %v1074 = vunpack.c.l.b16 %v232
  %v1075 = vunpack.c.h.b16 %v232
  %v1076 = vunpack.c.l.b16 %v233
  %v1077 = vunpack.c.h.b16 %v233
  %v1078 = vunpack.c.l.b16 %v234
  %v1079 = vunpack.c.h.b16 %v234
  %v1080 = vunpack.c.l.b16 %v235
  %v1081 = vunpack.c.h.b16 %v235
  %v1082 = vunpack.c.l.b16 %v236
  %v1083 = vunpack.c.h.b16 %v236
  %v1084 = vunpack.c.l.b16 %v237
  %v1085 = vunpack.c.h.b16 %v237
  %v1086 = vunpack.c.l.b16 %v238
  %v1087 = vunpack.c.h.b16 %v238
  %v1088 = vunpack.c.l.b16 %v239
  %v1089 = vunpack.c.h.b16 %v239
  %v1090 = vunpack.c.l.b16 %v240
  %v1091 = vunpack.c.h.b16 %v240
  %v1092 = vunpack.c.l.b16 %v241
  %v1093 = vunpack.c.h.b16 %v241
  %v1094 = vunpack.c.l.b16 %v242
  %v1095 = vunpack.c.h.b16 %v242
  %v1096 = vunpack.c.l.b16 %v243
  %v1097 = vunpack.c.h.b16 %v243
  %v1098 = vunpack.c.l.b16 %v244
  %v1099 = vunpack.c.h.b16 %v244
  %v1100 = vunpack.c.l.b16 %v245
  %v1101 = vunpack.c.h.b16 %v245
  %v1102 = vunpack.c.l.b16 %v246
  %v1103 = vunpack.c.h.b16 %v246
  %v1104 = vunpack.c.l.b16 %v247
  %v1105 = vunpack.c.h.b16 %v247
  %v1106 = vunpack.c.l.b16 %v248
  %v1107 = vunpack.c.h.b16 %v248
  %v1108 = vunpack.c.l.b16 %v249
  %v1109 = vunpack.c.h.b16 %v249
  %v1110 = vunpack.c.l.b16 %v250
  %v1111 = vunpack.c.h.b16 %v250
  %v1112 = vunpack.c.l.b16 %v251
  %v1113 = vunpack.c.h.b16 %v251
  %v1114 = vunpack.c.l.b16 %v252
  %v1115 = vunpack.c.h.b16 %v252
  %v1116 = vunpack.c.l.b16 %v253
  %v1117 = vunpack.c.h.b16 %v253
  %v1118 = vunpack.c.l.b16 %v254
  %v1119 = vunpack.c.h.b16 %v254
  %v1120 = vunpack.c.l.b16 %v255
  %v1121 = vunpack.c.h.b16 %v255
  %v1122 = vunpack.c.l.b16 %v256
  %v1123 = vunpack.c.h.b16 %v256
  %v1124 = vunpack.c.l.b16 %v257
  %v1125 = vunpack.c.h.b16 %v257
  %v1126 = vunpack.c.l.b16 %v258
  %v1127 = vunpack.c.h.b16 %v258
  %v1128 = vunpack.c.l.b16 %v259
  %v1129 = vunpack.c.h.b16 %v259
  %v1130 = vunpack.c.l.b16 %v260
  %v1131 = vunpack.c.h.b16 %v260
  %v1132 = vunpack.c.l.b16 %v261
  %v1133 = vunpack.c.h.b16 %v261
  %v1134 = vunpack.c.l.b16 %v262
  %v1135 = vunpack.c.h.b16 %v262
  %v1136 = vunpack.c.l.b16 %v263
  %v1137 = vunpack.c.h.b16 %v263
  %v1138 = vunpack.c.l.b16 %v264
  %v1139 = vunpack.c.h.b16 %v264
  %v1140 = vunpack.c.l.b16 %v265
  %v1141 = vunpack.c.h.b16 %v265
  %v1142 = vunpack.c.l.b16 %v266
  %v1143 = vunpack.c.h.b16 %v266
  %v1144 = vunpack.c.l.b16 %v267
  %v1145 = vunpack.c.h.b16 %v267
  %v1146 = vunpack.c.l.b16 %v268
  %v1147 = vunpack.c.h.b16 %v268
  %v1148 = vunpack.c.l.b16 %v269
  %v1149 = vunpack.c.h.b16 %v269
  %v1150 = vunpack.c.l.b16 %v270
  %v1151 = vunpack.c.h.b16 %v270
  %v1152 = vunpack.c.l.b16 %v271
  %v1153 = vunpack.c.h.b16 %v271
  %v1154 = vunpack.c.l.b16 %v272
  %v1155 = vunpack.c.h.b16 %v272
  %v1156 = vunpack.c.l.b16 %v273
  %v1157 = vunpack.c.h.b16 %v273
  %v1158 = vunpack.c.l.b16 %v274
  %v1159 = vunpack.c.h.b16 %v274
  %v1160 = vunpack.c.l.b16 %v275
  %v1161 = vunpack.c.h.b16 %v275
  %v1162 = vunpack.c.l.b16 %v276
  %v1163 = vunpack.c.h.b16 %v276
  %v1164 = vunpack.c.l.b16 %v277
  %v1165 = vunpack.c.h.b16 %v277
  %v1166 = vunpack.c.l.b16 %v278
  %v1167 = vunpack.c.h.b16 %v278
  %v1168 = vunpack.c.l.b16 %v279
  %v1169 = vunpack.c.h.b16 %v279
  %v1170 = vunpack.c.l.b16 %v280
  %v1171 = vunpack.c.h.b16 %v280
  %v1172 = vunpack.c.l.b16 %v281
  %v1173 = vunpack.c.h.b16 %v281
  %v1174 = vunpack.c.l.b16 %v282
  %v1175 = vunpack.c.h.b16 %v282
  %v1176 = vunpack.c.l.b16 %v283
  %v1177 = vunpack.c.h.b16 %v283
  %v1178 = vunpack.c.l.b16 %v284
  %v1179 = vunpack.c.h.b16 %v284
  %v1180 = vunpack.c.l.b16 %v285
  %v1181 = vunpack.c.h.b16 %v285
  %v1182 = vunpack.c.l.b16 %v286
  %v1183 = vunpack.c.h.b16 %v286
  %v1184 = vunpack.c.l.b16 %v287
  %v1185 = vunpack.c.h.b16 %v287
  %v1186 = vunpack.c.l.b16 %v288
  %v1187 = vunpack.c.h.b16 %v288
  %v1188 = vunpack.c.l.b16 %v289
  %v1189 = vunpack.c.h.b16 %v289
  %v1190 = vunpack.c.l.b16 %v290
  %v1191 = vunpack.c.h.b16 %v290
  %v1192 = vunpack.c.l.b16 %v291
  %v1193 = vunpack.c.h.b16 %v291
  %v1194 = vunpack.c.l.b16 %v292
  %v1195 = vunpack.c.h.b16 %v292
  %v1196 = vunpack.c.l.b16 %v293
  %v1197 = vunpack.c.h.b16 %v293
  %v1198 = vunpack.c.l.b16 %v294
  %v1199 = vunpack.c.h.b16 %v294
  %v1200 = vunpack.c.l.b16 %v295
  %v1201 = vunpack.c.h.b16 %v295
  %v1202 = vunpack.c.l.b16 %v296
  %v1203 = vunpack.c.h.b16 %v296
  %v1204 = vunpack.c.l.b16 %v297
  %v1205 = vunpack.c.h.b16 %v297
  %v1206 = vunpack.c.l.b16 %v298
  %v1207 = vunpack.c.h.b16 %v298
  %v1208 = vunpack.c.l.b16 %v299
  %v1209 = vunpack.c.h.b16 %v299
  %v1210 = vunpack.c.l.b16 %v300
  %v1211 = vunpack.c.h.b16 %v300
  %v1212 = vpack.c.b16 %v672, %v668
  %v1213 = vpack.c.b16 %v673, %v669
  %v1214 = vpack.c.b16 %v674, %v670
  %v1215 = vpack.c.b16 %v675, %v671
  %v1216 = vpack.c.b16 %v680, %v676
  %v1217 = vpack.c.b16 %v681, %v677
  %v1218 = vpack.c.b16 %v682, %v678
  %v1219 = vpack.c.b16 %v683, %v679
  %v1220 = vpack.c.b16 %v688, %v684
  %v1221 = vpack.c.b16 %v689, %v685
  %v1222 = vpack.c.b16 %v690, %v686
  %v1223 = vpack.c.b16 %v691, %v687
  %v1224 = vpack.c.b16 %v696, %v692
  %v1225 = vpack.c.b16 %v697, %v693
  %v1226 = vpack.c.b16 %v698, %v694
  %v1227 = vpack.c.b16 %v699, %v695
  %v1228 = vpack.c.b16 %v704, %v700
  %v1229 = vpack.c.b16 %v705, %v701
  %v1230 = vpack.c.b16 %v706, %v702
  %v1231 = vpack.c.b16 %v707, %v703
  %v1232 = vpack.c.b16 %v712, %v708
  %v1233 = vpack.c.b16 %v713, %v709
  %v1234 = vpack.c.b16 %v714, %v710
  %v1235 = vpack.c.b16 %v715, %v711
  %v1236 = vpack.c.b16 %v720, %v716
  %v1237 = vpack.c.b16 %v721, %v717
  %v1238 = vpack.c.b16 %v722, %v718
  %v1239 = vpack.c.b16 %v723, %v719
  %v1240 = vpack.c.b16 %v728, %v724
  %v1241 = vpack.c.b16 %v729, %v725
  %v1242 = vpack.c.b16 %v730, %v726
  %v1243 = vpack.c.b16 %v731, %v727
  %v1244 = vpack.c.b16 %v736, %v732
  %v1245 = vpack.c.b16 %v737, %v733
  %v1246 = vpack.c.b16 %v738, %v734
  %v1247 = vpack.c.b16 %v739, %v735
  %v1248 = vpack.c.b16 %v744, %v740
  %v1249 = vpack.c.b16 %v745, %v741
  %v1250 = vpack.c.b16 %v746, %v742
  %v1251 = vpack.c.b16 %v747, %v743
  %v1252 = vpack.c.b16 %v752, %v748
  %v1253 = vpack.c.b16 %v753, %v749
  %v1254 = vpack.c.b16 %v754, %v750
  %v1255 = vpack.c.b16 %v755, %v751
  %v1256 = vpack.c.b16 %v760, %v756
  %v1257 = vpack.c.b16 %v761, %v757
  %v1258 = vpack.c.b16 %v762, %v758
  %v1259 = vpack.c.b16 %v763, %v759
  %v1260 = vpack.c.b16 %v768, %v764
  %v1261 = vpack.c.b16 %v769, %v765
  %v1262 = vpack.c.b16 %v770, %v766
  %v1263 = vpack.c.b16 %v771, %v767
  %v1264 = vpack.c.b16 %v776, %v772
  %v1265 = vpack.c.b16 %v777, %v773
  %v1266 = vpack.c.b16 %v778, %v774
  %v1267 = vpack.c.b16 %v779, %v775
  %v1268 = vpack.c.b16 %v784, %v780
  %v1269 = vpack.c.b16 %v785, %v781
  %v1270 = vpack.c.b16 %v786, %v782
  %v1271 = vpack.c.b16 %v787, %v783
  %v1272 = vpack.c.b16 %v792, %v788
  %v1273 = vpack.c.b16 %v793, %v789
  %v1274 = vpack.c.b16 %v794, %v790
  %v1275 = vpack.c.b16 %v795, %v791
  %v1276 = vpack.c.b16 %v800, %v796
  %v1277 = vpack.c.b16 %v801, %v797
  %v1278 = vpack.c.b16 %v802, %v798
  %v1279 = vpack.c.b16 %v803, %v799
  %v1280 = vpack.c.b16 %v808, %v804
  %v1281 = vpack.c.b16 %v809, %v805
  %v1282 = vpack.c.b16 %v810, %v806
  %v1283 = vpack.c.b16 %v811, %v807
  %v1284 = vpack.c.b16 %v816, %v812
  %v1285 = vpack.c.b16 %v817, %v813
  %v1286 = vpack.c.b16 %v818, %v814
  %v1287 = vpack.c.b16 %v819, %v815
  %v1288 = vpack.c.b16 %v824, %v820
  %v1289 = vpack.c.b16 %v825, %v821
  %v1290 = vpack.c.b16 %v826, %v822
  %v1291 = vpack.c.b16 %v827, %v823
  %v1292 = vpack.c.b16 %v832, %v828
  %v1293 = vpack.c.b16 %v833, %v829
  %v1294 = vpack.c.b16 %v834, %v830
  %v1295 = vpack.c.b16 %v835, %v831
  %v1296 = vpack.c.b16 %v840, %v836
  %v1297 = vpack.c.b16 %v841, %v837
  %v1298 = vpack.c.b16 %v842, %v838
  %v1299 = vpack.c.b16 %v843, %v839
  %v1300 = vpack.c.b16 %v848, %v844
  %v1301 = vpack.c.b16 %v849, %v845
  %v1302 = vpack.c.b16 %v850, %v846
  %v1303 = vpack.c.b16 %v851, %v847
  %v1304 = vpack.c.b16 %v856, %v852
  %v1305 = vpack.c.b16 %v857, %v853
  %v1306 = vpack.c.b16 %v858, %v854
  %v1307 = vpack.c.b16 %v859, %v855
  %v1308 = vpack.c.b16 %v864, %v860
  %v1309 = vpack.c.b16 %v865, %v861
  %v1310 = vpack.c.b16 %v866, %v862
  %v1311 = vpack.c.b16 %v867, %v863
  %v1312 = vpack.c.b16 %v872, %v868
  %v1313 = vpack.c.b16 %v873, %v869
  %v1314 = vpack.c.b16 %v874, %v870
  %v1315 = vpack.c.b16 %v875, %v871
  %v1316 = vpack.c.b16 %v880, %v876
  %v1317 = vpack.c.b16 %v881, %v877
  %v1318 = vpack.c.b16 %v882, %v878
  %v1319 = vpack.c.b16 %v883, %v879
  %v1320 = vpack.c.b16 %v888, %v884
  %v1321 = vpack.c.b16 %v889, %v885
  %v1322 = vpack.c.b16 %v890, %v886
  %v1323 = vpack.c.b16 %v891, %v887
  %v1324 = vpack.c.b16 %v896, %v892
  %v1325 = vpack.c.b16 %v897, %v893
  %v1326 = vpack.c.b16 %v898, %v894
  %v1327 = vpack.c.b16 %v899, %v895
  %v1328 = vpack.c.b16 %v904, %v900
  %v1329 = vpack.c.b16 %v905, %v901
  %v1330 = vpack.c.b16 %v906, %v902
  %v1331 = vpack.c.b16 %v907, %v903
  %v1332 = vpack.c.b16 %v912, %v908
  %v1333 = vpack.c.b16 %v913, %v909
  %v1334 = vpack.c.b16 %v914, %v910
  %v1335 = vpack.c.b16 %v915, %v911
  %v1336 = vpack.c.b16 %v920, %v916
  %v1337 = vpack.c.b16 %v921, %v917
  %v1338 = vpack.c.b16 %v922, %v918
  %v1339 = vpack.c.b16 %v923, %v919
  %v1340 = vpack.c.b16 %v928, %v924
  %v1341 = vpack.c.b16 %v929, %v925
  %v1342 = vpack.c.b16 %v930, %v926
  %v1343 = vpack.c.b16 %v931, %v927
  %v1344 = vpack.c.b16 %v936, %v932
  %v1345 = vpack.c.b16 %v937, %v933
  %v1346 = vpack.c.b16 %v938, %v934
  %v1347 = vpack.c.b16 %v939, %v935
  %v1348 = vpack.c.b16 %v944, %v940
  %v1349 = vpack.c.b16 %v945, %v941
  %v1350 = vpack.c.b16 %v946, %v942
  %v1351 = vpack.c.b16 %v947, %v943
  %v1352 = vpack.c.b16 %v952, %v948
  %v1353 = vpack.c.b16 %v953, %v949
  %v1354 = vpack.c.b16 %v954, %v950
  %v1355 = vpack.c.b16 %v955, %v951
  %v1356 = vpack.c.b16 %v960, %v956
  %v1357 = vpack.c.b16 %v961, %v957
  %v1358 = vpack.c.b16 %v962, %v958
  %v1359 = vpack.c.b16 %v963, %v959
  %v1360 = vpack.c.b16 %v968, %v964
  %v1361 = vpack.c.b16 %v969, %v965
  %v1362 = vpack.c.b16 %v970, %v966
  %v1363 = vpack.c.b16 %v971, %v967
  %v1364 = vpack.c.b16 %v976, %v972
  %v1365 = vpack.c.b16 %v977, %v973
  %v1366 = vpack.c.b16 %v978, %v974
  %v1367 = vpack.c.b16 %v979, %v975
  %v1368 = vpack.c.b16 %v984, %v980
  %v1369 = vpack.c.b16 %v985, %v981
  %v1370 = vpack.c.b16 %v986, %v982
  %v1371 = vpack.c.b16 %v987, %v983
  %v1372 = vpack.c.b16 %v992, %v988
  %v1373 = vpack.c.b16 %v993, %v989
  %v1374 = vpack.c.b16 %v994, %v990
  %v1375 = vpack.c.b16 %v995, %v991
  %v1376 = vpack.c.b16 %v1000, %v996
  %v1377 = vpack.c.b16 %v1001, %v997
  %v1378 = vpack.c.b16 %v1002, %v998
  %v1379 = vpack.c.b16 %v1003, %v999
  %v1380 = vpack.c.b16 %v1008, %v1004
  %v1381 = vpack.c.b16 %v1009, %v1005
  %v1382 = vpack.c.b16 %v1010, %v1006
  %v1383 = vpack.c.b16 %v1011, %v1007
  %v1384 = vpack.c.b16 %v1016, %v1012
  %v1385 = vpack.c.b16 %v1017, %v1013
  %v1386 = vpack.c.b16 %v1018, %v1014
  %v1387 = vpack.c.b16 %v1019, %v1015
  %v1388 = vpack.c.b16 %v1024, %v1020
  %v1389 = vpack.c.b16 %v1025, %v1021
  %v1390 = vpack.c.b16 %v1026, %v1022
  %v1391 = vpack.c.b16 %v1027, %v1023
  %v1392 = vpack.c.b16 %v1032, %v1028
  %v1393 = vpack.c.b16 %v1033, %v1029
  %v1394 = vpack.c.b16 %v1034, %v1030
  %v1395 = vpack.c.b16 %v1035, %v1031
  %v1396 = vpack.c.b16 %v1040, %v1036
  %v1397 = vpack.c.b16 %v1041, %v1037
  %v1398 = vpack.c.b16 %v1042, %v1038
  %v1399 = vpack.c.b16 %v1043, %v1039
  %v1400 = vpack.c.b16 %v1048, %v1044
  %v1401 = vpack.c.b16 %v1049, %v1045
  %v1402 = vpack.c.b16 %v1050, %v1046
  %v1403 = vpack.c.b16 %v1051, %v1047
  %v1404 = vpack.c.b16 %v1056, %v1052
  %v1405 = vpack.c.b16 %v1057, %v1053
  %v1406 = vpack.c.b16 %v1058, %v1054
  %v1407 = vpack.c.b16 %v1059, %v1055
  %v1408 = vpack.c.b16 %v1064, %v1060
  %v1409 = vpack.c.b16 %v1065, %v1061
  %v1410 = vpack.c.b16 %v1066, %v1062
  %v1411 = vpack.c.b16 %v1067, %v1063
  %v1412 = vpack.c.b16 %v1072, %v1068
  %v1413 = vpack.c.b16 %v1073, %v1069
  %v1414 = vpack.c.b16 %v1074, %v1070
  %v1415 = vpack.c.b16 %v1075, %v1071
  %v1416 = vpack.c.b16 %v1080, %v1076
  %v1417 = vpack.c.b16 %v1081, %v1077
  %v1418 = vpack.c.b16 %v1082, %v1078
  %v1419 = vpack.c.b16 %v1083, %v1079
  %v1420 = vpack.c.b16 %v1088, %v1084
  %v1421 = vpack.c.b16 %v1089, %v1085
  %v1422 = vpack.c.b16 %v1090, %v1086
  %v1423 = vpack.c.b16 %v1091, %v1087
  %v1424 = vpack.c.b16 %v1096, %v1092
  %v1425 = vpack.c.b16 %v1097, %v1093
  %v1426 = vpack.c.b16 %v1098, %v1094
  %v1427 = vpack.c.b16 %v1099, %v1095
  %v1428 = vpack.c.b16 %v1104, %v1100
  %v1429 = vpack.c.b16 %v1105, %v1101
  %v1430 = vpack.c.b16 %v1106, %v1102
  %v1431 = vpack.c.b16 %v1107, %v1103
  %v1432 = vpack.c.b16 %v1112, %v1108
  %v1433 = vpack.c.b16 %v1113, %v1109
  %v1434 = vpack.c.b16 %v1114, %v1110
  %v1435 = vpack.c.b16 %v1115, %v1111
  %v1436 = vpack.c.b16 %v1120, %v1116
  %v1437 = vpack.c.b16 %v1121, %v1117
  %v1438 = vpack.c.b16 %v1122, %v1118
  %v1439 = vpack.c.b16 %v1123, %v1119
  %v1440 = vpack.c.b16 %v1128, %v1124
  %v1441 = vpack.c.b16 %v1129, %v1125
  %v1442 = vpack.c.b16 %v1130, %v1126
  %v1443 = vpack.c.b16 %v1131, %v1127
  %v1444 = vpack.c.b16 %v1136, %v1132
  %v1445 = vpack.c.b16 %v1137, %v1133
  %v1446 = vpack.c.b16 %v1138, %v1134
  %v1447 = vpack.c.b16 %v1139, %v1135
  %v1448 = vpack.c.b16 %v1144, %v1140
  %v1449 = vpack.c.b16 %v1145, %v1141
  %v1450 = vpack.c.b16 %v1146, %v1142
  %v1451 = vpack.c.b16 %v1147, %v1143
  %v1452 = vpack.c.b16 %v1152, %v1148
  %v1453 = vpack.c.b16 %v1153, %v1149
  %v1454 = vpack.c.b16 %v1154, %v1150
  %v1455 = vpack.c.b16 %v1155, %v1151
  %v1456 = vpack.c.b16 %v1160, %v1156
  %v1457 = vpack.c.b16 %v1161, %v1157
  %v1458 = vpack.c.b16 %v1162, %v1158
  %v1459 = vpack.c.b16 %v1163, %v1159
  %v1460 = vpack.c.b16 %v1168, %v1164
  %v1461 = vpack.c.b16 %v1169, %v1165
  %v1462 = vpack.c.b16 %v1170, %v1166
  %v1463 = vpack.c.b16 %v1171, %v1167
  %v1464 = vpack.c.b16 %v1176, %v1172
  %v1465 = vpack.c.b16 %v1177, %v1173
  %v1466 = vpack.c.b16 %v1178, %v1174
  %v1467 = vpack.c.b16 %v1179, %v1175
  %v1468 = vpack.c.b16 %v1184, %v1180
  %v1469 = vpack.c.b16 %v1185, %v1181
  %v1470 = vpack.c.b16 %v1186, %v1182
  %v1471 = vpack.c.b16 %v1187, %v1183
  %v1472 = vpack.c.b16 %v1192, %v1188
  %v1473 = vpack.c.b16 %v1193, %v1189
  %v1474 = vpack.c.b16 %v1194, %v1190
  %v1475 = vpack.c.b16 %v1195, %v1191
  %v1476 = vpack.c.b16 %v1200, %v1196
  %v1477 = vpack.c.b16 %v1201, %v1197
  %v1478 = vpack.c.b16 %v1202, %v1198
  %v1479 = vpack.c.b16 %v1203, %v1199
  %v1480 = vpack.c.b16 %v1208, %v1204
  %v1481 = vpack.c.b16 %v1209, %v1205
  %v1482 = vpack.c.b16 %v1210, %v1206
  %v1483 = vpack.c.b16 %v1211, %v1207
  %vm1756 = vcmask 523264
  %v1758 = vsel %vm1756, %v387, 0
  %1760 = vmatprep.subr.bf16.mxu0 %v1213
  %1761 = vmatpush1.bf16.msra.mxu0 %v1212
  %1762 = vmatprep.subr.bf16.mxu0 %v1217
  %1763 = vmatpush1.bf16.msra.mxu0 %v1216
  %1764 = vmatprep.subr.bf16.mxu0 %v1221
  %1765 = vmatpush1.bf16.msra.mxu0 %v1220
  %1766 = vmatprep.subr.bf16.mxu0 %v1225
  %1767 = vmatpush1.bf16.msra.mxu0 %v1224
  %1768 = vmatprep.subr.bf16.mxu0 %v1229
  %1769 = vmatpush1.bf16.msra.mxu0 %v1228
  %1770 = vmatprep.subr.bf16.mxu0 %v1233
  %1771 = vmatpush1.bf16.msra.mxu0 %v1232
  %1772 = vmatprep.subr.bf16.mxu0 %v1237
  %1773 = vmatpush1.bf16.msra.mxu0 %v1236
  %1774 = vmatprep.subr.bf16.mxu0 %v1241
  %1775 = vmatpush1.bf16.msra.mxu0 %v1240
  %1776 = vmatprep.subr.bf16.mxu0 %v1245
  %1777 = vmatpush1.bf16.msra.mxu0 %v1244
  %1778 = vmatprep.subr.bf16.mxu0 %v1249
  %1779 = vmatpush1.bf16.msra.mxu0 %v1248
  %1780 = vmatprep.subr.bf16.mxu0 %v1253
  %1781 = vmatpush1.bf16.msra.mxu0 %v1252
  %1782 = vmatprep.subr.bf16.mxu0 %v1257
  %1783 = vmatpush1.bf16.msra.mxu0 %v1256
  %1784 = vmatprep.subr.bf16.mxu0 %v1261
  %1785 = vmatpush1.bf16.msra.mxu0 %v1260
  %1786 = vmatprep.subr.bf16.mxu0 %v1265
  %1787 = vmatpush1.bf16.msra.mxu0 %v1264
  %1788 = vmatprep.subr.bf16.mxu0 %v1269
  %1789 = vmatpush1.bf16.msra.mxu0 %v1268
  %1790 = vmatprep.subr.bf16.mxu0 %v1273
  %1791 = vmatpush1.bf16.msra.mxu0 %v1272
  %1792 = vmatprep.mubr.bf16.mxu0 %v362
  %1793 = vmatmul.mubr.bf16.gmra.mrb[0].mxu0 %v348
  %v1794 = vpop.f32.mrb[0].mxu0
  %v1795 = vadd.f32 %v306, %v1794
  %v1796 = vpop.f32.mrb[0].mxu0
  %v1797 = vadd.f32 %v310, %v1796
  %v1798 = vpop.f32.mrb[0].mxu0
  %v1799 = vpop.f32.mrb[0].mxu0
  %1800 = vdwg.mxu0
  %1801 = vmatprep.subr.bf16.mxu0 %v1277
  %1802 = vmatpush1.bf16.msra.mxu0 %v1276
  %1803 = vmatprep.subr.bf16.mxu0 %v1281
  %1804 = vmatpush1.bf16.msra.mxu0 %v1280
  %1805 = vmatprep.subr.bf16.mxu0 %v1285
  %1806 = vmatpush1.bf16.msra.mxu0 %v1284
  %1807 = vmatprep.subr.bf16.mxu0 %v1289
  %1808 = vmatpush1.bf16.msra.mxu0 %v1288
  %1809 = vmatprep.subr.bf16.mxu0 %v1293
  %1810 = vmatpush1.bf16.msra.mxu0 %v1292
  %1811 = vmatprep.subr.bf16.mxu0 %v1297
  %1812 = vmatpush1.bf16.msra.mxu0 %v1296
  %1813 = vmatprep.subr.bf16.mxu0 %v1301
  %1814 = vmatpush1.bf16.msra.mxu0 %v1300
  %1815 = vmatprep.subr.bf16.mxu0 %v1305
  %1816 = vmatpush1.bf16.msra.mxu0 %v1304
  %1817 = vmatprep.subr.bf16.mxu0 %v1309
  %1818 = vmatpush1.bf16.msra.mxu0 %v1308
  %1819 = vmatprep.subr.bf16.mxu0 %v1313
  %1820 = vmatpush1.bf16.msra.mxu0 %v1312
  %1821 = vmatprep.subr.bf16.mxu0 %v1317
  %1822 = vmatpush1.bf16.msra.mxu0 %v1316
  %1823 = vmatprep.subr.bf16.mxu0 %v1321
  %1824 = vmatpush1.bf16.msra.mxu0 %v1320
  %1825 = vmatprep.subr.bf16.mxu0 %v1325
  %1826 = vmatpush1.bf16.msra.mxu0 %v1324
  %1827 = vmatprep.subr.bf16.mxu0 %v1329
  %1828 = vmatpush1.bf16.msra.mxu0 %v1328
  %1829 = vmatprep.subr.bf16.mxu0 %v1333
  %1830 = vmatpush1.bf16.msra.mxu0 %v1332
  %1831 = vmatprep.subr.bf16.mxu0 %v1337
  %1832 = vmatpush1.bf16.msra.mxu0 %v1336
  %1833 = vmatprep.mubr.bf16.mxu0 %v372
  %1834 = vmatmul.mubr.bf16.gmra.mrb[0].mxu0 %v370
  %v1835 = vpop.f32.mrb[0].mxu0
  %v1836 = vadd.f32 %v1795, %v1835
  %v1837 = vpop.f32.mrb[0].mxu0
  %v1838 = vadd.f32 %v1797, %v1837
  %v1839 = vpop.f32.mrb[0].mxu0
  %v1840 = vpop.f32.mrb[0].mxu0
  %1841 = vdwg.mxu0
  %1842 = vmatprep.subr.bf16.mxu0 %v1341
  %1843 = vmatpush1.bf16.msra.mxu0 %v1340
  %1844 = vmatprep.subr.bf16.mxu0 %v1345
  %1845 = vmatpush1.bf16.msra.mxu0 %v1344
  %1846 = vmatprep.subr.bf16.mxu0 %v1349
  %1847 = vmatpush1.bf16.msra.mxu0 %v1348
  %1848 = vmatprep.subr.bf16.mxu0 %v1353
  %1849 = vmatpush1.bf16.msra.mxu0 %v1352
  %1850 = vmatprep.subr.bf16.mxu0 %v1357
  %1851 = vmatpush1.bf16.msra.mxu0 %v1356
  %1852 = vmatprep.subr.bf16.mxu0 %v1361
  %1853 = vmatpush1.bf16.msra.mxu0 %v1360
  %1854 = vmatprep.subr.bf16.mxu0 %v1365
  %1855 = vmatpush1.bf16.msra.mxu0 %v1364
  %1856 = vmatprep.subr.bf16.mxu0 %v1369
  %1857 = vmatpush1.bf16.msra.mxu0 %v1368
  %1858 = vmatprep.subr.bf16.mxu0 %v1373
  %1859 = vmatpush1.bf16.msra.mxu0 %v1372
  %1860 = vmatprep.subr.bf16.mxu0 %v1377
  %1861 = vmatpush1.bf16.msra.mxu0 %v1376
  %1862 = vmatprep.subr.bf16.mxu0 %v1381
  %1863 = vmatpush1.bf16.msra.mxu0 %v1380
  %1864 = vmatprep.subr.bf16.mxu0 %v1385
  %1865 = vmatpush1.bf16.msra.mxu0 %v1384
  %1866 = vmatprep.subr.bf16.mxu0 %v1389
  %1867 = vmatpush1.bf16.msra.mxu0 %v1388
  %1868 = vmatprep.subr.bf16.mxu0 %v1393
  %1869 = vmatpush1.bf16.msra.mxu0 %v1392
  %1870 = vmatprep.subr.bf16.mxu0 %v1397
  %1871 = vmatpush1.bf16.msra.mxu0 %v1396
  %1872 = vmatprep.subr.bf16.mxu0 %v1401
  %1873 = vmatpush1.bf16.msra.mxu0 %v1400
  %1874 = vmatprep.mubr.bf16.mxu0 %v369
  %1875 = vmatmul.mubr.bf16.gmra.mrb[0].mxu0 %v355
  %v1876 = vpop.f32.mrb[0].mxu0
  %v1877 = vadd.f32 %v1836, %v1876
  %v1878 = vpop.f32.mrb[0].mxu0
  %v1879 = vadd.f32 %v1838, %v1878
  %v1880 = vpop.f32.mrb[0].mxu0
  %v1881 = vpop.f32.mrb[0].mxu0
  %1882 = vdwg.mxu0
  %1883 = vmatprep.subr.bf16.mxu0 %v1405
  %1884 = vmatpush1.bf16.msra.mxu0 %v1404
  %1885 = vmatprep.subr.bf16.mxu0 %v1409
  %1886 = vmatpush1.bf16.msra.mxu0 %v1408
  %1887 = vmatprep.subr.bf16.mxu0 %v1413
  %1888 = vmatpush1.bf16.msra.mxu0 %v1412
  %1889 = vmatprep.subr.bf16.mxu0 %v1417
  %1890 = vmatpush1.bf16.msra.mxu0 %v1416
  %1891 = vmatprep.subr.bf16.mxu0 %v1421
  %1892 = vmatpush1.bf16.msra.mxu0 %v1420
  %1893 = vmatprep.subr.bf16.mxu0 %v1425
  %1894 = vmatpush1.bf16.msra.mxu0 %v1424
  %1895 = vmatprep.subr.bf16.mxu0 %v1429
  %1896 = vmatpush1.bf16.msra.mxu0 %v1428
  %1897 = vmatprep.subr.bf16.mxu0 %v1433
  %1898 = vmatpush1.bf16.msra.mxu0 %v1432
  %1899 = vmatprep.subr.bf16.mxu0 %v1437
  %1900 = vmatpush1.bf16.msra.mxu0 %v1436
  %1901 = vmatprep.subr.bf16.mxu0 %v1441
  %1902 = vmatpush1.bf16.msra.mxu0 %v1440
  %1903 = vmatprep.subr.bf16.mxu0 %v1445
  %1904 = vmatpush1.bf16.msra.mxu0 %v1444
  %1905 = vmatprep.subr.bf16.mxu0 %v1449
  %1906 = vmatpush1.bf16.msra.mxu0 %v1448
  %1907 = vmatprep.subr.bf16.mxu0 %v1453
  %1908 = vmatpush1.bf16.msra.mxu0 %v1452
  %1909 = vmatprep.subr.bf16.mxu0 %v1457
  %1910 = vmatpush1.bf16.msra.mxu0 %v1456
  %1911 = vmatprep.subr.bf16.mxu0 %v1461
  %1912 = vmatpush1.bf16.msra.mxu0 %v1460
  %1913 = vmatprep.subr.bf16.mxu0 %v1465
  %1914 = vmatpush1.bf16.msra.mxu0 %v1464
  %1915 = vmatprep.mubr.bf16.mxu0 %v373
  %1916 = vmatmul.mubr.bf16.gmra.mrb[0].mxu0 %v371
  %v1917 = vpop.f32.mrb[0].mxu0
  %v1918 = vadd.f32 %v1877, %v1917
  %v1919 = vpop.f32.mrb[0].mxu0
  %v1920 = vadd.f32 %v1879, %v1919
  %v1921 = vpop.f32.mrb[0].mxu0
  %v1922 = vpop.f32.mrb[0].mxu0
  %1923 = vdwg.mxu0
  %1924 = vmatprep.subr.bf16.mxu0 %v1469
  %1925 = vmatpush1.bf16.msra.mxu0 %v1468
  %1926 = vmatprep.subr.bf16.mxu0 %v1473
  %1927 = vmatpush1.bf16.msra.mxu0 %v1472
  %1928 = vmatprep.subr.bf16.mxu0 %v1477
  %1929 = vmatpush1.bf16.msra.mxu0 %v1476
  %1930 = vmatprep.subr.bf16.mxu0 %v1481
  %1931 = vmatpush1.bf16.msra.mxu0 %v1480
  %1932 = vmatprep.subr.bf16.mxu0 0
  %1933 = vmatpush1.bf16.msra.mxu0 0
  %1934 = vmatprep.subr.bf16.mxu0 0
  %1935 = vmatpush1.bf16.msra.mxu0 0
  %1936 = vmatprep.subr.bf16.mxu0 0
  %1937 = vmatpush1.bf16.msra.mxu0 0
  %1938 = vmatprep.subr.bf16.mxu0 0
  %1939 = vmatpush1.bf16.msra.mxu0 0
  %1940 = vmatprep.subr.bf16.mxu0 0
  %1941 = vmatpush1.bf16.msra.mxu0 0
  %1942 = vmatprep.subr.bf16.mxu0 0
  %1943 = vmatpush1.bf16.msra.mxu0 0
  %1944 = vmatprep.subr.bf16.mxu0 0
  %1945 = vmatpush1.bf16.msra.mxu0 0
  %1946 = vmatprep.subr.bf16.mxu0 0
  %1947 = vmatpush1.bf16.msra.mxu0 0
  %1948 = vmatprep.subr.bf16.mxu0 0
  %1949 = vmatpush1.bf16.msra.mxu0 0
  %1950 = vmatprep.subr.bf16.mxu0 0
  %1951 = vmatpush1.bf16.msra.mxu0 0
  %1952 = vmatprep.subr.bf16.mxu0 0
  %1953 = vmatpush1.bf16.msra.mxu0 0
  %1954 = vmatprep.subr.bf16.mxu0 0
  %1955 = vmatpush1.bf16.msra.mxu0 0
  %1956 = vmatprep.mubr.bf16.mxu0 0
  %1957 = vmatmul.mubr.bf16.gmra.mrb[0].mxu0 %v1758
  %v1958 = vpop.f32.mrb[0].mxu0
  %v1959 = vadd.f32 %v1918, %v1958
  %v1960 = vpop.f32.mrb[0].mxu0
  %v1961 = vadd.f32 %v1920, %v1960
  %v1962 = vpop.f32.mrb[0].mxu0
  %v1963 = vpop.f32.mrb[0].mxu0
  %1964 = vdwg.mxu0
  %1965 = vmatprep.subr.bf16.mxu0 %v1215
  %1966 = vmatpush1.bf16.msra.mxu0 %v1214
  %1967 = vmatprep.subr.bf16.mxu0 %v1219
  %1968 = vmatpush1.bf16.msra.mxu0 %v1218
  %1969 = vmatprep.subr.bf16.mxu0 %v1223
  %1970 = vmatpush1.bf16.msra.mxu0 %v1222
  %1971 = vmatprep.subr.bf16.mxu0 %v1227
  %1972 = vmatpush1.bf16.msra.mxu0 %v1226
  %1973 = vmatprep.subr.bf16.mxu0 %v1231
  %1974 = vmatpush1.bf16.msra.mxu0 %v1230
  %1975 = vmatprep.subr.bf16.mxu0 %v1235
  %1976 = vmatpush1.bf16.msra.mxu0 %v1234
  %1977 = vmatprep.subr.bf16.mxu0 %v1239
  %1978 = vmatpush1.bf16.msra.mxu0 %v1238
  %1979 = vmatprep.subr.bf16.mxu0 %v1243
  %1980 = vmatpush1.bf16.msra.mxu0 %v1242
  %1981 = vmatprep.subr.bf16.mxu0 %v1247
  %1982 = vmatpush1.bf16.msra.mxu0 %v1246
  %1983 = vmatprep.subr.bf16.mxu0 %v1251
  %1984 = vmatpush1.bf16.msra.mxu0 %v1250
  %1985 = vmatprep.subr.bf16.mxu0 %v1255
  %1986 = vmatpush1.bf16.msra.mxu0 %v1254
  %1987 = vmatprep.subr.bf16.mxu0 %v1259
  %1988 = vmatpush1.bf16.msra.mxu0 %v1258
  %1989 = vmatprep.subr.bf16.mxu0 %v1263
  %1990 = vmatpush1.bf16.msra.mxu0 %v1262
  %1991 = vmatprep.subr.bf16.mxu0 %v1267
  %1992 = vmatpush1.bf16.msra.mxu0 %v1266
  %1993 = vmatprep.subr.bf16.mxu0 %v1271
  %1994 = vmatpush1.bf16.msra.mxu0 %v1270
  %1995 = vmatprep.subr.bf16.mxu0 %v1275
  %1996 = vmatpush1.bf16.msra.mxu0 %v1274
  %1997 = vmatprep.mubr.bf16.mxu0 %v362
  %1998 = vmatmul.mubr.bf16.gmra.mrb[0].mxu0 %v348
  %v1999 = vpop.f32.mrb[0].mxu0
  %v2000 = vadd.f32 %v314, %v1999
  %v2001 = vpop.f32.mrb[0].mxu0
  %v2002 = vadd.f32 %v318, %v2001
  %v2003 = vpop.f32.mrb[0].mxu0
  %v2004 = vpop.f32.mrb[0].mxu0
  %2005 = vdwg.mxu0
  %2006 = vmatprep.subr.bf16.mxu0 %v1279
  %2007 = vmatpush1.bf16.msra.mxu0 %v1278
  %2008 = vmatprep.subr.bf16.mxu0 %v1283
  %2009 = vmatpush1.bf16.msra.mxu0 %v1282
  %2010 = vmatprep.subr.bf16.mxu0 %v1287
  %2011 = vmatpush1.bf16.msra.mxu0 %v1286
  %2012 = vmatprep.subr.bf16.mxu0 %v1291
  %2013 = vmatpush1.bf16.msra.mxu0 %v1290
  %2014 = vmatprep.subr.bf16.mxu0 %v1295
  %2015 = vmatpush1.bf16.msra.mxu0 %v1294
  %2016 = vmatprep.subr.bf16.mxu0 %v1299
  %2017 = vmatpush1.bf16.msra.mxu0 %v1298
  %2018 = vmatprep.subr.bf16.mxu0 %v1303
  %2019 = vmatpush1.bf16.msra.mxu0 %v1302
  %2020 = vmatprep.subr.bf16.mxu0 %v1307
  %2021 = vmatpush1.bf16.msra.mxu0 %v1306
  %2022 = vmatprep.subr.bf16.mxu0 %v1311
  %2023 = vmatpush1.bf16.msra.mxu0 %v1310
  %2024 = vmatprep.subr.bf16.mxu0 %v1315
  %2025 = vmatpush1.bf16.msra.mxu0 %v1314
  %2026 = vmatprep.subr.bf16.mxu0 %v1319
  %2027 = vmatpush1.bf16.msra.mxu0 %v1318
  %2028 = vmatprep.subr.bf16.mxu0 %v1323
  %2029 = vmatpush1.bf16.msra.mxu0 %v1322
  %2030 = vmatprep.subr.bf16.mxu0 %v1327
  %2031 = vmatpush1.bf16.msra.mxu0 %v1326
  %2032 = vmatprep.subr.bf16.mxu0 %v1331
  %2033 = vmatpush1.bf16.msra.mxu0 %v1330
  %2034 = vmatprep.subr.bf16.mxu0 %v1335
  %2035 = vmatpush1.bf16.msra.mxu0 %v1334
  %2036 = vmatprep.subr.bf16.mxu0 %v1339
  %2037 = vmatpush1.bf16.msra.mxu0 %v1338
  %2038 = vmatprep.mubr.bf16.mxu0 %v372
  %2039 = vmatmul.mubr.bf16.gmra.mrb[0].mxu0 %v370
  %v2040 = vpop.f32.mrb[0].mxu0
  %v2041 = vadd.f32 %v2000, %v2040
  %v2042 = vpop.f32.mrb[0].mxu0
  %v2043 = vadd.f32 %v2002, %v2042
  %v2044 = vpop.f32.mrb[0].mxu0
  %v2045 = vpop.f32.mrb[0].mxu0
  %2046 = vdwg.mxu0
  %2047 = vmatprep.subr.bf16.mxu0 %v1343
  %2048 = vmatpush1.bf16.msra.mxu0 %v1342
  %2049 = vmatprep.subr.bf16.mxu0 %v1347
  %2050 = vmatpush1.bf16.msra.mxu0 %v1346
  %2051 = vmatprep.subr.bf16.mxu0 %v1351
  %2052 = vmatpush1.bf16.msra.mxu0 %v1350
  %2053 = vmatprep.subr.bf16.mxu0 %v1355
  %2054 = vmatpush1.bf16.msra.mxu0 %v1354
  %2055 = vmatprep.subr.bf16.mxu0 %v1359
  %2056 = vmatpush1.bf16.msra.mxu0 %v1358
  %2057 = vmatprep.subr.bf16.mxu0 %v1363
  %2058 = vmatpush1.bf16.msra.mxu0 %v1362
  %2059 = vmatprep.subr.bf16.mxu0 %v1367
  %2060 = vmatpush1.bf16.msra.mxu0 %v1366
  %2061 = vmatprep.subr.bf16.mxu0 %v1371
  %2062 = vmatpush1.bf16.msra.mxu0 %v1370
  %2063 = vmatprep.subr.bf16.mxu0 %v1375
  %2064 = vmatpush1.bf16.msra.mxu0 %v1374
  %2065 = vmatprep.subr.bf16.mxu0 %v1379
  %2066 = vmatpush1.bf16.msra.mxu0 %v1378
  %2067 = vmatprep.subr.bf16.mxu0 %v1383
  %2068 = vmatpush1.bf16.msra.mxu0 %v1382
  %2069 = vmatprep.subr.bf16.mxu0 %v1387
  %2070 = vmatpush1.bf16.msra.mxu0 %v1386
  %2071 = vmatprep.subr.bf16.mxu0 %v1391
  %2072 = vmatpush1.bf16.msra.mxu0 %v1390
  %2073 = vmatprep.subr.bf16.mxu0 %v1395
  %2074 = vmatpush1.bf16.msra.mxu0 %v1394
  %2075 = vmatprep.subr.bf16.mxu0 %v1399
  %2076 = vmatpush1.bf16.msra.mxu0 %v1398
  %2077 = vmatprep.subr.bf16.mxu0 %v1403
  %2078 = vmatpush1.bf16.msra.mxu0 %v1402
  %2079 = vmatprep.mubr.bf16.mxu0 %v369
  %2080 = vmatmul.mubr.bf16.gmra.mrb[0].mxu0 %v355
  %v2081 = vpop.f32.mrb[0].mxu0
  %v2082 = vadd.f32 %v2041, %v2081
  %v2083 = vpop.f32.mrb[0].mxu0
  %v2084 = vadd.f32 %v2043, %v2083
  %v2085 = vpop.f32.mrb[0].mxu0
  %v2086 = vpop.f32.mrb[0].mxu0
  %2087 = vdwg.mxu0
  %2088 = vmatprep.subr.bf16.mxu0 %v1407
  %2089 = vmatpush1.bf16.msra.mxu0 %v1406
  %2090 = vmatprep.subr.bf16.mxu0 %v1411
  %2091 = vmatpush1.bf16.msra.mxu0 %v1410
  %2092 = vmatprep.subr.bf16.mxu0 %v1415
  %2093 = vmatpush1.bf16.msra.mxu0 %v1414
  %2094 = vmatprep.subr.bf16.mxu0 %v1419
  %2095 = vmatpush1.bf16.msra.mxu0 %v1418
  %2096 = vmatprep.subr.bf16.mxu0 %v1423
  %2097 = vmatpush1.bf16.msra.mxu0 %v1422
  %2098 = vmatprep.subr.bf16.mxu0 %v1427
  %2099 = vmatpush1.bf16.msra.mxu0 %v1426
  %2100 = vmatprep.subr.bf16.mxu0 %v1431
  %2101 = vmatpush1.bf16.msra.mxu0 %v1430
  %2102 = vmatprep.subr.bf16.mxu0 %v1435
  %2103 = vmatpush1.bf16.msra.mxu0 %v1434
  %2104 = vmatprep.subr.bf16.mxu0 %v1439
  %2105 = vmatpush1.bf16.msra.mxu0 %v1438
  %2106 = vmatprep.subr.bf16.mxu0 %v1443
  %2107 = vmatpush1.bf16.msra.mxu0 %v1442
  %2108 = vmatprep.subr.bf16.mxu0 %v1447
  %2109 = vmatpush1.bf16.msra.mxu0 %v1446
  %2110 = vmatprep.subr.bf16.mxu0 %v1451
  %2111 = vmatpush1.bf16.msra.mxu0 %v1450
  %2112 = vmatprep.subr.bf16.mxu0 %v1455
  %2113 = vmatpush1.bf16.msra.mxu0 %v1454
  %2114 = vmatprep.subr.bf16.mxu0 %v1459
  %2115 = vmatpush1.bf16.msra.mxu0 %v1458
  %2116 = vmatprep.subr.bf16.mxu0 %v1463
  %2117 = vmatpush1.bf16.msra.mxu0 %v1462
  %2118 = vmatprep.subr.bf16.mxu0 %v1467
  %2119 = vmatpush1.bf16.msra.mxu0 %v1466
  %2120 = vmatprep.mubr.bf16.mxu0 %v373
  %2121 = vmatmul.mubr.bf16.gmra.mrb[0].mxu0 %v371
  %v2122 = vpop.f32.mrb[0].mxu0
  %v2123 = vadd.f32 %v2082, %v2122
  %v2124 = vpop.f32.mrb[0].mxu0
  %v2125 = vadd.f32 %v2084, %v2124
  %v2126 = vpop.f32.mrb[0].mxu0
  %v2127 = vpop.f32.mrb[0].mxu0
  %2128 = vdwg.mxu0
  %2129 = vmatprep.subr.bf16.mxu0 %v1471
  %2130 = vmatpush1.bf16.msra.mxu0 %v1470
  %2131 = vmatprep.subr.bf16.mxu0 %v1475
  %2132 = vmatpush1.bf16.msra.mxu0 %v1474
  %2133 = vmatprep.subr.bf16.mxu0 %v1479
  %2134 = vmatpush1.bf16.msra.mxu0 %v1478
  %2135 = vmatprep.subr.bf16.mxu0 %v1483
  %2136 = vmatpush1.bf16.msra.mxu0 %v1482
  %2137 = vmatprep.subr.bf16.mxu0 0
  %2138 = vmatpush1.bf16.msra.mxu0 0
  %2139 = vmatprep.subr.bf16.mxu0 0
  %2140 = vmatpush1.bf16.msra.mxu0 0
  %2141 = vmatprep.subr.bf16.mxu0 0
  %2142 = vmatpush1.bf16.msra.mxu0 0
  %2143 = vmatprep.subr.bf16.mxu0 0
  %2144 = vmatpush1.bf16.msra.mxu0 0
  %2145 = vmatprep.subr.bf16.mxu0 0
  %2146 = vmatpush1.bf16.msra.mxu0 0
  %2147 = vmatprep.subr.bf16.mxu0 0
  %2148 = vmatpush1.bf16.msra.mxu0 0
  %2149 = vmatprep.subr.bf16.mxu0 0
  %2150 = vmatpush1.bf16.msra.mxu0 0
  %2151 = vmatprep.subr.bf16.mxu0 0
  %2152 = vmatpush1.bf16.msra.mxu0 0
  %2153 = vmatprep.subr.bf16.mxu0 0
  %2154 = vmatpush1.bf16.msra.mxu0 0
  %2155 = vmatprep.subr.bf16.mxu0 0
  %2156 = vmatpush1.bf16.msra.mxu0 0
  %2157 = vmatprep.subr.bf16.mxu0 0
  %2158 = vmatpush1.bf16.msra.mxu0 0
  %2159 = vmatprep.subr.bf16.mxu0 0
  %2160 = vmatpush1.bf16.msra.mxu0 0
  %2161 = vmatprep.mubr.bf16.mxu0 0
  %2162 = vmatmul.mubr.bf16.gmra.mrb[0].mxu0 %v1758
  %v2163 = vpop.f32.mrb[0].mxu0
  %v2164 = vadd.f32 %v2123, %v2163
  %v2165 = vpop.f32.mrb[0].mxu0
  %v2166 = vadd.f32 %v2125, %v2165
  %v2167 = vpop.f32.mrb[0].mxu0
  %v2168 = vpop.f32.mrb[0].mxu0
  %2169 = vdwg.mxu0
  %v2170 = vmax.f32 %v1959, 0.0
  %v2171 = vmax.f32 %v1961, 0.0
  %v2172 = vmax.f32 %v2164, 0.0
  %v2173 = vmax.f32 %v2166, 0.0
  %v2174 = vpack.c.bf16 %v2170, %v2170
  %v2175 = vpack.c.bf16 %v2171, %v2171
  %v2176 = vpack.c.bf16 %v2172, %v2172
  %v2177 = vpack.c.bf16 %v2173, %v2173
  %v2178 = vld [vmem:[%s3] sm:$0xff]
  %v2179 = vld [vmem:[%s3 + $0x8] sm:$0xff]
  %v2180 = vld [vmem:[%s3 + $0x10] sm:$0xff]
  %v2181 = vld [vmem:[%s3 + $0x18] sm:$0xff]
  %v2182 = vld [vmem:[%s3 + $0x20] sm:$0xff]
  %v2183 = vld [vmem:[%s3 + $0x28] sm:$0xff]
  %v2184 = vld [vmem:[%s3 + $0x30] sm:$0xff]
  %v2185 = vld [vmem:[%s3 + $0x38] sm:$0xff]
  %v2186 = vld [vmem:[%s3 + $0x40] sm:$0xff]
  %v2187 = vld [vmem:[%s3 + $0x48] sm:$0xff]
  %v2188 = vld [vmem:[%s3 + $0x50] sm:$0xff]
  %v2189 = vld [vmem:[%s3 + $0x58] sm:$0xff]
  %v2190 = vld [vmem:[%s3 + $0x60] sm:$0xff]
  %v2191 = vld [vmem:[%s3 + $0x68] sm:$0xff]
  %v2192 = vld [vmem:[%s3 + $0x70] sm:$0xff]
  %v2193 = vld [vmem:[%s3 + $0x78] sm:$0xff]
  %v2194 = vld [vmem:[%s3 + $0x80] sm:$0xff]
  %v2195 = vld [vmem:[%s3 + $0x88] sm:$0xff]
  %v2196 = vld [vmem:[%s3 + $0x90] sm:$0xff]
  %v2197 = vld [vmem:[%s3 + $0x98] sm:$0xff]
  %v2198 = vld [vmem:[%s3 + $0xa0] sm:$0xff]
  %v2199 = vld [vmem:[%s3 + $0xa8] sm:$0xff]
  %v2200 = vld [vmem:[%s3 + $0xb0] sm:$0xff]
  %v2201 = vld [vmem:[%s3 + $0xb8] sm:$0xff]
  %v2202 = vld [vmem:[%s3 + $0xc0] sm:$0xff]
  %v2203 = vld [vmem:[%s3 + $0xc8] sm:$0xff]
  %v2204 = vld [vmem:[%s3 + $0xd0] sm:$0xff]
  %v2205 = vld [vmem:[%s3 + $0xd8] sm:$0xff]
  %v2206 = vld [vmem:[%s3 + $0xe0] sm:$0xff]
  %v2207 = vld [vmem:[%s3 + $0xe8] sm:$0xff]
  %v2208 = vld [vmem:[%s3 + $0xf0] sm:$0xff]
  %v2209 = vld [vmem:[%s3 + $0xf8] sm:$0xff]
  %v2210 = vld [vmem:[%s3 + $0x100] sm:$0xff]
  %v2211 = vld [vmem:[%s3 + $0x108] sm:$0xff]
  %v2212 = vld [vmem:[%s3 + $0x110] sm:$0xff]
  %v2213 = vld [vmem:[%s3 + $0x118] sm:$0xff]
  %v2214 = vld [vmem:[%s3 + $0x120] sm:$0xff]
  %v2215 = vld [vmem:[%s3 + $0x128] sm:$0xff]
  %v2216 = vld [vmem:[%s3 + $0x130] sm:$0xff]
  %v2217 = vld [vmem:[%s3 + $0x138] sm:$0xff]
  %v2218 = vld [vmem:[%s3 + $0x140] sm:$0xff]
  %v2219 = vld [vmem:[%s3 + $0x148] sm:$0xff]
  %v2220 = vld [vmem:[%s3 + $0x150] sm:$0xff]
  %v2221 = vld [vmem:[%s3 + $0x158] sm:$0xff]
  %v2222 = vld [vmem:[%s3 + $0x160] sm:$0xff]
  %v2223 = vld [vmem:[%s3 + $0x168] sm:$0xff]
  %v2224 = vld [vmem:[%s3 + $0x170] sm:$0xff]
  %v2225 = vld [vmem:[%s3 + $0x178] sm:$0xff]
  %v2226 = vld [vmem:[%s3 + $0x180] sm:$0xff]
  %v2227 = vld [vmem:[%s3 + $0x188] sm:$0xff]
  %v2228 = vld [vmem:[%s3 + $0x190] sm:$0xff]
  %v2229 = vld [vmem:[%s3 + $0x198] sm:$0xff]
  %v2230 = vld [vmem:[%s3 + $0x1a0] sm:$0xff]
  %v2231 = vld [vmem:[%s3 + $0x1a8] sm:$0xff]
  %v2232 = vld [vmem:[%s3 + $0x1b0] sm:$0xff]
  %v2233 = vld [vmem:[%s3 + $0x1b8] sm:$0xff]
  %v2234 = vld [vmem:[%s3 + $0x1c0] sm:$0xff]
  %v2235 = vld [vmem:[%s3 + $0x1c8] sm:$0xff]
  %v2236 = vld [vmem:[%s3 + $0x1d0] sm:$0xff]
  %v2237 = vld [vmem:[%s3 + $0x1d8] sm:$0xff]
  %v2238 = vld [vmem:[%s3 + $0x1e0] sm:$0xff]
  %v2239 = vld [vmem:[%s3 + $0x1e8] sm:$0xff]
  %v2240 = vld [vmem:[%s3 + $0x1f0] sm:$0xff]
  %v2241 = vld [vmem:[%s3 + $0x1f8] sm:$0xff]
  %v2242 = vld [vmem:[%s4] sm:$0x3]
  %v2244 = vlaneseq
  %v2245 = vshrl.u32 %v2244, 7
  %v2246 = vsub.s32 0, %v2245
  %v2247 = vrot.slane %v2242, %v2246
  %v2248 = vlaneseq
  %v2249 = vshrl.u32 %v2248, 7
  %v2250 = vsub.s32 1, %v2249
  %v2251 = vrot.slane %v2242, %v2250
  %v2318 = vunpack.c.l.b16 %v2178
  %v2319 = vunpack.c.h.b16 %v2178
  %v2320 = vunpack.c.l.b16 %v2179
  %v2321 = vunpack.c.h.b16 %v2179
  %v2322 = vunpack.c.l.b16 %v2180
  %v2323 = vunpack.c.h.b16 %v2180
  %v2324 = vunpack.c.l.b16 %v2181
  %v2325 = vunpack.c.h.b16 %v2181
  %v2326 = vunpack.c.l.b16 %v2182
  %v2327 = vunpack.c.h.b16 %v2182
  %v2328 = vunpack.c.l.b16 %v2183
  %v2329 = vunpack.c.h.b16 %v2183
  %v2330 = vunpack.c.l.b16 %v2184
  %v2331 = vunpack.c.h.b16 %v2184
  %v2332 = vunpack.c.l.b16 %v2185
  %v2333 = vunpack.c.h.b16 %v2185
  %v2334 = vunpack.c.l.b16 %v2186
  %v2335 = vunpack.c.h.b16 %v2186
  %v2336 = vunpack.c.l.b16 %v2187
  %v2337 = vunpack.c.h.b16 %v2187
  %v2338 = vunpack.c.l.b16 %v2188
  %v2339 = vunpack.c.h.b16 %v2188
  %v2340 = vunpack.c.l.b16 %v2189
  %v2341 = vunpack.c.h.b16 %v2189
  %v2342 = vunpack.c.l.b16 %v2190
  %v2343 = vunpack.c.h.b16 %v2190
  %v2344 = vunpack.c.l.b16 %v2191
  %v2345 = vunpack.c.h.b16 %v2191
  %v2346 = vunpack.c.l.b16 %v2192
  %v2347 = vunpack.c.h.b16 %v2192
  %v2348 = vunpack.c.l.b16 %v2193
  %v2349 = vunpack.c.h.b16 %v2193
  %v2350 = vunpack.c.l.b16 %v2194
  %v2351 = vunpack.c.h.b16 %v2194
  %v2352 = vunpack.c.l.b16 %v2195
  %v2353 = vunpack.c.h.b16 %v2195
  %v2354 = vunpack.c.l.b16 %v2196
  %v2355 = vunpack.c.h.b16 %v2196
  %v2356 = vunpack.c.l.b16 %v2197
  %v2357 = vunpack.c.h.b16 %v2197
  %v2358 = vunpack.c.l.b16 %v2198
  %v2359 = vunpack.c.h.b16 %v2198
  %v2360 = vunpack.c.l.b16 %v2199
  %v2361 = vunpack.c.h.b16 %v2199
  %v2362 = vunpack.c.l.b16 %v2200
  %v2363 = vunpack.c.h.b16 %v2200
  %v2364 = vunpack.c.l.b16 %v2201
  %v2365 = vunpack.c.h.b16 %v2201
  %v2366 = vunpack.c.l.b16 %v2202
  %v2367 = vunpack.c.h.b16 %v2202
  %v2368 = vunpack.c.l.b16 %v2203
  %v2369 = vunpack.c.h.b16 %v2203
  %v2370 = vunpack.c.l.b16 %v2204
  %v2371 = vunpack.c.h.b16 %v2204
  %v2372 = vunpack.c.l.b16 %v2205
  %v2373 = vunpack.c.h.b16 %v2205
  %v2374 = vunpack.c.l.b16 %v2206
  %v2375 = vunpack.c.h.b16 %v2206
  %v2376 = vunpack.c.l.b16 %v2207
  %v2377 = vunpack.c.h.b16 %v2207
  %v2378 = vunpack.c.l.b16 %v2208
  %v2379 = vunpack.c.h.b16 %v2208
  %v2380 = vunpack.c.l.b16 %v2209
  %v2381 = vunpack.c.h.b16 %v2209
  %v2382 = vunpack.c.l.b16 %v2210
  %v2383 = vunpack.c.h.b16 %v2210
  %v2384 = vunpack.c.l.b16 %v2211
  %v2385 = vunpack.c.h.b16 %v2211
  %v2386 = vunpack.c.l.b16 %v2212
  %v2387 = vunpack.c.h.b16 %v2212
  %v2388 = vunpack.c.l.b16 %v2213
  %v2389 = vunpack.c.h.b16 %v2213
  %v2390 = vunpack.c.l.b16 %v2214
  %v2391 = vunpack.c.h.b16 %v2214
  %v2392 = vunpack.c.l.b16 %v2215
  %v2393 = vunpack.c.h.b16 %v2215
  %v2394 = vunpack.c.l.b16 %v2216
  %v2395 = vunpack.c.h.b16 %v2216
  %v2396 = vunpack.c.l.b16 %v2217
  %v2397 = vunpack.c.h.b16 %v2217
  %v2398 = vunpack.c.l.b16 %v2218
  %v2399 = vunpack.c.h.b16 %v2218
  %v2400 = vunpack.c.l.b16 %v2219
  %v2401 = vunpack.c.h.b16 %v2219
  %v2402 = vunpack.c.l.b16 %v2220
  %v2403 = vunpack.c.h.b16 %v2220
  %v2404 = vunpack.c.l.b16 %v2221
  %v2405 = vunpack.c.h.b16 %v2221
  %v2406 = vunpack.c.l.b16 %v2222
  %v2407 = vunpack.c.h.b16 %v2222
  %v2408 = vunpack.c.l.b16 %v2223
  %v2409 = vunpack.c.h.b16 %v2223
  %v2410 = vunpack.c.l.b16 %v2224
  %v2411 = vunpack.c.h.b16 %v2224
  %v2412 = vunpack.c.l.b16 %v2225
  %v2413 = vunpack.c.h.b16 %v2225
  %v2414 = vunpack.c.l.b16 %v2226
  %v2415 = vunpack.c.h.b16 %v2226
  %v2416 = vunpack.c.l.b16 %v2227
  %v2417 = vunpack.c.h.b16 %v2227
  %v2418 = vunpack.c.l.b16 %v2228
  %v2419 = vunpack.c.h.b16 %v2228
  %v2420 = vunpack.c.l.b16 %v2229
  %v2421 = vunpack.c.h.b16 %v2229
  %v2422 = vunpack.c.l.b16 %v2230
  %v2423 = vunpack.c.h.b16 %v2230
  %v2424 = vunpack.c.l.b16 %v2231
  %v2425 = vunpack.c.h.b16 %v2231
  %v2426 = vunpack.c.l.b16 %v2232
  %v2427 = vunpack.c.h.b16 %v2232
  %v2428 = vunpack.c.l.b16 %v2233
  %v2429 = vunpack.c.h.b16 %v2233
  %v2430 = vunpack.c.l.b16 %v2234
  %v2431 = vunpack.c.h.b16 %v2234
  %v2432 = vunpack.c.l.b16 %v2235
  %v2433 = vunpack.c.h.b16 %v2235
  %v2434 = vunpack.c.l.b16 %v2236
  %v2435 = vunpack.c.h.b16 %v2236
  %v2436 = vunpack.c.l.b16 %v2237
  %v2437 = vunpack.c.h.b16 %v2237
  %v2438 = vunpack.c.l.b16 %v2238
  %v2439 = vunpack.c.h.b16 %v2238
  %v2440 = vunpack.c.l.b16 %v2239
  %v2441 = vunpack.c.h.b16 %v2239
  %v2442 = vunpack.c.l.b16 %v2240
  %v2443 = vunpack.c.h.b16 %v2240
  %v2444 = vunpack.c.l.b16 %v2241
  %v2445 = vunpack.c.h.b16 %v2241
  %v2446 = vpack.c.b16 %v2320, %v2318
  %v2447 = vpack.c.b16 %v2321, %v2319
  %v2448 = vpack.c.b16 %v2324, %v2322
  %v2449 = vpack.c.b16 %v2325, %v2323
  %v2450 = vpack.c.b16 %v2328, %v2326
  %v2451 = vpack.c.b16 %v2329, %v2327
  %v2452 = vpack.c.b16 %v2332, %v2330
  %v2453 = vpack.c.b16 %v2333, %v2331
  %v2454 = vpack.c.b16 %v2336, %v2334
  %v2455 = vpack.c.b16 %v2337, %v2335
  %v2456 = vpack.c.b16 %v2340, %v2338
  %v2457 = vpack.c.b16 %v2341, %v2339
  %v2458 = vpack.c.b16 %v2344, %v2342
  %v2459 = vpack.c.b16 %v2345, %v2343
  %v2460 = vpack.c.b16 %v2348, %v2346
  %v2461 = vpack.c.b16 %v2349, %v2347
  %v2462 = vpack.c.b16 %v2352, %v2350
  %v2463 = vpack.c.b16 %v2353, %v2351
  %v2464 = vpack.c.b16 %v2356, %v2354
  %v2465 = vpack.c.b16 %v2357, %v2355
  %v2466 = vpack.c.b16 %v2360, %v2358
  %v2467 = vpack.c.b16 %v2361, %v2359
  %v2468 = vpack.c.b16 %v2364, %v2362
  %v2469 = vpack.c.b16 %v2365, %v2363
  %v2470 = vpack.c.b16 %v2368, %v2366
  %v2471 = vpack.c.b16 %v2369, %v2367
  %v2472 = vpack.c.b16 %v2372, %v2370
  %v2473 = vpack.c.b16 %v2373, %v2371
  %v2474 = vpack.c.b16 %v2376, %v2374
  %v2475 = vpack.c.b16 %v2377, %v2375
  %v2476 = vpack.c.b16 %v2380, %v2378
  %v2477 = vpack.c.b16 %v2381, %v2379
  %v2478 = vpack.c.b16 %v2384, %v2382
  %v2479 = vpack.c.b16 %v2385, %v2383
  %v2480 = vpack.c.b16 %v2388, %v2386
  %v2481 = vpack.c.b16 %v2389, %v2387
  %v2482 = vpack.c.b16 %v2392, %v2390
  %v2483 = vpack.c.b16 %v2393, %v2391
  %v2484 = vpack.c.b16 %v2396, %v2394
  %v2485 = vpack.c.b16 %v2397, %v2395
  %v2486 = vpack.c.b16 %v2400, %v2398
  %v2487 = vpack.c.b16 %v2401, %v2399
  %v2488 = vpack.c.b16 %v2404, %v2402
  %v2489 = vpack.c.b16 %v2405, %v2403
  %v2490 = vpack.c.b16 %v2408, %v2406
  %v2491 = vpack.c.b16 %v2409, %v2407
  %v2492 = vpack.c.b16 %v2412, %v2410
  %v2493 = vpack.c.b16 %v2413, %v2411
  %v2494 = vpack.c.b16 %v2416, %v2414
  %v2495 = vpack.c.b16 %v2417, %v2415
  %v2496 = vpack.c.b16 %v2420, %v2418
  %v2497 = vpack.c.b16 %v2421, %v2419
  %v2498 = vpack.c.b16 %v2424, %v2422
  %v2499 = vpack.c.b16 %v2425, %v2423
  %v2500 = vpack.c.b16 %v2428, %v2426
  %v2501 = vpack.c.b16 %v2429, %v2427
  %v2502 = vpack.c.b16 %v2432, %v2430
  %v2503 = vpack.c.b16 %v2433, %v2431
  %v2504 = vpack.c.b16 %v2436, %v2434
  %v2505 = vpack.c.b16 %v2437, %v2435
  %v2506 = vpack.c.b16 %v2440, %v2438
  %v2507 = vpack.c.b16 %v2441, %v2439
  %v2508 = vpack.c.b16 %v2444, %v2442
  %v2509 = vpack.c.b16 %v2445, %v2443
  %2574 = vmatprep.subr.bf16.mxu0 %v2447
  %2575 = vmatpush1.bf16.msra.mxu0 %v2446
  %2576 = vmatprep.subr.bf16.mxu0 %v2449
  %2577 = vmatpush1.bf16.msra.mxu0 %v2448
  %2578 = vmatprep.subr.bf16.mxu0 %v2451
  %2579 = vmatpush1.bf16.msra.mxu0 %v2450
  %2580 = vmatprep.subr.bf16.mxu0 %v2453
  %2581 = vmatpush1.bf16.msra.mxu0 %v2452
  %2582 = vmatprep.subr.bf16.mxu0 %v2455
  %2583 = vmatpush1.bf16.msra.mxu0 %v2454
  %2584 = vmatprep.subr.bf16.mxu0 %v2457
  %2585 = vmatpush1.bf16.msra.mxu0 %v2456
  %2586 = vmatprep.subr.bf16.mxu0 %v2459
  %2587 = vmatpush1.bf16.msra.mxu0 %v2458
  %2588 = vmatprep.subr.bf16.mxu0 %v2461
  %2589 = vmatpush1.bf16.msra.mxu0 %v2460
  %2590 = vmatprep.subr.bf16.mxu0 %v2463
  %2591 = vmatpush1.bf16.msra.mxu0 %v2462
  %2592 = vmatprep.subr.bf16.mxu0 %v2465
  %2593 = vmatpush1.bf16.msra.mxu0 %v2464
  %2594 = vmatprep.subr.bf16.mxu0 %v2467
  %2595 = vmatpush1.bf16.msra.mxu0 %v2466
  %2596 = vmatprep.subr.bf16.mxu0 %v2469
  %2597 = vmatpush1.bf16.msra.mxu0 %v2468
  %2598 = vmatprep.subr.bf16.mxu0 %v2471
  %2599 = vmatpush1.bf16.msra.mxu0 %v2470
  %2600 = vmatprep.subr.bf16.mxu0 %v2473
  %2601 = vmatpush1.bf16.msra.mxu0 %v2472
  %2602 = vmatprep.subr.bf16.mxu0 %v2475
  %2603 = vmatpush1.bf16.msra.mxu0 %v2474
  %2604 = vmatprep.subr.bf16.mxu0 %v2477
  %2605 = vmatpush1.bf16.msra.mxu0 %v2476
  %2606 = vmatprep.mubr.bf16.mxu0 %v2175
  %2607 = vmatmul.mubr.bf16.gmra.mrb[0].mxu0 %v2174
  %v2608 = vpop.f32.mrb[0].mxu0
  %v2609 = vadd.f32 %v2247, %v2608
  %v2610 = vpop.f32.mrb[0].mxu0
  %v2611 = vadd.f32 %v2251, %v2610
  %v2612 = vpop.f32.mrb[0].mxu0
  %v2613 = vpop.f32.mrb[0].mxu0
  %2614 = vdwg.mxu0
  %2615 = vmatprep.subr.bf16.mxu0 %v2479
  %2616 = vmatpush1.bf16.msra.mxu0 %v2478
  %2617 = vmatprep.subr.bf16.mxu0 %v2481
  %2618 = vmatpush1.bf16.msra.mxu0 %v2480
  %2619 = vmatprep.subr.bf16.mxu0 %v2483
  %2620 = vmatpush1.bf16.msra.mxu0 %v2482
  %2621 = vmatprep.subr.bf16.mxu0 %v2485
  %2622 = vmatpush1.bf16.msra.mxu0 %v2484
  %2623 = vmatprep.subr.bf16.mxu0 %v2487
  %2624 = vmatpush1.bf16.msra.mxu0 %v2486
  %2625 = vmatprep.subr.bf16.mxu0 %v2489
  %2626 = vmatpush1.bf16.msra.mxu0 %v2488
  %2627 = vmatprep.subr.bf16.mxu0 %v2491
  %2628 = vmatpush1.bf16.msra.mxu0 %v2490
  %2629 = vmatprep.subr.bf16.mxu0 %v2493
  %2630 = vmatpush1.bf16.msra.mxu0 %v2492
  %2631 = vmatprep.subr.bf16.mxu0 %v2495
  %2632 = vmatpush1.bf16.msra.mxu0 %v2494
  %2633 = vmatprep.subr.bf16.mxu0 %v2497
  %2634 = vmatpush1.bf16.msra.mxu0 %v2496
  %2635 = vmatprep.subr.bf16.mxu0 %v2499
  %2636 = vmatpush1.bf16.msra.mxu0 %v2498
  %2637 = vmatprep.subr.bf16.mxu0 %v2501
  %2638 = vmatpush1.bf16.msra.mxu0 %v2500
  %2639 = vmatprep.subr.bf16.mxu0 %v2503
  %2640 = vmatpush1.bf16.msra.mxu0 %v2502
  %2641 = vmatprep.subr.bf16.mxu0 %v2505
  %2642 = vmatpush1.bf16.msra.mxu0 %v2504
  %2643 = vmatprep.subr.bf16.mxu0 %v2507
  %2644 = vmatpush1.bf16.msra.mxu0 %v2506
  %2645 = vmatprep.subr.bf16.mxu0 %v2509
  %2646 = vmatpush1.bf16.msra.mxu0 %v2508
  %2647 = vmatprep.mubr.bf16.mxu0 %v2177
  %2648 = vmatmul.mubr.bf16.gmra.mrb[0].mxu0 %v2176
  %v2649 = vpop.f32.mrb[0].mxu0
  %v2650 = vadd.f32 %v2609, %v2649
  %v2651 = vpop.f32.mrb[0].mxu0
  %v2652 = vadd.f32 %v2611, %v2651
  %v2653 = vpop.f32.mrb[0].mxu0
  %v2654 = vpop.f32.mrb[0].mxu0
  %2655 = vdwg.mxu0
  %v2656 = vmax.f32 %v2650, 0.0
  %v2657 = vmax.f32 %v2652, 0.0
  %v2658 = vpack.c.bf16 %v2656, %v2656
  %v2659 = vpack.c.bf16 %v2657, %v2657
  %v2660 = vld [vmem:[%s5] sm:$0xf]
  %v2661 = vld [vmem:[%s5 + $0x4] sm:$0xf]
  %v2662 = vld [vmem:[%s5 + $0x8] sm:$0xf]
  %v2663 = vld [vmem:[%s5 + $0xc] sm:$0xf]
  %v2664 = vld [vmem:[%s5 + $0x10] sm:$0xf]
  %v2665 = vld [vmem:[%s5 + $0x14] sm:$0xf]
  %v2666 = vld [vmem:[%s5 + $0x18] sm:$0xf]
  %v2667 = vld [vmem:[%s5 + $0x1c] sm:$0xf]
  %v2668 = vld [vmem:[%s5 + $0x20] sm:$0xf]
  %v2669 = vld [vmem:[%s5 + $0x24] sm:$0xf]
  %v2670 = vld [vmem:[%s5 + $0x28] sm:$0xf]
  %v2671 = vld [vmem:[%s5 + $0x2c] sm:$0xf]
  %v2672 = vld [vmem:[%s5 + $0x30] sm:$0xf]
  %v2673 = vld [vmem:[%s5 + $0x34] sm:$0xf]
  %v2674 = vld [vmem:[%s5 + $0x38] sm:$0xf]
  %v2675 = vld [vmem:[%s5 + $0x3c] sm:$0xf]
  %v2676 = vld [vmem:[%s5 + $0x40] sm:$0xf]
  %v2677 = vld [vmem:[%s5 + $0x44] sm:$0xf]
  %v2678 = vld [vmem:[%s5 + $0x48] sm:$0xf]
  %v2679 = vld [vmem:[%s5 + $0x4c] sm:$0xf]
  %v2680 = vld [vmem:[%s5 + $0x50] sm:$0xf]
  %v2681 = vld [vmem:[%s5 + $0x54] sm:$0xf]
  %v2682 = vld [vmem:[%s5 + $0x58] sm:$0xf]
  %v2683 = vld [vmem:[%s5 + $0x5c] sm:$0xf]
  %v2684 = vld [vmem:[%s5 + $0x60] sm:$0xf]
  %v2685 = vld [vmem:[%s5 + $0x64] sm:$0xf]
  %v2686 = vld [vmem:[%s5 + $0x68] sm:$0xf]
  %v2687 = vld [vmem:[%s5 + $0x6c] sm:$0xf]
  %v2688 = vld [vmem:[%s5 + $0x70] sm:$0xf]
  %v2689 = vld [vmem:[%s5 + $0x74] sm:$0xf]
  %v2690 = vld [vmem:[%s5 + $0x78] sm:$0xf]
  %v2691 = vld [vmem:[%s5 + $0x7c] sm:$0xf]
  %v2692 = vld [vmem:[%s6] sm:$0x1]
  %v2694 = vlaneseq
  %v2695 = vshrl.u32 %v2694, 7
  %v2696 = vsub.s32 0, %v2695
  %v2697 = vrot.slane %v2692, %v2696
  %v2731 = vunpack.c.l.b16 %v2660
  %v2732 = vunpack.c.l.b16 %v2661
  %v2733 = vunpack.c.l.b16 %v2662
  %v2734 = vunpack.c.l.b16 %v2663
  %v2735 = vunpack.c.l.b16 %v2664
  %v2736 = vunpack.c.l.b16 %v2665
  %v2737 = vunpack.c.l.b16 %v2666
  %v2738 = vunpack.c.l.b16 %v2667
  %v2739 = vunpack.c.l.b16 %v2668
  %v2740 = vunpack.c.l.b16 %v2669
  %v2741 = vunpack.c.l.b16 %v2670
  %v2742 = vunpack.c.l.b16 %v2671
  %v2743 = vunpack.c.l.b16 %v2672
  %v2744 = vunpack.c.l.b16 %v2673
  %v2745 = vunpack.c.l.b16 %v2674
  %v2746 = vunpack.c.l.b16 %v2675
  %v2747 = vunpack.c.l.b16 %v2676
  %v2748 = vunpack.c.l.b16 %v2677
  %v2749 = vunpack.c.l.b16 %v2678
  %v2750 = vunpack.c.l.b16 %v2679
  %v2751 = vunpack.c.l.b16 %v2680
  %v2752 = vunpack.c.l.b16 %v2681
  %v2753 = vunpack.c.l.b16 %v2682
  %v2754 = vunpack.c.l.b16 %v2683
  %v2755 = vunpack.c.l.b16 %v2684
  %v2756 = vunpack.c.l.b16 %v2685
  %v2757 = vunpack.c.l.b16 %v2686
  %v2758 = vunpack.c.l.b16 %v2687
  %v2759 = vunpack.c.l.b16 %v2688
  %v2760 = vunpack.c.l.b16 %v2689
  %v2761 = vunpack.c.l.b16 %v2690
  %v2762 = vunpack.c.l.b16 %v2691
  %v2763 = vpack.c.b16 %v2732, %v2731
  %v2764 = vpack.c.b16 %v2734, %v2733
  %v2765 = vpack.c.b16 %v2736, %v2735
  %v2766 = vpack.c.b16 %v2738, %v2737
  %v2767 = vpack.c.b16 %v2740, %v2739
  %v2768 = vpack.c.b16 %v2742, %v2741
  %v2769 = vpack.c.b16 %v2744, %v2743
  %v2770 = vpack.c.b16 %v2746, %v2745
  %v2771 = vpack.c.b16 %v2748, %v2747
  %v2772 = vpack.c.b16 %v2750, %v2749
  %v2773 = vpack.c.b16 %v2752, %v2751
  %v2774 = vpack.c.b16 %v2754, %v2753
  %v2775 = vpack.c.b16 %v2756, %v2755
  %v2776 = vpack.c.b16 %v2758, %v2757
  %v2777 = vpack.c.b16 %v2760, %v2759
  %v2778 = vpack.c.b16 %v2762, %v2761
  %2795 = vmatprep.subr.bf16.mxu0 0
  %2796 = vmatpush1.bf16.msra.mxu0 %v2763
  %2797 = vmatprep.subr.bf16.mxu0 0
  %2798 = vmatpush1.bf16.msra.mxu0 %v2764
  %2799 = vmatprep.subr.bf16.mxu0 0
  %2800 = vmatpush1.bf16.msra.mxu0 %v2765
  %2801 = vmatprep.subr.bf16.mxu0 0
  %2802 = vmatpush1.bf16.msra.mxu0 %v2766
  %2803 = vmatprep.subr.bf16.mxu0 0
  %2804 = vmatpush1.bf16.msra.mxu0 %v2767
  %2805 = vmatprep.subr.bf16.mxu0 0
  %2806 = vmatpush1.bf16.msra.mxu0 %v2768
  %2807 = vmatprep.subr.bf16.mxu0 0
  %2808 = vmatpush1.bf16.msra.mxu0 %v2769
  %2809 = vmatprep.subr.bf16.mxu0 0
  %2810 = vmatpush1.bf16.msra.mxu0 %v2770
  %2811 = vmatprep.subr.bf16.mxu0 0
  %2812 = vmatpush1.bf16.msra.mxu0 %v2771
  %2813 = vmatprep.subr.bf16.mxu0 0
  %2814 = vmatpush1.bf16.msra.mxu0 %v2772
  %2815 = vmatprep.subr.bf16.mxu0 0
  %2816 = vmatpush1.bf16.msra.mxu0 %v2773
  %2817 = vmatprep.subr.bf16.mxu0 0
  %2818 = vmatpush1.bf16.msra.mxu0 %v2774
  %2819 = vmatprep.subr.bf16.mxu0 0
  %2820 = vmatpush1.bf16.msra.mxu0 %v2775
  %2821 = vmatprep.subr.bf16.mxu0 0
  %2822 = vmatpush1.bf16.msra.mxu0 %v2776
  %2823 = vmatprep.subr.bf16.mxu0 0
  %2824 = vmatpush1.bf16.msra.mxu0 %v2777
  %2825 = vmatprep.subr.bf16.mxu0 0
  %2826 = vmatpush1.bf16.msra.mxu0 %v2778
  %2827 = vmatprep.mubr.bf16.mxu0 %v2659
  %2828 = vmatmul.mubr.bf16.gmra.mrb[0].mxu0 %v2658
  %v2829 = vpop.f32.mrb[0].mxu0
  %v2830 = vadd.f32 %v2697, %v2829
  %v2831 = vpop.f32.mrb[0].mxu0
  %v2832 = vpop.f32.mrb[0].mxu0
  %v2833 = vpop.f32.mrb[0].mxu0
  %2834 = vdwg.mxu0
  %vm2835 = vcmask 25600
  %2836 = vst.msk [vmem:[%s7] sm:$0x3] %vm2835, %v2830
  // Predicated region
  $region30: #{generator_forward.10} parent=0 // pred_check
    _
  $region31: #{generator_forward.10} parent=0 // pred_check_branch
    %2838 = sbr.rel (0) target = $region33
  $region32: #{generator_forward.10} parent=0 // pred_region
    _
  $region33: #{generator_forward.10} parent=0 // pred_fallthru
    _
  // Predicated region
  $region34: #{generator_forward.10} parent=0 // pred_check
    _
  $region35: #{generator_forward.10} parent=0 // pred_check_branch
    %2840 = sbr.rel (0) target = $region37
  $region36: #{generator_forward.10} parent=0 // pred_region
    _
  $region37: #{generator_forward.10} parent=0 // pred_fallthru
    _

</llo_original>
